<compile_context>
chip_gen: v7x
topology: tpu7x:2x2x1
jax: 0.10.0
libtpu: 0.0.40
codegen_flags: <defaults>
</compile_context>

<pallas_src>
from functools import partial

import jax
import jax.numpy as jnp
from jax.experimental import pallas as pl
from jax.experimental.pallas import tpu as pltpu


def _convt3d_kernel(x_ref, t_ref, b_ref, o_ref, xp_ref, *,
                    K, D, H, pad, D_out, H_out, lanes_in, lanes_out):
    """One batch element per grid step.

    x_ref : (1, D, H, W_pad*C_in)            input, W pre-padded, (W,C) merged
    t_ref : (K, K, W_pad*C_in, W_out*C_out)  block-Toeplitz packed weights
    b_ref : (1, W_out*C_out)                 bias row (zeros if no bias)
    o_ref : (1, D_out, H_out, W_out*C_out)   lane-dense output block
    xp_ref: (D_pad, H_pad, W_pad*C_in)       VMEM scratch, D/H padded here
    """
    # Zero-pad D and H in VMEM.  (W was padded in the wrapper so this store is
    # full lane width; offsets touch only the leading and sublane dims.)
    xp_ref[...] = jnp.zeros(xp_ref.shape, xp_ref.dtype)
    xp_ref[pad:pad + D, pad:pad + H, :] = x_ref[0]

    # K*K accumulating MXU dots; the (kw, C_in) taps live in the contraction
    # dimension of the Toeplitz-expanded weight, so no per-tap im2col copies.
    acc = jnp.zeros((D_out * H_out, lanes_out), jnp.float32)
    for kd in range(K):
        for kh in range(K):
            lhs = xp_ref[kd:kd + D_out, kh:kh + H_out, :]
            lhs = lhs.reshape(D_out * H_out, lanes_in)
            acc = acc + jnp.dot(lhs, t_ref[kd, kh],
                                preferred_element_type=jnp.float32)

    acc = acc + b_ref[...]                          # fused bias epilogue
    o_ref[0] = acc.reshape(D_out, H_out, lanes_out).astype(o_ref.dtype)


def _pack_toeplitz_weight(weight, W_out, W_pad):
    """(C_in, C_out, K, K, K) conv_transpose weight ->
       (K, K, W_pad*C_in, W_out*C_out) block-Toeplitz matrices with
       T[kd, kh, w_in*C_in + c, ow*C_out + co] = wf[kd, kh, w_in - ow, c, co]
       (wf = spatially flipped kernel; zero outside 0 <= w_in - ow < K)."""
    C_in, C_out, K = weight.shape[0], weight.shape[1], weight.shape[2]
    # conv_transpose == full correlation with the spatially flipped kernel.
    wf = jnp.transpose(jnp.flip(weight, axis=(2, 3, 4)), (2, 3, 4, 0, 1))
    T = jnp.zeros((K, K, W_out, W_pad, C_in, C_out), weight.dtype)
    ow = jnp.arange(W_out)
    for kw in range(K):
        T = T.at[:, :, ow, ow + kw, :, :].set(wf[:, :, kw][:, :, None, :, :])
    T = jnp.transpose(T, (0, 1, 3, 4, 2, 5))   # (K, K, W_pad, C_in, W_out, C_out)
    return T.reshape(K, K, W_pad * C_in, W_out * C_out)


@jax.jit
def conv_transpose3d_pallas(x, weight, bias=None):
    """x: (N, C_in, D, H, W) NCDHW; weight: (C_in, C_out, K, K, K) — the layout
    F.conv_transpose3d expects; bias: (C_out,) or None."""
    N, C_in, D, H, W = x.shape
    Cw_in, C_out, K, K2, K3 = weight.shape
    assert Cw_in == C_in and K == K2 == K3
    pad = K - 1
    D_out, H_out, W_out = D + pad, H + pad, W + pad
    D_pad, H_pad, W_pad = D + 2 * pad, H + 2 * pad, W + 2 * pad
    lanes_in, lanes_out = W_pad * C_in, W_out * C_out

    # NCDHW -> NDHWC, pad W only (D/H are padded inside the kernel), merge
    # (W, C) into a single lane axis.  Under jit these fuse into one copy.
    x_l = jnp.transpose(x, (0, 2, 3, 4, 1))
    x_l = jnp.pad(x_l, ((0, 0), (0, 0), (0, 0), (pad, pad), (0, 0)))
    x_l = x_l.reshape(N, D, H, lanes_in)

    t_packed = _pack_toeplitz_weight(weight, W_out, W_pad).astype(x.dtype)
    if bias is None:
        b_row = jnp.zeros((1, lanes_out), x.dtype)
    else:
        b_row = jnp.tile(bias.astype(x.dtype), W_out).reshape(1, lanes_out)

    kernel = partial(_convt3d_kernel, K=K, D=D, H=H, pad=pad,
                     D_out=D_out, H_out=H_out,
                     lanes_in=lanes_in, lanes_out=lanes_out)

    out = pl.pallas_call(
        kernel,
        out_shape=jax.ShapeDtypeStruct((N, D_out, H_out, lanes_out), x.dtype),
        grid=(N,),
        in_specs=[
            pl.BlockSpec((1, D, H, lanes_in), lambda n: (n, 0, 0, 0)),
            pl.BlockSpec((K, K, lanes_in, lanes_out), lambda n: (0, 0, 0, 0)),
            pl.BlockSpec((1, lanes_out), lambda n: (0, 0)),
        ],
        out_specs=pl.BlockSpec((1, D_out, H_out, lanes_out),
                               lambda n: (n, 0, 0, 0)),
        scratch_shapes=[pltpu.VMEM((D_pad, H_pad, lanes_in), x.dtype)],
        compiler_params=pltpu.CompilerParams(
            dimension_semantics=("parallel",)),
    )(x_l, t_packed, b_row)

    # (N, D_out, H_out, W_out*C_out) -> NCDHW; the reshape is a free bitcast,
    # the transpose is the single remaining layout copy.
    out = out.reshape(N, D_out, H_out, W_out, C_out)
    return jnp.transpose(out, (0, 4, 1, 2, 3))


def conv_transpose3d_ref(x, weight, bias=None):
    """Direct-definition reference (scatter-add form), plain JAX."""
    N, C_in, D, H, W = x.shape
    _, C_out, K, _, _ = weight.shape
    out = jnp.zeros((N, C_out, D + K - 1, H + K - 1, W + K - 1), jnp.float32)
    for kd in range(K):
        for kh in range(K):
            for kw in range(K):
                contrib = jnp.einsum('ncdhw,co->nodhw',
                                     x.astype(jnp.float32),
                                     weight[:, :, kd, kh, kw].astype(jnp.float32))
                out = out.at[:, :, kd:kd + D, kh:kh + H, kw:kw + W].add(contrib)
    if bias is not None:
        out = out + bias.reshape(1, C_out, 1, 1, 1)
    return out.astype(x.dtype)


if __name__ == "__main__":
    # Module constants: in_channels=32, out_channels=16, kernel_size=3.  The
    # weight built in __init__ has shape (out_channels, in_channels, k, k, k)
    # = (16, 32, 3, 3, 3) and F.conv_transpose3d treats dim 0 as the conv's
    # *input* channel count, so x carries 16 channels and the output 32.
    in_channels = 32
    out_channels = 16
    kernel_size = 3
    N, D, H, W = 2, 6, 8, 10          # small, asymmetric spatial dims

    key = jax.random.PRNGKey(0)
    kx, kw_key = jax.random.split(key)
    x = jax.random.normal(kx, (N, out_channels, D, H, W), dtype=jnp.float32)
    fan_in = in_channels * kernel_size ** 3
    bound = 1.0 / (fan_in ** 0.5)
    weight = jax.random.uniform(
        kw_key,
        (out_channels, in_channels, kernel_size, kernel_size, kernel_size),
        minval=-bound, maxval=bound, dtype=jnp.float32)
    bias = None  # module default bias=False

    out = conv_transpose3d_pallas(x, weight, bias)
    out = jax.block_until_ready(out)

    ref = conv_transpose3d_ref(x, weight, bias)
    assert out.shape == (N, in_channels, D + kernel_size - 1,
                         H + kernel_size - 1, W + kernel_size - 1), out.shape
    assert jnp.allclose(out, ref, atol=1e-4, rtol=1e-4), (
        float(jnp.max(jnp.abs(out - ref))))
    print("KERNEL_OK")
</pallas_src>

<mosaic_0001>
module attributes {stable_mosaic.version = 11 : i64} {
  func.func @_convt3d_kernel(%arg0: i32, %arg1: memref<1x6x8x224xf32, #tpu.memory_space<vmem>>, %arg2: memref<3x3x224x384xf32, #tpu.memory_space<vmem>>, %arg3: memref<1x384xf32, #tpu.memory_space<vmem>>, %arg4: memref<1x8x10x384xf32, #tpu.memory_space<vmem>>, %arg5: memref<10x12x224xf32, #tpu.memory_space<vmem>>) attributes {dimension_semantics = [#tpu.dimension_semantics<parallel>], iteration_bounds = array<i64: 2>, scalar_prefetch = 0 : i64, scratch_operands = 1 : i64, tpu.core_type = #tpu.core_type<tc>, window_params = [{transform_indices = @transform_0, window_bounds = array<i64: 1, 6, 8, 224>}, {pipeline_mode = #tpu.pipeline_mode<synchronous>, transform_indices = @transform_1, window_bounds = array<i64: 3, 3, 224, 384>}, {pipeline_mode = #tpu.pipeline_mode<synchronous>, transform_indices = @transform_2, window_bounds = array<i64: 1, 384>}, {transform_indices = @transform_3, window_bounds = array<i64: 1, 8, 10, 384>}]} {
    %cst = arith.constant 0.000000e+00 : f32
    %0 = vector.broadcast %cst : f32 to vector<10x12x224xf32>
    %c0 = arith.constant 0 : index
    %c0_0 = arith.constant 0 : index
    %c0_1 = arith.constant 0 : index
    %1 = vector.load %arg5[%c0, %c0_0, %c0_1] : memref<10x12x224xf32, #tpu.memory_space<vmem>>, vector<10x12x224xf32>
    tpu.vector_store %arg5[%c0, %c0_0, %c0_1], %0 {strides = array<i32>} : memref<10x12x224xf32, #tpu.memory_space<vmem>>, vector<10x12x224xf32>,
    %c0_2 = arith.constant 0 : index
    %c0_3 = arith.constant 0 : index
    %c0_4 = arith.constant 0 : index
    %c0_5 = arith.constant 0 : index
    %2 = vector.load %arg1[%c0_2, %c0_3, %c0_4, %c0_5] : memref<1x6x8x224xf32, #tpu.memory_space<vmem>>, vector<1x6x8x224xf32>
    %3 = vector.shape_cast %2 : vector<1x6x8x224xf32> to vector<6x8x224xf32>
    %c2 = arith.constant 2 : index
    %c2_6 = arith.constant 2 : index
    %c0_7 = arith.constant 0 : index
    %4 = vector.load %arg5[%c2, %c2_6, %c0_7] : memref<10x12x224xf32, #tpu.memory_space<vmem>>, vector<6x8x224xf32>
    tpu.vector_store %arg5[%c2, %c2_6, %c0_7], %3 {strides = array<i32>} : memref<10x12x224xf32, #tpu.memory_space<vmem>>, vector<6x8x224xf32>,
    %cst_8 = arith.constant 0.000000e+00 : f32
    %5 = vector.broadcast %cst_8 : f32 to vector<80x384xf32>
    %c0_9 = arith.constant 0 : index
    %c0_10 = arith.constant 0 : index
    %c0_11 = arith.constant 0 : index
    %6 = vector.load %arg5[%c0_9, %c0_10, %c0_11] : memref<10x12x224xf32, #tpu.memory_space<vmem>>, vector<8x10x224xf32>
    %7 = vector.shape_cast %6 : vector<8x10x224xf32> to vector<80x224xf32>
    %c0_12 = arith.constant 0 : index
    %c0_13 = arith.constant 0 : index
    %c0_14 = arith.constant 0 : index
    %c0_15 = arith.constant 0 : index
    %8 = vector.load %arg2[%c0_12, %c0_13, %c0_14, %c0_15] : memref<3x3x224x384xf32, #tpu.memory_space<vmem>>, vector<1x1x224x384xf32>
    %9 = vector.shape_cast %8 : vector<1x1x224x384xf32> to vector<224x384xf32>
    %cst_16 = arith.constant dense<0.000000e+00> : vector<80x384xf32>
    %10 = tpu.matmul %7, %9, %cst_16 {dimension_numbers = #tpu.dot_dimension_numbers<[1], [0], [0], [1], [0, 0, 1, 1], [], []>} : vector<80x224xf32>, vector<224x384xf32>, vector<80x384xf32> -> vector<80x384xf32>
    %11 = arith.addf %5, %10 : vector<80x384xf32>
    %c0_17 = arith.constant 0 : index
    %c1 = arith.constant 1 : index
    %c0_18 = arith.constant 0 : index
    %12 = vector.load %arg5[%c0_17, %c1, %c0_18] : memref<10x12x224xf32, #tpu.memory_space<vmem>>, vector<8x10x224xf32>
    %13 = vector.shape_cast %12 : vector<8x10x224xf32> to vector<80x224xf32>
    %c0_19 = arith.constant 0 : index
    %c1_20 = arith.constant 1 : index
    %c0_21 = arith.constant 0 : index
    %c0_22 = arith.constant 0 : index
    %14 = vector.load %arg2[%c0_19, %c1_20, %c0_21, %c0_22] : memref<3x3x224x384xf32, #tpu.memory_space<vmem>>, vector<1x1x224x384xf32>
    %15 = vector.shape_cast %14 : vector<1x1x224x384xf32> to vector<224x384xf32>
    %cst_23 = arith.constant dense<0.000000e+00> : vector<80x384xf32>
    %16 = tpu.matmul %13, %15, %cst_23 {dimension_numbers = #tpu.dot_dimension_numbers<[1], [0], [0], [1], [0, 0, 1, 1], [], []>} : vector<80x224xf32>, vector<224x384xf32>, vector<80x384xf32> -> vector<80x384xf32>
    %17 = arith.addf %11, %16 : vector<80x384xf32>
    %c0_24 = arith.constant 0 : index
    %c2_25 = arith.constant 2 : index
    %c0_26 = arith.constant 0 : index
    %18 = vector.load %arg5[%c0_24, %c2_25, %c0_26] : memref<10x12x224xf32, #tpu.memory_space<vmem>>, vector<8x10x224xf32>
    %19 = vector.shape_cast %18 : vector<8x10x224xf32> to vector<80x224xf32>
    %c0_27 = arith.constant 0 : index
    %c2_28 = arith.constant 2 : index
    %c0_29 = arith.constant 0 : index
    %c0_30 = arith.constant 0 : index
    %20 = vector.load %arg2[%c0_27, %c2_28, %c0_29, %c0_30] : memref<3x3x224x384xf32, #tpu.memory_space<vmem>>, vector<1x1x224x384xf32>
    %21 = vector.shape_cast %20 : vector<1x1x224x384xf32> to vector<224x384xf32>
    %cst_31 = arith.constant dense<0.000000e+00> : vector<80x384xf32>
    %22 = tpu.matmul %19, %21, %cst_31 {dimension_numbers = #tpu.dot_dimension_numbers<[1], [0], [0], [1], [0, 0, 1, 1], [], []>} : vector<80x224xf32>, vector<224x384xf32>, vector<80x384xf32> -> vector<80x384xf32>
    %23 = arith.addf %17, %22 : vector<80x384xf32>
    %c1_32 = arith.constant 1 : index
    %c0_33 = arith.constant 0 : index
    %c0_34 = arith.constant 0 : index
    %24 = vector.load %arg5[%c1_32, %c0_33, %c0_34] : memref<10x12x224xf32, #tpu.memory_space<vmem>>, vector<8x10x224xf32>
    %25 = vector.shape_cast %24 : vector<8x10x224xf32> to vector<80x224xf32>
    %c1_35 = arith.constant 1 : index
    %c0_36 = arith.constant 0 : index
    %c0_37 = arith.constant 0 : index
    %c0_38 = arith.constant 0 : index
    %26 = vector.load %arg2[%c1_35, %c0_36, %c0_37, %c0_38] : memref<3x3x224x384xf32, #tpu.memory_space<vmem>>, vector<1x1x224x384xf32>
    %27 = vector.shape_cast %26 : vector<1x1x224x384xf32> to vector<224x384xf32>
    %cst_39 = arith.constant dense<0.000000e+00> : vector<80x384xf32>
    %28 = tpu.matmul %25, %27, %cst_39 {dimension_numbers = #tpu.dot_dimension_numbers<[1], [0], [0], [1], [0, 0, 1, 1], [], []>} : vector<80x224xf32>, vector<224x384xf32>, vector<80x384xf32> -> vector<80x384xf32>
    %29 = arith.addf %23, %28 : vector<80x384xf32>
    %c1_40 = arith.constant 1 : index
    %c1_41 = arith.constant 1 : index
    %c0_42 = arith.constant 0 : index
    %30 = vector.load %arg5[%c1_40, %c1_41, %c0_42] : memref<10x12x224xf32, #tpu.memory_space<vmem>>, vector<8x10x224xf32>
    %31 = vector.shape_cast %30 : vector<8x10x224xf32> to vector<80x224xf32>
    %c1_43 = arith.constant 1 : index
    %c1_44 = arith.constant 1 : index
    %c0_45 = arith.constant 0 : index
    %c0_46 = arith.constant 0 : index
    %32 = vector.load %arg2[%c1_43, %c1_44, %c0_45, %c0_46] : memref<3x3x224x384xf32, #tpu.memory_space<vmem>>, vector<1x1x224x384xf32>
    %33 = vector.shape_cast %32 : vector<1x1x224x384xf32> to vector<224x384xf32>
    %cst_47 = arith.constant dense<0.000000e+00> : vector<80x384xf32>
    %34 = tpu.matmul %31, %33, %cst_47 {dimension_numbers = #tpu.dot_dimension_numbers<[1], [0], [0], [1], [0, 0, 1, 1], [], []>} : vector<80x224xf32>, vector<224x384xf32>, vector<80x384xf32> -> vector<80x384xf32>
    %35 = arith.addf %29, %34 : vector<80x384xf32>
    %c1_48 = arith.constant 1 : index
    %c2_49 = arith.constant 2 : index
    %c0_50 = arith.constant 0 : index
    %36 = vector.load %arg5[%c1_48, %c2_49, %c0_50] : memref<10x12x224xf32, #tpu.memory_space<vmem>>, vector<8x10x224xf32>
    %37 = vector.shape_cast %36 : vector<8x10x224xf32> to vector<80x224xf32>
    %c1_51 = arith.constant 1 : index
    %c2_52 = arith.constant 2 : index
    %c0_53 = arith.constant 0 : index
    %c0_54 = arith.constant 0 : index
    %38 = vector.load %arg2[%c1_51, %c2_52, %c0_53, %c0_54] : memref<3x3x224x384xf32, #tpu.memory_space<vmem>>, vector<1x1x224x384xf32>
    %39 = vector.shape_cast %38 : vector<1x1x224x384xf32> to vector<224x384xf32>
    %cst_55 = arith.constant dense<0.000000e+00> : vector<80x384xf32>
    %40 = tpu.matmul %37, %39, %cst_55 {dimension_numbers = #tpu.dot_dimension_numbers<[1], [0], [0], [1], [0, 0, 1, 1], [], []>} : vector<80x224xf32>, vector<224x384xf32>, vector<80x384xf32> -> vector<80x384xf32>
    %41 = arith.addf %35, %40 : vector<80x384xf32>
    %c2_56 = arith.constant 2 : index
    %c0_57 = arith.constant 0 : index
    %c0_58 = arith.constant 0 : index
    %42 = vector.load %arg5[%c2_56, %c0_57, %c0_58] : memref<10x12x224xf32, #tpu.memory_space<vmem>>, vector<8x10x224xf32>
    %43 = vector.shape_cast %42 : vector<8x10x224xf32> to vector<80x224xf32>
    %c2_59 = arith.constant 2 : index
    %c0_60 = arith.constant 0 : index
    %c0_61 = arith.constant 0 : index
    %c0_62 = arith.constant 0 : index
    %44 = vector.load %arg2[%c2_59, %c0_60, %c0_61, %c0_62] : memref<3x3x224x384xf32, #tpu.memory_space<vmem>>, vector<1x1x224x384xf32>
    %45 = vector.shape_cast %44 : vector<1x1x224x384xf32> to vector<224x384xf32>
    %cst_63 = arith.constant dense<0.000000e+00> : vector<80x384xf32>
    %46 = tpu.matmul %43, %45, %cst_63 {dimension_numbers = #tpu.dot_dimension_numbers<[1], [0], [0], [1], [0, 0, 1, 1], [], []>} : vector<80x224xf32>, vector<224x384xf32>, vector<80x384xf32> -> vector<80x384xf32>
    %47 = arith.addf %41, %46 : vector<80x384xf32>
    %c2_64 = arith.constant 2 : index
    %c1_65 = arith.constant 1 : index
    %c0_66 = arith.constant 0 : index
    %48 = vector.load %arg5[%c2_64, %c1_65, %c0_66] : memref<10x12x224xf32, #tpu.memory_space<vmem>>, vector<8x10x224xf32>
    %49 = vector.shape_cast %48 : vector<8x10x224xf32> to vector<80x224xf32>
    %c2_67 = arith.constant 2 : index
    %c1_68 = arith.constant 1 : index
    %c0_69 = arith.constant 0 : index
    %c0_70 = arith.constant 0 : index
    %50 = vector.load %arg2[%c2_67, %c1_68, %c0_69, %c0_70] : memref<3x3x224x384xf32, #tpu.memory_space<vmem>>, vector<1x1x224x384xf32>
    %51 = vector.shape_cast %50 : vector<1x1x224x384xf32> to vector<224x384xf32>
    %cst_71 = arith.constant dense<0.000000e+00> : vector<80x384xf32>
    %52 = tpu.matmul %49, %51, %cst_71 {dimension_numbers = #tpu.dot_dimension_numbers<[1], [0], [0], [1], [0, 0, 1, 1], [], []>} : vector<80x224xf32>, vector<224x384xf32>, vector<80x384xf32> -> vector<80x384xf32>
    %53 = arith.addf %47, %52 : vector<80x384xf32>
    %c2_72 = arith.constant 2 : index
    %c2_73 = arith.constant 2 : index
    %c0_74 = arith.constant 0 : index
    %54 = vector.load %arg5[%c2_72, %c2_73, %c0_74] : memref<10x12x224xf32, #tpu.memory_space<vmem>>, vector<8x10x224xf32>
    %55 = vector.shape_cast %54 : vector<8x10x224xf32> to vector<80x224xf32>
    %c2_75 = arith.constant 2 : index
    %c2_76 = arith.constant 2 : index
    %c0_77 = arith.constant 0 : index
    %c0_78 = arith.constant 0 : index
    %56 = vector.load %arg2[%c2_75, %c2_76, %c0_77, %c0_78] : memref<3x3x224x384xf32, #tpu.memory_space<vmem>>, vector<1x1x224x384xf32>
    %57 = vector.shape_cast %56 : vector<1x1x224x384xf32> to vector<224x384xf32>
    %cst_79 = arith.constant dense<0.000000e+00> : vector<80x384xf32>
    %58 = tpu.matmul %55, %57, %cst_79 {dimension_numbers = #tpu.dot_dimension_numbers<[1], [0], [0], [1], [0, 0, 1, 1], [], []>} : vector<80x224xf32>, vector<224x384xf32>, vector<80x384xf32> -> vector<80x384xf32>
    %59 = arith.addf %53, %58 : vector<80x384xf32>
    %c0_80 = arith.constant 0 : index
    %c0_81 = arith.constant 0 : index
    %60 = vector.load %arg3[%c0_80, %c0_81] : memref<1x384xf32, #tpu.memory_space<vmem>>, vector<1x384xf32>
    %61 = vector.broadcast %60 : vector<1x384xf32> to vector<80x384xf32>
    %62 = arith.addf %59, %61 : vector<80x384xf32>
    %63 = vector.shape_cast %62 : vector<80x384xf32> to vector<8x10x384xf32>
    %c0_82 = arith.constant 0 : index
    %c0_83 = arith.constant 0 : index
    %c0_84 = arith.constant 0 : index
    %c0_85 = arith.constant 0 : index
    %64 = vector.load %arg4[%c0_82, %c0_83, %c0_84, %c0_85] : memref<1x8x10x384xf32, #tpu.memory_space<vmem>>, vector<1x8x10x384xf32>
    %65 = vector.shape_cast %64 : vector<1x8x10x384xf32> to vector<8x10x384xf32>
    %66 = vector.shape_cast %63 : vector<8x10x384xf32> to vector<1x8x10x384xf32>
    tpu.vector_store %arg4[%c0_82, %c0_83, %c0_84, %c0_85], %66 {strides = array<i32>} : memref<1x8x10x384xf32, #tpu.memory_space<vmem>>, vector<1x8x10x384xf32>,
    return
  }
  func.func @transform_0(%arg0: i32) -> (i32, i32, i32, i32) {
    %c0_i32 = arith.constant 0 : i32
    %c0_i32_0 = arith.constant 0 : i32
    %c0_i32_1 = arith.constant 0 : i32
    %c0_i32_2 = arith.constant 0 : i32
    return %arg0, %c0_i32, %c0_i32_0, %c0_i32_1 : i32, i32, i32, i32
  }
  func.func @transform_1(%arg0: i32) -> (i32, i32, i32, i32) {
    %c0_i32 = arith.constant 0 : i32
    %c0_i32_0 = arith.constant 0 : i32
    %c0_i32_1 = arith.constant 0 : i32
    %c0_i32_2 = arith.constant 0 : i32
    %c0_i32_3 = arith.constant 0 : i32
    return %c0_i32, %c0_i32_0, %c0_i32_1, %c0_i32_2 : i32, i32, i32, i32
  }
  func.func @transform_2(%arg0: i32) -> (i32, i32) {
    %c0_i32 = arith.constant 0 : i32
    %c0_i32_0 = arith.constant 0 : i32
    %c0_i32_1 = arith.constant 0 : i32
    return %c0_i32, %c0_i32_0 : i32, i32
  }
  func.func @transform_3(%arg0: i32) -> (i32, i32, i32, i32) {
    %c0_i32 = arith.constant 0 : i32
    %c0_i32_0 = arith.constant 0 : i32
    %c0_i32_1 = arith.constant 0 : i32
    %c0_i32_2 = arith.constant 0 : i32
    return %arg0, %c0_i32, %c0_i32_0, %c0_i32_1 : i32, i32, i32, i32
  }
}

</mosaic_0001>

<llo_original>
// kernel: conv_transpose3d_pallas.1
$region0: #{conv_transpose3d_pallas.1}
  #allocation0 [shape = 'u32[]', space=smem, size = 0x4, offset = 0x4, fixed_abs, tag = 'smem constant byte address 0x4 - core index']
  #allocation1 [shape = 'u32[144,128]{1,0:T(1,128)}', space=vmem, size = 0x12000, scoped, tag = 'internal scratch']
  #allocation2 [shape = 'f32[10,12,224]{2,1,0:T(8,128)}', space=vmem, size = 0x28000, scoped, tag = 'scratch operand']
  %s0 = inlined_call_operand.vmem [shape: f32[2,6,8,224], index: 0, kind: input, shape index: {}]
  %s1 = inlined_call_operand.vmem [shape: f32[3,3,224,384], index: 1, kind: input, shape index: {}]
  %s2 = inlined_call_operand.vmem [shape: f32[1,384], index: 2, kind: input, shape index: {}]
  %s3 = inlined_call_operand.vmem [shape: f32[2,8,10,384], index: 3, kind: output, shape index: {}]
  %s4 = sld [smem:[#allocation0]]
  $region45: #{conv_transpose3d_pallas.1} parent=0
    _
  %s6 = ssub.s32 1, %s4
  %s7 = scalar_select 0, %s6, %s4
  loop: start=0, step=1, limit=4
  $region2: #{conv_transpose3d_pallas.1} parent=0 // loop_pre_header
    _
  $region3: #{conv_transpose3d_pallas.1} parent=0 // loop_header
    %s9 = sphi 0, %s13
    %p10 = scmp.ge.s32.totalorder %s9, 4
    %s19 = sphi 0, %s21
    %s22 = sphi 0, %s19
    %s23 = sphi 0, %s22
    %s39 = sphi 0, %s23
    %s43 = sphi 0, %s43
    %s45 = sphi 0, %s43
    %s46 = sphi 0, %s45
    %s60 = sphi 0, %s46
    %s64 = sphi 0, %s64
    %s66 = sphi 0, %s64
    %s67 = sphi 0, %s66
    %s81 = sphi 0, %s67
    %s87 = sphi 0, %s89
    %s90 = sphi 0, %s87
    %s91 = sphi 0, %s90
    %s107 = sphi 0, %s91
  $region4: #{conv_transpose3d_pallas.1} parent=0 // loop_header_branch
    %12 = sbr.rel (%p10) target = $region8
  $region5: #{conv_transpose3d_pallas.1} parent=0 // loop_body
    %s14 = ssub.s32 %s9, 1
    %s15 = ssub.s32 %s9, 2
    %s16 = sadd.s32 %s9, 1
    %s17 = ssub.s32 %s9, %s16
    %p18 = scmp.eq.s32.totalorder %s17, 0
    %s20 = sadd.s32 %s19, 1
    %s21 = scalar_select %p18, %s19, %s20
    %p24 = pneg %p18
    %p25 = scmp.eq.s32.totalorder %s9, 1
    %p26 = por %p24, %p25
    %p27 = scmp.ne.s32.totalorder %s19, %s22
    %p28 = scmp.eq.s32.totalorder %s9, 0
    %p29 = por %p27, %p28
    %p30 = scmp.ne.s32.totalorder %s19, %s22
    %p31 = scmp.eq.s32.totalorder %s14, 1
    %p32 = por %p30, %p31
    %p33 = scmp.ne.s32.totalorder %s22, %s23
    %p34 = scmp.eq.s32.totalorder %s14, 0
    %p35 = por %p33, %p34
    %p36 = scmp.ne.s32.totalorder %s22, %s23
    %p37 = scmp.eq.s32.totalorder %s15, 1
    %p38 = por %p36, %p37
    %p40 = scmp.ne.s32.totalorder %s23, %s39
    %p41 = scmp.eq.s32.totalorder %s15, 0
    %p42 = por %p40, %p41
    %s44 = sadd.s32 %s43, 1
    %p47 = scmp.eq.s32.totalorder %s9, 1
    %p48 = scmp.ne.s32.totalorder %s43, %s45
    %p49 = scmp.eq.s32.totalorder %s9, 0
    %p50 = por %p48, %p49
    %p51 = scmp.ne.s32.totalorder %s43, %s45
    %p52 = scmp.eq.s32.totalorder %s14, 1
    %p53 = por %p51, %p52
    %p54 = scmp.ne.s32.totalorder %s45, %s46
    %p55 = scmp.eq.s32.totalorder %s14, 0
    %p56 = por %p54, %p55
    %p57 = scmp.ne.s32.totalorder %s45, %s46
    %p58 = scmp.eq.s32.totalorder %s15, 1
    %p59 = por %p57, %p58
    %p61 = scmp.ne.s32.totalorder %s46, %s60
    %p62 = scmp.eq.s32.totalorder %s15, 0
    %p63 = por %p61, %p62
    %s65 = sadd.s32 %s64, 1
    %p68 = scmp.eq.s32.totalorder %s9, 1
    %p69 = scmp.ne.s32.totalorder %s64, %s66
    %p70 = scmp.eq.s32.totalorder %s9, 0
    %p71 = por %p69, %p70
    %p72 = scmp.ne.s32.totalorder %s64, %s66
    %p73 = scmp.eq.s32.totalorder %s14, 1
    %p74 = por %p72, %p73
    %p75 = scmp.ne.s32.totalorder %s66, %s67
    %p76 = scmp.eq.s32.totalorder %s14, 0
    %p77 = por %p75, %p76
    %p78 = scmp.ne.s32.totalorder %s66, %s67
    %p79 = scmp.eq.s32.totalorder %s15, 1
    %p80 = por %p78, %p79
    %p82 = scmp.ne.s32.totalorder %s67, %s81
    %p83 = scmp.eq.s32.totalorder %s15, 0
    %p84 = por %p82, %p83
    %s85 = ssub.s32 %s9, %s16
    %p86 = scmp.eq.s32.totalorder %s85, 0
    %s88 = sadd.s32 %s87, 1
    %s89 = scalar_select %p86, %s87, %s88
    %p92 = pneg %p86
    %p93 = scmp.eq.s32.totalorder %s9, 1
    %p94 = por %p92, %p93
    %p95 = scmp.ne.s32.totalorder %s87, %s90
    %p96 = scmp.eq.s32.totalorder %s9, 0
    %p97 = por %p95, %p96
    %p98 = scmp.ne.s32.totalorder %s87, %s90
    %p99 = scmp.eq.s32.totalorder %s14, 1
    %p100 = por %p98, %p99
    %p101 = scmp.ne.s32.totalorder %s90, %s91
    %p102 = scmp.eq.s32.totalorder %s14, 0
    %p103 = por %p101, %p102
    %p104 = scmp.ne.s32.totalorder %s90, %s91
    %p105 = scmp.eq.s32.totalorder %s15, 1
    %p106 = por %p104, %p105
    %p108 = scmp.ne.s32.totalorder %s91, %s107
    %p109 = scmp.eq.s32.totalorder %s15, 0
    %p110 = por %p108, %p109
    %p111 = scmp.le.s32.totalorder 1, %s9
    %p112 = scmp.lt.s32.totalorder %s9, 3
    %p113 = pnand %p111, %p112
    %p114 = pneg %p113
    // Predicated region
    $region9: #{conv_transpose3d_pallas.1} parent=5 // pred_check
      _
    $region10: #{conv_transpose3d_pallas.1} parent=5 // pred_check_branch
      %116 = sbr.rel (%p113) target = $region12
    $region11: #{conv_transpose3d_pallas.1} parent=5 // pred_region
      %s117 = ssub.s32 %s9, 1
      // Predicated region
      $region13: #{conv_transpose3d_pallas.1} parent=11 // pred_check
        %p118 = pneg %p56
      $region14: #{conv_transpose3d_pallas.1} parent=11 // pred_check_branch
        %120 = sbr.rel (%p118) target = $region16
      $region15: #{conv_transpose3d_pallas.1} parent=11 // pred_region
        _
      $region16: #{conv_transpose3d_pallas.1} parent=11 // pred_fallthru
        _
      // Predicated region
      $region17: #{conv_transpose3d_pallas.1} parent=11 // pred_check
        %p121 = pneg %p77
      $region18: #{conv_transpose3d_pallas.1} parent=11 // pred_check_branch
        %123 = sbr.rel (%p121) target = $region20
      $region19: #{conv_transpose3d_pallas.1} parent=11 // pred_region
        _
      $region20: #{conv_transpose3d_pallas.1} parent=11 // pred_fallthru
        _
    $region12: #{conv_transpose3d_pallas.1} parent=5 // pred_fallthru
      _
    %p124 = scmp.lt.s32.totalorder %s9, 2
    // Predicated region
    $region21: #{conv_transpose3d_pallas.1} parent=5 // pred_check
      %p125 = pneg %p124
    $region22: #{conv_transpose3d_pallas.1} parent=5 // pred_check_branch
      %127 = sbr.rel (%p125) target = $region24
    $region23: #{conv_transpose3d_pallas.1} parent=5 // pred_region
      // Predicated region
      $region25: #{conv_transpose3d_pallas.1} parent=23 // pred_check
        %p128 = pneg %p29
      $region26: #{conv_transpose3d_pallas.1} parent=23 // pred_check_branch
        %130 = sbr.rel (%p128) target = $region28
      $region27: #{conv_transpose3d_pallas.1} parent=23 // pred_region
        %p131 = scmp.lt.s32.totalorder %s9, 1
        %s132 = scalar_select %p131, %s9, 1
        %s133 = smul.addr %s132, 12
        %s134 = smul.addr %s133, 8
        %s135 = scalar_lea.vmem %s0, %s134
      $region28: #{conv_transpose3d_pallas.1} parent=23 // pred_fallthru
        _
    $region24: #{conv_transpose3d_pallas.1} parent=5 // pred_fallthru
      _
    %p136 = scmp.le.s32.totalorder 1, %s9
    %p137 = scmp.lt.s32.totalorder %s9, 3
    %p138 = pnand %p136, %p137
    %p139 = pneg %p138
    // Predicated region
    $region29: #{conv_transpose3d_pallas.1} parent=5 // pred_check
      _
    $region30: #{conv_transpose3d_pallas.1} parent=5 // pred_check_branch
      %141 = sbr.rel (%p138) target = $region32
    $region31: #{conv_transpose3d_pallas.1} parent=5 // pred_region
      %s142 = ssub.s32 %s9, 1
      %p143 = scmp.lt.s32.totalorder %s14, 1
      %s144 = scalar_select %p143, %s14, 1
      %s145 = smul.addr %s144, 12
      %s146 = smul.addr %s145, 8
      %s147 = scalar_lea.vmem %s0, %s146
      %p148 = pneg %p35
      %p149 = pneg %p32
      %p150 = pneg %p56
      %p151 = pneg %p53
      %p152 = pneg %p77
      %p153 = pneg %p74
      %p154 = pneg %p103
      %p155 = pneg %p100
      %p156 = scmp.lt.s32.totalorder %s14, 1
      %s157 = scalar_select %p156, %s14, 1
      %s158 = smul.addr %s157, 48
      %s159 = smul.addr %s158, 8
      %s160 = scalar_lea.vmem %s3, %s159
      %p161 = scmp.lt.s32.totalorder %s14, 1
      %s162 = scalar_select %p161, %s14, 1
      %s163 = smul.addr %s162, 12
      %s164 = smul.addr %s163, 8
      %s165 = scalar_lea.vmem %s0, %s164
      %p166 = scmp.lt.s32.totalorder %s14, 1
      %s167 = scalar_select %p166, %s14, 1
      %s168 = smul.addr %s167, 48
      %s169 = smul.addr %s168, 8
      %s170 = scalar_lea.vmem %s3, %s169
      %171 = vst [vmem:[#allocation2] sm:$0xff] 0.0
      %vm172 = vcmask 785408
      %173 = vst.msk [vmem:[#allocation2 + $0x8] sm:$0xff] %vm172, 0.0
      %174 = vst [vmem:[#allocation2 + $0x10] sm:$0xf] 0.0
      %vm175 = vcmask 781312
      %176 = vst.msk [vmem:[#allocation2 + $0x18] sm:$0xf] %vm175, 0.0
      %177 = vst [vmem:[#allocation2 + $0x20] sm:$0xff] 0.0
      %178 = vst.msk [vmem:[#allocation2 + $0x28] sm:$0xff] %vm172, 0.0
      %179 = vst [vmem:[#allocation2 + $0x30] sm:$0xf] 0.0
      %180 = vst.msk [vmem:[#allocation2 + $0x38] sm:$0xf] %vm175, 0.0
      %181 = vst [vmem:[#allocation2 + $0x40] sm:$0xff] 0.0
      %182 = vst.msk [vmem:[#allocation2 + $0x48] sm:$0xff] %vm172, 0.0
      %183 = vst [vmem:[#allocation2 + $0x50] sm:$0xf] 0.0
      %184 = vst.msk [vmem:[#allocation2 + $0x58] sm:$0xf] %vm175, 0.0
      %185 = vst [vmem:[#allocation2 + $0x60] sm:$0xff] 0.0
      %186 = vst.msk [vmem:[#allocation2 + $0x68] sm:$0xff] %vm172, 0.0
      %187 = vst [vmem:[#allocation2 + $0x70] sm:$0xf] 0.0
      %188 = vst.msk [vmem:[#allocation2 + $0x78] sm:$0xf] %vm175, 0.0
      %189 = vst [vmem:[#allocation2 + $0x80] sm:$0xff] 0.0
      %190 = vst.msk [vmem:[#allocation2 + $0x88] sm:$0xff] %vm172, 0.0
      %191 = vst [vmem:[#allocation2 + $0x90] sm:$0xf] 0.0
      %192 = vst.msk [vmem:[#allocation2 + $0x98] sm:$0xf] %vm175, 0.0
      %193 = vst [vmem:[#allocation2 + $0xa0] sm:$0xff] 0.0
      %194 = vst.msk [vmem:[#allocation2 + $0xa8] sm:$0xff] %vm172, 0.0
      %195 = vst [vmem:[#allocation2 + $0xb0] sm:$0xf] 0.0
      %196 = vst.msk [vmem:[#allocation2 + $0xb8] sm:$0xf] %vm175, 0.0
      %197 = vst [vmem:[#allocation2 + $0xc0] sm:$0xff] 0.0
      %198 = vst.msk [vmem:[#allocation2 + $0xc8] sm:$0xff] %vm172, 0.0
      %199 = vst [vmem:[#allocation2 + $0xd0] sm:$0xf] 0.0
      %200 = vst.msk [vmem:[#allocation2 + $0xd8] sm:$0xf] %vm175, 0.0
      %201 = vst [vmem:[#allocation2 + $0xe0] sm:$0xff] 0.0
      %202 = vst.msk [vmem:[#allocation2 + $0xe8] sm:$0xff] %vm172, 0.0
      %203 = vst [vmem:[#allocation2 + $0xf0] sm:$0xf] 0.0
      %204 = vst.msk [vmem:[#allocation2 + $0xf8] sm:$0xf] %vm175, 0.0
      %205 = vst [vmem:[#allocation2 + $0x100] sm:$0xff] 0.0
      %206 = vst.msk [vmem:[#allocation2 + $0x108] sm:$0xff] %vm172, 0.0
      %207 = vst [vmem:[#allocation2 + $0x110] sm:$0xf] 0.0
      %208 = vst.msk [vmem:[#allocation2 + $0x118] sm:$0xf] %vm175, 0.0
      %209 = vst [vmem:[#allocation2 + $0x120] sm:$0xff] 0.0
      %210 = vst.msk [vmem:[#allocation2 + $0x128] sm:$0xff] %vm172, 0.0
      %211 = vst [vmem:[#allocation2 + $0x130] sm:$0xf] 0.0
      %212 = vst.msk [vmem:[#allocation2 + $0x138] sm:$0xf] %vm175, 0.0
      %v213 = vld [vmem:[%s165] sm:$0xff]
      %v214 = vld [vmem:[%s165 + $0x8] sm:$0xff]
      %v215 = vld [vmem:[%s165 + $0x10] sm:$0xff]
      %v216 = vld [vmem:[%s165 + $0x18] sm:$0xff]
      %v217 = vld [vmem:[%s165 + $0x20] sm:$0xff]
      %v218 = vld [vmem:[%s165 + $0x28] sm:$0xff]
      %v219 = vld [vmem:[%s165 + $0x30] sm:$0xff]
      %v220 = vld [vmem:[%s165 + $0x38] sm:$0xff]
      %v221 = vld [vmem:[%s165 + $0x40] sm:$0xff]
      %v222 = vld [vmem:[%s165 + $0x48] sm:$0xff]
      %v223 = vld [vmem:[%s165 + $0x50] sm:$0xff]
      %v224 = vld [vmem:[%s165 + $0x58] sm:$0xff]
      %v237 = vrot.slane %v213, 6
      %v238 = vrot.slane %v214, 6
      %v239 = vrot.slane %v215, 6
      %v240 = vrot.slane %v216, 6
      %v241 = vrot.slane %v217, 6
      %v242 = vrot.slane %v218, 6
      %v243 = vrot.slane %v219, 6
      %v244 = vrot.slane %v220, 6
      %v245 = vrot.slane %v221, 6
      %v246 = vrot.slane %v222, 6
      %v247 = vrot.slane %v223, 6
      %v248 = vrot.slane %v224, 6
      %s261 = scalar_lea.vmem [#allocation2], 64
      %262 = vst [vmem:[%s261] sm:$0xfc] %v237
      %vm263 = vcmask 785410
      %264 = vst.msk [vmem:[%s261 + $0x8] sm:$0xfc] %vm263, %v238
      %265 = vst [vmem:[%s261 + $0x10] sm:$0x3] %v237
      %vm266 = vcmask 779264
      %267 = vst.msk [vmem:[%s261 + $0x18] sm:$0x3] %vm266, %v238
      %268 = vst [vmem:[%s261 + $0x20] sm:$0xfc] %v239
      %269 = vst.msk [vmem:[%s261 + $0x28] sm:$0xfc] %vm263, %v240
      %270 = vst [vmem:[%s261 + $0x30] sm:$0x3] %v239
      %271 = vst.msk [vmem:[%s261 + $0x38] sm:$0x3] %vm266, %v240
      %272 = vst [vmem:[%s261 + $0x40] sm:$0xfc] %v241
      %273 = vst.msk [vmem:[%s261 + $0x48] sm:$0xfc] %vm263, %v242
      %274 = vst [vmem:[%s261 + $0x50] sm:$0x3] %v241
      %275 = vst.msk [vmem:[%s261 + $0x58] sm:$0x3] %vm266, %v242
      %276 = vst [vmem:[%s261 + $0x60] sm:$0xfc] %v243
      %277 = vst.msk [vmem:[%s261 + $0x68] sm:$0xfc] %vm263, %v244
      %278 = vst [vmem:[%s261 + $0x70] sm:$0x3] %v243
      %279 = vst.msk [vmem:[%s261 + $0x78] sm:$0x3] %vm266, %v244
      %280 = vst [vmem:[%s261 + $0x80] sm:$0xfc] %v245
      %281 = vst.msk [vmem:[%s261 + $0x88] sm:$0xfc] %vm263, %v246
      %282 = vst [vmem:[%s261 + $0x90] sm:$0x3] %v245
      %283 = vst.msk [vmem:[%s261 + $0x98] sm:$0x3] %vm266, %v246
      %284 = vst [vmem:[%s261 + $0xa0] sm:$0xfc] %v247
      %285 = vst.msk [vmem:[%s261 + $0xa8] sm:$0xfc] %vm263, %v248
      %286 = vst [vmem:[%s261 + $0xb0] sm:$0x3] %v247
      %287 = vst.msk [vmem:[%s261 + $0xb8] sm:$0x3] %vm266, %v248
      %v288 = vld [vmem:[#allocation2] sm:$0xff]
      %v289 = vld [vmem:[#allocation2 + $0x8] sm:$0xff]
      %v290 = vld [vmem:[#allocation2 + $0x10] sm:$0x3]
      %v291 = vld [vmem:[#allocation2 + $0x18] sm:$0x3]
      %v292 = vld [vmem:[#allocation2 + $0x20] sm:$0xff]
      %v293 = vld [vmem:[#allocation2 + $0x28] sm:$0xff]
      %v294 = vld [vmem:[#allocation2 + $0x30] sm:$0x3]
      %v295 = vld [vmem:[#allocation2 + $0x38] sm:$0x3]
      %v296 = vld [vmem:[#allocation2 + $0x40] sm:$0xff]
      %v297 = vld [vmem:[#allocation2 + $0x48] sm:$0xff]
      %v298 = vld [vmem:[#allocation2 + $0x50] sm:$0x3]
      %v299 = vld [vmem:[#allocation2 + $0x58] sm:$0x3]
      %v300 = vld [vmem:[#allocation2 + $0x60] sm:$0xff]
      %v301 = vld [vmem:[#allocation2 + $0x68] sm:$0xff]
      %v302 = vld [vmem:[#allocation2 + $0x70] sm:$0x3]
      %v303 = vld [vmem:[#allocation2 + $0x78] sm:$0x3]
      %v304 = vld [vmem:[#allocation2 + $0x80] sm:$0xff]
      %v305 = vld [vmem:[#allocation2 + $0x88] sm:$0xff]
      %v306 = vld [vmem:[#allocation2 + $0x90] sm:$0x3]
      %v307 = vld [vmem:[#allocation2 + $0x98] sm:$0x3]
      %v308 = vld [vmem:[#allocation2 + $0xa0] sm:$0xff]
      %v309 = vld [vmem:[#allocation2 + $0xa8] sm:$0xff]
      %v310 = vld [vmem:[#allocation2 + $0xb0] sm:$0x3]
      %v311 = vld [vmem:[#allocation2 + $0xb8] sm:$0x3]
      %v312 = vld [vmem:[#allocation2 + $0xc0] sm:$0xff]
      %v313 = vld [vmem:[#allocation2 + $0xc8] sm:$0xff]
      %v314 = vld [vmem:[#allocation2 + $0xd0] sm:$0x3]
      %v315 = vld [vmem:[#allocation2 + $0xd8] sm:$0x3]
      %v316 = vld [vmem:[#allocation2 + $0xe0] sm:$0xff]
      %v317 = vld [vmem:[#allocation2 + $0xe8] sm:$0xff]
      %v318 = vld [vmem:[#allocation2 + $0xf0] sm:$0x3]
      %v319 = vld [vmem:[#allocation2 + $0xf8] sm:$0x3]
      %v352 = vcombine.low %v288, %v289
      %v353 = vcombine.high %v288, %v289
      %v355 = vunpack.c.l.s4 1983009808
      %v356 = vunpack.c.0.s8 %v355
      %v357 = vlaneseq
      %v358 = vshrl.u32 %v357, 7
      %v359 = vsub.s32 %v356, %v358
      %v360 = vrot.slane %v352, %v359
      %v362 = vunpack.c.l.s4 1983009808
      %v363 = vunpack.c.0.s8 %v362
      %v364 = vlaneseq
      %v365 = vshrl.u32 %v364, 7
      %v366 = vsub.s32 %v363, %v365
      %v367 = vrot.slane %v353, %v366
      %v368 = vcombine.high %v360, %v360
      %v369 = vcombine.high %v367, %v367
      %v370 = vcombine.low %v290, %v291
      %v372 = vunpack.c.l.s4 1983009808
      %v373 = vunpack.c.0.s8 %v372
      %v374 = vlaneseq
      %v375 = vshrl.u32 %v374, 7
      %v376 = vsub.s32 %v373, %v375
      %v377 = vrot.slane %v370, %v376
      %v378 = vcombine.low %v292, %v293
      %v379 = vcombine.high %v292, %v293
      %v381 = vunpack.c.l.s4 1983009808
      %v382 = vunpack.c.0.s8 %v381
      %v383 = vlaneseq
      %v384 = vshrl.u32 %v383, 7
      %v385 = vsub.s32 %v382, %v384
      %v386 = vrot.slane %v378, %v385
      %v388 = vunpack.c.l.s4 1983009808
      %v389 = vunpack.c.0.s8 %v388
      %v390 = vlaneseq
      %v391 = vshrl.u32 %v390, 7
      %v392 = vsub.s32 %v389, %v391
      %v393 = vrot.slane %v379, %v392
      %v394 = vcombine.high %v386, %v386
      %v395 = vcombine.high %v393, %v393
      %v396 = vcombine.low %v294, %v295
      %v398 = vunpack.c.l.s4 1983009808
      %v399 = vunpack.c.0.s8 %v398
      %v400 = vlaneseq
      %v401 = vshrl.u32 %v400, 7
      %v402 = vsub.s32 %v399, %v401
      %v403 = vrot.slane %v396, %v402
      %v404 = vcombine.low %v296, %v297
      %v405 = vcombine.high %v296, %v297
      %v407 = vunpack.c.l.s4 1983009808
      %v408 = vunpack.c.0.s8 %v407
      %v409 = vlaneseq
      %v410 = vshrl.u32 %v409, 7
      %v411 = vsub.s32 %v408, %v410
      %v412 = vrot.slane %v404, %v411
      %v414 = vunpack.c.l.s4 1983009808
      %v415 = vunpack.c.0.s8 %v414
      %v416 = vlaneseq
      %v417 = vshrl.u32 %v416, 7
      %v418 = vsub.s32 %v415, %v417
      %v419 = vrot.slane %v405, %v418
      %v420 = vcombine.high %v412, %v412
      %v421 = vcombine.high %v419, %v419
      %v422 = vcombine.low %v298, %v299
      %v424 = vunpack.c.l.s4 1983009808
      %v425 = vunpack.c.0.s8 %v424
      %v426 = vlaneseq
      %v427 = vshrl.u32 %v426, 7
      %v428 = vsub.s32 %v425, %v427
      %v429 = vrot.slane %v422, %v428
      %v430 = vcombine.low %v300, %v301
      %v431 = vcombine.high %v300, %v301
      %v433 = vunpack.c.l.s4 1983009808
      %v434 = vunpack.c.0.s8 %v433
      %v435 = vlaneseq
      %v436 = vshrl.u32 %v435, 7
      %v437 = vsub.s32 %v434, %v436
      %v438 = vrot.slane %v430, %v437
      %v440 = vunpack.c.l.s4 1983009808
      %v441 = vunpack.c.0.s8 %v440
      %v442 = vlaneseq
      %v443 = vshrl.u32 %v442, 7
      %v444 = vsub.s32 %v441, %v443
      %v445 = vrot.slane %v431, %v444
      %v446 = vcombine.high %v438, %v438
      %v447 = vcombine.high %v445, %v445
      %v448 = vcombine.low %v302, %v303
      %v450 = vunpack.c.l.s4 1983009808
      %v451 = vunpack.c.0.s8 %v450
      %v452 = vlaneseq
      %v453 = vshrl.u32 %v452, 7
      %v454 = vsub.s32 %v451, %v453
      %v455 = vrot.slane %v448, %v454
      %v456 = vcombine.low %v304, %v305
      %v457 = vcombine.high %v304, %v305
      %v459 = vunpack.c.l.s4 1983009808
      %v460 = vunpack.c.0.s8 %v459
      %v461 = vlaneseq
      %v462 = vshrl.u32 %v461, 7
      %v463 = vsub.s32 %v460, %v462
      %v464 = vrot.slane %v456, %v463
      %v466 = vunpack.c.l.s4 1983009808
      %v467 = vunpack.c.0.s8 %v466
      %v468 = vlaneseq
      %v469 = vshrl.u32 %v468, 7
      %v470 = vsub.s32 %v467, %v469
      %v471 = vrot.slane %v457, %v470
      %v472 = vcombine.high %v464, %v464
      %v473 = vcombine.high %v471, %v471
      %v474 = vcombine.low %v306, %v307
      %v476 = vunpack.c.l.s4 1983009808
      %v477 = vunpack.c.0.s8 %v476
      %v478 = vlaneseq
      %v479 = vshrl.u32 %v478, 7
      %v480 = vsub.s32 %v477, %v479
      %v481 = vrot.slane %v474, %v480
      %v482 = vcombine.low %v308, %v309
      %v483 = vcombine.high %v308, %v309
      %v485 = vunpack.c.l.s4 1983009808
      %v486 = vunpack.c.0.s8 %v485
      %v487 = vlaneseq
      %v488 = vshrl.u32 %v487, 7
      %v489 = vsub.s32 %v486, %v488
      %v490 = vrot.slane %v482, %v489
      %v492 = vunpack.c.l.s4 1983009808
      %v493 = vunpack.c.0.s8 %v492
      %v494 = vlaneseq
      %v495 = vshrl.u32 %v494, 7
      %v496 = vsub.s32 %v493, %v495
      %v497 = vrot.slane %v483, %v496
      %v498 = vcombine.high %v490, %v490
      %v499 = vcombine.high %v497, %v497
      %v500 = vcombine.low %v310, %v311
      %v502 = vunpack.c.l.s4 1983009808
      %v503 = vunpack.c.0.s8 %v502
      %v504 = vlaneseq
      %v505 = vshrl.u32 %v504, 7
      %v506 = vsub.s32 %v503, %v505
      %v507 = vrot.slane %v500, %v506
      %v508 = vcombine.low %v312, %v313
      %v509 = vcombine.high %v312, %v313
      %v511 = vunpack.c.l.s4 1983009808
      %v512 = vunpack.c.0.s8 %v511
      %v513 = vlaneseq
      %v514 = vshrl.u32 %v513, 7
      %v515 = vsub.s32 %v512, %v514
      %v516 = vrot.slane %v508, %v515
      %v518 = vunpack.c.l.s4 1983009808
      %v519 = vunpack.c.0.s8 %v518
      %v520 = vlaneseq
      %v521 = vshrl.u32 %v520, 7
      %v522 = vsub.s32 %v519, %v521
      %v523 = vrot.slane %v509, %v522
      %v524 = vcombine.high %v516, %v516
      %v525 = vcombine.high %v523, %v523
      %v526 = vcombine.low %v314, %v315
      %v528 = vunpack.c.l.s4 1983009808
      %v529 = vunpack.c.0.s8 %v528
      %v530 = vlaneseq
      %v531 = vshrl.u32 %v530, 7
      %v532 = vsub.s32 %v529, %v531
      %v533 = vrot.slane %v526, %v532
      %v534 = vcombine.low %v316, %v317
      %v535 = vcombine.high %v316, %v317
      %v537 = vunpack.c.l.s4 1983009808
      %v538 = vunpack.c.0.s8 %v537
      %v539 = vlaneseq
      %v540 = vshrl.u32 %v539, 7
      %v541 = vsub.s32 %v538, %v540
      %v542 = vrot.slane %v534, %v541
      %v544 = vunpack.c.l.s4 1983009808
      %v545 = vunpack.c.0.s8 %v544
      %v546 = vlaneseq
      %v547 = vshrl.u32 %v546, 7
      %v548 = vsub.s32 %v545, %v547
      %v549 = vrot.slane %v535, %v548
      %v550 = vcombine.high %v542, %v542
      %v551 = vcombine.high %v549, %v549
      %v552 = vcombine.low %v318, %v319
      %v554 = vunpack.c.l.s4 1983009808
      %v555 = vunpack.c.0.s8 %v554
      %v556 = vlaneseq
      %v557 = vshrl.u32 %v556, 7
      %v558 = vsub.s32 %v555, %v557
      %v559 = vrot.slane %v552, %v558
      %v560 = vld [vmem:[%s1] sm:$0xff]
      %v561 = vld [vmem:[%s1 + $0x8] sm:$0xff]
      %v562 = vld [vmem:[%s1 + $0x10] sm:$0xff]
      %v563 = vld [vmem:[%s1 + $0x18] sm:$0xff]
      %v564 = vld [vmem:[%s1 + $0x20] sm:$0xff]
      %v565 = vld [vmem:[%s1 + $0x28] sm:$0xff]
      %v566 = vld [vmem:[%s1 + $0x30] sm:$0xff]
      %v567 = vld [vmem:[%s1 + $0x38] sm:$0xff]
      %v568 = vld [vmem:[%s1 + $0x40] sm:$0xff]
      %v569 = vld [vmem:[%s1 + $0x48] sm:$0xff]
      %v570 = vld [vmem:[%s1 + $0x50] sm:$0xff]
      %v571 = vld [vmem:[%s1 + $0x58] sm:$0xff]
      %v572 = vld [vmem:[%s1 + $0x60] sm:$0xff]
      %v573 = vld [vmem:[%s1 + $0x68] sm:$0xff]
      %v574 = vld [vmem:[%s1 + $0x70] sm:$0xff]
      %v575 = vld [vmem:[%s1 + $0x78] sm:$0xff]
      %v576 = vld [vmem:[%s1 + $0x80] sm:$0xff]
      %v577 = vld [vmem:[%s1 + $0x88] sm:$0xff]
      %v578 = vld [vmem:[%s1 + $0x90] sm:$0xff]
      %v579 = vld [vmem:[%s1 + $0x98] sm:$0xff]
      %v580 = vld [vmem:[%s1 + $0xa0] sm:$0xff]
      %v581 = vld [vmem:[%s1 + $0xa8] sm:$0xff]
      %v582 = vld [vmem:[%s1 + $0xb0] sm:$0xff]
      %v583 = vld [vmem:[%s1 + $0xb8] sm:$0xff]
      %v584 = vld [vmem:[%s1 + $0xc0] sm:$0xff]
      %v585 = vld [vmem:[%s1 + $0xc8] sm:$0xff]
      %v586 = vld [vmem:[%s1 + $0xd0] sm:$0xff]
      %v587 = vld [vmem:[%s1 + $0xd8] sm:$0xff]
      %v588 = vld [vmem:[%s1 + $0xe0] sm:$0xff]
      %v589 = vld [vmem:[%s1 + $0xe8] sm:$0xff]
      %v590 = vld [vmem:[%s1 + $0xf0] sm:$0xff]
      %v591 = vld [vmem:[%s1 + $0xf8] sm:$0xff]
      %v592 = vld [vmem:[%s1 + $0x100] sm:$0xff]
      %v593 = vld [vmem:[%s1 + $0x108] sm:$0xff]
      %v594 = vld [vmem:[%s1 + $0x110] sm:$0xff]
      %v595 = vld [vmem:[%s1 + $0x118] sm:$0xff]
      %v596 = vld [vmem:[%s1 + $0x120] sm:$0xff]
      %v597 = vld [vmem:[%s1 + $0x128] sm:$0xff]
      %v598 = vld [vmem:[%s1 + $0x130] sm:$0xff]
      %v599 = vld [vmem:[%s1 + $0x138] sm:$0xff]
      %v600 = vld [vmem:[%s1 + $0x140] sm:$0xff]
      %v601 = vld [vmem:[%s1 + $0x148] sm:$0xff]
      %v602 = vld [vmem:[%s1 + $0x150] sm:$0xff]
      %v603 = vld [vmem:[%s1 + $0x158] sm:$0xff]
      %v604 = vld [vmem:[%s1 + $0x160] sm:$0xff]
      %v605 = vld [vmem:[%s1 + $0x168] sm:$0xff]
      %v606 = vld [vmem:[%s1 + $0x170] sm:$0xff]
      %v607 = vld [vmem:[%s1 + $0x178] sm:$0xff]
      %v608 = vld [vmem:[%s1 + $0x180] sm:$0xff]
      %v609 = vld [vmem:[%s1 + $0x188] sm:$0xff]
      %v610 = vld [vmem:[%s1 + $0x190] sm:$0xff]
      %v611 = vld [vmem:[%s1 + $0x198] sm:$0xff]
      %v612 = vld [vmem:[%s1 + $0x1a0] sm:$0xff]
      %v613 = vld [vmem:[%s1 + $0x1a8] sm:$0xff]
      %v614 = vld [vmem:[%s1 + $0x1b0] sm:$0xff]
      %v615 = vld [vmem:[%s1 + $0x1b8] sm:$0xff]
      %v616 = vld [vmem:[%s1 + $0x1c0] sm:$0xff]
      %v617 = vld [vmem:[%s1 + $0x1c8] sm:$0xff]
      %v618 = vld [vmem:[%s1 + $0x1d0] sm:$0xff]
      %v619 = vld [vmem:[%s1 + $0x1d8] sm:$0xff]
      %v620 = vld [vmem:[%s1 + $0x1e0] sm:$0xff]
      %v621 = vld [vmem:[%s1 + $0x1e8] sm:$0xff]
      %v622 = vld [vmem:[%s1 + $0x1f0] sm:$0xff]
      %v623 = vld [vmem:[%s1 + $0x1f8] sm:$0xff]
      %v624 = vld [vmem:[%s1 + $0x200] sm:$0xff]
      %v625 = vld [vmem:[%s1 + $0x208] sm:$0xff]
      %v626 = vld [vmem:[%s1 + $0x210] sm:$0xff]
      %v627 = vld [vmem:[%s1 + $0x218] sm:$0xff]
      %v628 = vld [vmem:[%s1 + $0x220] sm:$0xff]
      %v629 = vld [vmem:[%s1 + $0x228] sm:$0xff]
      %v630 = vld [vmem:[%s1 + $0x230] sm:$0xff]
      %v631 = vld [vmem:[%s1 + $0x238] sm:$0xff]
      %v632 = vld [vmem:[%s1 + $0x240] sm:$0xff]
      %v633 = vld [vmem:[%s1 + $0x248] sm:$0xff]
      %v634 = vld [vmem:[%s1 + $0x250] sm:$0xff]
      %v635 = vld [vmem:[%s1 + $0x258] sm:$0xff]
      %v636 = vld [vmem:[%s1 + $0x260] sm:$0xff]
      %v637 = vld [vmem:[%s1 + $0x268] sm:$0xff]
      %v638 = vld [vmem:[%s1 + $0x270] sm:$0xff]
      %v639 = vld [vmem:[%s1 + $0x278] sm:$0xff]
      %v640 = vld [vmem:[%s1 + $0x280] sm:$0xff]
      %v641 = vld [vmem:[%s1 + $0x288] sm:$0xff]
      %v642 = vld [vmem:[%s1 + $0x290] sm:$0xff]
      %v643 = vld [vmem:[%s1 + $0x298] sm:$0xff]
      %v644 = vld [vmem:[#allocation2] sm:$0xfe]
      %v645 = vld [vmem:[#allocation2 + $0x8] sm:$0xfe]
      %v646 = vld [vmem:[#allocation2 + $0x10] sm:$0x7]
      %v647 = vld [vmem:[#allocation2 + $0x18] sm:$0x7]
      %v648 = vld [vmem:[#allocation2 + $0x20] sm:$0xfe]
      %v649 = vld [vmem:[#allocation2 + $0x28] sm:$0xfe]
      %v650 = vld [vmem:[#allocation2 + $0x30] sm:$0x7]
      %v651 = vld [vmem:[#allocation2 + $0x38] sm:$0x7]
      %v652 = vld [vmem:[#allocation2 + $0x40] sm:$0xfe]
      %v653 = vld [vmem:[#allocation2 + $0x48] sm:$0xfe]
      %v654 = vld [vmem:[#allocation2 + $0x50] sm:$0x7]
      %v655 = vld [vmem:[#allocation2 + $0x58] sm:$0x7]
      %v656 = vld [vmem:[#allocation2 + $0x60] sm:$0xfe]
      %v657 = vld [vmem:[#allocation2 + $0x68] sm:$0xfe]
      %v658 = vld [vmem:[#allocation2 + $0x70] sm:$0x7]
      %v659 = vld [vmem:[#allocation2 + $0x78] sm:$0x7]
      %v660 = vld [vmem:[#allocation2 + $0x80] sm:$0xfe]
      %v661 = vld [vmem:[#allocation2 + $0x88] sm:$0xfe]
      %v662 = vld [vmem:[#allocation2 + $0x90] sm:$0x7]
      %v663 = vld [vmem:[#allocation2 + $0x98] sm:$0x7]
      %v664 = vld [vmem:[#allocation2 + $0xa0] sm:$0xfe]
      %v665 = vld [vmem:[#allocation2 + $0xa8] sm:$0xfe]
      %v666 = vld [vmem:[#allocation2 + $0xb0] sm:$0x7]
      %v667 = vld [vmem:[#allocation2 + $0xb8] sm:$0x7]
      %v668 = vld [vmem:[#allocation2 + $0xc0] sm:$0xfe]
      %v669 = vld [vmem:[#allocation2 + $0xc8] sm:$0xfe]
      %v670 = vld [vmem:[#allocation2 + $0xd0] sm:$0x7]
      %v671 = vld [vmem:[#allocation2 + $0xd8] sm:$0x7]
      %v672 = vld [vmem:[#allocation2 + $0xe0] sm:$0xfe]
      %v673 = vld [vmem:[#allocation2 + $0xe8] sm:$0xfe]
      %v674 = vld [vmem:[#allocation2 + $0xf0] sm:$0x7]
      %v675 = vld [vmem:[#allocation2 + $0xf8] sm:$0x7]
      %v708 = vcombine.low %v644, %v645
      %v709 = vcombine.high %v644, %v645
      %v711 = vunpack.c.l.s4 1983009808
      %v712 = vunpack.c.0.s8 %v711
      %v713 = vlaneseq
      %v714 = vshrl.u32 %v713, 7
      %v715 = vsub.s32 %v712, %v714
      %v716 = vrot.slane %v708, %v715
      %v718 = vunpack.c.l.s4 1983009808
      %v719 = vunpack.c.0.s8 %v718
      %v720 = vlaneseq
      %v721 = vshrl.u32 %v720, 7
      %v722 = vsub.s32 %v719, %v721
      %v723 = vrot.slane %v709, %v722
      %v724 = vcombine.high %v716, %v716
      %v725 = vcombine.high %v723, %v723
      %v726 = vcombine.low %v646, %v647
      %v728 = vunpack.c.l.s4 1983009808
      %v729 = vunpack.c.0.s8 %v728
      %v730 = vlaneseq
      %v731 = vshrl.u32 %v730, 7
      %v732 = vsub.s32 %v729, %v731
      %v733 = vrot.slane %v726, %v732
      %v734 = vcombine.high %v733, %v733
      %v735 = vcombine.low %v648, %v649
      %v736 = vcombine.high %v648, %v649
      %v738 = vunpack.c.l.s4 1983009808
      %v739 = vunpack.c.0.s8 %v738
      %v740 = vlaneseq
      %v741 = vshrl.u32 %v740, 7
      %v742 = vsub.s32 %v739, %v741
      %v743 = vrot.slane %v735, %v742
      %v745 = vunpack.c.l.s4 1983009808
      %v746 = vunpack.c.0.s8 %v745
      %v747 = vlaneseq
      %v748 = vshrl.u32 %v747, 7
      %v749 = vsub.s32 %v746, %v748
      %v750 = vrot.slane %v736, %v749
      %v751 = vcombine.high %v743, %v743
      %v752 = vcombine.high %v750, %v750
      %v753 = vcombine.low %v650, %v651
      %v755 = vunpack.c.l.s4 1983009808
      %v756 = vunpack.c.0.s8 %v755
      %v757 = vlaneseq
      %v758 = vshrl.u32 %v757, 7
      %v759 = vsub.s32 %v756, %v758
      %v760 = vrot.slane %v753, %v759
      %v761 = vcombine.high %v760, %v760
      %v762 = vcombine.low %v652, %v653
      %v763 = vcombine.high %v652, %v653
      %v765 = vunpack.c.l.s4 1983009808
      %v766 = vunpack.c.0.s8 %v765
      %v767 = vlaneseq
      %v768 = vshrl.u32 %v767, 7
      %v769 = vsub.s32 %v766, %v768
      %v770 = vrot.slane %v762, %v769
      %v772 = vunpack.c.l.s4 1983009808
      %v773 = vunpack.c.0.s8 %v772
      %v774 = vlaneseq
      %v775 = vshrl.u32 %v774, 7
      %v776 = vsub.s32 %v773, %v775
      %v777 = vrot.slane %v763, %v776
      %v778 = vcombine.high %v770, %v770
      %v779 = vcombine.high %v777, %v777
      %v780 = vcombine.low %v654, %v655
      %v782 = vunpack.c.l.s4 1983009808
      %v783 = vunpack.c.0.s8 %v782
      %v784 = vlaneseq
      %v785 = vshrl.u32 %v784, 7
      %v786 = vsub.s32 %v783, %v785
      %v787 = vrot.slane %v780, %v786
      %v788 = vcombine.high %v787, %v787
      %v789 = vcombine.low %v656, %v657
      %v790 = vcombine.high %v656, %v657
      %v792 = vunpack.c.l.s4 1983009808
      %v793 = vunpack.c.0.s8 %v792
      %v794 = vlaneseq
      %v795 = vshrl.u32 %v794, 7
      %v796 = vsub.s32 %v793, %v795
      %v797 = vrot.slane %v789, %v796
      %v799 = vunpack.c.l.s4 1983009808
      %v800 = vunpack.c.0.s8 %v799
      %v801 = vlaneseq
      %v802 = vshrl.u32 %v801, 7
      %v803 = vsub.s32 %v800, %v802
      %v804 = vrot.slane %v790, %v803
      %v805 = vcombine.high %v797, %v797
      %v806 = vcombine.high %v804, %v804
      %v807 = vcombine.low %v658, %v659
      %v809 = vunpack.c.l.s4 1983009808
      %v810 = vunpack.c.0.s8 %v809
      %v811 = vlaneseq
      %v812 = vshrl.u32 %v811, 7
      %v813 = vsub.s32 %v810, %v812
      %v814 = vrot.slane %v807, %v813
      %v815 = vcombine.high %v814, %v814
      %v816 = vcombine.low %v660, %v661
      %v817 = vcombine.high %v660, %v661
      %v819 = vunpack.c.l.s4 1983009808
      %v820 = vunpack.c.0.s8 %v819
      %v821 = vlaneseq
      %v822 = vshrl.u32 %v821, 7
      %v823 = vsub.s32 %v820, %v822
      %v824 = vrot.slane %v816, %v823
      %v826 = vunpack.c.l.s4 1983009808
      %v827 = vunpack.c.0.s8 %v826
      %v828 = vlaneseq
      %v829 = vshrl.u32 %v828, 7
      %v830 = vsub.s32 %v827, %v829
      %v831 = vrot.slane %v817, %v830
      %v832 = vcombine.high %v824, %v824
      %v833 = vcombine.high %v831, %v831
      %v834 = vcombine.low %v662, %v663
      %v836 = vunpack.c.l.s4 1983009808
      %v837 = vunpack.c.0.s8 %v836
      %v838 = vlaneseq
      %v839 = vshrl.u32 %v838, 7
      %v840 = vsub.s32 %v837, %v839
      %v841 = vrot.slane %v834, %v840
      %v842 = vcombine.high %v841, %v841
      %v843 = vcombine.low %v664, %v665
      %v844 = vcombine.high %v664, %v665
      %v846 = vunpack.c.l.s4 1983009808
      %v847 = vunpack.c.0.s8 %v846
      %v848 = vlaneseq
      %v849 = vshrl.u32 %v848, 7
      %v850 = vsub.s32 %v847, %v849
      %v851 = vrot.slane %v843, %v850
      %v853 = vunpack.c.l.s4 1983009808
      %v854 = vunpack.c.0.s8 %v853
      %v855 = vlaneseq
      %v856 = vshrl.u32 %v855, 7
      %v857 = vsub.s32 %v854, %v856
      %v858 = vrot.slane %v844, %v857
      %v859 = vcombine.high %v851, %v851
      %v860 = vcombine.high %v858, %v858
      %v861 = vcombine.low %v666, %v667
      %v863 = vunpack.c.l.s4 1983009808
      %v864 = vunpack.c.0.s8 %v863
      %v865 = vlaneseq
      %v866 = vshrl.u32 %v865, 7
      %v867 = vsub.s32 %v864, %v866
      %v868 = vrot.slane %v861, %v867
      %v869 = vcombine.high %v868, %v868
      %v870 = vcombine.low %v668, %v669
      %v871 = vcombine.high %v668, %v669
      %v873 = vunpack.c.l.s4 1983009808
      %v874 = vunpack.c.0.s8 %v873
      %v875 = vlaneseq
      %v876 = vshrl.u32 %v875, 7
      %v877 = vsub.s32 %v874, %v876
      %v878 = vrot.slane %v870, %v877
      %v880 = vunpack.c.l.s4 1983009808
      %v881 = vunpack.c.0.s8 %v880
      %v882 = vlaneseq
      %v883 = vshrl.u32 %v882, 7
      %v884 = vsub.s32 %v881, %v883
      %v885 = vrot.slane %v871, %v884
      %v886 = vcombine.high %v878, %v878
      %v887 = vcombine.high %v885, %v885
      %v888 = vcombine.low %v670, %v671
      %v890 = vunpack.c.l.s4 1983009808
      %v891 = vunpack.c.0.s8 %v890
      %v892 = vlaneseq
      %v893 = vshrl.u32 %v892, 7
      %v894 = vsub.s32 %v891, %v893
      %v895 = vrot.slane %v888, %v894
      %v896 = vcombine.high %v895, %v895
      %v897 = vcombine.low %v672, %v673
      %v898 = vcombine.high %v672, %v673
      %v900 = vunpack.c.l.s4 1983009808
      %v901 = vunpack.c.0.s8 %v900
      %v902 = vlaneseq
      %v903 = vshrl.u32 %v902, 7
      %v904 = vsub.s32 %v901, %v903
      %v905 = vrot.slane %v897, %v904
      %v907 = vunpack.c.l.s4 1983009808
      %v908 = vunpack.c.0.s8 %v907
      %v909 = vlaneseq
      %v910 = vshrl.u32 %v909, 7
      %v911 = vsub.s32 %v908, %v910
      %v912 = vrot.slane %v898, %v911
      %v913 = vcombine.high %v905, %v905
      %v914 = vcombine.high %v912, %v912
      %v915 = vcombine.low %v674, %v675
      %v917 = vunpack.c.l.s4 1983009808
      %v918 = vunpack.c.0.s8 %v917
      %v919 = vlaneseq
      %v920 = vshrl.u32 %v919, 7
      %v921 = vsub.s32 %v918, %v920
      %v922 = vrot.slane %v915, %v921
      %v923 = vcombine.high %v922, %v922
      %vm924 = vcmask 1040384
      %vm925 = vcmask 1042434
      %vm926 = vmor %vm924, %vm925
      %vm927 = vcmask 1044484
      %vm928 = vmor %vm926, %vm927
      %vm929 = vcmask 1046534
      %vm930 = vmor %vm928, %vm929
      %v931 = vrot.slane %v716, 7
      %v932 = vrot.slane %v931, 2
      %v933 = vrot.slane %v724, 7
      %v934 = vsel %vm930, %v932, %v933
      %v935 = vrot.slane %v933, 2
      %v936 = vrot.slane %v723, 7
      %v937 = vsel %vm930, %v935, %v936
      %v938 = vrot.slane %v936, 2
      %v939 = vrot.slane %v725, 7
      %v940 = vsel %vm930, %v938, %v939
      %v941 = vrot.slane %v939, 2
      %v942 = vrot.slane %v733, 7
      %v943 = vsel %vm930, %v941, %v942
      %v944 = vrot.slane %v942, 2
      %v945 = vrot.slane %v734, 7
      %v946 = vsel %vm930, %v944, %v945
      %v947 = vrot.slane %v743, 7
      %v948 = vrot.slane %v947, 2
      %v949 = vrot.slane %v751, 7
      %v950 = vsel %vm930, %v948, %v949
      %v951 = vrot.slane %v949, 2
      %v952 = vrot.slane %v750, 7
      %v953 = vsel %vm930, %v951, %v952
      %v954 = vrot.slane %v952, 2
      %v955 = vrot.slane %v752, 7
      %v956 = vsel %vm930, %v954, %v955
      %v957 = vrot.slane %v955, 2
      %v958 = vrot.slane %v760, 7
      %v959 = vsel %vm930, %v957, %v958
      %v960 = vrot.slane %v958, 2
      %v961 = vrot.slane %v761, 7
      %v962 = vsel %vm930, %v960, %v961
      %v963 = vrot.slane %v770, 7
      %v964 = vrot.slane %v963, 2
      %v965 = vrot.slane %v778, 7
      %v966 = vsel %vm930, %v964, %v965
      %v967 = vrot.slane %v965, 2
      %v968 = vrot.slane %v777, 7
      %v969 = vsel %vm930, %v967, %v968
      %v970 = vrot.slane %v968, 2
      %v971 = vrot.slane %v779, 7
      %v972 = vsel %vm930, %v970, %v971
      %v973 = vrot.slane %v971, 2
      %v974 = vrot.slane %v787, 7
      %v975 = vsel %vm930, %v973, %v974
      %v976 = vrot.slane %v974, 2
      %v977 = vrot.slane %v788, 7
      %v978 = vsel %vm930, %v976, %v977
      %v979 = vrot.slane %v797, 7
      %v980 = vrot.slane %v979, 2
      %v981 = vrot.slane %v805, 7
      %v982 = vsel %vm930, %v980, %v981
      %v983 = vrot.slane %v981, 2
      %v984 = vrot.slane %v804, 7
      %v985 = vsel %vm930, %v983, %v984
      %v986 = vrot.slane %v984, 2
      %v987 = vrot.slane %v806, 7
      %v988 = vsel %vm930, %v986, %v987
      %v989 = vrot.slane %v987, 2
      %v990 = vrot.slane %v814, 7
      %v991 = vsel %vm930, %v989, %v990
      %v992 = vrot.slane %v990, 2
      %v993 = vrot.slane %v815, 7
      %v994 = vsel %vm930, %v992, %v993
      %v995 = vrot.slane %v824, 7
      %v996 = vrot.slane %v995, 2
      %v997 = vrot.slane %v832, 7
      %v998 = vsel %vm930, %v996, %v997
      %v999 = vrot.slane %v997, 2
      %v1000 = vrot.slane %v831, 7
      %v1001 = vsel %vm930, %v999, %v1000
      %v1002 = vrot.slane %v1000, 2
      %v1003 = vrot.slane %v833, 7
      %v1004 = vsel %vm930, %v1002, %v1003
      %v1005 = vrot.slane %v1003, 2
      %v1006 = vrot.slane %v841, 7
      %v1007 = vsel %vm930, %v1005, %v1006
      %v1008 = vrot.slane %v1006, 2
      %v1009 = vrot.slane %v842, 7
      %v1010 = vsel %vm930, %v1008, %v1009
      %v1011 = vrot.slane %v851, 7
      %v1012 = vrot.slane %v1011, 2
      %v1013 = vrot.slane %v859, 7
      %v1014 = vsel %vm930, %v1012, %v1013
      %v1015 = vrot.slane %v1013, 2
      %v1016 = vrot.slane %v858, 7
      %v1017 = vsel %vm930, %v1015, %v1016
      %v1018 = vrot.slane %v1016, 2
      %v1019 = vrot.slane %v860, 7
      %v1020 = vsel %vm930, %v1018, %v1019
      %v1021 = vrot.slane %v1019, 2
      %v1022 = vrot.slane %v868, 7
      %v1023 = vsel %vm930, %v1021, %v1022
      %v1024 = vrot.slane %v1022, 2
      %v1025 = vrot.slane %v869, 7
      %v1026 = vsel %vm930, %v1024, %v1025
      %v1027 = vrot.slane %v878, 7
      %v1028 = vrot.slane %v1027, 2
      %v1029 = vrot.slane %v886, 7
      %v1030 = vsel %vm930, %v1028, %v1029
      %v1031 = vrot.slane %v1029, 2
      %v1032 = vrot.slane %v885, 7
      %v1033 = vsel %vm930, %v1031, %v1032
      %v1034 = vrot.slane %v1032, 2
      %v1035 = vrot.slane %v887, 7
      %v1036 = vsel %vm930, %v1034, %v1035
      %v1037 = vrot.slane %v1035, 2
      %v1038 = vrot.slane %v895, 7
      %v1039 = vsel %vm930, %v1037, %v1038
      %v1040 = vrot.slane %v1038, 2
      %v1041 = vrot.slane %v896, 7
      %v1042 = vsel %vm930, %v1040, %v1041
      %v1043 = vrot.slane %v905, 7
      %v1044 = vrot.slane %v1043, 2
      %v1045 = vrot.slane %v913, 7
      %v1046 = vsel %vm930, %v1044, %v1045
      %v1047 = vrot.slane %v1045, 2
      %v1048 = vrot.slane %v912, 7
      %v1049 = vsel %vm930, %v1047, %v1048
      %v1050 = vrot.slane %v1048, 2
      %v1051 = vrot.slane %v914, 7
      %v1052 = vsel %vm930, %v1050, %v1051
      %v1053 = vrot.slane %v1051, 2
      %v1054 = vrot.slane %v922, 7
      %v1055 = vsel %vm930, %v1053, %v1054
      %v1056 = vrot.slane %v1054, 2
      %v1057 = vrot.slane %v923, 7
      %v1058 = vsel %vm930, %v1056, %v1057
      %s1059 = scalar_lea.vmem %s1, 672
      %v1060 = vld [vmem:[%s1059] sm:$0xff]
      %v1061 = vld [vmem:[%s1059 + $0x8] sm:$0xff]
      %v1062 = vld [vmem:[%s1059 + $0x10] sm:$0xff]
      %v1063 = vld [vmem:[%s1059 + $0x18] sm:$0xff]
      %v1064 = vld [vmem:[%s1059 + $0x20] sm:$0xff]
      %v1065 = vld [vmem:[%s1059 + $0x28] sm:$0xff]
      %v1066 = vld [vmem:[%s1059 + $0x30] sm:$0xff]
      %v1067 = vld [vmem:[%s1059 + $0x38] sm:$0xff]
      %v1068 = vld [vmem:[%s1059 + $0x40] sm:$0xff]
      %v1069 = vld [vmem:[%s1059 + $0x48] sm:$0xff]
      %v1070 = vld [vmem:[%s1059 + $0x50] sm:$0xff]
      %v1071 = vld [vmem:[%s1059 + $0x58] sm:$0xff]
      %v1072 = vld [vmem:[%s1059 + $0x60] sm:$0xff]
      %v1073 = vld [vmem:[%s1059 + $0x68] sm:$0xff]
      %v1074 = vld [vmem:[%s1059 + $0x70] sm:$0xff]
      %v1075 = vld [vmem:[%s1059 + $0x78] sm:$0xff]
      %v1076 = vld [vmem:[%s1059 + $0x80] sm:$0xff]
      %v1077 = vld [vmem:[%s1059 + $0x88] sm:$0xff]
      %v1078 = vld [vmem:[%s1059 + $0x90] sm:$0xff]
      %v1079 = vld [vmem:[%s1059 + $0x98] sm:$0xff]
      %v1080 = vld [vmem:[%s1059 + $0xa0] sm:$0xff]
      %v1081 = vld [vmem:[%s1059 + $0xa8] sm:$0xff]
      %v1082 = vld [vmem:[%s1059 + $0xb0] sm:$0xff]
      %v1083 = vld [vmem:[%s1059 + $0xb8] sm:$0xff]
      %v1084 = vld [vmem:[%s1059 + $0xc0] sm:$0xff]
      %v1085 = vld [vmem:[%s1059 + $0xc8] sm:$0xff]
      %v1086 = vld [vmem:[%s1059 + $0xd0] sm:$0xff]
      %v1087 = vld [vmem:[%s1059 + $0xd8] sm:$0xff]
      %v1088 = vld [vmem:[%s1059 + $0xe0] sm:$0xff]
      %v1089 = vld [vmem:[%s1059 + $0xe8] sm:$0xff]
      %v1090 = vld [vmem:[%s1059 + $0xf0] sm:$0xff]
      %v1091 = vld [vmem:[%s1059 + $0xf8] sm:$0xff]
      %v1092 = vld [vmem:[%s1059 + $0x100] sm:$0xff]
      %v1093 = vld [vmem:[%s1059 + $0x108] sm:$0xff]
      %v1094 = vld [vmem:[%s1059 + $0x110] sm:$0xff]
      %v1095 = vld [vmem:[%s1059 + $0x118] sm:$0xff]
      %v1096 = vld [vmem:[%s1059 + $0x120] sm:$0xff]
      %v1097 = vld [vmem:[%s1059 + $0x128] sm:$0xff]
      %v1098 = vld [vmem:[%s1059 + $0x130] sm:$0xff]
      %v1099 = vld [vmem:[%s1059 + $0x138] sm:$0xff]
      %v1100 = vld [vmem:[%s1059 + $0x140] sm:$0xff]
      %v1101 = vld [vmem:[%s1059 + $0x148] sm:$0xff]
      %v1102 = vld [vmem:[%s1059 + $0x150] sm:$0xff]
      %v1103 = vld [vmem:[%s1059 + $0x158] sm:$0xff]
      %v1104 = vld [vmem:[%s1059 + $0x160] sm:$0xff]
      %v1105 = vld [vmem:[%s1059 + $0x168] sm:$0xff]
      %v1106 = vld [vmem:[%s1059 + $0x170] sm:$0xff]
      %v1107 = vld [vmem:[%s1059 + $0x178] sm:$0xff]
      %v1108 = vld [vmem:[%s1059 + $0x180] sm:$0xff]
      %v1109 = vld [vmem:[%s1059 + $0x188] sm:$0xff]
      %v1110 = vld [vmem:[%s1059 + $0x190] sm:$0xff]
      %v1111 = vld [vmem:[%s1059 + $0x198] sm:$0xff]
      %v1112 = vld [vmem:[%s1059 + $0x1a0] sm:$0xff]
      %v1113 = vld [vmem:[%s1059 + $0x1a8] sm:$0xff]
      %v1114 = vld [vmem:[%s1059 + $0x1b0] sm:$0xff]
      %v1115 = vld [vmem:[%s1059 + $0x1b8] sm:$0xff]
      %v1116 = vld [vmem:[%s1059 + $0x1c0] sm:$0xff]
      %v1117 = vld [vmem:[%s1059 + $0x1c8] sm:$0xff]
      %v1118 = vld [vmem:[%s1059 + $0x1d0] sm:$0xff]
      %v1119 = vld [vmem:[%s1059 + $0x1d8] sm:$0xff]
      %v1120 = vld [vmem:[%s1059 + $0x1e0] sm:$0xff]
      %v1121 = vld [vmem:[%s1059 + $0x1e8] sm:$0xff]
      %v1122 = vld [vmem:[%s1059 + $0x1f0] sm:$0xff]
      %v1123 = vld [vmem:[%s1059 + $0x1f8] sm:$0xff]
      %v1124 = vld [vmem:[%s1059 + $0x200] sm:$0xff]
      %v1125 = vld [vmem:[%s1059 + $0x208] sm:$0xff]
      %v1126 = vld [vmem:[%s1059 + $0x210] sm:$0xff]
      %v1127 = vld [vmem:[%s1059 + $0x218] sm:$0xff]
      %v1128 = vld [vmem:[%s1059 + $0x220] sm:$0xff]
      %v1129 = vld [vmem:[%s1059 + $0x228] sm:$0xff]
      %v1130 = vld [vmem:[%s1059 + $0x230] sm:$0xff]
      %v1131 = vld [vmem:[%s1059 + $0x238] sm:$0xff]
      %v1132 = vld [vmem:[%s1059 + $0x240] sm:$0xff]
      %v1133 = vld [vmem:[%s1059 + $0x248] sm:$0xff]
      %v1134 = vld [vmem:[%s1059 + $0x250] sm:$0xff]
      %v1135 = vld [vmem:[%s1059 + $0x258] sm:$0xff]
      %v1136 = vld [vmem:[%s1059 + $0x260] sm:$0xff]
      %v1137 = vld [vmem:[%s1059 + $0x268] sm:$0xff]
      %v1138 = vld [vmem:[%s1059 + $0x270] sm:$0xff]
      %v1139 = vld [vmem:[%s1059 + $0x278] sm:$0xff]
      %v1140 = vld [vmem:[%s1059 + $0x280] sm:$0xff]
      %v1141 = vld [vmem:[%s1059 + $0x288] sm:$0xff]
      %v1142 = vld [vmem:[%s1059 + $0x290] sm:$0xff]
      %v1143 = vld [vmem:[%s1059 + $0x298] sm:$0xff]
      %v1144 = vcombine.low %v934, %v937
      %v1145 = vcombine.low %v940, %v943
      %v1147 = vunpack.c.l.s4 1983009808
      %v1148 = vunpack.c.0.s8 %v1147
      %v1149 = vlaneseq
      %v1150 = vshrl.u32 %v1149, 7
      %v1151 = vsub.s32 %v1148, %v1150
      %v1152 = vrot.slane %v1144, %v1151
      %v1154 = vunpack.c.l.s4 1983009808
      %v1155 = vunpack.c.0.s8 %v1154
      %v1156 = vlaneseq
      %v1157 = vshrl.u32 %v1156, 7
      %v1158 = vsub.s32 %v1155, %v1157
      %v1159 = vrot.slane %v1145, %v1158
      %v1160 = vcombine.low %v1152, %v1159
      %v1161 = vcombine.high %v1152, %v1159
      %v1162 = vcombine.low %v946, %v950
      %v1163 = vcombine.low %v953, %v956
      %v1165 = vunpack.c.l.s4 1983009808
      %v1166 = vunpack.c.0.s8 %v1165
      %v1167 = vlaneseq
      %v1168 = vshrl.u32 %v1167, 7
      %v1169 = vsub.s32 %v1166, %v1168
      %v1170 = vrot.slane %v1162, %v1169
      %v1172 = vunpack.c.l.s4 1983009808
      %v1173 = vunpack.c.0.s8 %v1172
      %v1174 = vlaneseq
      %v1175 = vshrl.u32 %v1174, 7
      %v1176 = vsub.s32 %v1173, %v1175
      %v1177 = vrot.slane %v1163, %v1176
      %v1178 = vcombine.low %v1170, %v1177
      %v1179 = vcombine.high %v1170, %v1177
      %v1180 = vcombine.low %v959, %v962
      %v1181 = vcombine.low %v966, %v969
      %v1183 = vunpack.c.l.s4 1983009808
      %v1184 = vunpack.c.0.s8 %v1183
      %v1185 = vlaneseq
      %v1186 = vshrl.u32 %v1185, 7
      %v1187 = vsub.s32 %v1184, %v1186
      %v1188 = vrot.slane %v1180, %v1187
      %v1190 = vunpack.c.l.s4 1983009808
      %v1191 = vunpack.c.0.s8 %v1190
      %v1192 = vlaneseq
      %v1193 = vshrl.u32 %v1192, 7
      %v1194 = vsub.s32 %v1191, %v1193
      %v1195 = vrot.slane %v1181, %v1194
      %v1196 = vcombine.low %v1188, %v1195
      %v1197 = vcombine.high %v1188, %v1195
      %v1198 = vcombine.low %v972, %v975
      %v1199 = vcombine.low %v978, %v982
      %v1201 = vunpack.c.l.s4 1983009808
      %v1202 = vunpack.c.0.s8 %v1201
      %v1203 = vlaneseq
      %v1204 = vshrl.u32 %v1203, 7
      %v1205 = vsub.s32 %v1202, %v1204
      %v1206 = vrot.slane %v1198, %v1205
      %v1208 = vunpack.c.l.s4 1983009808
      %v1209 = vunpack.c.0.s8 %v1208
      %v1210 = vlaneseq
      %v1211 = vshrl.u32 %v1210, 7
      %v1212 = vsub.s32 %v1209, %v1211
      %v1213 = vrot.slane %v1199, %v1212
      %v1214 = vcombine.low %v1206, %v1213
      %v1215 = vcombine.high %v1206, %v1213
      %v1216 = vcombine.low %v985, %v988
      %v1217 = vcombine.low %v991, %v994
      %v1219 = vunpack.c.l.s4 1983009808
      %v1220 = vunpack.c.0.s8 %v1219
      %v1221 = vlaneseq
      %v1222 = vshrl.u32 %v1221, 7
      %v1223 = vsub.s32 %v1220, %v1222
      %v1224 = vrot.slane %v1216, %v1223
      %v1226 = vunpack.c.l.s4 1983009808
      %v1227 = vunpack.c.0.s8 %v1226
      %v1228 = vlaneseq
      %v1229 = vshrl.u32 %v1228, 7
      %v1230 = vsub.s32 %v1227, %v1229
      %v1231 = vrot.slane %v1217, %v1230
      %v1232 = vcombine.low %v1224, %v1231
      %v1233 = vcombine.high %v1224, %v1231
      %v1234 = vcombine.low %v998, %v1001
      %v1235 = vcombine.low %v1004, %v1007
      %v1237 = vunpack.c.l.s4 1983009808
      %v1238 = vunpack.c.0.s8 %v1237
      %v1239 = vlaneseq
      %v1240 = vshrl.u32 %v1239, 7
      %v1241 = vsub.s32 %v1238, %v1240
      %v1242 = vrot.slane %v1234, %v1241
      %v1244 = vunpack.c.l.s4 1983009808
      %v1245 = vunpack.c.0.s8 %v1244
      %v1246 = vlaneseq
      %v1247 = vshrl.u32 %v1246, 7
      %v1248 = vsub.s32 %v1245, %v1247
      %v1249 = vrot.slane %v1235, %v1248
      %v1250 = vcombine.low %v1242, %v1249
      %v1251 = vcombine.high %v1242, %v1249
      %v1252 = vcombine.low %v1010, %v1014
      %v1253 = vcombine.low %v1017, %v1020
      %v1255 = vunpack.c.l.s4 1983009808
      %v1256 = vunpack.c.0.s8 %v1255
      %v1257 = vlaneseq
      %v1258 = vshrl.u32 %v1257, 7
      %v1259 = vsub.s32 %v1256, %v1258
      %v1260 = vrot.slane %v1252, %v1259
      %v1262 = vunpack.c.l.s4 1983009808
      %v1263 = vunpack.c.0.s8 %v1262
      %v1264 = vlaneseq
      %v1265 = vshrl.u32 %v1264, 7
      %v1266 = vsub.s32 %v1263, %v1265
      %v1267 = vrot.slane %v1253, %v1266
      %v1268 = vcombine.low %v1260, %v1267
      %v1269 = vcombine.high %v1260, %v1267
      %v1270 = vcombine.low %v1023, %v1026
      %v1271 = vcombine.low %v1030, %v1033
      %v1273 = vunpack.c.l.s4 1983009808
      %v1274 = vunpack.c.0.s8 %v1273
      %v1275 = vlaneseq
      %v1276 = vshrl.u32 %v1275, 7
      %v1277 = vsub.s32 %v1274, %v1276
      %v1278 = vrot.slane %v1270, %v1277
      %v1280 = vunpack.c.l.s4 1983009808
      %v1281 = vunpack.c.0.s8 %v1280
      %v1282 = vlaneseq
      %v1283 = vshrl.u32 %v1282, 7
      %v1284 = vsub.s32 %v1281, %v1283
      %v1285 = vrot.slane %v1271, %v1284
      %v1286 = vcombine.low %v1278, %v1285
      %v1287 = vcombine.high %v1278, %v1285
      %v1288 = vcombine.low %v1036, %v1039
      %v1289 = vcombine.low %v1042, %v1046
      %v1291 = vunpack.c.l.s4 1983009808
      %v1292 = vunpack.c.0.s8 %v1291
      %v1293 = vlaneseq
      %v1294 = vshrl.u32 %v1293, 7
      %v1295 = vsub.s32 %v1292, %v1294
      %v1296 = vrot.slane %v1288, %v1295
      %v1298 = vunpack.c.l.s4 1983009808
      %v1299 = vunpack.c.0.s8 %v1298
      %v1300 = vlaneseq
      %v1301 = vshrl.u32 %v1300, 7
      %v1302 = vsub.s32 %v1299, %v1301
      %v1303 = vrot.slane %v1289, %v1302
      %v1304 = vcombine.low %v1296, %v1303
      %v1305 = vcombine.high %v1296, %v1303
      %v1306 = vcombine.low %v1049, %v1052
      %v1307 = vcombine.low %v1055, %v1058
      %v1309 = vunpack.c.l.s4 1983009808
      %v1310 = vunpack.c.0.s8 %v1309
      %v1311 = vlaneseq
      %v1312 = vshrl.u32 %v1311, 7
      %v1313 = vsub.s32 %v1310, %v1312
      %v1314 = vrot.slane %v1306, %v1313
      %v1316 = vunpack.c.l.s4 1983009808
      %v1317 = vunpack.c.0.s8 %v1316
      %v1318 = vlaneseq
      %v1319 = vshrl.u32 %v1318, 7
      %v1320 = vsub.s32 %v1317, %v1319
      %v1321 = vrot.slane %v1307, %v1320
      %v1322 = vcombine.low %v1314, %v1321
      %v1323 = vcombine.high %v1314, %v1321
      %v1334 = vsel %vm172, %v1161, 0
      %v1336 = vsel %vm172, %v1179, 0
      %v1338 = vsel %vm172, %v1197, 0
      %v1340 = vsel %vm172, %v1215, 0
      %v1342 = vsel %vm172, %v1233, 0
      %v1344 = vsel %vm172, %v1251, 0
      %v1346 = vsel %vm172, %v1269, 0
      %v1348 = vsel %vm172, %v1287, 0
      %v1350 = vsel %vm172, %v1305, 0
      %v1352 = vsel %vm172, %v1323, 0
      %1354 = vmatprep.subr.mxu0 %v1061
      %1355 = vmatpush1.msra.mxu0 %v1060
      %1356 = vmatprep.subr.mxu0 %v1064
      %1357 = vmatpush1.msra.mxu0 %v1063
      %1358 = vmatprep.subr.mxu0 %v1067
      %1359 = vmatpush1.msra.mxu0 %v1066
      %1360 = vmatprep.subr.mxu0 %v1070
      %1361 = vmatpush1.msra.mxu0 %v1069
      %1362 = vmatprep.subr.mxu0 %v1073
      %1363 = vmatpush1.msra.mxu0 %v1072
      %1364 = vmatprep.subr.mxu0 %v1076
      %1365 = vmatpush1.msra.mxu0 %v1075
      %1366 = vmatprep.subr.mxu0 %v1079
      %1367 = vmatpush1.msra.mxu0 %v1078
      %1368 = vmatprep.subr.mxu0 %v1082
      %1369 = vmatpush1.msra.mxu0 %v1081
      %1370 = vmatprep.subr.mxu0 %v1085
      %1371 = vmatpush1.msra.mxu0 %v1084
      %1372 = vmatprep.subr.mxu0 %v1088
      %1373 = vmatpush1.msra.mxu0 %v1087
      %1374 = vmatprep.subr.mxu0 %v1091
      %1375 = vmatpush1.msra.mxu0 %v1090
      %1376 = vmatprep.subr.mxu0 %v1094
      %1377 = vmatpush1.msra.mxu0 %v1093
      %1378 = vmatprep.subr.mxu0 %v1097
      %1379 = vmatpush1.msra.mxu0 %v1096
      %1380 = vmatprep.subr.mxu0 %v1100
      %1381 = vmatpush1.msra.mxu0 %v1099
      %1382 = vmatprep.subr.mxu0 %v1103
      %1383 = vmatpush1.msra.mxu0 %v1102
      %1384 = vmatprep.subr.mxu0 %v1106
      %1385 = vmatpush1.msra.mxu0 %v1105
      %1386 = vmatprep.subr.mxu0 %v1109
      %1387 = vmatpush1.msra.mxu0 %v1108
      %1388 = vmatprep.subr.mxu0 %v1112
      %1389 = vmatpush1.msra.mxu0 %v1111
      %1390 = vmatprep.subr.mxu0 %v1115
      %1391 = vmatpush1.msra.mxu0 %v1114
      %1392 = vmatprep.subr.mxu0 %v1118
      %1393 = vmatpush1.msra.mxu0 %v1117
      %1394 = vmatprep.subr.mxu0 %v1121
      %1395 = vmatpush1.msra.mxu0 %v1120
      %1396 = vmatprep.subr.mxu0 %v1124
      %1397 = vmatpush1.msra.mxu0 %v1123
      %1398 = vmatprep.subr.mxu0 %v1127
      %1399 = vmatpush1.msra.mxu0 %v1126
      %1400 = vmatprep.subr.mxu0 %v1130
      %1401 = vmatpush1.msra.mxu0 %v1129
      %1402 = vmatprep.subr.mxu0 %v1133
      %1403 = vmatpush1.msra.mxu0 %v1132
      %1404 = vmatprep.subr.mxu0 %v1136
      %1405 = vmatpush1.msra.mxu0 %v1135
      %1406 = vmatprep.subr.mxu0 %v1139
      %1407 = vmatpush1.msra.mxu0 %v1138
      %1408 = vmatprep.subr.mxu0 %v1142
      %1409 = vmatpush1.msra.mxu0 %v1141
      %1410 = vmatprep.subr.mxu0 0.0
      %1411 = vmatpush1.msra.mxu0 0.0
      %1412 = vmatprep.subr.mxu0 0.0
      %1413 = vmatpush1.msra.mxu0 0.0
      %1414 = vmatprep.subr.mxu0 0.0
      %1415 = vmatpush1.msra.mxu0 0.0
      %1416 = vmatprep.subr.mxu0 0.0
      %1417 = vmatpush1.msra.mxu0 0.0
      %1418 = vmatprep.mubr.f32.mxu0 %v1334
      %1419 = vmatmul.mubr.f32.gmra.mrb[0].mxu0 %v1160
      %v1420 = vpop.f32.mrb[0].mxu0
      %v1421 = vadd.f32 0.0, %v1420
      %v1422 = vpop.f32.mrb[0].mxu0
      %v1423 = vadd.f32 0.0, %v1422
      %1424 = vmatprep.mubr.f32.mxu0 %v1336
      %1425 = vmatmul.mubr.f32.gmra.mrb[0].mxu0 %v1178
      %v1426 = vpop.f32.mrb[0].mxu0
      %v1427 = vadd.f32 0.0, %v1426
      %v1428 = vpop.f32.mrb[0].mxu0
      %v1429 = vadd.f32 0.0, %v1428
      %1430 = vmatprep.mubr.f32.mxu0 %v1338
      %1431 = vmatmul.mubr.f32.gmra.mrb[0].mxu0 %v1196
      %v1432 = vpop.f32.mrb[0].mxu0
      %v1433 = vadd.f32 0.0, %v1432
      %v1434 = vpop.f32.mrb[0].mxu0
      %v1435 = vadd.f32 0.0, %v1434
      %1436 = vmatprep.mubr.f32.mxu0 %v1340
      %1437 = vmatmul.mubr.f32.gmra.mrb[0].mxu0 %v1214
      %v1438 = vpop.f32.mrb[0].mxu0
      %v1439 = vadd.f32 0.0, %v1438
      %v1440 = vpop.f32.mrb[0].mxu0
      %v1441 = vadd.f32 0.0, %v1440
      %1442 = vmatprep.mubr.f32.mxu0 %v1342
      %1443 = vmatmul.mubr.f32.gmra.mrb[0].mxu0 %v1232
      %v1444 = vpop.f32.mrb[0].mxu0
      %v1445 = vadd.f32 0.0, %v1444
      %v1446 = vpop.f32.mrb[0].mxu0
      %v1447 = vadd.f32 0.0, %v1446
      %1448 = vmatprep.mubr.f32.mxu0 %v1344
      %1449 = vmatmul.mubr.f32.gmra.mrb[0].mxu0 %v1250
      %v1450 = vpop.f32.mrb[0].mxu0
      %v1451 = vadd.f32 0.0, %v1450
      %v1452 = vpop.f32.mrb[0].mxu0
      %v1453 = vadd.f32 0.0, %v1452
      %1454 = vmatprep.mubr.f32.mxu0 %v1346
      %1455 = vmatmul.mubr.f32.gmra.mrb[0].mxu0 %v1268
      %v1456 = vpop.f32.mrb[0].mxu0
      %v1457 = vadd.f32 0.0, %v1456
      %v1458 = vpop.f32.mrb[0].mxu0
      %v1459 = vadd.f32 0.0, %v1458
      %1460 = vmatprep.mubr.f32.mxu0 %v1348
      %1461 = vmatmul.mubr.f32.gmra.mrb[0].mxu0 %v1286
      %v1462 = vpop.f32.mrb[0].mxu0
      %v1463 = vadd.f32 0.0, %v1462
      %v1464 = vpop.f32.mrb[0].mxu0
      %v1465 = vadd.f32 0.0, %v1464
      %1466 = vmatprep.mubr.f32.mxu0 %v1350
      %1467 = vmatmul.mubr.f32.gmra.mrb[0].mxu0 %v1304
      %v1468 = vpop.f32.mrb[0].mxu0
      %v1469 = vadd.f32 0.0, %v1468
      %v1470 = vpop.f32.mrb[0].mxu0
      %v1471 = vadd.f32 0.0, %v1470
      %1472 = vmatprep.mubr.f32.mxu0 %v1352
      %1473 = vmatmul.mubr.f32.gmra.mrb[0].mxu0 %v1322
      %v1474 = vpop.f32.mrb[0].mxu0
      %v1475 = vadd.f32 0.0, %v1474
      %v1476 = vpop.f32.mrb[0].mxu0
      %v1477 = vadd.f32 0.0, %v1476
      %1478 = vdwg.mxu0
      %1479 = vmatprep.subr.mxu0 0.0
      %1480 = vmatpush1.msra.mxu0 %v1062
      %1481 = vmatprep.subr.mxu0 0.0
      %1482 = vmatpush1.msra.mxu0 %v1065
      %1483 = vmatprep.subr.mxu0 0.0
      %1484 = vmatpush1.msra.mxu0 %v1068
      %1485 = vmatprep.subr.mxu0 0.0
      %1486 = vmatpush1.msra.mxu0 %v1071
      %1487 = vmatprep.subr.mxu0 0.0
      %1488 = vmatpush1.msra.mxu0 %v1074
      %1489 = vmatprep.subr.mxu0 0.0
      %1490 = vmatpush1.msra.mxu0 %v1077
      %1491 = vmatprep.subr.mxu0 0.0
      %1492 = vmatpush1.msra.mxu0 %v1080
      %1493 = vmatprep.subr.mxu0 0.0
      %1494 = vmatpush1.msra.mxu0 %v1083
      %1495 = vmatprep.subr.mxu0 0.0
      %1496 = vmatpush1.msra.mxu0 %v1086
      %1497 = vmatprep.subr.mxu0 0.0
      %1498 = vmatpush1.msra.mxu0 %v1089
      %1499 = vmatprep.subr.mxu0 0.0
      %1500 = vmatpush1.msra.mxu0 %v1092
      %1501 = vmatprep.subr.mxu0 0.0
      %1502 = vmatpush1.msra.mxu0 %v1095
      %1503 = vmatprep.subr.mxu0 0.0
      %1504 = vmatpush1.msra.mxu0 %v1098
      %1505 = vmatprep.subr.mxu0 0.0
      %1506 = vmatpush1.msra.mxu0 %v1101
      %1507 = vmatprep.subr.mxu0 0.0
      %1508 = vmatpush1.msra.mxu0 %v1104
      %1509 = vmatprep.subr.mxu0 0.0
      %1510 = vmatpush1.msra.mxu0 %v1107
      %1511 = vmatprep.subr.mxu0 0.0
      %1512 = vmatpush1.msra.mxu0 %v1110
      %1513 = vmatprep.subr.mxu0 0.0
      %1514 = vmatpush1.msra.mxu0 %v1113
      %1515 = vmatprep.subr.mxu0 0.0
      %1516 = vmatpush1.msra.mxu0 %v1116
      %1517 = vmatprep.subr.mxu0 0.0
      %1518 = vmatpush1.msra.mxu0 %v1119
      %1519 = vmatprep.subr.mxu0 0.0
      %1520 = vmatpush1.msra.mxu0 %v1122
      %1521 = vmatprep.subr.mxu0 0.0
      %1522 = vmatpush1.msra.mxu0 %v1125
      %1523 = vmatprep.subr.mxu0 0.0
      %1524 = vmatpush1.msra.mxu0 %v1128
      %1525 = vmatprep.subr.mxu0 0.0
      %1526 = vmatpush1.msra.mxu0 %v1131
      %1527 = vmatprep.subr.mxu0 0.0
      %1528 = vmatpush1.msra.mxu0 %v1134
      %1529 = vmatprep.subr.mxu0 0.0
      %1530 = vmatpush1.msra.mxu0 %v1137
      %1531 = vmatprep.subr.mxu0 0.0
      %1532 = vmatpush1.msra.mxu0 %v1140
      %1533 = vmatprep.subr.mxu0 0.0
      %1534 = vmatpush1.msra.mxu0 %v1143
      %1535 = vmatprep.subr.mxu0 0.0
      %1536 = vmatpush1.msra.mxu0 0.0
      %1537 = vmatprep.subr.mxu0 0.0
      %1538 = vmatpush1.msra.mxu0 0.0
      %1539 = vmatprep.subr.mxu0 0.0
      %1540 = vmatpush1.msra.mxu0 0.0
      %1541 = vmatprep.subr.mxu0 0.0
      %1542 = vmatpush1.msra.mxu0 0.0
      %1543 = vmatprep.mubr.f32.mxu0 %v1334
      %1544 = vmatmul.mubr.f32.gmra.mrb[0].mxu0 %v1160
      %v1545 = vpop.f32.mrb[0].mxu0
      %v1546 = vadd.f32 0.0, %v1545
      %v1547 = vpop.f32.mrb[0].mxu0
      %1548 = vmatprep.mubr.f32.mxu0 %v1336
      %1549 = vmatmul.mubr.f32.gmra.mrb[0].mxu0 %v1178
      %v1550 = vpop.f32.mrb[0].mxu0
      %v1551 = vadd.f32 0.0, %v1550
      %v1552 = vpop.f32.mrb[0].mxu0
      %1553 = vmatprep.mubr.f32.mxu0 %v1338
      %1554 = vmatmul.mubr.f32.gmra.mrb[0].mxu0 %v1196
      %v1555 = vpop.f32.mrb[0].mxu0
      %v1556 = vadd.f32 0.0, %v1555
      %v1557 = vpop.f32.mrb[0].mxu0
      %1558 = vmatprep.mubr.f32.mxu0 %v1340
      %1559 = vmatmul.mubr.f32.gmra.mrb[0].mxu0 %v1214
      %v1560 = vpop.f32.mrb[0].mxu0
      %v1561 = vadd.f32 0.0, %v1560
      %v1562 = vpop.f32.mrb[0].mxu0
      %1563 = vmatprep.mubr.f32.mxu0 %v1342
      %1564 = vmatmul.mubr.f32.gmra.mrb[0].mxu0 %v1232
      %v1565 = vpop.f32.mrb[0].mxu0
      %v1566 = vadd.f32 0.0, %v1565
      %v1567 = vpop.f32.mrb[0].mxu0
      %1568 = vmatprep.mubr.f32.mxu0 %v1344
      %1569 = vmatmul.mubr.f32.gmra.mrb[0].mxu0 %v1250
      %v1570 = vpop.f32.mrb[0].mxu0
      %v1571 = vadd.f32 0.0, %v1570
      %v1572 = vpop.f32.mrb[0].mxu0
      %1573 = vmatprep.mubr.f32.mxu0 %v1346
      %1574 = vmatmul.mubr.f32.gmra.mrb[0].mxu0 %v1268
      %v1575 = vpop.f32.mrb[0].mxu0
      %v1576 = vadd.f32 0.0, %v1575
      %v1577 = vpop.f32.mrb[0].mxu0
      %1578 = vmatprep.mubr.f32.mxu0 %v1348
      %1579 = vmatmul.mubr.f32.gmra.mrb[0].mxu0 %v1286
      %v1580 = vpop.f32.mrb[0].mxu0
      %v1581 = vadd.f32 0.0, %v1580
      %v1582 = vpop.f32.mrb[0].mxu0
      %1583 = vmatprep.mubr.f32.mxu0 %v1350
      %1584 = vmatmul.mubr.f32.gmra.mrb[0].mxu0 %v1304
      %v1585 = vpop.f32.mrb[0].mxu0
      %v1586 = vadd.f32 0.0, %v1585
      %v1587 = vpop.f32.mrb[0].mxu0
      %1588 = vmatprep.mubr.f32.mxu0 %v1352
      %1589 = vmatmul.mubr.f32.gmra.mrb[0].mxu0 %v1322
      %v1590 = vpop.f32.mrb[0].mxu0
      %v1591 = vadd.f32 0.0, %v1590
      %v1592 = vpop.f32.mrb[0].mxu0
      %1593 = vdwg.mxu0
      %v1594 = vcombine.low %v360, %v368
      %v1595 = vcombine.low %v367, %v369
      %v1597 = vunpack.c.l.s4 1983009808
      %v1598 = vunpack.c.0.s8 %v1597
      %v1599 = vlaneseq
      %v1600 = vshrl.u32 %v1599, 7
      %v1601 = vsub.s32 %v1598, %v1600
      %v1602 = vrot.slane %v1594, %v1601
      %v1604 = vunpack.c.l.s4 1983009808
      %v1605 = vunpack.c.0.s8 %v1604
      %v1606 = vlaneseq
      %v1607 = vshrl.u32 %v1606, 7
      %v1608 = vsub.s32 %v1605, %v1607
      %v1609 = vrot.slane %v1595, %v1608
      %v1610 = vcombine.low %v1602, %v1609
      %v1611 = vcombine.high %v1602, %v1609
      %v1612 = vcombine.low %v377, %v386
      %v1613 = vcombine.low %v394, %v393
      %v1615 = vunpack.c.l.s4 1983009808
      %v1616 = vunpack.c.0.s8 %v1615
      %v1617 = vlaneseq
      %v1618 = vshrl.u32 %v1617, 7
      %v1619 = vsub.s32 %v1616, %v1618
      %v1620 = vrot.slane %v1612, %v1619
      %v1622 = vunpack.c.l.s4 1983009808
      %v1623 = vunpack.c.0.s8 %v1622
      %v1624 = vlaneseq
      %v1625 = vshrl.u32 %v1624, 7
      %v1626 = vsub.s32 %v1623, %v1625
      %v1627 = vrot.slane %v1613, %v1626
      %v1628 = vcombine.low %v1620, %v1627
      %v1629 = vcombine.high %v1620, %v1627
      %v1630 = vcombine.low %v395, %v403
      %v1631 = vcombine.low %v412, %v420
      %v1633 = vunpack.c.l.s4 1983009808
      %v1634 = vunpack.c.0.s8 %v1633
      %v1635 = vlaneseq
      %v1636 = vshrl.u32 %v1635, 7
      %v1637 = vsub.s32 %v1634, %v1636
      %v1638 = vrot.slane %v1630, %v1637
      %v1640 = vunpack.c.l.s4 1983009808
      %v1641 = vunpack.c.0.s8 %v1640
      %v1642 = vlaneseq
      %v1643 = vshrl.u32 %v1642, 7
      %v1644 = vsub.s32 %v1641, %v1643
      %v1645 = vrot.slane %v1631, %v1644
      %v1646 = vcombine.low %v1638, %v1645
      %v1647 = vcombine.high %v1638, %v1645
      %v1648 = vcombine.low %v419, %v421
      %v1649 = vcombine.low %v429, %v438
      %v1651 = vunpack.c.l.s4 1983009808
      %v1652 = vunpack.c.0.s8 %v1651
      %v1653 = vlaneseq
      %v1654 = vshrl.u32 %v1653, 7
      %v1655 = vsub.s32 %v1652, %v1654
      %v1656 = vrot.slane %v1648, %v1655
      %v1658 = vunpack.c.l.s4 1983009808
      %v1659 = vunpack.c.0.s8 %v1658
      %v1660 = vlaneseq
      %v1661 = vshrl.u32 %v1660, 7
      %v1662 = vsub.s32 %v1659, %v1661
      %v1663 = vrot.slane %v1649, %v1662
      %v1664 = vcombine.low %v1656, %v1663
      %v1665 = vcombine.high %v1656, %v1663
      %v1666 = vcombine.low %v446, %v445
      %v1667 = vcombine.low %v447, %v455
      %v1669 = vunpack.c.l.s4 1983009808
      %v1670 = vunpack.c.0.s8 %v1669
      %v1671 = vlaneseq
      %v1672 = vshrl.u32 %v1671, 7
      %v1673 = vsub.s32 %v1670, %v1672
      %v1674 = vrot.slane %v1666, %v1673
      %v1676 = vunpack.c.l.s4 1983009808
      %v1677 = vunpack.c.0.s8 %v1676
      %v1678 = vlaneseq
      %v1679 = vshrl.u32 %v1678, 7
      %v1680 = vsub.s32 %v1677, %v1679
      %v1681 = vrot.slane %v1667, %v1680
      %v1682 = vcombine.low %v1674, %v1681
      %v1683 = vcombine.high %v1674, %v1681
      %v1684 = vcombine.low %v464, %v472
      %v1685 = vcombine.low %v471, %v473
      %v1687 = vunpack.c.l.s4 1983009808
      %v1688 = vunpack.c.0.s8 %v1687
      %v1689 = vlaneseq
      %v1690 = vshrl.u32 %v1689, 7
      %v1691 = vsub.s32 %v1688, %v1690
      %v1692 = vrot.slane %v1684, %v1691
      %v1694 = vunpack.c.l.s4 1983009808
      %v1695 = vunpack.c.0.s8 %v1694
      %v1696 = vlaneseq
      %v1697 = vshrl.u32 %v1696, 7
      %v1698 = vsub.s32 %v1695, %v1697
      %v1699 = vrot.slane %v1685, %v1698
      %v1700 = vcombine.low %v1692, %v1699
      %v1701 = vcombine.high %v1692, %v1699
      %v1702 = vcombine.low %v481, %v490
      %v1703 = vcombine.low %v498, %v497
      %v1705 = vunpack.c.l.s4 1983009808
      %v1706 = vunpack.c.0.s8 %v1705
      %v1707 = vlaneseq
      %v1708 = vshrl.u32 %v1707, 7
      %v1709 = vsub.s32 %v1706, %v1708
      %v1710 = vrot.slane %v1702, %v1709
      %v1712 = vunpack.c.l.s4 1983009808
      %v1713 = vunpack.c.0.s8 %v1712
      %v1714 = vlaneseq
      %v1715 = vshrl.u32 %v1714, 7
      %v1716 = vsub.s32 %v1713, %v1715
      %v1717 = vrot.slane %v1703, %v1716
      %v1718 = vcombine.low %v1710, %v1717
      %v1719 = vcombine.high %v1710, %v1717
      %v1720 = vcombine.low %v499, %v507
      %v1721 = vcombine.low %v516, %v524
      %v1723 = vunpack.c.l.s4 1983009808
      %v1724 = vunpack.c.0.s8 %v1723
      %v1725 = vlaneseq
      %v1726 = vshrl.u32 %v1725, 7
      %v1727 = vsub.s32 %v1724, %v1726
      %v1728 = vrot.slane %v1720, %v1727
      %v1730 = vunpack.c.l.s4 1983009808
      %v1731 = vunpack.c.0.s8 %v1730
      %v1732 = vlaneseq
      %v1733 = vshrl.u32 %v1732, 7
      %v1734 = vsub.s32 %v1731, %v1733
      %v1735 = vrot.slane %v1721, %v1734
      %v1736 = vcombine.low %v1728, %v1735
      %v1737 = vcombine.high %v1728, %v1735
      %v1738 = vcombine.low %v523, %v525
      %v1739 = vcombine.low %v533, %v542
      %v1741 = vunpack.c.l.s4 1983009808
      %v1742 = vunpack.c.0.s8 %v1741
      %v1743 = vlaneseq
      %v1744 = vshrl.u32 %v1743, 7
      %v1745 = vsub.s32 %v1742, %v1744
      %v1746 = vrot.slane %v1738, %v1745
      %v1748 = vunpack.c.l.s4 1983009808
      %v1749 = vunpack.c.0.s8 %v1748
      %v1750 = vlaneseq
      %v1751 = vshrl.u32 %v1750, 7
      %v1752 = vsub.s32 %v1749, %v1751
      %v1753 = vrot.slane %v1739, %v1752
      %v1754 = vcombine.low %v1746, %v1753
      %v1755 = vcombine.high %v1746, %v1753
      %v1756 = vcombine.low %v550, %v549
      %v1757 = vcombine.low %v551, %v559
      %v1759 = vunpack.c.l.s4 1983009808
      %v1760 = vunpack.c.0.s8 %v1759
      %v1761 = vlaneseq
      %v1762 = vshrl.u32 %v1761, 7
      %v1763 = vsub.s32 %v1760, %v1762
      %v1764 = vrot.slane %v1756, %v1763
      %v1766 = vunpack.c.l.s4 1983009808
      %v1767 = vunpack.c.0.s8 %v1766
      %v1768 = vlaneseq
      %v1769 = vshrl.u32 %v1768, 7
      %v1770 = vsub.s32 %v1767, %v1769
      %v1771 = vrot.slane %v1757, %v1770
      %v1772 = vcombine.low %v1764, %v1771
      %v1773 = vcombine.high %v1764, %v1771
      %v1784 = vsel %vm172, %v1611, 0
      %v1786 = vsel %vm172, %v1629, 0
      %v1788 = vsel %vm172, %v1647, 0
      %v1790 = vsel %vm172, %v1665, 0
      %v1792 = vsel %vm172, %v1683, 0
      %v1794 = vsel %vm172, %v1701, 0
      %v1796 = vsel %vm172, %v1719, 0
      %v1798 = vsel %vm172, %v1737, 0
      %v1800 = vsel %vm172, %v1755, 0
      %v1802 = vsel %vm172, %v1773, 0
      %1804 = vmatprep.subr.mxu0 %v561
      %1805 = vmatpush1.msra.mxu0 %v560
      %1806 = vmatprep.subr.mxu0 %v564
      %1807 = vmatpush1.msra.mxu0 %v563
      %1808 = vmatprep.subr.mxu0 %v567
      %1809 = vmatpush1.msra.mxu0 %v566
      %1810 = vmatprep.subr.mxu0 %v570
      %1811 = vmatpush1.msra.mxu0 %v569
      %1812 = vmatprep.subr.mxu0 %v573
      %1813 = vmatpush1.msra.mxu0 %v572
      %1814 = vmatprep.subr.mxu0 %v576
      %1815 = vmatpush1.msra.mxu0 %v575
      %1816 = vmatprep.subr.mxu0 %v579
      %1817 = vmatpush1.msra.mxu0 %v578
      %1818 = vmatprep.subr.mxu0 %v582
      %1819 = vmatpush1.msra.mxu0 %v581
      %1820 = vmatprep.subr.mxu0 %v585
      %1821 = vmatpush1.msra.mxu0 %v584
      %1822 = vmatprep.subr.mxu0 %v588
      %1823 = vmatpush1.msra.mxu0 %v587
      %1824 = vmatprep.subr.mxu0 %v591
      %1825 = vmatpush1.msra.mxu0 %v590
      %1826 = vmatprep.subr.mxu0 %v594
      %1827 = vmatpush1.msra.mxu0 %v593
      %1828 = vmatprep.subr.mxu0 %v597
      %1829 = vmatpush1.msra.mxu0 %v596
      %1830 = vmatprep.subr.mxu0 %v600
      %1831 = vmatpush1.msra.mxu0 %v599
      %1832 = vmatprep.subr.mxu0 %v603
      %1833 = vmatpush1.msra.mxu0 %v602
      %1834 = vmatprep.subr.mxu0 %v606
      %1835 = vmatpush1.msra.mxu0 %v605
      %1836 = vmatprep.subr.mxu0 %v609
      %1837 = vmatpush1.msra.mxu0 %v608
      %1838 = vmatprep.subr.mxu0 %v612
      %1839 = vmatpush1.msra.mxu0 %v611
      %1840 = vmatprep.subr.mxu0 %v615
      %1841 = vmatpush1.msra.mxu0 %v614
      %1842 = vmatprep.subr.mxu0 %v618
      %1843 = vmatpush1.msra.mxu0 %v617
      %1844 = vmatprep.subr.mxu0 %v621
      %1845 = vmatpush1.msra.mxu0 %v620
      %1846 = vmatprep.subr.mxu0 %v624
      %1847 = vmatpush1.msra.mxu0 %v623
      %1848 = vmatprep.subr.mxu0 %v627
      %1849 = vmatpush1.msra.mxu0 %v626
      %1850 = vmatprep.subr.mxu0 %v630
      %1851 = vmatpush1.msra.mxu0 %v629
      %1852 = vmatprep.subr.mxu0 %v633
      %1853 = vmatpush1.msra.mxu0 %v632
      %1854 = vmatprep.subr.mxu0 %v636
      %1855 = vmatpush1.msra.mxu0 %v635
      %1856 = vmatprep.subr.mxu0 %v639
      %1857 = vmatpush1.msra.mxu0 %v638
      %1858 = vmatprep.subr.mxu0 %v642
      %1859 = vmatpush1.msra.mxu0 %v641
      %1860 = vmatprep.subr.mxu0 0.0
      %1861 = vmatpush1.msra.mxu0 0.0
      %1862 = vmatprep.subr.mxu0 0.0
      %1863 = vmatpush1.msra.mxu0 0.0
      %1864 = vmatprep.subr.mxu0 0.0
      %1865 = vmatpush1.msra.mxu0 0.0
      %1866 = vmatprep.subr.mxu0 0.0
      %1867 = vmatpush1.msra.mxu0 0.0
      %1868 = vmatprep.mubr.f32.mxu0 %v1784
      %1869 = vmatmul.mubr.f32.gmra.mrb[0].mxu0 %v1610
      %v1870 = vpop.f32.mrb[0].mxu0
      %v1871 = vadd.f32 %v1421, %v1870
      %v1872 = vpop.f32.mrb[0].mxu0
      %v1873 = vadd.f32 %v1423, %v1872
      %1874 = vmatprep.mubr.f32.mxu0 %v1786
      %1875 = vmatmul.mubr.f32.gmra.mrb[0].mxu0 %v1628
      %v1876 = vpop.f32.mrb[0].mxu0
      %v1877 = vadd.f32 %v1427, %v1876
      %v1878 = vpop.f32.mrb[0].mxu0
      %v1879 = vadd.f32 %v1429, %v1878
      %1880 = vmatprep.mubr.f32.mxu0 %v1788
      %1881 = vmatmul.mubr.f32.gmra.mrb[0].mxu0 %v1646
      %v1882 = vpop.f32.mrb[0].mxu0
      %v1883 = vadd.f32 %v1433, %v1882
      %v1884 = vpop.f32.mrb[0].mxu0
      %v1885 = vadd.f32 %v1435, %v1884
      %1886 = vmatprep.mubr.f32.mxu0 %v1790
      %1887 = vmatmul.mubr.f32.gmra.mrb[0].mxu0 %v1664
      %v1888 = vpop.f32.mrb[0].mxu0
      %v1889 = vadd.f32 %v1439, %v1888
      %v1890 = vpop.f32.mrb[0].mxu0
      %v1891 = vadd.f32 %v1441, %v1890
      %1892 = vmatprep.mubr.f32.mxu0 %v1792
      %1893 = vmatmul.mubr.f32.gmra.mrb[0].mxu0 %v1682
      %v1894 = vpop.f32.mrb[0].mxu0
      %v1895 = vadd.f32 %v1445, %v1894
      %v1896 = vpop.f32.mrb[0].mxu0
      %v1897 = vadd.f32 %v1447, %v1896
      %1898 = vmatprep.mubr.f32.mxu0 %v1794
      %1899 = vmatmul.mubr.f32.gmra.mrb[0].mxu0 %v1700
      %v1900 = vpop.f32.mrb[0].mxu0
      %v1901 = vadd.f32 %v1451, %v1900
      %v1902 = vpop.f32.mrb[0].mxu0
      %v1903 = vadd.f32 %v1453, %v1902
      %1904 = vmatprep.mubr.f32.mxu0 %v1796
      %1905 = vmatmul.mubr.f32.gmra.mrb[0].mxu0 %v1718
      %v1906 = vpop.f32.mrb[0].mxu0
      %v1907 = vadd.f32 %v1457, %v1906
      %v1908 = vpop.f32.mrb[0].mxu0
      %v1909 = vadd.f32 %v1459, %v1908
      %1910 = vmatprep.mubr.f32.mxu0 %v1798
      %1911 = vmatmul.mubr.f32.gmra.mrb[0].mxu0 %v1736
      %v1912 = vpop.f32.mrb[0].mxu0
      %v1913 = vadd.f32 %v1463, %v1912
      %v1914 = vpop.f32.mrb[0].mxu0
      %v1915 = vadd.f32 %v1465, %v1914
      %1916 = vmatprep.mubr.f32.mxu0 %v1800
      %1917 = vmatmul.mubr.f32.gmra.mrb[0].mxu0 %v1754
      %v1918 = vpop.f32.mrb[0].mxu0
      %v1919 = vadd.f32 %v1469, %v1918
      %v1920 = vpop.f32.mrb[0].mxu0
      %v1921 = vadd.f32 %v1471, %v1920
      %1922 = vmatprep.mubr.f32.mxu0 %v1802
      %1923 = vmatmul.mubr.f32.gmra.mrb[0].mxu0 %v1772
      %v1924 = vpop.f32.mrb[0].mxu0
      %v1925 = vadd.f32 %v1475, %v1924
      %v1926 = vpop.f32.mrb[0].mxu0
      %v1927 = vadd.f32 %v1477, %v1926
      %1928 = vdwg.mxu0
      %1929 = vmatprep.subr.mxu0 0.0
      %1930 = vmatpush1.msra.mxu0 %v562
      %1931 = vmatprep.subr.mxu0 0.0
      %1932 = vmatpush1.msra.mxu0 %v565
      %1933 = vmatprep.subr.mxu0 0.0
      %1934 = vmatpush1.msra.mxu0 %v568
      %1935 = vmatprep.subr.mxu0 0.0
      %1936 = vmatpush1.msra.mxu0 %v571
      %1937 = vmatprep.subr.mxu0 0.0
      %1938 = vmatpush1.msra.mxu0 %v574
      %1939 = vmatprep.subr.mxu0 0.0
      %1940 = vmatpush1.msra.mxu0 %v577
      %1941 = vmatprep.subr.mxu0 0.0
      %1942 = vmatpush1.msra.mxu0 %v580
      %1943 = vmatprep.subr.mxu0 0.0
      %1944 = vmatpush1.msra.mxu0 %v583
      %1945 = vmatprep.subr.mxu0 0.0
      %1946 = vmatpush1.msra.mxu0 %v586
      %1947 = vmatprep.subr.mxu0 0.0
      %1948 = vmatpush1.msra.mxu0 %v589
      %1949 = vmatprep.subr.mxu0 0.0
      %1950 = vmatpush1.msra.mxu0 %v592
      %1951 = vmatprep.subr.mxu0 0.0
      %1952 = vmatpush1.msra.mxu0 %v595
      %1953 = vmatprep.subr.mxu0 0.0
      %1954 = vmatpush1.msra.mxu0 %v598
      %1955 = vmatprep.subr.mxu0 0.0
      %1956 = vmatpush1.msra.mxu0 %v601
      %1957 = vmatprep.subr.mxu0 0.0
      %1958 = vmatpush1.msra.mxu0 %v604
      %1959 = vmatprep.subr.mxu0 0.0
      %1960 = vmatpush1.msra.mxu0 %v607
      %1961 = vmatprep.subr.mxu0 0.0
      %1962 = vmatpush1.msra.mxu0 %v610
      %1963 = vmatprep.subr.mxu0 0.0
      %1964 = vmatpush1.msra.mxu0 %v613
      %1965 = vmatprep.subr.mxu0 0.0
      %1966 = vmatpush1.msra.mxu0 %v616
      %1967 = vmatprep.subr.mxu0 0.0
      %1968 = vmatpush1.msra.mxu0 %v619
      %1969 = vmatprep.subr.mxu0 0.0
      %1970 = vmatpush1.msra.mxu0 %v622
      %1971 = vmatprep.subr.mxu0 0.0
      %1972 = vmatpush1.msra.mxu0 %v625
      %1973 = vmatprep.subr.mxu0 0.0
      %1974 = vmatpush1.msra.mxu0 %v628
      %1975 = vmatprep.subr.mxu0 0.0
      %1976 = vmatpush1.msra.mxu0 %v631
      %1977 = vmatprep.subr.mxu0 0.0
      %1978 = vmatpush1.msra.mxu0 %v634
      %1979 = vmatprep.subr.mxu0 0.0
      %1980 = vmatpush1.msra.mxu0 %v637
      %1981 = vmatprep.subr.mxu0 0.0
      %1982 = vmatpush1.msra.mxu0 %v640
      %1983 = vmatprep.subr.mxu0 0.0
      %1984 = vmatpush1.msra.mxu0 %v643
      %1985 = vmatprep.subr.mxu0 0.0
      %1986 = vmatpush1.msra.mxu0 0.0
      %1987 = vmatprep.subr.mxu0 0.0
      %1988 = vmatpush1.msra.mxu0 0.0
      %1989 = vmatprep.subr.mxu0 0.0
      %1990 = vmatpush1.msra.mxu0 0.0
      %1991 = vmatprep.subr.mxu0 0.0
      %1992 = vmatpush1.msra.mxu0 0.0
      %1993 = vmatprep.mubr.f32.mxu0 %v1784
      %1994 = vmatmul.mubr.f32.gmra.mrb[0].mxu0 %v1610
      %v1995 = vpop.f32.mrb[0].mxu0
      %v1996 = vadd.f32 %v1546, %v1995
      %v1997 = vpop.f32.mrb[0].mxu0
      %1998 = vmatprep.mubr.f32.mxu0 %v1786
      %1999 = vmatmul.mubr.f32.gmra.mrb[0].mxu0 %v1628
      %v2000 = vpop.f32.mrb[0].mxu0
      %v2001 = vadd.f32 %v1551, %v2000
      %v2002 = vpop.f32.mrb[0].mxu0
      %2003 = vmatprep.mubr.f32.mxu0 %v1788
      %2004 = vmatmul.mubr.f32.gmra.mrb[0].mxu0 %v1646
      %v2005 = vpop.f32.mrb[0].mxu0
      %v2006 = vadd.f32 %v1556, %v2005
      %v2007 = vpop.f32.mrb[0].mxu0
      %2008 = vmatprep.mubr.f32.mxu0 %v1790
      %2009 = vmatmul.mubr.f32.gmra.mrb[0].mxu0 %v1664
      %v2010 = vpop.f32.mrb[0].mxu0
      %v2011 = vadd.f32 %v1561, %v2010
      %v2012 = vpop.f32.mrb[0].mxu0
      %2013 = vmatprep.mubr.f32.mxu0 %v1792
      %2014 = vmatmul.mubr.f32.gmra.mrb[0].mxu0 %v1682
      %v2015 = vpop.f32.mrb[0].mxu0
      %v2016 = vadd.f32 %v1566, %v2015
      %v2017 = vpop.f32.mrb[0].mxu0
      %2018 = vmatprep.mubr.f32.mxu0 %v1794
      %2019 = vmatmul.mubr.f32.gmra.mrb[0].mxu0 %v1700
      %v2020 = vpop.f32.mrb[0].mxu0
      %v2021 = vadd.f32 %v1571, %v2020
      %v2022 = vpop.f32.mrb[0].mxu0
      %2023 = vmatprep.mubr.f32.mxu0 %v1796
      %2024 = vmatmul.mubr.f32.gmra.mrb[0].mxu0 %v1718
      %v2025 = vpop.f32.mrb[0].mxu0
      %v2026 = vadd.f32 %v1576, %v2025
      %v2027 = vpop.f32.mrb[0].mxu0
      %2028 = vmatprep.mubr.f32.mxu0 %v1798
      %2029 = vmatmul.mubr.f32.gmra.mrb[0].mxu0 %v1736
      %v2030 = vpop.f32.mrb[0].mxu0
      %v2031 = vadd.f32 %v1581, %v2030
      %v2032 = vpop.f32.mrb[0].mxu0
      %2033 = vmatprep.mubr.f32.mxu0 %v1800
      %2034 = vmatmul.mubr.f32.gmra.mrb[0].mxu0 %v1754
      %v2035 = vpop.f32.mrb[0].mxu0
      %v2036 = vadd.f32 %v1586, %v2035
      %v2037 = vpop.f32.mrb[0].mxu0
      %2038 = vmatprep.mubr.f32.mxu0 %v1802
      %2039 = vmatmul.mubr.f32.gmra.mrb[0].mxu0 %v1772
      %v2040 = vpop.f32.mrb[0].mxu0
      %v2041 = vadd.f32 %v1591, %v2040
      %v2042 = vpop.f32.mrb[0].mxu0
      %2043 = vdwg.mxu0
      %v2044 = vld [vmem:[#allocation2] sm:$0xfc]
      %v2045 = vld [vmem:[#allocation2 + $0x8] sm:$0xfc]
      %v2046 = vld [vmem:[#allocation2 + $0x10] sm:$0xf]
      %v2047 = vld [vmem:[#allocation2 + $0x18] sm:$0xf]
      %v2048 = vld [vmem:[#allocation2 + $0x20] sm:$0xfc]
      %v2049 = vld [vmem:[#allocation2 + $0x28] sm:$0xfc]
      %v2050 = vld [vmem:[#allocation2 + $0x30] sm:$0xf]
      %v2051 = vld [vmem:[#allocation2 + $0x38] sm:$0xf]
      %v2052 = vld [vmem:[#allocation2 + $0x40] sm:$0xfc]
      %v2053 = vld [vmem:[#allocation2 + $0x48] sm:$0xfc]
      %v2054 = vld [vmem:[#allocation2 + $0x50] sm:$0xf]
      %v2055 = vld [vmem:[#allocation2 + $0x58] sm:$0xf]
      %v2056 = vld [vmem:[#allocation2 + $0x60] sm:$0xfc]
      %v2057 = vld [vmem:[#allocation2 + $0x68] sm:$0xfc]
      %v2058 = vld [vmem:[#allocation2 + $0x70] sm:$0xf]
      %v2059 = vld [vmem:[#allocation2 + $0x78] sm:$0xf]
      %v2060 = vld [vmem:[#allocation2 + $0x80] sm:$0xfc]
      %v2061 = vld [vmem:[#allocation2 + $0x88] sm:$0xfc]
      %v2062 = vld [vmem:[#allocation2 + $0x90] sm:$0xf]
      %v2063 = vld [vmem:[#allocation2 + $0x98] sm:$0xf]
      %v2064 = vld [vmem:[#allocation2 + $0xa0] sm:$0xfc]
      %v2065 = vld [vmem:[#allocation2 + $0xa8] sm:$0xfc]
      %v2066 = vld [vmem:[#allocation2 + $0xb0] sm:$0xf]
      %v2067 = vld [vmem:[#allocation2 + $0xb8] sm:$0xf]
      %v2068 = vld [vmem:[#allocation2 + $0xc0] sm:$0xfc]
      %v2069 = vld [vmem:[#allocation2 + $0xc8] sm:$0xfc]
      %v2070 = vld [vmem:[#allocation2 + $0xd0] sm:$0xf]
      %v2071 = vld [vmem:[#allocation2 + $0xd8] sm:$0xf]
      %v2072 = vld [vmem:[#allocation2 + $0xe0] sm:$0xfc]
      %v2073 = vld [vmem:[#allocation2 + $0xe8] sm:$0xfc]
      %v2074 = vld [vmem:[#allocation2 + $0xf0] sm:$0xf]
      %v2075 = vld [vmem:[#allocation2 + $0xf8] sm:$0xf]
      %v2108 = vcombine.low %v2044, %v2045
      %v2109 = vcombine.high %v2044, %v2045
      %v2111 = vunpack.c.l.s4 1983009808
      %v2112 = vunpack.c.0.s8 %v2111
      %v2113 = vlaneseq
      %v2114 = vshrl.u32 %v2113, 7
      %v2115 = vsub.s32 %v2112, %v2114
      %v2116 = vrot.slane %v2108, %v2115
      %v2118 = vunpack.c.l.s4 1983009808
      %v2119 = vunpack.c.0.s8 %v2118
      %v2120 = vlaneseq
      %v2121 = vshrl.u32 %v2120, 7
      %v2122 = vsub.s32 %v2119, %v2121
      %v2123 = vrot.slane %v2109, %v2122
      %v2124 = vcombine.high %v2116, %v2116
      %v2125 = vcombine.high %v2123, %v2123
      %v2126 = vcombine.low %v2046, %v2047
      %v2128 = vunpack.c.l.s4 1983009808
      %v2129 = vunpack.c.0.s8 %v2128
      %v2130 = vlaneseq
      %v2131 = vshrl.u32 %v2130, 7
      %v2132 = vsub.s32 %v2129, %v2131
      %v2133 = vrot.slane %v2126, %v2132
      %v2134 = vcombine.high %v2133, %v2133
      %v2135 = vcombine.low %v2048, %v2049
      %v2136 = vcombine.high %v2048, %v2049
      %v2138 = vunpack.c.l.s4 1983009808
      %v2139 = vunpack.c.0.s8 %v2138
      %v2140 = vlaneseq
      %v2141 = vshrl.u32 %v2140, 7
      %v2142 = vsub.s32 %v2139, %v2141
      %v2143 = vrot.slane %v2135, %v2142
      %v2145 = vunpack.c.l.s4 1983009808
      %v2146 = vunpack.c.0.s8 %v2145
      %v2147 = vlaneseq
      %v2148 = vshrl.u32 %v2147, 7
      %v2149 = vsub.s32 %v2146, %v2148
      %v2150 = vrot.slane %v2136, %v2149
      %v2151 = vcombine.high %v2143, %v2143
      %v2152 = vcombine.high %v2150, %v2150
      %v2153 = vcombine.low %v2050, %v2051
      %v2155 = vunpack.c.l.s4 1983009808
      %v2156 = vunpack.c.0.s8 %v2155
      %v2157 = vlaneseq
      %v2158 = vshrl.u32 %v2157, 7
      %v2159 = vsub.s32 %v2156, %v2158
      %v2160 = vrot.slane %v2153, %v2159
      %v2161 = vcombine.high %v2160, %v2160
      %v2162 = vcombine.low %v2052, %v2053
      %v2163 = vcombine.high %v2052, %v2053
      %v2165 = vunpack.c.l.s4 1983009808
      %v2166 = vunpack.c.0.s8 %v2165
      %v2167 = vlaneseq
      %v2168 = vshrl.u32 %v2167, 7
      %v2169 = vsub.s32 %v2166, %v2168
      %v2170 = vrot.slane %v2162, %v2169
      %v2172 = vunpack.c.l.s4 1983009808
      %v2173 = vunpack.c.0.s8 %v2172
      %v2174 = vlaneseq
      %v2175 = vshrl.u32 %v2174, 7
      %v2176 = vsub.s32 %v2173, %v2175
      %v2177 = vrot.slane %v2163, %v2176
      %v2178 = vcombine.high %v2170, %v2170
      %v2179 = vcombine.high %v2177, %v2177
      %v2180 = vcombine.low %v2054, %v2055
      %v2182 = vunpack.c.l.s4 1983009808
      %v2183 = vunpack.c.0.s8 %v2182
      %v2184 = vlaneseq
      %v2185 = vshrl.u32 %v2184, 7
      %v2186 = vsub.s32 %v2183, %v2185
      %v2187 = vrot.slane %v2180, %v2186
      %v2188 = vcombine.high %v2187, %v2187
      %v2189 = vcombine.low %v2056, %v2057
      %v2190 = vcombine.high %v2056, %v2057
      %v2192 = vunpack.c.l.s4 1983009808
      %v2193 = vunpack.c.0.s8 %v2192
      %v2194 = vlaneseq
      %v2195 = vshrl.u32 %v2194, 7
      %v2196 = vsub.s32 %v2193, %v2195
      %v2197 = vrot.slane %v2189, %v2196
      %v2199 = vunpack.c.l.s4 1983009808
      %v2200 = vunpack.c.0.s8 %v2199
      %v2201 = vlaneseq
      %v2202 = vshrl.u32 %v2201, 7
      %v2203 = vsub.s32 %v2200, %v2202
      %v2204 = vrot.slane %v2190, %v2203
      %v2205 = vcombine.high %v2197, %v2197
      %v2206 = vcombine.high %v2204, %v2204
      %v2207 = vcombine.low %v2058, %v2059
      %v2209 = vunpack.c.l.s4 1983009808
      %v2210 = vunpack.c.0.s8 %v2209
      %v2211 = vlaneseq
      %v2212 = vshrl.u32 %v2211, 7
      %v2213 = vsub.s32 %v2210, %v2212
      %v2214 = vrot.slane %v2207, %v2213
      %v2215 = vcombine.high %v2214, %v2214
      %v2216 = vcombine.low %v2060, %v2061
      %v2217 = vcombine.high %v2060, %v2061
      %v2219 = vunpack.c.l.s4 1983009808
      %v2220 = vunpack.c.0.s8 %v2219
      %v2221 = vlaneseq
      %v2222 = vshrl.u32 %v2221, 7
      %v2223 = vsub.s32 %v2220, %v2222
      %v2224 = vrot.slane %v2216, %v2223
      %v2226 = vunpack.c.l.s4 1983009808
      %v2227 = vunpack.c.0.s8 %v2226
      %v2228 = vlaneseq
      %v2229 = vshrl.u32 %v2228, 7
      %v2230 = vsub.s32 %v2227, %v2229
      %v2231 = vrot.slane %v2217, %v2230
      %v2232 = vcombine.high %v2224, %v2224
      %v2233 = vcombine.high %v2231, %v2231
      %v2234 = vcombine.low %v2062, %v2063
      %v2236 = vunpack.c.l.s4 1983009808
      %v2237 = vunpack.c.0.s8 %v2236
      %v2238 = vlaneseq
      %v2239 = vshrl.u32 %v2238, 7
      %v2240 = vsub.s32 %v2237, %v2239
      %v2241 = vrot.slane %v2234, %v2240
      %v2242 = vcombine.high %v2241, %v2241
      %v2243 = vcombine.low %v2064, %v2065
      %v2244 = vcombine.high %v2064, %v2065
      %v2246 = vunpack.c.l.s4 1983009808
      %v2247 = vunpack.c.0.s8 %v2246
      %v2248 = vlaneseq
      %v2249 = vshrl.u32 %v2248, 7
      %v2250 = vsub.s32 %v2247, %v2249
      %v2251 = vrot.slane %v2243, %v2250
      %v2253 = vunpack.c.l.s4 1983009808
      %v2254 = vunpack.c.0.s8 %v2253
      %v2255 = vlaneseq
      %v2256 = vshrl.u32 %v2255, 7
      %v2257 = vsub.s32 %v2254, %v2256
      %v2258 = vrot.slane %v2244, %v2257
      %v2259 = vcombine.high %v2251, %v2251
      %v2260 = vcombine.high %v2258, %v2258
      %v2261 = vcombine.low %v2066, %v2067
      %v2263 = vunpack.c.l.s4 1983009808
      %v2264 = vunpack.c.0.s8 %v2263
      %v2265 = vlaneseq
      %v2266 = vshrl.u32 %v2265, 7
      %v2267 = vsub.s32 %v2264, %v2266
      %v2268 = vrot.slane %v2261, %v2267
      %v2269 = vcombine.high %v2268, %v2268
      %v2270 = vcombine.low %v2068, %v2069
      %v2271 = vcombine.high %v2068, %v2069
      %v2273 = vunpack.c.l.s4 1983009808
      %v2274 = vunpack.c.0.s8 %v2273
      %v2275 = vlaneseq
      %v2276 = vshrl.u32 %v2275, 7
      %v2277 = vsub.s32 %v2274, %v2276
      %v2278 = vrot.slane %v2270, %v2277
      %v2280 = vunpack.c.l.s4 1983009808
      %v2281 = vunpack.c.0.s8 %v2280
      %v2282 = vlaneseq
      %v2283 = vshrl.u32 %v2282, 7
      %v2284 = vsub.s32 %v2281, %v2283
      %v2285 = vrot.slane %v2271, %v2284
      %v2286 = vcombine.high %v2278, %v2278
      %v2287 = vcombine.high %v2285, %v2285
      %v2288 = vcombine.low %v2070, %v2071
      %v2290 = vunpack.c.l.s4 1983009808
      %v2291 = vunpack.c.0.s8 %v2290
      %v2292 = vlaneseq
      %v2293 = vshrl.u32 %v2292, 7
      %v2294 = vsub.s32 %v2291, %v2293
      %v2295 = vrot.slane %v2288, %v2294
      %v2296 = vcombine.high %v2295, %v2295
      %v2297 = vcombine.low %v2072, %v2073
      %v2298 = vcombine.high %v2072, %v2073
      %v2300 = vunpack.c.l.s4 1983009808
      %v2301 = vunpack.c.0.s8 %v2300
      %v2302 = vlaneseq
      %v2303 = vshrl.u32 %v2302, 7
      %v2304 = vsub.s32 %v2301, %v2303
      %v2305 = vrot.slane %v2297, %v2304
      %v2307 = vunpack.c.l.s4 1983009808
      %v2308 = vunpack.c.0.s8 %v2307
      %v2309 = vlaneseq
      %v2310 = vshrl.u32 %v2309, 7
      %v2311 = vsub.s32 %v2308, %v2310
      %v2312 = vrot.slane %v2298, %v2311
      %v2313 = vcombine.high %v2305, %v2305
      %v2314 = vcombine.high %v2312, %v2312
      %v2315 = vcombine.low %v2074, %v2075
      %v2317 = vunpack.c.l.s4 1983009808
      %v2318 = vunpack.c.0.s8 %v2317
      %v2319 = vlaneseq
      %v2320 = vshrl.u32 %v2319, 7
      %v2321 = vsub.s32 %v2318, %v2320
      %v2322 = vrot.slane %v2315, %v2321
      %v2323 = vcombine.high %v2322, %v2322
      %s2324 = scalar_lea.vmem %s1, 1344
      %v2325 = vld [vmem:[%s2324] sm:$0xff]
      %v2326 = vld [vmem:[%s2324 + $0x8] sm:$0xff]
      %v2327 = vld [vmem:[%s2324 + $0x10] sm:$0xff]
      %v2328 = vld [vmem:[%s2324 + $0x18] sm:$0xff]
      %v2329 = vld [vmem:[%s2324 + $0x20] sm:$0xff]
      %v2330 = vld [vmem:[%s2324 + $0x28] sm:$0xff]
      %v2331 = vld [vmem:[%s2324 + $0x30] sm:$0xff]
      %v2332 = vld [vmem:[%s2324 + $0x38] sm:$0xff]
      %v2333 = vld [vmem:[%s2324 + $0x40] sm:$0xff]
      %v2334 = vld [vmem:[%s2324 + $0x48] sm:$0xff]
      %v2335 = vld [vmem:[%s2324 + $0x50] sm:$0xff]
      %v2336 = vld [vmem:[%s2324 + $0x58] sm:$0xff]
      %v2337 = vld [vmem:[%s2324 + $0x60] sm:$0xff]
      %v2338 = vld [vmem:[%s2324 + $0x68] sm:$0xff]
      %v2339 = vld [vmem:[%s2324 + $0x70] sm:$0xff]
      %v2340 = vld [vmem:[%s2324 + $0x78] sm:$0xff]
      %v2341 = vld [vmem:[%s2324 + $0x80] sm:$0xff]
      %v2342 = vld [vmem:[%s2324 + $0x88] sm:$0xff]
      %v2343 = vld [vmem:[%s2324 + $0x90] sm:$0xff]
      %v2344 = vld [vmem:[%s2324 + $0x98] sm:$0xff]
      %v2345 = vld [vmem:[%s2324 + $0xa0] sm:$0xff]
      %v2346 = vld [vmem:[%s2324 + $0xa8] sm:$0xff]
      %v2347 = vld [vmem:[%s2324 + $0xb0] sm:$0xff]
      %v2348 = vld [vmem:[%s2324 + $0xb8] sm:$0xff]
      %v2349 = vld [vmem:[%s2324 + $0xc0] sm:$0xff]
      %v2350 = vld [vmem:[%s2324 + $0xc8] sm:$0xff]
      %v2351 = vld [vmem:[%s2324 + $0xd0] sm:$0xff]
      %v2352 = vld [vmem:[%s2324 + $0xd8] sm:$0xff]
      %v2353 = vld [vmem:[%s2324 + $0xe0] sm:$0xff]
      %v2354 = vld [vmem:[%s2324 + $0xe8] sm:$0xff]
      %v2355 = vld [vmem:[%s2324 + $0xf0] sm:$0xff]
      %v2356 = vld [vmem:[%s2324 + $0xf8] sm:$0xff]
      %v2357 = vld [vmem:[%s2324 + $0x100] sm:$0xff]
      %v2358 = vld [vmem:[%s2324 + $0x108] sm:$0xff]
      %v2359 = vld [vmem:[%s2324 + $0x110] sm:$0xff]
      %v2360 = vld [vmem:[%s2324 + $0x118] sm:$0xff]
      %v2361 = vld [vmem:[%s2324 + $0x120] sm:$0xff]
      %v2362 = vld [vmem:[%s2324 + $0x128] sm:$0xff]
      %v2363 = vld [vmem:[%s2324 + $0x130] sm:$0xff]
      %v2364 = vld [vmem:[%s2324 + $0x138] sm:$0xff]
      %v2365 = vld [vmem:[%s2324 + $0x140] sm:$0xff]
      %v2366 = vld [vmem:[%s2324 + $0x148] sm:$0xff]
      %v2367 = vld [vmem:[%s2324 + $0x150] sm:$0xff]
      %v2368 = vld [vmem:[%s2324 + $0x158] sm:$0xff]
      %v2369 = vld [vmem:[%s2324 + $0x160] sm:$0xff]
      %v2370 = vld [vmem:[%s2324 + $0x168] sm:$0xff]
      %v2371 = vld [vmem:[%s2324 + $0x170] sm:$0xff]
      %v2372 = vld [vmem:[%s2324 + $0x178] sm:$0xff]
      %v2373 = vld [vmem:[%s2324 + $0x180] sm:$0xff]
      %v2374 = vld [vmem:[%s2324 + $0x188] sm:$0xff]
      %v2375 = vld [vmem:[%s2324 + $0x190] sm:$0xff]
      %v2376 = vld [vmem:[%s2324 + $0x198] sm:$0xff]
      %v2377 = vld [vmem:[%s2324 + $0x1a0] sm:$0xff]
      %v2378 = vld [vmem:[%s2324 + $0x1a8] sm:$0xff]
      %v2379 = vld [vmem:[%s2324 + $0x1b0] sm:$0xff]
      %v2380 = vld [vmem:[%s2324 + $0x1b8] sm:$0xff]
      %v2381 = vld [vmem:[%s2324 + $0x1c0] sm:$0xff]
      %v2382 = vld [vmem:[%s2324 + $0x1c8] sm:$0xff]
      %v2383 = vld [vmem:[%s2324 + $0x1d0] sm:$0xff]
      %v2384 = vld [vmem:[%s2324 + $0x1d8] sm:$0xff]
      %v2385 = vld [vmem:[%s2324 + $0x1e0] sm:$0xff]
      %v2386 = vld [vmem:[%s2324 + $0x1e8] sm:$0xff]
      %v2387 = vld [vmem:[%s2324 + $0x1f0] sm:$0xff]
      %v2388 = vld [vmem:[%s2324 + $0x1f8] sm:$0xff]
      %v2389 = vld [vmem:[%s2324 + $0x200] sm:$0xff]
      %v2390 = vld [vmem:[%s2324 + $0x208] sm:$0xff]
      %v2391 = vld [vmem:[%s2324 + $0x210] sm:$0xff]
      %v2392 = vld [vmem:[%s2324 + $0x218] sm:$0xff]
      %v2393 = vld [vmem:[%s2324 + $0x220] sm:$0xff]
      %v2394 = vld [vmem:[%s2324 + $0x228] sm:$0xff]
      %v2395 = vld [vmem:[%s2324 + $0x230] sm:$0xff]
      %v2396 = vld [vmem:[%s2324 + $0x238] sm:$0xff]
      %v2397 = vld [vmem:[%s2324 + $0x240] sm:$0xff]
      %v2398 = vld [vmem:[%s2324 + $0x248] sm:$0xff]
      %v2399 = vld [vmem:[%s2324 + $0x250] sm:$0xff]
      %v2400 = vld [vmem:[%s2324 + $0x258] sm:$0xff]
      %v2401 = vld [vmem:[%s2324 + $0x260] sm:$0xff]
      %v2402 = vld [vmem:[%s2324 + $0x268] sm:$0xff]
      %v2403 = vld [vmem:[%s2324 + $0x270] sm:$0xff]
      %v2404 = vld [vmem:[%s2324 + $0x278] sm:$0xff]
      %v2405 = vld [vmem:[%s2324 + $0x280] sm:$0xff]
      %v2406 = vld [vmem:[%s2324 + $0x288] sm:$0xff]
      %v2407 = vld [vmem:[%s2324 + $0x290] sm:$0xff]
      %v2408 = vld [vmem:[%s2324 + $0x298] sm:$0xff]
      %v2409 = vcombine.low %v2124, %v2123
      %v2410 = vcombine.low %v2125, %v2133
      %v2412 = vunpack.c.l.s4 1983009808
      %v2413 = vunpack.c.0.s8 %v2412
      %v2414 = vlaneseq
      %v2415 = vshrl.u32 %v2414, 7
      %v2416 = vsub.s32 %v2413, %v2415
      %v2417 = vrot.slane %v2409, %v2416
      %v2419 = vunpack.c.l.s4 1983009808
      %v2420 = vunpack.c.0.s8 %v2419
      %v2421 = vlaneseq
      %v2422 = vshrl.u32 %v2421, 7
      %v2423 = vsub.s32 %v2420, %v2422
      %v2424 = vrot.slane %v2410, %v2423
      %v2425 = vcombine.low %v2417, %v2424
      %v2426 = vcombine.high %v2417, %v2424
      %v2427 = vcombine.low %v2134, %v2151
      %v2428 = vcombine.low %v2150, %v2152
      %v2430 = vunpack.c.l.s4 1983009808
      %v2431 = vunpack.c.0.s8 %v2430
      %v2432 = vlaneseq
      %v2433 = vshrl.u32 %v2432, 7
      %v2434 = vsub.s32 %v2431, %v2433
      %v2435 = vrot.slane %v2427, %v2434
      %v2437 = vunpack.c.l.s4 1983009808
      %v2438 = vunpack.c.0.s8 %v2437
      %v2439 = vlaneseq
      %v2440 = vshrl.u32 %v2439, 7
      %v2441 = vsub.s32 %v2438, %v2440
      %v2442 = vrot.slane %v2428, %v2441
      %v2443 = vcombine.low %v2435, %v2442
      %v2444 = vcombine.high %v2435, %v2442
      %v2445 = vcombine.low %v2160, %v2161
      %v2446 = vcombine.low %v2178, %v2177
      %v2448 = vunpack.c.l.s4 1983009808
      %v2449 = vunpack.c.0.s8 %v2448
      %v2450 = vlaneseq
      %v2451 = vshrl.u32 %v2450, 7
      %v2452 = vsub.s32 %v2449, %v2451
      %v2453 = vrot.slane %v2445, %v2452
      %v2455 = vunpack.c.l.s4 1983009808
      %v2456 = vunpack.c.0.s8 %v2455
      %v2457 = vlaneseq
      %v2458 = vshrl.u32 %v2457, 7
      %v2459 = vsub.s32 %v2456, %v2458
      %v2460 = vrot.slane %v2446, %v2459
      %v2461 = vcombine.low %v2453, %v2460
      %v2462 = vcombine.high %v2453, %v2460
      %v2463 = vcombine.low %v2179, %v2187
      %v2464 = vcombine.low %v2188, %v2205
      %v2466 = vunpack.c.l.s4 1983009808
      %v2467 = vunpack.c.0.s8 %v2466
      %v2468 = vlaneseq
      %v2469 = vshrl.u32 %v2468, 7
      %v2470 = vsub.s32 %v2467, %v2469
      %v2471 = vrot.slane %v2463, %v2470
      %v2473 = vunpack.c.l.s4 1983009808
      %v2474 = vunpack.c.0.s8 %v2473
      %v2475 = vlaneseq
      %v2476 = vshrl.u32 %v2475, 7
      %v2477 = vsub.s32 %v2474, %v2476
      %v2478 = vrot.slane %v2464, %v2477
      %v2479 = vcombine.low %v2471, %v2478
      %v2480 = vcombine.high %v2471, %v2478
      %v2481 = vcombine.low %v2204, %v2206
      %v2482 = vcombine.low %v2214, %v2215
      %v2484 = vunpack.c.l.s4 1983009808
      %v2485 = vunpack.c.0.s8 %v2484
      %v2486 = vlaneseq
      %v2487 = vshrl.u32 %v2486, 7
      %v2488 = vsub.s32 %v2485, %v2487
      %v2489 = vrot.slane %v2481, %v2488
      %v2491 = vunpack.c.l.s4 1983009808
      %v2492 = vunpack.c.0.s8 %v2491
      %v2493 = vlaneseq
      %v2494 = vshrl.u32 %v2493, 7
      %v2495 = vsub.s32 %v2492, %v2494
      %v2496 = vrot.slane %v2482, %v2495
      %v2497 = vcombine.low %v2489, %v2496
      %v2498 = vcombine.high %v2489, %v2496
      %v2499 = vcombine.low %v2232, %v2231
      %v2500 = vcombine.low %v2233, %v2241
      %v2502 = vunpack.c.l.s4 1983009808
      %v2503 = vunpack.c.0.s8 %v2502
      %v2504 = vlaneseq
      %v2505 = vshrl.u32 %v2504, 7
      %v2506 = vsub.s32 %v2503, %v2505
      %v2507 = vrot.slane %v2499, %v2506
      %v2509 = vunpack.c.l.s4 1983009808
      %v2510 = vunpack.c.0.s8 %v2509
      %v2511 = vlaneseq
      %v2512 = vshrl.u32 %v2511, 7
      %v2513 = vsub.s32 %v2510, %v2512
      %v2514 = vrot.slane %v2500, %v2513
      %v2515 = vcombine.low %v2507, %v2514
      %v2516 = vcombine.high %v2507, %v2514
      %v2517 = vcombine.low %v2242, %v2259
      %v2518 = vcombine.low %v2258, %v2260
      %v2520 = vunpack.c.l.s4 1983009808
      %v2521 = vunpack.c.0.s8 %v2520
      %v2522 = vlaneseq
      %v2523 = vshrl.u32 %v2522, 7
      %v2524 = vsub.s32 %v2521, %v2523
      %v2525 = vrot.slane %v2517, %v2524
      %v2527 = vunpack.c.l.s4 1983009808
      %v2528 = vunpack.c.0.s8 %v2527
      %v2529 = vlaneseq
      %v2530 = vshrl.u32 %v2529, 7
      %v2531 = vsub.s32 %v2528, %v2530
      %v2532 = vrot.slane %v2518, %v2531
      %v2533 = vcombine.low %v2525, %v2532
      %v2534 = vcombine.high %v2525, %v2532
      %v2535 = vcombine.low %v2268, %v2269
      %v2536 = vcombine.low %v2286, %v2285
      %v2538 = vunpack.c.l.s4 1983009808
      %v2539 = vunpack.c.0.s8 %v2538
      %v2540 = vlaneseq
      %v2541 = vshrl.u32 %v2540, 7
      %v2542 = vsub.s32 %v2539, %v2541
      %v2543 = vrot.slane %v2535, %v2542
      %v2545 = vunpack.c.l.s4 1983009808
      %v2546 = vunpack.c.0.s8 %v2545
      %v2547 = vlaneseq
      %v2548 = vshrl.u32 %v2547, 7
      %v2549 = vsub.s32 %v2546, %v2548
      %v2550 = vrot.slane %v2536, %v2549
      %v2551 = vcombine.low %v2543, %v2550
      %v2552 = vcombine.high %v2543, %v2550
      %v2553 = vcombine.low %v2287, %v2295
      %v2554 = vcombine.low %v2296, %v2313
      %v2556 = vunpack.c.l.s4 1983009808
      %v2557 = vunpack.c.0.s8 %v2556
      %v2558 = vlaneseq
      %v2559 = vshrl.u32 %v2558, 7
      %v2560 = vsub.s32 %v2557, %v2559
      %v2561 = vrot.slane %v2553, %v2560
      %v2563 = vunpack.c.l.s4 1983009808
      %v2564 = vunpack.c.0.s8 %v2563
      %v2565 = vlaneseq
      %v2566 = vshrl.u32 %v2565, 7
      %v2567 = vsub.s32 %v2564, %v2566
      %v2568 = vrot.slane %v2554, %v2567
      %v2569 = vcombine.low %v2561, %v2568
      %v2570 = vcombine.high %v2561, %v2568
      %v2571 = vcombine.low %v2312, %v2314
      %v2572 = vcombine.low %v2322, %v2323
      %v2574 = vunpack.c.l.s4 1983009808
      %v2575 = vunpack.c.0.s8 %v2574
      %v2576 = vlaneseq
      %v2577 = vshrl.u32 %v2576, 7
      %v2578 = vsub.s32 %v2575, %v2577
      %v2579 = vrot.slane %v2571, %v2578
      %v2581 = vunpack.c.l.s4 1983009808
      %v2582 = vunpack.c.0.s8 %v2581
      %v2583 = vlaneseq
      %v2584 = vshrl.u32 %v2583, 7
      %v2585 = vsub.s32 %v2582, %v2584
      %v2586 = vrot.slane %v2572, %v2585
      %v2587 = vcombine.low %v2579, %v2586
      %v2588 = vcombine.high %v2579, %v2586
      %v2599 = vsel %vm172, %v2426, 0
      %v2601 = vsel %vm172, %v2444, 0
      %v2603 = vsel %vm172, %v2462, 0
      %v2605 = vsel %vm172, %v2480, 0
      %v2607 = vsel %vm172, %v2498, 0
      %v2609 = vsel %vm172, %v2516, 0
      %v2611 = vsel %vm172, %v2534, 0
      %v2613 = vsel %vm172, %v2552, 0
      %v2615 = vsel %vm172, %v2570, 0
      %v2617 = vsel %vm172, %v2588, 0
      %2619 = vmatprep.subr.mxu0 %v2326
      %2620 = vmatpush1.msra.mxu0 %v2325
      %2621 = vmatprep.subr.mxu0 %v2329
      %2622 = vmatpush1.msra.mxu0 %v2328
      %2623 = vmatprep.subr.mxu0 %v2332
      %2624 = vmatpush1.msra.mxu0 %v2331
      %2625 = vmatprep.subr.mxu0 %v2335
      %2626 = vmatpush1.msra.mxu0 %v2334
      %2627 = vmatprep.subr.mxu0 %v2338
      %2628 = vmatpush1.msra.mxu0 %v2337
      %2629 = vmatprep.subr.mxu0 %v2341
      %2630 = vmatpush1.msra.mxu0 %v2340
      %2631 = vmatprep.subr.mxu0 %v2344
      %2632 = vmatpush1.msra.mxu0 %v2343
      %2633 = vmatprep.subr.mxu0 %v2347
      %2634 = vmatpush1.msra.mxu0 %v2346
      %2635 = vmatprep.subr.mxu0 %v2350
      %2636 = vmatpush1.msra.mxu0 %v2349
      %2637 = vmatprep.subr.mxu0 %v2353
      %2638 = vmatpush1.msra.mxu0 %v2352
      %2639 = vmatprep.subr.mxu0 %v2356
      %2640 = vmatpush1.msra.mxu0 %v2355
      %2641 = vmatprep.subr.mxu0 %v2359
      %2642 = vmatpush1.msra.mxu0 %v2358
      %2643 = vmatprep.subr.mxu0 %v2362
      %2644 = vmatpush1.msra.mxu0 %v2361
      %2645 = vmatprep.subr.mxu0 %v2365
      %2646 = vmatpush1.msra.mxu0 %v2364
      %2647 = vmatprep.subr.mxu0 %v2368
      %2648 = vmatpush1.msra.mxu0 %v2367
      %2649 = vmatprep.subr.mxu0 %v2371
      %2650 = vmatpush1.msra.mxu0 %v2370
      %2651 = vmatprep.subr.mxu0 %v2374
      %2652 = vmatpush1.msra.mxu0 %v2373
      %2653 = vmatprep.subr.mxu0 %v2377
      %2654 = vmatpush1.msra.mxu0 %v2376
      %2655 = vmatprep.subr.mxu0 %v2380
      %2656 = vmatpush1.msra.mxu0 %v2379
      %2657 = vmatprep.subr.mxu0 %v2383
      %2658 = vmatpush1.msra.mxu0 %v2382
      %2659 = vmatprep.subr.mxu0 %v2386
      %2660 = vmatpush1.msra.mxu0 %v2385
      %2661 = vmatprep.subr.mxu0 %v2389
      %2662 = vmatpush1.msra.mxu0 %v2388
      %2663 = vmatprep.subr.mxu0 %v2392
      %2664 = vmatpush1.msra.mxu0 %v2391
      %2665 = vmatprep.subr.mxu0 %v2395
      %2666 = vmatpush1.msra.mxu0 %v2394
      %2667 = vmatprep.subr.mxu0 %v2398
      %2668 = vmatpush1.msra.mxu0 %v2397
      %2669 = vmatprep.subr.mxu0 %v2401
      %2670 = vmatpush1.msra.mxu0 %v2400
      %2671 = vmatprep.subr.mxu0 %v2404
      %2672 = vmatpush1.msra.mxu0 %v2403
      %2673 = vmatprep.subr.mxu0 %v2407
      %2674 = vmatpush1.msra.mxu0 %v2406
      %2675 = vmatprep.subr.mxu0 0.0
      %2676 = vmatpush1.msra.mxu0 0.0
      %2677 = vmatprep.subr.mxu0 0.0
      %2678 = vmatpush1.msra.mxu0 0.0
      %2679 = vmatprep.subr.mxu0 0.0
      %2680 = vmatpush1.msra.mxu0 0.0
      %2681 = vmatprep.subr.mxu0 0.0
      %2682 = vmatpush1.msra.mxu0 0.0
      %2683 = vmatprep.mubr.f32.mxu0 %v2599
      %2684 = vmatmul.mubr.f32.gmra.mrb[0].mxu0 %v2425
      %v2685 = vpop.f32.mrb[0].mxu0
      %v2686 = vadd.f32 0.0, %v2685
      %v2687 = vpop.f32.mrb[0].mxu0
      %v2688 = vadd.f32 0.0, %v2687
      %2689 = vmatprep.mubr.f32.mxu0 %v2601
      %2690 = vmatmul.mubr.f32.gmra.mrb[0].mxu0 %v2443
      %v2691 = vpop.f32.mrb[0].mxu0
      %v2692 = vadd.f32 0.0, %v2691
      %v2693 = vpop.f32.mrb[0].mxu0
      %v2694 = vadd.f32 0.0, %v2693
      %2695 = vmatprep.mubr.f32.mxu0 %v2603
      %2696 = vmatmul.mubr.f32.gmra.mrb[0].mxu0 %v2461
      %v2697 = vpop.f32.mrb[0].mxu0
      %v2698 = vadd.f32 0.0, %v2697
      %v2699 = vpop.f32.mrb[0].mxu0
      %v2700 = vadd.f32 0.0, %v2699
      %2701 = vmatprep.mubr.f32.mxu0 %v2605
      %2702 = vmatmul.mubr.f32.gmra.mrb[0].mxu0 %v2479
      %v2703 = vpop.f32.mrb[0].mxu0
      %v2704 = vadd.f32 0.0, %v2703
      %v2705 = vpop.f32.mrb[0].mxu0
      %v2706 = vadd.f32 0.0, %v2705
      %2707 = vmatprep.mubr.f32.mxu0 %v2607
      %2708 = vmatmul.mubr.f32.gmra.mrb[0].mxu0 %v2497
      %v2709 = vpop.f32.mrb[0].mxu0
      %v2710 = vadd.f32 0.0, %v2709
      %v2711 = vpop.f32.mrb[0].mxu0
      %v2712 = vadd.f32 0.0, %v2711
      %2713 = vmatprep.mubr.f32.mxu0 %v2609
      %2714 = vmatmul.mubr.f32.gmra.mrb[0].mxu0 %v2515
      %v2715 = vpop.f32.mrb[0].mxu0
      %v2716 = vadd.f32 0.0, %v2715
      %v2717 = vpop.f32.mrb[0].mxu0
      %v2718 = vadd.f32 0.0, %v2717
      %2719 = vmatprep.mubr.f32.mxu0 %v2611
      %2720 = vmatmul.mubr.f32.gmra.mrb[0].mxu0 %v2533
      %v2721 = vpop.f32.mrb[0].mxu0
      %v2722 = vadd.f32 0.0, %v2721
      %v2723 = vpop.f32.mrb[0].mxu0
      %v2724 = vadd.f32 0.0, %v2723
      %2725 = vmatprep.mubr.f32.mxu0 %v2613
      %2726 = vmatmul.mubr.f32.gmra.mrb[0].mxu0 %v2551
      %v2727 = vpop.f32.mrb[0].mxu0
      %v2728 = vadd.f32 0.0, %v2727
      %v2729 = vpop.f32.mrb[0].mxu0
      %v2730 = vadd.f32 0.0, %v2729
      %2731 = vmatprep.mubr.f32.mxu0 %v2615
      %2732 = vmatmul.mubr.f32.gmra.mrb[0].mxu0 %v2569
      %v2733 = vpop.f32.mrb[0].mxu0
      %v2734 = vadd.f32 0.0, %v2733
      %v2735 = vpop.f32.mrb[0].mxu0
      %v2736 = vadd.f32 0.0, %v2735
      %2737 = vmatprep.mubr.f32.mxu0 %v2617
      %2738 = vmatmul.mubr.f32.gmra.mrb[0].mxu0 %v2587
      %v2739 = vpop.f32.mrb[0].mxu0
      %v2740 = vadd.f32 0.0, %v2739
      %v2741 = vpop.f32.mrb[0].mxu0
      %v2742 = vadd.f32 0.0, %v2741
      %2743 = vdwg.mxu0
      %2744 = vmatprep.subr.mxu0 0.0
      %2745 = vmatpush1.msra.mxu0 %v2327
      %2746 = vmatprep.subr.mxu0 0.0
      %2747 = vmatpush1.msra.mxu0 %v2330
      %2748 = vmatprep.subr.mxu0 0.0
      %2749 = vmatpush1.msra.mxu0 %v2333
      %2750 = vmatprep.subr.mxu0 0.0
      %2751 = vmatpush1.msra.mxu0 %v2336
      %2752 = vmatprep.subr.mxu0 0.0
      %2753 = vmatpush1.msra.mxu0 %v2339
      %2754 = vmatprep.subr.mxu0 0.0
      %2755 = vmatpush1.msra.mxu0 %v2342
      %2756 = vmatprep.subr.mxu0 0.0
      %2757 = vmatpush1.msra.mxu0 %v2345
      %2758 = vmatprep.subr.mxu0 0.0
      %2759 = vmatpush1.msra.mxu0 %v2348
      %2760 = vmatprep.subr.mxu0 0.0
      %2761 = vmatpush1.msra.mxu0 %v2351
      %2762 = vmatprep.subr.mxu0 0.0
      %2763 = vmatpush1.msra.mxu0 %v2354
      %2764 = vmatprep.subr.mxu0 0.0
      %2765 = vmatpush1.msra.mxu0 %v2357
      %2766 = vmatprep.subr.mxu0 0.0
      %2767 = vmatpush1.msra.mxu0 %v2360
      %2768 = vmatprep.subr.mxu0 0.0
      %2769 = vmatpush1.msra.mxu0 %v2363
      %2770 = vmatprep.subr.mxu0 0.0
      %2771 = vmatpush1.msra.mxu0 %v2366
      %2772 = vmatprep.subr.mxu0 0.0
      %2773 = vmatpush1.msra.mxu0 %v2369
      %2774 = vmatprep.subr.mxu0 0.0
      %2775 = vmatpush1.msra.mxu0 %v2372
      %2776 = vmatprep.subr.mxu0 0.0
      %2777 = vmatpush1.msra.mxu0 %v2375
      %2778 = vmatprep.subr.mxu0 0.0
      %2779 = vmatpush1.msra.mxu0 %v2378
      %2780 = vmatprep.subr.mxu0 0.0
      %2781 = vmatpush1.msra.mxu0 %v2381
      %2782 = vmatprep.subr.mxu0 0.0
      %2783 = vmatpush1.msra.mxu0 %v2384
      %2784 = vmatprep.subr.mxu0 0.0
      %2785 = vmatpush1.msra.mxu0 %v2387
      %2786 = vmatprep.subr.mxu0 0.0
      %2787 = vmatpush1.msra.mxu0 %v2390
      %2788 = vmatprep.subr.mxu0 0.0
      %2789 = vmatpush1.msra.mxu0 %v2393
      %2790 = vmatprep.subr.mxu0 0.0
      %2791 = vmatpush1.msra.mxu0 %v2396
      %2792 = vmatprep.subr.mxu0 0.0
      %2793 = vmatpush1.msra.mxu0 %v2399
      %2794 = vmatprep.subr.mxu0 0.0
      %2795 = vmatpush1.msra.mxu0 %v2402
      %2796 = vmatprep.subr.mxu0 0.0
      %2797 = vmatpush1.msra.mxu0 %v2405
      %2798 = vmatprep.subr.mxu0 0.0
      %2799 = vmatpush1.msra.mxu0 %v2408
      %2800 = vmatprep.subr.mxu0 0.0
      %2801 = vmatpush1.msra.mxu0 0.0
      %2802 = vmatprep.subr.mxu0 0.0
      %2803 = vmatpush1.msra.mxu0 0.0
      %2804 = vmatprep.subr.mxu0 0.0
      %2805 = vmatpush1.msra.mxu0 0.0
      %2806 = vmatprep.subr.mxu0 0.0
      %2807 = vmatpush1.msra.mxu0 0.0
      %2808 = vmatprep.mubr.f32.mxu0 %v2599
      %2809 = vmatmul.mubr.f32.gmra.mrb[0].mxu0 %v2425
      %v2810 = vpop.f32.mrb[0].mxu0
      %v2811 = vadd.f32 0.0, %v2810
      %v2812 = vpop.f32.mrb[0].mxu0
      %2813 = vmatprep.mubr.f32.mxu0 %v2601
      %2814 = vmatmul.mubr.f32.gmra.mrb[0].mxu0 %v2443
      %v2815 = vpop.f32.mrb[0].mxu0
      %v2816 = vadd.f32 0.0, %v2815
      %v2817 = vpop.f32.mrb[0].mxu0
      %2818 = vmatprep.mubr.f32.mxu0 %v2603
      %2819 = vmatmul.mubr.f32.gmra.mrb[0].mxu0 %v2461
      %v2820 = vpop.f32.mrb[0].mxu0
      %v2821 = vadd.f32 0.0, %v2820
      %v2822 = vpop.f32.mrb[0].mxu0
      %2823 = vmatprep.mubr.f32.mxu0 %v2605
      %2824 = vmatmul.mubr.f32.gmra.mrb[0].mxu0 %v2479
      %v2825 = vpop.f32.mrb[0].mxu0
      %v2826 = vadd.f32 0.0, %v2825
      %v2827 = vpop.f32.mrb[0].mxu0
      %2828 = vmatprep.mubr.f32.mxu0 %v2607
      %2829 = vmatmul.mubr.f32.gmra.mrb[0].mxu0 %v2497
      %v2830 = vpop.f32.mrb[0].mxu0
      %v2831 = vadd.f32 0.0, %v2830
      %v2832 = vpop.f32.mrb[0].mxu0
      %2833 = vmatprep.mubr.f32.mxu0 %v2609
      %2834 = vmatmul.mubr.f32.gmra.mrb[0].mxu0 %v2515
      %v2835 = vpop.f32.mrb[0].mxu0
      %v2836 = vadd.f32 0.0, %v2835
      %v2837 = vpop.f32.mrb[0].mxu0
      %2838 = vmatprep.mubr.f32.mxu0 %v2611
      %2839 = vmatmul.mubr.f32.gmra.mrb[0].mxu0 %v2533
      %v2840 = vpop.f32.mrb[0].mxu0
      %v2841 = vadd.f32 0.0, %v2840
      %v2842 = vpop.f32.mrb[0].mxu0
      %2843 = vmatprep.mubr.f32.mxu0 %v2613
      %2844 = vmatmul.mubr.f32.gmra.mrb[0].mxu0 %v2551
      %v2845 = vpop.f32.mrb[0].mxu0
      %v2846 = vadd.f32 0.0, %v2845
      %v2847 = vpop.f32.mrb[0].mxu0
      %2848 = vmatprep.mubr.f32.mxu0 %v2615
      %2849 = vmatmul.mubr.f32.gmra.mrb[0].mxu0 %v2569
      %v2850 = vpop.f32.mrb[0].mxu0
      %v2851 = vadd.f32 0.0, %v2850
      %v2852 = vpop.f32.mrb[0].mxu0
      %2853 = vmatprep.mubr.f32.mxu0 %v2617
      %2854 = vmatmul.mubr.f32.gmra.mrb[0].mxu0 %v2587
      %v2855 = vpop.f32.mrb[0].mxu0
      %v2856 = vadd.f32 0.0, %v2855
      %v2857 = vpop.f32.mrb[0].mxu0
      %2858 = vdwg.mxu0
      %v2859 = vadd.f32 %v1871, %v2686
      %v2860 = vadd.f32 %v1873, %v2688
      %v2861 = vadd.f32 %v1996, %v2811
      %v2862 = vadd.f32 %v1877, %v2692
      %v2863 = vadd.f32 %v1879, %v2694
      %v2864 = vadd.f32 %v2001, %v2816
      %v2865 = vadd.f32 %v1883, %v2698
      %v2866 = vadd.f32 %v1885, %v2700
      %v2867 = vadd.f32 %v2006, %v2821
      %v2868 = vadd.f32 %v1889, %v2704
      %v2869 = vadd.f32 %v1891, %v2706
      %v2870 = vadd.f32 %v2011, %v2826
      %v2871 = vadd.f32 %v1895, %v2710
      %v2872 = vadd.f32 %v1897, %v2712
      %v2873 = vadd.f32 %v2016, %v2831
      %v2874 = vadd.f32 %v1901, %v2716
      %v2875 = vadd.f32 %v1903, %v2718
      %v2876 = vadd.f32 %v2021, %v2836
      %v2877 = vadd.f32 %v1907, %v2722
      %v2878 = vadd.f32 %v1909, %v2724
      %v2879 = vadd.f32 %v2026, %v2841
      %v2880 = vadd.f32 %v1913, %v2728
      %v2881 = vadd.f32 %v1915, %v2730
      %v2882 = vadd.f32 %v2031, %v2846
      %v2883 = vadd.f32 %v1919, %v2734
      %v2884 = vadd.f32 %v1921, %v2736
      %v2885 = vadd.f32 %v2036, %v2851
      %v2886 = vadd.f32 %v1925, %v2740
      %v2887 = vadd.f32 %v1927, %v2742
      %v2888 = vadd.f32 %v2041, %v2856
      %s2889 = scalar_lea.vmem [#allocation2], 32
      %v2890 = vld [vmem:[%s2889] sm:$0xff]
      %v2891 = vld [vmem:[%s2889 + $0x8] sm:$0xff]
      %v2892 = vld [vmem:[%s2889 + $0x10] sm:$0x3]
      %v2893 = vld [vmem:[%s2889 + $0x18] sm:$0x3]
      %v2894 = vld [vmem:[%s2889 + $0x20] sm:$0xff]
      %v2895 = vld [vmem:[%s2889 + $0x28] sm:$0xff]
      %v2896 = vld [vmem:[%s2889 + $0x30] sm:$0x3]
      %v2897 = vld [vmem:[%s2889 + $0x38] sm:$0x3]
      %v2898 = vld [vmem:[%s2889 + $0x40] sm:$0xff]
      %v2899 = vld [vmem:[%s2889 + $0x48] sm:$0xff]
      %v2900 = vld [vmem:[%s2889 + $0x50] sm:$0x3]
      %v2901 = vld [vmem:[%s2889 + $0x58] sm:$0x3]
      %v2902 = vld [vmem:[%s2889 + $0x60] sm:$0xff]
      %v2903 = vld [vmem:[%s2889 + $0x68] sm:$0xff]
      %v2904 = vld [vmem:[%s2889 + $0x70] sm:$0x3]
      %v2905 = vld [vmem:[%s2889 + $0x78] sm:$0x3]
      %v2906 = vld [vmem:[%s2889 + $0x80] sm:$0xff]
      %v2907 = vld [vmem:[%s2889 + $0x88] sm:$0xff]
      %v2908 = vld [vmem:[%s2889 + $0x90] sm:$0x3]
      %v2909 = vld [vmem:[%s2889 + $0x98] sm:$0x3]
      %v2910 = vld [vmem:[%s2889 + $0xa0] sm:$0xff]
      %v2911 = vld [vmem:[%s2889 + $0xa8] sm:$0xff]
      %v2912 = vld [vmem:[%s2889 + $0xb0] sm:$0x3]
      %v2913 = vld [vmem:[%s2889 + $0xb8] sm:$0x3]
      %v2914 = vld [vmem:[%s2889 + $0xc0] sm:$0xff]
      %v2915 = vld [vmem:[%s2889 + $0xc8] sm:$0xff]
      %v2916 = vld [vmem:[%s2889 + $0xd0] sm:$0x3]
      %v2917 = vld [vmem:[%s2889 + $0xd8] sm:$0x3]
      %v2918 = vld [vmem:[%s2889 + $0xe0] sm:$0xff]
      %v2919 = vld [vmem:[%s2889 + $0xe8] sm:$0xff]
      %v2920 = vld [vmem:[%s2889 + $0xf0] sm:$0x3]
      %v2921 = vld [vmem:[%s2889 + $0xf8] sm:$0x3]
      %v2954 = vcombine.low %v2890, %v2891
      %v2955 = vcombine.high %v2890, %v2891
      %v2957 = vunpack.c.l.s4 1983009808
      %v2958 = vunpack.c.0.s8 %v2957
      %v2959 = vlaneseq
      %v2960 = vshrl.u32 %v2959, 7
      %v2961 = vsub.s32 %v2958, %v2960
      %v2962 = vrot.slane %v2954, %v2961
      %v2964 = vunpack.c.l.s4 1983009808
      %v2965 = vunpack.c.0.s8 %v2964
      %v2966 = vlaneseq
      %v2967 = vshrl.u32 %v2966, 7
      %v2968 = vsub.s32 %v2965, %v2967
      %v2969 = vrot.slane %v2955, %v2968
      %v2970 = vcombine.high %v2962, %v2962
      %v2971 = vcombine.high %v2969, %v2969
      %v2972 = vcombine.low %v2892, %v2893
      %v2974 = vunpack.c.l.s4 1983009808
      %v2975 = vunpack.c.0.s8 %v2974
      %v2976 = vlaneseq
      %v2977 = vshrl.u32 %v2976, 7
      %v2978 = vsub.s32 %v2975, %v2977
      %v2979 = vrot.slane %v2972, %v2978
      %v2980 = vcombine.low %v2894, %v2895
      %v2981 = vcombine.high %v2894, %v2895
      %v2983 = vunpack.c.l.s4 1983009808
      %v2984 = vunpack.c.0.s8 %v2983
      %v2985 = vlaneseq
      %v2986 = vshrl.u32 %v2985, 7
      %v2987 = vsub.s32 %v2984, %v2986
      %v2988 = vrot.slane %v2980, %v2987
      %v2990 = vunpack.c.l.s4 1983009808
      %v2991 = vunpack.c.0.s8 %v2990
      %v2992 = vlaneseq
      %v2993 = vshrl.u32 %v2992, 7
      %v2994 = vsub.s32 %v2991, %v2993
      %v2995 = vrot.slane %v2981, %v2994
      %v2996 = vcombine.high %v2988, %v2988
      %v2997 = vcombine.high %v2995, %v2995
      %v2998 = vcombine.low %v2896, %v2897
      %v3000 = vunpack.c.l.s4 1983009808
      %v3001 = vunpack.c.0.s8 %v3000
      %v3002 = vlaneseq
      %v3003 = vshrl.u32 %v3002, 7
      %v3004 = vsub.s32 %v3001, %v3003
      %v3005 = vrot.slane %v2998, %v3004
      %v3006 = vcombine.low %v2898, %v2899
      %v3007 = vcombine.high %v2898, %v2899
      %v3009 = vunpack.c.l.s4 1983009808
      %v3010 = vunpack.c.0.s8 %v3009
      %v3011 = vlaneseq
      %v3012 = vshrl.u32 %v3011, 7
      %v3013 = vsub.s32 %v3010, %v3012
      %v3014 = vrot.slane %v3006, %v3013
      %v3016 = vunpack.c.l.s4 1983009808
      %v3017 = vunpack.c.0.s8 %v3016
      %v3018 = vlaneseq
      %v3019 = vshrl.u32 %v3018, 7
      %v3020 = vsub.s32 %v3017, %v3019
      %v3021 = vrot.slane %v3007, %v3020
      %v3022 = vcombine.high %v3014, %v3014
      %v3023 = vcombine.high %v3021, %v3021
      %v3024 = vcombine.low %v2900, %v2901
      %v3026 = vunpack.c.l.s4 1983009808
      %v3027 = vunpack.c.0.s8 %v3026
      %v3028 = vlaneseq
      %v3029 = vshrl.u32 %v3028, 7
      %v3030 = vsub.s32 %v3027, %v3029
      %v3031 = vrot.slane %v3024, %v3030
      %v3032 = vcombine.low %v2902, %v2903
      %v3033 = vcombine.high %v2902, %v2903
      %v3035 = vunpack.c.l.s4 1983009808
      %v3036 = vunpack.c.0.s8 %v3035
      %v3037 = vlaneseq
      %v3038 = vshrl.u32 %v3037, 7
      %v3039 = vsub.s32 %v3036, %v3038
      %v3040 = vrot.slane %v3032, %v3039
      %v3042 = vunpack.c.l.s4 1983009808
      %v3043 = vunpack.c.0.s8 %v3042
      %v3044 = vlaneseq
      %v3045 = vshrl.u32 %v3044, 7
      %v3046 = vsub.s32 %v3043, %v3045
      %v3047 = vrot.slane %v3033, %v3046
      %v3048 = vcombine.high %v3040, %v3040
      %v3049 = vcombine.high %v3047, %v3047
      %v3050 = vcombine.low %v2904, %v2905
      %v3052 = vunpack.c.l.s4 1983009808
      %v3053 = vunpack.c.0.s8 %v3052
      %v3054 = vlaneseq
      %v3055 = vshrl.u32 %v3054, 7
      %v3056 = vsub.s32 %v3053, %v3055
      %v3057 = vrot.slane %v3050, %v3056
      %v3058 = vcombine.low %v2906, %v2907
      %v3059 = vcombine.high %v2906, %v2907
      %v3061 = vunpack.c.l.s4 1983009808
      %v3062 = vunpack.c.0.s8 %v3061
      %v3063 = vlaneseq
      %v3064 = vshrl.u32 %v3063, 7
      %v3065 = vsub.s32 %v3062, %v3064
      %v3066 = vrot.slane %v3058, %v3065
      %v3068 = vunpack.c.l.s4 1983009808
      %v3069 = vunpack.c.0.s8 %v3068
      %v3070 = vlaneseq
      %v3071 = vshrl.u32 %v3070, 7
      %v3072 = vsub.s32 %v3069, %v3071
      %v3073 = vrot.slane %v3059, %v3072
      %v3074 = vcombine.high %v3066, %v3066
      %v3075 = vcombine.high %v3073, %v3073
      %v3076 = vcombine.low %v2908, %v2909
      %v3078 = vunpack.c.l.s4 1983009808
      %v3079 = vunpack.c.0.s8 %v3078
      %v3080 = vlaneseq
      %v3081 = vshrl.u32 %v3080, 7
      %v3082 = vsub.s32 %v3079, %v3081
      %v3083 = vrot.slane %v3076, %v3082
      %v3084 = vcombine.low %v2910, %v2911
      %v3085 = vcombine.high %v2910, %v2911
      %v3087 = vunpack.c.l.s4 1983009808
      %v3088 = vunpack.c.0.s8 %v3087
      %v3089 = vlaneseq
      %v3090 = vshrl.u32 %v3089, 7
      %v3091 = vsub.s32 %v3088, %v3090
      %v3092 = vrot.slane %v3084, %v3091
      %v3094 = vunpack.c.l.s4 1983009808
      %v3095 = vunpack.c.0.s8 %v3094
      %v3096 = vlaneseq
      %v3097 = vshrl.u32 %v3096, 7
      %v3098 = vsub.s32 %v3095, %v3097
      %v3099 = vrot.slane %v3085, %v3098
      %v3100 = vcombine.high %v3092, %v3092
      %v3101 = vcombine.high %v3099, %v3099
      %v3102 = vcombine.low %v2912, %v2913
      %v3104 = vunpack.c.l.s4 1983009808
      %v3105 = vunpack.c.0.s8 %v3104
      %v3106 = vlaneseq
      %v3107 = vshrl.u32 %v3106, 7
      %v3108 = vsub.s32 %v3105, %v3107
      %v3109 = vrot.slane %v3102, %v3108
      %v3110 = vcombine.low %v2914, %v2915
      %v3111 = vcombine.high %v2914, %v2915
      %v3113 = vunpack.c.l.s4 1983009808
      %v3114 = vunpack.c.0.s8 %v3113
      %v3115 = vlaneseq
      %v3116 = vshrl.u32 %v3115, 7
      %v3117 = vsub.s32 %v3114, %v3116
      %v3118 = vrot.slane %v3110, %v3117
      %v3120 = vunpack.c.l.s4 1983009808
      %v3121 = vunpack.c.0.s8 %v3120
      %v3122 = vlaneseq
      %v3123 = vshrl.u32 %v3122, 7
      %v3124 = vsub.s32 %v3121, %v3123
      %v3125 = vrot.slane %v3111, %v3124
      %v3126 = vcombine.high %v3118, %v3118
      %v3127 = vcombine.high %v3125, %v3125
      %v3128 = vcombine.low %v2916, %v2917
      %v3130 = vunpack.c.l.s4 1983009808
      %v3131 = vunpack.c.0.s8 %v3130
      %v3132 = vlaneseq
      %v3133 = vshrl.u32 %v3132, 7
      %v3134 = vsub.s32 %v3131, %v3133
      %v3135 = vrot.slane %v3128, %v3134
      %v3136 = vcombine.low %v2918, %v2919
      %v3137 = vcombine.high %v2918, %v2919
      %v3139 = vunpack.c.l.s4 1983009808
      %v3140 = vunpack.c.0.s8 %v3139
      %v3141 = vlaneseq
      %v3142 = vshrl.u32 %v3141, 7
      %v3143 = vsub.s32 %v3140, %v3142
      %v3144 = vrot.slane %v3136, %v3143
      %v3146 = vunpack.c.l.s4 1983009808
      %v3147 = vunpack.c.0.s8 %v3146
      %v3148 = vlaneseq
      %v3149 = vshrl.u32 %v3148, 7
      %v3150 = vsub.s32 %v3147, %v3149
      %v3151 = vrot.slane %v3137, %v3150
      %v3152 = vcombine.high %v3144, %v3144
      %v3153 = vcombine.high %v3151, %v3151
      %v3154 = vcombine.low %v2920, %v2921
      %v3156 = vunpack.c.l.s4 1983009808
      %v3157 = vunpack.c.0.s8 %v3156
      %v3158 = vlaneseq
      %v3159 = vshrl.u32 %v3158, 7
      %v3160 = vsub.s32 %v3157, %v3159
      %v3161 = vrot.slane %v3154, %v3160
      %s3162 = scalar_lea.vmem %s1, 2016
      %v3163 = vld [vmem:[%s3162] sm:$0xff]
      %v3164 = vld [vmem:[%s3162 + $0x8] sm:$0xff]
      %v3165 = vld [vmem:[%s3162 + $0x10] sm:$0xff]
      %v3166 = vld [vmem:[%s3162 + $0x18] sm:$0xff]
      %v3167 = vld [vmem:[%s3162 + $0x20] sm:$0xff]
      %v3168 = vld [vmem:[%s3162 + $0x28] sm:$0xff]
      %v3169 = vld [vmem:[%s3162 + $0x30] sm:$0xff]
      %v3170 = vld [vmem:[%s3162 + $0x38] sm:$0xff]
      %v3171 = vld [vmem:[%s3162 + $0x40] sm:$0xff]
      %v3172 = vld [vmem:[%s3162 + $0x48] sm:$0xff]
      %v3173 = vld [vmem:[%s3162 + $0x50] sm:$0xff]
      %v3174 = vld [vmem:[%s3162 + $0x58] sm:$0xff]
      %v3175 = vld [vmem:[%s3162 + $0x60] sm:$0xff]
      %v3176 = vld [vmem:[%s3162 + $0x68] sm:$0xff]
      %v3177 = vld [vmem:[%s3162 + $0x70] sm:$0xff]
      %v3178 = vld [vmem:[%s3162 + $0x78] sm:$0xff]
      %v3179 = vld [vmem:[%s3162 + $0x80] sm:$0xff]
      %v3180 = vld [vmem:[%s3162 + $0x88] sm:$0xff]
      %v3181 = vld [vmem:[%s3162 + $0x90] sm:$0xff]
      %v3182 = vld [vmem:[%s3162 + $0x98] sm:$0xff]
      %v3183 = vld [vmem:[%s3162 + $0xa0] sm:$0xff]
      %v3184 = vld [vmem:[%s3162 + $0xa8] sm:$0xff]
      %v3185 = vld [vmem:[%s3162 + $0xb0] sm:$0xff]
      %v3186 = vld [vmem:[%s3162 + $0xb8] sm:$0xff]
      %v3187 = vld [vmem:[%s3162 + $0xc0] sm:$0xff]
      %v3188 = vld [vmem:[%s3162 + $0xc8] sm:$0xff]
      %v3189 = vld [vmem:[%s3162 + $0xd0] sm:$0xff]
      %v3190 = vld [vmem:[%s3162 + $0xd8] sm:$0xff]
      %v3191 = vld [vmem:[%s3162 + $0xe0] sm:$0xff]
      %v3192 = vld [vmem:[%s3162 + $0xe8] sm:$0xff]
      %v3193 = vld [vmem:[%s3162 + $0xf0] sm:$0xff]
      %v3194 = vld [vmem:[%s3162 + $0xf8] sm:$0xff]
      %v3195 = vld [vmem:[%s3162 + $0x100] sm:$0xff]
      %v3196 = vld [vmem:[%s3162 + $0x108] sm:$0xff]
      %v3197 = vld [vmem:[%s3162 + $0x110] sm:$0xff]
      %v3198 = vld [vmem:[%s3162 + $0x118] sm:$0xff]
      %v3199 = vld [vmem:[%s3162 + $0x120] sm:$0xff]
      %v3200 = vld [vmem:[%s3162 + $0x128] sm:$0xff]
      %v3201 = vld [vmem:[%s3162 + $0x130] sm:$0xff]
      %v3202 = vld [vmem:[%s3162 + $0x138] sm:$0xff]
      %v3203 = vld [vmem:[%s3162 + $0x140] sm:$0xff]
      %v3204 = vld [vmem:[%s3162 + $0x148] sm:$0xff]
      %v3205 = vld [vmem:[%s3162 + $0x150] sm:$0xff]
      %v3206 = vld [vmem:[%s3162 + $0x158] sm:$0xff]
      %v3207 = vld [vmem:[%s3162 + $0x160] sm:$0xff]
      %v3208 = vld [vmem:[%s3162 + $0x168] sm:$0xff]
      %v3209 = vld [vmem:[%s3162 + $0x170] sm:$0xff]
      %v3210 = vld [vmem:[%s3162 + $0x178] sm:$0xff]
      %v3211 = vld [vmem:[%s3162 + $0x180] sm:$0xff]
      %v3212 = vld [vmem:[%s3162 + $0x188] sm:$0xff]
      %v3213 = vld [vmem:[%s3162 + $0x190] sm:$0xff]
      %v3214 = vld [vmem:[%s3162 + $0x198] sm:$0xff]
      %v3215 = vld [vmem:[%s3162 + $0x1a0] sm:$0xff]
      %v3216 = vld [vmem:[%s3162 + $0x1a8] sm:$0xff]
      %v3217 = vld [vmem:[%s3162 + $0x1b0] sm:$0xff]
      %v3218 = vld [vmem:[%s3162 + $0x1b8] sm:$0xff]
      %v3219 = vld [vmem:[%s3162 + $0x1c0] sm:$0xff]
      %v3220 = vld [vmem:[%s3162 + $0x1c8] sm:$0xff]
      %v3221 = vld [vmem:[%s3162 + $0x1d0] sm:$0xff]
      %v3222 = vld [vmem:[%s3162 + $0x1d8] sm:$0xff]
      %v3223 = vld [vmem:[%s3162 + $0x1e0] sm:$0xff]
      %v3224 = vld [vmem:[%s3162 + $0x1e8] sm:$0xff]
      %v3225 = vld [vmem:[%s3162 + $0x1f0] sm:$0xff]
      %v3226 = vld [vmem:[%s3162 + $0x1f8] sm:$0xff]
      %v3227 = vld [vmem:[%s3162 + $0x200] sm:$0xff]
      %v3228 = vld [vmem:[%s3162 + $0x208] sm:$0xff]
      %v3229 = vld [vmem:[%s3162 + $0x210] sm:$0xff]
      %v3230 = vld [vmem:[%s3162 + $0x218] sm:$0xff]
      %v3231 = vld [vmem:[%s3162 + $0x220] sm:$0xff]
      %v3232 = vld [vmem:[%s3162 + $0x228] sm:$0xff]
      %v3233 = vld [vmem:[%s3162 + $0x230] sm:$0xff]
      %v3234 = vld [vmem:[%s3162 + $0x238] sm:$0xff]
      %v3235 = vld [vmem:[%s3162 + $0x240] sm:$0xff]
      %v3236 = vld [vmem:[%s3162 + $0x248] sm:$0xff]
      %v3237 = vld [vmem:[%s3162 + $0x250] sm:$0xff]
      %v3238 = vld [vmem:[%s3162 + $0x258] sm:$0xff]
      %v3239 = vld [vmem:[%s3162 + $0x260] sm:$0xff]
      %v3240 = vld [vmem:[%s3162 + $0x268] sm:$0xff]
      %v3241 = vld [vmem:[%s3162 + $0x270] sm:$0xff]
      %v3242 = vld [vmem:[%s3162 + $0x278] sm:$0xff]
      %v3243 = vld [vmem:[%s3162 + $0x280] sm:$0xff]
      %v3244 = vld [vmem:[%s3162 + $0x288] sm:$0xff]
      %v3245 = vld [vmem:[%s3162 + $0x290] sm:$0xff]
      %v3246 = vld [vmem:[%s3162 + $0x298] sm:$0xff]
      %v3247 = vcombine.low %v2962, %v2970
      %v3248 = vcombine.low %v2969, %v2971
      %v3250 = vunpack.c.l.s4 1983009808
      %v3251 = vunpack.c.0.s8 %v3250
      %v3252 = vlaneseq
      %v3253 = vshrl.u32 %v3252, 7
      %v3254 = vsub.s32 %v3251, %v3253
      %v3255 = vrot.slane %v3247, %v3254
      %v3257 = vunpack.c.l.s4 1983009808
      %v3258 = vunpack.c.0.s8 %v3257
      %v3259 = vlaneseq
      %v3260 = vshrl.u32 %v3259, 7
      %v3261 = vsub.s32 %v3258, %v3260
      %v3262 = vrot.slane %v3248, %v3261
      %v3263 = vcombine.low %v3255, %v3262
      %v3264 = vcombine.high %v3255, %v3262
      %v3265 = vcombine.low %v2979, %v2988
      %v3266 = vcombine.low %v2996, %v2995
      %v3268 = vunpack.c.l.s4 1983009808
      %v3269 = vunpack.c.0.s8 %v3268
      %v3270 = vlaneseq
      %v3271 = vshrl.u32 %v3270, 7
      %v3272 = vsub.s32 %v3269, %v3271
      %v3273 = vrot.slane %v3265, %v3272
      %v3275 = vunpack.c.l.s4 1983009808
      %v3276 = vunpack.c.0.s8 %v3275
      %v3277 = vlaneseq
      %v3278 = vshrl.u32 %v3277, 7
      %v3279 = vsub.s32 %v3276, %v3278
      %v3280 = vrot.slane %v3266, %v3279
      %v3281 = vcombine.low %v3273, %v3280
      %v3282 = vcombine.high %v3273, %v3280
      %v3283 = vcombine.low %v2997, %v3005
      %v3284 = vcombine.low %v3014, %v3022
      %v3286 = vunpack.c.l.s4 1983009808
      %v3287 = vunpack.c.0.s8 %v3286
      %v3288 = vlaneseq
      %v3289 = vshrl.u32 %v3288, 7
      %v3290 = vsub.s32 %v3287, %v3289
      %v3291 = vrot.slane %v3283, %v3290
      %v3293 = vunpack.c.l.s4 1983009808
      %v3294 = vunpack.c.0.s8 %v3293
      %v3295 = vlaneseq
      %v3296 = vshrl.u32 %v3295, 7
      %v3297 = vsub.s32 %v3294, %v3296
      %v3298 = vrot.slane %v3284, %v3297
      %v3299 = vcombine.low %v3291, %v3298
      %v3300 = vcombine.high %v3291, %v3298
      %v3301 = vcombine.low %v3021, %v3023
      %v3302 = vcombine.low %v3031, %v3040
      %v3304 = vunpack.c.l.s4 1983009808
      %v3305 = vunpack.c.0.s8 %v3304
      %v3306 = vlaneseq
      %v3307 = vshrl.u32 %v3306, 7
      %v3308 = vsub.s32 %v3305, %v3307
      %v3309 = vrot.slane %v3301, %v3308
      %v3311 = vunpack.c.l.s4 1983009808
      %v3312 = vunpack.c.0.s8 %v3311
      %v3313 = vlaneseq
      %v3314 = vshrl.u32 %v3313, 7
      %v3315 = vsub.s32 %v3312, %v3314
      %v3316 = vrot.slane %v3302, %v3315
      %v3317 = vcombine.low %v3309, %v3316
      %v3318 = vcombine.high %v3309, %v3316
      %v3319 = vcombine.low %v3048, %v3047
      %v3320 = vcombine.low %v3049, %v3057
      %v3322 = vunpack.c.l.s4 1983009808
      %v3323 = vunpack.c.0.s8 %v3322
      %v3324 = vlaneseq
      %v3325 = vshrl.u32 %v3324, 7
      %v3326 = vsub.s32 %v3323, %v3325
      %v3327 = vrot.slane %v3319, %v3326
      %v3329 = vunpack.c.l.s4 1983009808
      %v3330 = vunpack.c.0.s8 %v3329
      %v3331 = vlaneseq
      %v3332 = vshrl.u32 %v3331, 7
      %v3333 = vsub.s32 %v3330, %v3332
      %v3334 = vrot.slane %v3320, %v3333
      %v3335 = vcombine.low %v3327, %v3334
      %v3336 = vcombine.high %v3327, %v3334
      %v3337 = vcombine.low %v3066, %v3074
      %v3338 = vcombine.low %v3073, %v3075
      %v3340 = vunpack.c.l.s4 1983009808
      %v3341 = vunpack.c.0.s8 %v3340
      %v3342 = vlaneseq
      %v3343 = vshrl.u32 %v3342, 7
      %v3344 = vsub.s32 %v3341, %v3343
      %v3345 = vrot.slane %v3337, %v3344
      %v3347 = vunpack.c.l.s4 1983009808
      %v3348 = vunpack.c.0.s8 %v3347
      %v3349 = vlaneseq
      %v3350 = vshrl.u32 %v3349, 7
      %v3351 = vsub.s32 %v3348, %v3350
      %v3352 = vrot.slane %v3338, %v3351
      %v3353 = vcombine.low %v3345, %v3352
      %v3354 = vcombine.high %v3345, %v3352
      %v3355 = vcombine.low %v3083, %v3092
      %v3356 = vcombine.low %v3100, %v3099
      %v3358 = vunpack.c.l.s4 1983009808
      %v3359 = vunpack.c.0.s8 %v3358
      %v3360 = vlaneseq
      %v3361 = vshrl.u32 %v3360, 7
      %v3362 = vsub.s32 %v3359, %v3361
      %v3363 = vrot.slane %v3355, %v3362
      %v3365 = vunpack.c.l.s4 1983009808
      %v3366 = vunpack.c.0.s8 %v3365
      %v3367 = vlaneseq
      %v3368 = vshrl.u32 %v3367, 7
      %v3369 = vsub.s32 %v3366, %v3368
      %v3370 = vrot.slane %v3356, %v3369
      %v3371 = vcombine.low %v3363, %v3370
      %v3372 = vcombine.high %v3363, %v3370
      %v3373 = vcombine.low %v3101, %v3109
      %v3374 = vcombine.low %v3118, %v3126
      %v3376 = vunpack.c.l.s4 1983009808
      %v3377 = vunpack.c.0.s8 %v3376
      %v3378 = vlaneseq
      %v3379 = vshrl.u32 %v3378, 7
      %v3380 = vsub.s32 %v3377, %v3379
      %v3381 = vrot.slane %v3373, %v3380
      %v3383 = vunpack.c.l.s4 1983009808
      %v3384 = vunpack.c.0.s8 %v3383
      %v3385 = vlaneseq
      %v3386 = vshrl.u32 %v3385, 7
      %v3387 = vsub.s32 %v3384, %v3386
      %v3388 = vrot.slane %v3374, %v3387
      %v3389 = vcombine.low %v3381, %v3388
      %v3390 = vcombine.high %v3381, %v3388
      %v3391 = vcombine.low %v3125, %v3127
      %v3392 = vcombine.low %v3135, %v3144
      %v3394 = vunpack.c.l.s4 1983009808
      %v3395 = vunpack.c.0.s8 %v3394
      %v3396 = vlaneseq
      %v3397 = vshrl.u32 %v3396, 7
      %v3398 = vsub.s32 %v3395, %v3397
      %v3399 = vrot.slane %v3391, %v3398
      %v3401 = vunpack.c.l.s4 1983009808
      %v3402 = vunpack.c.0.s8 %v3401
      %v3403 = vlaneseq
      %v3404 = vshrl.u32 %v3403, 7
      %v3405 = vsub.s32 %v3402, %v3404
      %v3406 = vrot.slane %v3392, %v3405
      %v3407 = vcombine.low %v3399, %v3406
      %v3408 = vcombine.high %v3399, %v3406
      %v3409 = vcombine.low %v3152, %v3151
      %v3410 = vcombine.low %v3153, %v3161
      %v3412 = vunpack.c.l.s4 1983009808
      %v3413 = vunpack.c.0.s8 %v3412
      %v3414 = vlaneseq
      %v3415 = vshrl.u32 %v3414, 7
      %v3416 = vsub.s32 %v3413, %v3415
      %v3417 = vrot.slane %v3409, %v3416
      %v3419 = vunpack.c.l.s4 1983009808
      %v3420 = vunpack.c.0.s8 %v3419
      %v3421 = vlaneseq
      %v3422 = vshrl.u32 %v3421, 7
      %v3423 = vsub.s32 %v3420, %v3422
      %v3424 = vrot.slane %v3410, %v3423
      %v3425 = vcombine.low %v3417, %v3424
      %v3426 = vcombine.high %v3417, %v3424
      %v3437 = vsel %vm172, %v3264, 0
      %v3439 = vsel %vm172, %v3282, 0
      %v3441 = vsel %vm172, %v3300, 0
      %v3443 = vsel %vm172, %v3318, 0
      %v3445 = vsel %vm172, %v3336, 0
      %v3447 = vsel %vm172, %v3354, 0
      %v3449 = vsel %vm172, %v3372, 0
      %v3451 = vsel %vm172, %v3390, 0
      %v3453 = vsel %vm172, %v3408, 0
      %v3455 = vsel %vm172, %v3426, 0
      %3457 = vmatprep.subr.mxu0 %v3164
      %3458 = vmatpush1.msra.mxu0 %v3163
      %3459 = vmatprep.subr.mxu0 %v3167
      %3460 = vmatpush1.msra.mxu0 %v3166
      %3461 = vmatprep.subr.mxu0 %v3170
      %3462 = vmatpush1.msra.mxu0 %v3169
      %3463 = vmatprep.subr.mxu0 %v3173
      %3464 = vmatpush1.msra.mxu0 %v3172
      %3465 = vmatprep.subr.mxu0 %v3176
      %3466 = vmatpush1.msra.mxu0 %v3175
      %3467 = vmatprep.subr.mxu0 %v3179
      %3468 = vmatpush1.msra.mxu0 %v3178
      %3469 = vmatprep.subr.mxu0 %v3182
      %3470 = vmatpush1.msra.mxu0 %v3181
      %3471 = vmatprep.subr.mxu0 %v3185
      %3472 = vmatpush1.msra.mxu0 %v3184
      %3473 = vmatprep.subr.mxu0 %v3188
      %3474 = vmatpush1.msra.mxu0 %v3187
      %3475 = vmatprep.subr.mxu0 %v3191
      %3476 = vmatpush1.msra.mxu0 %v3190
      %3477 = vmatprep.subr.mxu0 %v3194
      %3478 = vmatpush1.msra.mxu0 %v3193
      %3479 = vmatprep.subr.mxu0 %v3197
      %3480 = vmatpush1.msra.mxu0 %v3196
      %3481 = vmatprep.subr.mxu0 %v3200
      %3482 = vmatpush1.msra.mxu0 %v3199
      %3483 = vmatprep.subr.mxu0 %v3203
      %3484 = vmatpush1.msra.mxu0 %v3202
      %3485 = vmatprep.subr.mxu0 %v3206
      %3486 = vmatpush1.msra.mxu0 %v3205
      %3487 = vmatprep.subr.mxu0 %v3209
      %3488 = vmatpush1.msra.mxu0 %v3208
      %3489 = vmatprep.subr.mxu0 %v3212
      %3490 = vmatpush1.msra.mxu0 %v3211
      %3491 = vmatprep.subr.mxu0 %v3215
      %3492 = vmatpush1.msra.mxu0 %v3214
      %3493 = vmatprep.subr.mxu0 %v3218
      %3494 = vmatpush1.msra.mxu0 %v3217
      %3495 = vmatprep.subr.mxu0 %v3221
      %3496 = vmatpush1.msra.mxu0 %v3220
      %3497 = vmatprep.subr.mxu0 %v3224
      %3498 = vmatpush1.msra.mxu0 %v3223
      %3499 = vmatprep.subr.mxu0 %v3227
      %3500 = vmatpush1.msra.mxu0 %v3226
      %3501 = vmatprep.subr.mxu0 %v3230
      %3502 = vmatpush1.msra.mxu0 %v3229
      %3503 = vmatprep.subr.mxu0 %v3233
      %3504 = vmatpush1.msra.mxu0 %v3232
      %3505 = vmatprep.subr.mxu0 %v3236
      %3506 = vmatpush1.msra.mxu0 %v3235
      %3507 = vmatprep.subr.mxu0 %v3239
      %3508 = vmatpush1.msra.mxu0 %v3238
      %3509 = vmatprep.subr.mxu0 %v3242
      %3510 = vmatpush1.msra.mxu0 %v3241
      %3511 = vmatprep.subr.mxu0 %v3245
      %3512 = vmatpush1.msra.mxu0 %v3244
      %3513 = vmatprep.subr.mxu0 0.0
      %3514 = vmatpush1.msra.mxu0 0.0
      %3515 = vmatprep.subr.mxu0 0.0
      %3516 = vmatpush1.msra.mxu0 0.0
      %3517 = vmatprep.subr.mxu0 0.0
      %3518 = vmatpush1.msra.mxu0 0.0
      %3519 = vmatprep.subr.mxu0 0.0
      %3520 = vmatpush1.msra.mxu0 0.0
      %3521 = vmatprep.mubr.f32.mxu0 %v3437
      %3522 = vmatmul.mubr.f32.gmra.mrb[0].mxu0 %v3263
      %v3523 = vpop.f32.mrb[0].mxu0
      %v3524 = vadd.f32 0.0, %v3523
      %v3525 = vpop.f32.mrb[0].mxu0
      %v3526 = vadd.f32 0.0, %v3525
      %3527 = vmatprep.mubr.f32.mxu0 %v3439
      %3528 = vmatmul.mubr.f32.gmra.mrb[0].mxu0 %v3281
      %v3529 = vpop.f32.mrb[0].mxu0
      %v3530 = vadd.f32 0.0, %v3529
      %v3531 = vpop.f32.mrb[0].mxu0
      %v3532 = vadd.f32 0.0, %v3531
      %3533 = vmatprep.mubr.f32.mxu0 %v3441
      %3534 = vmatmul.mubr.f32.gmra.mrb[0].mxu0 %v3299
      %v3535 = vpop.f32.mrb[0].mxu0
      %v3536 = vadd.f32 0.0, %v3535
      %v3537 = vpop.f32.mrb[0].mxu0
      %v3538 = vadd.f32 0.0, %v3537
      %3539 = vmatprep.mubr.f32.mxu0 %v3443
      %3540 = vmatmul.mubr.f32.gmra.mrb[0].mxu0 %v3317
      %v3541 = vpop.f32.mrb[0].mxu0
      %v3542 = vadd.f32 0.0, %v3541
      %v3543 = vpop.f32.mrb[0].mxu0
      %v3544 = vadd.f32 0.0, %v3543
      %3545 = vmatprep.mubr.f32.mxu0 %v3445
      %3546 = vmatmul.mubr.f32.gmra.mrb[0].mxu0 %v3335
      %v3547 = vpop.f32.mrb[0].mxu0
      %v3548 = vadd.f32 0.0, %v3547
      %v3549 = vpop.f32.mrb[0].mxu0
      %v3550 = vadd.f32 0.0, %v3549
      %3551 = vmatprep.mubr.f32.mxu0 %v3447
      %3552 = vmatmul.mubr.f32.gmra.mrb[0].mxu0 %v3353
      %v3553 = vpop.f32.mrb[0].mxu0
      %v3554 = vadd.f32 0.0, %v3553
      %v3555 = vpop.f32.mrb[0].mxu0
      %v3556 = vadd.f32 0.0, %v3555
      %3557 = vmatprep.mubr.f32.mxu0 %v3449
      %3558 = vmatmul.mubr.f32.gmra.mrb[0].mxu0 %v3371
      %v3559 = vpop.f32.mrb[0].mxu0
      %v3560 = vadd.f32 0.0, %v3559
      %v3561 = vpop.f32.mrb[0].mxu0
      %v3562 = vadd.f32 0.0, %v3561
      %3563 = vmatprep.mubr.f32.mxu0 %v3451
      %3564 = vmatmul.mubr.f32.gmra.mrb[0].mxu0 %v3389
      %v3565 = vpop.f32.mrb[0].mxu0
      %v3566 = vadd.f32 0.0, %v3565
      %v3567 = vpop.f32.mrb[0].mxu0
      %v3568 = vadd.f32 0.0, %v3567
      %3569 = vmatprep.mubr.f32.mxu0 %v3453
      %3570 = vmatmul.mubr.f32.gmra.mrb[0].mxu0 %v3407
      %v3571 = vpop.f32.mrb[0].mxu0
      %v3572 = vadd.f32 0.0, %v3571
      %v3573 = vpop.f32.mrb[0].mxu0
      %v3574 = vadd.f32 0.0, %v3573
      %3575 = vmatprep.mubr.f32.mxu0 %v3455
      %3576 = vmatmul.mubr.f32.gmra.mrb[0].mxu0 %v3425
      %v3577 = vpop.f32.mrb[0].mxu0
      %v3578 = vadd.f32 0.0, %v3577
      %v3579 = vpop.f32.mrb[0].mxu0
      %v3580 = vadd.f32 0.0, %v3579
      %3581 = vdwg.mxu0
      %3582 = vmatprep.subr.mxu0 0.0
      %3583 = vmatpush1.msra.mxu0 %v3165
      %3584 = vmatprep.subr.mxu0 0.0
      %3585 = vmatpush1.msra.mxu0 %v3168
      %3586 = vmatprep.subr.mxu0 0.0
      %3587 = vmatpush1.msra.mxu0 %v3171
      %3588 = vmatprep.subr.mxu0 0.0
      %3589 = vmatpush1.msra.mxu0 %v3174
      %3590 = vmatprep.subr.mxu0 0.0
      %3591 = vmatpush1.msra.mxu0 %v3177
      %3592 = vmatprep.subr.mxu0 0.0
      %3593 = vmatpush1.msra.mxu0 %v3180
      %3594 = vmatprep.subr.mxu0 0.0
      %3595 = vmatpush1.msra.mxu0 %v3183
      %3596 = vmatprep.subr.mxu0 0.0
      %3597 = vmatpush1.msra.mxu0 %v3186
      %3598 = vmatprep.subr.mxu0 0.0
      %3599 = vmatpush1.msra.mxu0 %v3189
      %3600 = vmatprep.subr.mxu0 0.0
      %3601 = vmatpush1.msra.mxu0 %v3192
      %3602 = vmatprep.subr.mxu0 0.0
      %3603 = vmatpush1.msra.mxu0 %v3195
      %3604 = vmatprep.subr.mxu0 0.0
      %3605 = vmatpush1.msra.mxu0 %v3198
      %3606 = vmatprep.subr.mxu0 0.0
      %3607 = vmatpush1.msra.mxu0 %v3201
      %3608 = vmatprep.subr.mxu0 0.0
      %3609 = vmatpush1.msra.mxu0 %v3204
      %3610 = vmatprep.subr.mxu0 0.0
      %3611 = vmatpush1.msra.mxu0 %v3207
      %3612 = vmatprep.subr.mxu0 0.0
      %3613 = vmatpush1.msra.mxu0 %v3210
      %3614 = vmatprep.subr.mxu0 0.0
      %3615 = vmatpush1.msra.mxu0 %v3213
      %3616 = vmatprep.subr.mxu0 0.0
      %3617 = vmatpush1.msra.mxu0 %v3216
      %3618 = vmatprep.subr.mxu0 0.0
      %3619 = vmatpush1.msra.mxu0 %v3219
      %3620 = vmatprep.subr.mxu0 0.0
      %3621 = vmatpush1.msra.mxu0 %v3222
      %3622 = vmatprep.subr.mxu0 0.0
      %3623 = vmatpush1.msra.mxu0 %v3225
      %3624 = vmatprep.subr.mxu0 0.0
      %3625 = vmatpush1.msra.mxu0 %v3228
      %3626 = vmatprep.subr.mxu0 0.0
      %3627 = vmatpush1.msra.mxu0 %v3231
      %3628 = vmatprep.subr.mxu0 0.0
      %3629 = vmatpush1.msra.mxu0 %v3234
      %3630 = vmatprep.subr.mxu0 0.0
      %3631 = vmatpush1.msra.mxu0 %v3237
      %3632 = vmatprep.subr.mxu0 0.0
      %3633 = vmatpush1.msra.mxu0 %v3240
      %3634 = vmatprep.subr.mxu0 0.0
      %3635 = vmatpush1.msra.mxu0 %v3243
      %3636 = vmatprep.subr.mxu0 0.0
      %3637 = vmatpush1.msra.mxu0 %v3246
      %3638 = vmatprep.subr.mxu0 0.0
      %3639 = vmatpush1.msra.mxu0 0.0
      %3640 = vmatprep.subr.mxu0 0.0
      %3641 = vmatpush1.msra.mxu0 0.0
      %3642 = vmatprep.subr.mxu0 0.0
      %3643 = vmatpush1.msra.mxu0 0.0
      %3644 = vmatprep.subr.mxu0 0.0
      %3645 = vmatpush1.msra.mxu0 0.0
      %3646 = vmatprep.mubr.f32.mxu0 %v3437
      %3647 = vmatmul.mubr.f32.gmra.mrb[0].mxu0 %v3263
      %v3648 = vpop.f32.mrb[0].mxu0
      %v3649 = vadd.f32 0.0, %v3648
      %v3650 = vpop.f32.mrb[0].mxu0
      %3651 = vmatprep.mubr.f32.mxu0 %v3439
      %3652 = vmatmul.mubr.f32.gmra.mrb[0].mxu0 %v3281
      %v3653 = vpop.f32.mrb[0].mxu0
      %v3654 = vadd.f32 0.0, %v3653
      %v3655 = vpop.f32.mrb[0].mxu0
      %3656 = vmatprep.mubr.f32.mxu0 %v3441
      %3657 = vmatmul.mubr.f32.gmra.mrb[0].mxu0 %v3299
      %v3658 = vpop.f32.mrb[0].mxu0
      %v3659 = vadd.f32 0.0, %v3658
      %v3660 = vpop.f32.mrb[0].mxu0
      %3661 = vmatprep.mubr.f32.mxu0 %v3443
      %3662 = vmatmul.mubr.f32.gmra.mrb[0].mxu0 %v3317
      %v3663 = vpop.f32.mrb[0].mxu0
      %v3664 = vadd.f32 0.0, %v3663
      %v3665 = vpop.f32.mrb[0].mxu0
      %3666 = vmatprep.mubr.f32.mxu0 %v3445
      %3667 = vmatmul.mubr.f32.gmra.mrb[0].mxu0 %v3335
      %v3668 = vpop.f32.mrb[0].mxu0
      %v3669 = vadd.f32 0.0, %v3668
      %v3670 = vpop.f32.mrb[0].mxu0
      %3671 = vmatprep.mubr.f32.mxu0 %v3447
      %3672 = vmatmul.mubr.f32.gmra.mrb[0].mxu0 %v3353
      %v3673 = vpop.f32.mrb[0].mxu0
      %v3674 = vadd.f32 0.0, %v3673
      %v3675 = vpop.f32.mrb[0].mxu0
      %3676 = vmatprep.mubr.f32.mxu0 %v3449
      %3677 = vmatmul.mubr.f32.gmra.mrb[0].mxu0 %v3371
      %v3678 = vpop.f32.mrb[0].mxu0
      %v3679 = vadd.f32 0.0, %v3678
      %v3680 = vpop.f32.mrb[0].mxu0
      %3681 = vmatprep.mubr.f32.mxu0 %v3451
      %3682 = vmatmul.mubr.f32.gmra.mrb[0].mxu0 %v3389
      %v3683 = vpop.f32.mrb[0].mxu0
      %v3684 = vadd.f32 0.0, %v3683
      %v3685 = vpop.f32.mrb[0].mxu0
      %3686 = vmatprep.mubr.f32.mxu0 %v3453
      %3687 = vmatmul.mubr.f32.gmra.mrb[0].mxu0 %v3407
      %v3688 = vpop.f32.mrb[0].mxu0
      %v3689 = vadd.f32 0.0, %v3688
      %v3690 = vpop.f32.mrb[0].mxu0
      %3691 = vmatprep.mubr.f32.mxu0 %v3455
      %3692 = vmatmul.mubr.f32.gmra.mrb[0].mxu0 %v3425
      %v3693 = vpop.f32.mrb[0].mxu0
      %v3694 = vadd.f32 0.0, %v3693
      %v3695 = vpop.f32.mrb[0].mxu0
      %3696 = vdwg.mxu0
      %v3697 = vadd.f32 %v2859, %v3524
      %v3698 = vadd.f32 %v2860, %v3526
      %v3699 = vadd.f32 %v2861, %v3649
      %v3700 = vadd.f32 %v2862, %v3530
      %v3701 = vadd.f32 %v2863, %v3532
      %v3702 = vadd.f32 %v2864, %v3654
      %v3703 = vadd.f32 %v2865, %v3536
      %v3704 = vadd.f32 %v2866, %v3538
      %v3705 = vadd.f32 %v2867, %v3659
      %v3706 = vadd.f32 %v2868, %v3542
      %v3707 = vadd.f32 %v2869, %v3544
      %v3708 = vadd.f32 %v2870, %v3664
      %v3709 = vadd.f32 %v2871, %v3548
      %v3710 = vadd.f32 %v2872, %v3550
      %v3711 = vadd.f32 %v2873, %v3669
      %v3712 = vadd.f32 %v2874, %v3554
      %v3713 = vadd.f32 %v2875, %v3556
      %v3714 = vadd.f32 %v2876, %v3674
      %v3715 = vadd.f32 %v2877, %v3560
      %v3716 = vadd.f32 %v2878, %v3562
      %v3717 = vadd.f32 %v2879, %v3679
      %v3718 = vadd.f32 %v2880, %v3566
      %v3719 = vadd.f32 %v2881, %v3568
      %v3720 = vadd.f32 %v2882, %v3684
      %v3721 = vadd.f32 %v2883, %v3572
      %v3722 = vadd.f32 %v2884, %v3574
      %v3723 = vadd.f32 %v2885, %v3689
      %v3724 = vadd.f32 %v2886, %v3578
      %v3725 = vadd.f32 %v2887, %v3580
      %v3726 = vadd.f32 %v2888, %v3694
      %v3727 = vld [vmem:[%s2889] sm:$0xfe]
      %v3728 = vld [vmem:[%s2889 + $0x8] sm:$0xfe]
      %v3729 = vld [vmem:[%s2889 + $0x10] sm:$0x7]
      %v3730 = vld [vmem:[%s2889 + $0x18] sm:$0x7]
      %v3731 = vld [vmem:[%s2889 + $0x20] sm:$0xfe]
      %v3732 = vld [vmem:[%s2889 + $0x28] sm:$0xfe]
      %v3733 = vld [vmem:[%s2889 + $0x30] sm:$0x7]
      %v3734 = vld [vmem:[%s2889 + $0x38] sm:$0x7]
      %v3735 = vld [vmem:[%s2889 + $0x40] sm:$0xfe]
      %v3736 = vld [vmem:[%s2889 + $0x48] sm:$0xfe]
      %v3737 = vld [vmem:[%s2889 + $0x50] sm:$0x7]
      %v3738 = vld [vmem:[%s2889 + $0x58] sm:$0x7]
      %v3739 = vld [vmem:[%s2889 + $0x60] sm:$0xfe]
      %v3740 = vld [vmem:[%s2889 + $0x68] sm:$0xfe]
      %v3741 = vld [vmem:[%s2889 + $0x70] sm:$0x7]
      %v3742 = vld [vmem:[%s2889 + $0x78] sm:$0x7]
      %v3743 = vld [vmem:[%s2889 + $0x80] sm:$0xfe]
      %v3744 = vld [vmem:[%s2889 + $0x88] sm:$0xfe]
      %v3745 = vld [vmem:[%s2889 + $0x90] sm:$0x7]
      %v3746 = vld [vmem:[%s2889 + $0x98] sm:$0x7]
      %v3747 = vld [vmem:[%s2889 + $0xa0] sm:$0xfe]
      %v3748 = vld [vmem:[%s2889 + $0xa8] sm:$0xfe]
      %v3749 = vld [vmem:[%s2889 + $0xb0] sm:$0x7]
      %v3750 = vld [vmem:[%s2889 + $0xb8] sm:$0x7]
      %v3751 = vld [vmem:[%s2889 + $0xc0] sm:$0xfe]
      %v3752 = vld [vmem:[%s2889 + $0xc8] sm:$0xfe]
      %v3753 = vld [vmem:[%s2889 + $0xd0] sm:$0x7]
      %v3754 = vld [vmem:[%s2889 + $0xd8] sm:$0x7]
      %v3755 = vld [vmem:[%s2889 + $0xe0] sm:$0xfe]
      %v3756 = vld [vmem:[%s2889 + $0xe8] sm:$0xfe]
      %v3757 = vld [vmem:[%s2889 + $0xf0] sm:$0x7]
      %v3758 = vld [vmem:[%s2889 + $0xf8] sm:$0x7]
      %v3791 = vcombine.low %v3727, %v3728
      %v3792 = vcombine.high %v3727, %v3728
      %v3794 = vunpack.c.l.s4 1983009808
      %v3795 = vunpack.c.0.s8 %v3794
      %v3796 = vlaneseq
      %v3797 = vshrl.u32 %v3796, 7
      %v3798 = vsub.s32 %v3795, %v3797
      %v3799 = vrot.slane %v3791, %v3798
      %v3801 = vunpack.c.l.s4 1983009808
      %v3802 = vunpack.c.0.s8 %v3801
      %v3803 = vlaneseq
      %v3804 = vshrl.u32 %v3803, 7
      %v3805 = vsub.s32 %v3802, %v3804
      %v3806 = vrot.slane %v3792, %v3805
      %v3807 = vcombine.high %v3799, %v3799
      %v3808 = vcombine.high %v3806, %v3806
      %v3809 = vcombine.low %v3729, %v3730
      %v3811 = vunpack.c.l.s4 1983009808
      %v3812 = vunpack.c.0.s8 %v3811
      %v3813 = vlaneseq
      %v3814 = vshrl.u32 %v3813, 7
      %v3815 = vsub.s32 %v3812, %v3814
      %v3816 = vrot.slane %v3809, %v3815
      %v3817 = vcombine.high %v3816, %v3816
      %v3818 = vcombine.low %v3731, %v3732
      %v3819 = vcombine.high %v3731, %v3732
      %v3821 = vunpack.c.l.s4 1983009808
      %v3822 = vunpack.c.0.s8 %v3821
      %v3823 = vlaneseq
      %v3824 = vshrl.u32 %v3823, 7
      %v3825 = vsub.s32 %v3822, %v3824
      %v3826 = vrot.slane %v3818, %v3825
      %v3828 = vunpack.c.l.s4 1983009808
      %v3829 = vunpack.c.0.s8 %v3828
      %v3830 = vlaneseq
      %v3831 = vshrl.u32 %v3830, 7
      %v3832 = vsub.s32 %v3829, %v3831
      %v3833 = vrot.slane %v3819, %v3832
      %v3834 = vcombine.high %v3826, %v3826
      %v3835 = vcombine.high %v3833, %v3833
      %v3836 = vcombine.low %v3733, %v3734
      %v3838 = vunpack.c.l.s4 1983009808
      %v3839 = vunpack.c.0.s8 %v3838
      %v3840 = vlaneseq
      %v3841 = vshrl.u32 %v3840, 7
      %v3842 = vsub.s32 %v3839, %v3841
      %v3843 = vrot.slane %v3836, %v3842
      %v3844 = vcombine.high %v3843, %v3843
      %v3845 = vcombine.low %v3735, %v3736
      %v3846 = vcombine.high %v3735, %v3736
      %v3848 = vunpack.c.l.s4 1983009808
      %v3849 = vunpack.c.0.s8 %v3848
      %v3850 = vlaneseq
      %v3851 = vshrl.u32 %v3850, 7
      %v3852 = vsub.s32 %v3849, %v3851
      %v3853 = vrot.slane %v3845, %v3852
      %v3855 = vunpack.c.l.s4 1983009808
      %v3856 = vunpack.c.0.s8 %v3855
      %v3857 = vlaneseq
      %v3858 = vshrl.u32 %v3857, 7
      %v3859 = vsub.s32 %v3856, %v3858
      %v3860 = vrot.slane %v3846, %v3859
      %v3861 = vcombine.high %v3853, %v3853
      %v3862 = vcombine.high %v3860, %v3860
      %v3863 = vcombine.low %v3737, %v3738
      %v3865 = vunpack.c.l.s4 1983009808
      %v3866 = vunpack.c.0.s8 %v3865
      %v3867 = vlaneseq
      %v3868 = vshrl.u32 %v3867, 7
      %v3869 = vsub.s32 %v3866, %v3868
      %v3870 = vrot.slane %v3863, %v3869
      %v3871 = vcombine.high %v3870, %v3870
      %v3872 = vcombine.low %v3739, %v3740
      %v3873 = vcombine.high %v3739, %v3740
      %v3875 = vunpack.c.l.s4 1983009808
      %v3876 = vunpack.c.0.s8 %v3875
      %v3877 = vlaneseq
      %v3878 = vshrl.u32 %v3877, 7
      %v3879 = vsub.s32 %v3876, %v3878
      %v3880 = vrot.slane %v3872, %v3879
      %v3882 = vunpack.c.l.s4 1983009808
      %v3883 = vunpack.c.0.s8 %v3882
      %v3884 = vlaneseq
      %v3885 = vshrl.u32 %v3884, 7
      %v3886 = vsub.s32 %v3883, %v3885
      %v3887 = vrot.slane %v3873, %v3886
      %v3888 = vcombine.high %v3880, %v3880
      %v3889 = vcombine.high %v3887, %v3887
      %v3890 = vcombine.low %v3741, %v3742
      %v3892 = vunpack.c.l.s4 1983009808
      %v3893 = vunpack.c.0.s8 %v3892
      %v3894 = vlaneseq
      %v3895 = vshrl.u32 %v3894, 7
      %v3896 = vsub.s32 %v3893, %v3895
      %v3897 = vrot.slane %v3890, %v3896
      %v3898 = vcombine.high %v3897, %v3897
      %v3899 = vcombine.low %v3743, %v3744
      %v3900 = vcombine.high %v3743, %v3744
      %v3902 = vunpack.c.l.s4 1983009808
      %v3903 = vunpack.c.0.s8 %v3902
      %v3904 = vlaneseq
      %v3905 = vshrl.u32 %v3904, 7
      %v3906 = vsub.s32 %v3903, %v3905
      %v3907 = vrot.slane %v3899, %v3906
      %v3909 = vunpack.c.l.s4 1983009808
      %v3910 = vunpack.c.0.s8 %v3909
      %v3911 = vlaneseq
      %v3912 = vshrl.u32 %v3911, 7
      %v3913 = vsub.s32 %v3910, %v3912
      %v3914 = vrot.slane %v3900, %v3913
      %v3915 = vcombine.high %v3907, %v3907
      %v3916 = vcombine.high %v3914, %v3914
      %v3917 = vcombine.low %v3745, %v3746
      %v3919 = vunpack.c.l.s4 1983009808
      %v3920 = vunpack.c.0.s8 %v3919
      %v3921 = vlaneseq
      %v3922 = vshrl.u32 %v3921, 7
      %v3923 = vsub.s32 %v3920, %v3922
      %v3924 = vrot.slane %v3917, %v3923
      %v3925 = vcombine.high %v3924, %v3924
      %v3926 = vcombine.low %v3747, %v3748
      %v3927 = vcombine.high %v3747, %v3748
      %v3929 = vunpack.c.l.s4 1983009808
      %v3930 = vunpack.c.0.s8 %v3929
      %v3931 = vlaneseq
      %v3932 = vshrl.u32 %v3931, 7
      %v3933 = vsub.s32 %v3930, %v3932
      %v3934 = vrot.slane %v3926, %v3933
      %v3936 = vunpack.c.l.s4 1983009808
      %v3937 = vunpack.c.0.s8 %v3936
      %v3938 = vlaneseq
      %v3939 = vshrl.u32 %v3938, 7
      %v3940 = vsub.s32 %v3937, %v3939
      %v3941 = vrot.slane %v3927, %v3940
      %v3942 = vcombine.high %v3934, %v3934
      %v3943 = vcombine.high %v3941, %v3941
      %v3944 = vcombine.low %v3749, %v3750
      %v3946 = vunpack.c.l.s4 1983009808
      %v3947 = vunpack.c.0.s8 %v3946
      %v3948 = vlaneseq
      %v3949 = vshrl.u32 %v3948, 7
      %v3950 = vsub.s32 %v3947, %v3949
      %v3951 = vrot.slane %v3944, %v3950
      %v3952 = vcombine.high %v3951, %v3951
      %v3953 = vcombine.low %v3751, %v3752
      %v3954 = vcombine.high %v3751, %v3752
      %v3956 = vunpack.c.l.s4 1983009808
      %v3957 = vunpack.c.0.s8 %v3956
      %v3958 = vlaneseq
      %v3959 = vshrl.u32 %v3958, 7
      %v3960 = vsub.s32 %v3957, %v3959
      %v3961 = vrot.slane %v3953, %v3960
      %v3963 = vunpack.c.l.s4 1983009808
      %v3964 = vunpack.c.0.s8 %v3963
      %v3965 = vlaneseq
      %v3966 = vshrl.u32 %v3965, 7
      %v3967 = vsub.s32 %v3964, %v3966
      %v3968 = vrot.slane %v3954, %v3967
      %v3969 = vcombine.high %v3961, %v3961
      %v3970 = vcombine.high %v3968, %v3968
      %v3971 = vcombine.low %v3753, %v3754
      %v3973 = vunpack.c.l.s4 1983009808
      %v3974 = vunpack.c.0.s8 %v3973
      %v3975 = vlaneseq
      %v3976 = vshrl.u32 %v3975, 7
      %v3977 = vsub.s32 %v3974, %v3976
      %v3978 = vrot.slane %v3971, %v3977
      %v3979 = vcombine.high %v3978, %v3978
      %v3980 = vcombine.low %v3755, %v3756
      %v3981 = vcombine.high %v3755, %v3756
      %v3983 = vunpack.c.l.s4 1983009808
      %v3984 = vunpack.c.0.s8 %v3983
      %v3985 = vlaneseq
      %v3986 = vshrl.u32 %v3985, 7
      %v3987 = vsub.s32 %v3984, %v3986
      %v3988 = vrot.slane %v3980, %v3987
      %v3990 = vunpack.c.l.s4 1983009808
      %v3991 = vunpack.c.0.s8 %v3990
      %v3992 = vlaneseq
      %v3993 = vshrl.u32 %v3992, 7
      %v3994 = vsub.s32 %v3991, %v3993
      %v3995 = vrot.slane %v3981, %v3994
      %v3996 = vcombine.high %v3988, %v3988
      %v3997 = vcombine.high %v3995, %v3995
      %v3998 = vcombine.low %v3757, %v3758
      %v4000 = vunpack.c.l.s4 1983009808
      %v4001 = vunpack.c.0.s8 %v4000
      %v4002 = vlaneseq
      %v4003 = vshrl.u32 %v4002, 7
      %v4004 = vsub.s32 %v4001, %v4003
      %v4005 = vrot.slane %v3998, %v4004
      %v4006 = vcombine.high %v4005, %v4005
      %v4007 = vrot.slane %v3799, 7
      %v4008 = vrot.slane %v4007, 2
      %v4009 = vrot.slane %v3807, 7
      %v4010 = vsel %vm930, %v4008, %v4009
      %v4011 = vrot.slane %v4009, 2
      %v4012 = vrot.slane %v3806, 7
      %v4013 = vsel %vm930, %v4011, %v4012
      %v4014 = vrot.slane %v4012, 2
      %v4015 = vrot.slane %v3808, 7
      %v4016 = vsel %vm930, %v4014, %v4015
      %v4017 = vrot.slane %v4015, 2
      %v4018 = vrot.slane %v3816, 7
      %v4019 = vsel %vm930, %v4017, %v4018
      %v4020 = vrot.slane %v4018, 2
      %v4021 = vrot.slane %v3817, 7
      %v4022 = vsel %vm930, %v4020, %v4021
      %v4023 = vrot.slane %v3826, 7
      %v4024 = vrot.slane %v4023, 2
      %v4025 = vrot.slane %v3834, 7
      %v4026 = vsel %vm930, %v4024, %v4025
      %v4027 = vrot.slane %v4025, 2
      %v4028 = vrot.slane %v3833, 7
      %v4029 = vsel %vm930, %v4027, %v4028
      %v4030 = vrot.slane %v4028, 2
      %v4031 = vrot.slane %v3835, 7
      %v4032 = vsel %vm930, %v4030, %v4031
      %v4033 = vrot.slane %v4031, 2
      %v4034 = vrot.slane %v3843, 7
      %v4035 = vsel %vm930, %v4033, %v4034
      %v4036 = vrot.slane %v4034, 2
      %v4037 = vrot.slane %v3844, 7
      %v4038 = vsel %vm930, %v4036, %v4037
      %v4039 = vrot.slane %v3853, 7
      %v4040 = vrot.slane %v4039, 2
      %v4041 = vrot.slane %v3861, 7
      %v4042 = vsel %vm930, %v4040, %v4041
      %v4043 = vrot.slane %v4041, 2
      %v4044 = vrot.slane %v3860, 7
      %v4045 = vsel %vm930, %v4043, %v4044
      %v4046 = vrot.slane %v4044, 2
      %v4047 = vrot.slane %v3862, 7
      %v4048 = vsel %vm930, %v4046, %v4047
      %v4049 = vrot.slane %v4047, 2
      %v4050 = vrot.slane %v3870, 7
      %v4051 = vsel %vm930, %v4049, %v4050
      %v4052 = vrot.slane %v4050, 2
      %v4053 = vrot.slane %v3871, 7
      %v4054 = vsel %vm930, %v4052, %v4053
      %v4055 = vrot.slane %v3880, 7
      %v4056 = vrot.slane %v4055, 2
      %v4057 = vrot.slane %v3888, 7
      %v4058 = vsel %vm930, %v4056, %v4057
      %v4059 = vrot.slane %v4057, 2
      %v4060 = vrot.slane %v3887, 7
      %v4061 = vsel %vm930, %v4059, %v4060
      %v4062 = vrot.slane %v4060, 2
      %v4063 = vrot.slane %v3889, 7
      %v4064 = vsel %vm930, %v4062, %v4063
      %v4065 = vrot.slane %v4063, 2
      %v4066 = vrot.slane %v3897, 7
      %v4067 = vsel %vm930, %v4065, %v4066
      %v4068 = vrot.slane %v4066, 2
      %v4069 = vrot.slane %v3898, 7
      %v4070 = vsel %vm930, %v4068, %v4069
      %v4071 = vrot.slane %v3907, 7
      %v4072 = vrot.slane %v4071, 2
      %v4073 = vrot.slane %v3915, 7
      %v4074 = vsel %vm930, %v4072, %v4073
      %v4075 = vrot.slane %v4073, 2
      %v4076 = vrot.slane %v3914, 7
      %v4077 = vsel %vm930, %v4075, %v4076
      %v4078 = vrot.slane %v4076, 2
      %v4079 = vrot.slane %v3916, 7
      %v4080 = vsel %vm930, %v4078, %v4079
      %v4081 = vrot.slane %v4079, 2
      %v4082 = vrot.slane %v3924, 7
      %v4083 = vsel %vm930, %v4081, %v4082
      %v4084 = vrot.slane %v4082, 2
      %v4085 = vrot.slane %v3925, 7
      %v4086 = vsel %vm930, %v4084, %v4085
      %v4087 = vrot.slane %v3934, 7
      %v4088 = vrot.slane %v4087, 2
      %v4089 = vrot.slane %v3942, 7
      %v4090 = vsel %vm930, %v4088, %v4089
      %v4091 = vrot.slane %v4089, 2
      %v4092 = vrot.slane %v3941, 7
      %v4093 = vsel %vm930, %v4091, %v4092
      %v4094 = vrot.slane %v4092, 2
      %v4095 = vrot.slane %v3943, 7
      %v4096 = vsel %vm930, %v4094, %v4095
      %v4097 = vrot.slane %v4095, 2
      %v4098 = vrot.slane %v3951, 7
      %v4099 = vsel %vm930, %v4097, %v4098
      %v4100 = vrot.slane %v4098, 2
      %v4101 = vrot.slane %v3952, 7
      %v4102 = vsel %vm930, %v4100, %v4101
      %v4103 = vrot.slane %v3961, 7
      %v4104 = vrot.slane %v4103, 2
      %v4105 = vrot.slane %v3969, 7
      %v4106 = vsel %vm930, %v4104, %v4105
      %v4107 = vrot.slane %v4105, 2
      %v4108 = vrot.slane %v3968, 7
      %v4109 = vsel %vm930, %v4107, %v4108
      %v4110 = vrot.slane %v4108, 2
      %v4111 = vrot.slane %v3970, 7
      %v4112 = vsel %vm930, %v4110, %v4111
      %v4113 = vrot.slane %v4111, 2
      %v4114 = vrot.slane %v3978, 7
      %v4115 = vsel %vm930, %v4113, %v4114
      %v4116 = vrot.slane %v4114, 2
      %v4117 = vrot.slane %v3979, 7
      %v4118 = vsel %vm930, %v4116, %v4117
      %v4119 = vrot.slane %v3988, 7
      %v4120 = vrot.slane %v4119, 2
      %v4121 = vrot.slane %v3996, 7
      %v4122 = vsel %vm930, %v4120, %v4121
      %v4123 = vrot.slane %v4121, 2
      %v4124 = vrot.slane %v3995, 7
      %v4125 = vsel %vm930, %v4123, %v4124
      %v4126 = vrot.slane %v4124, 2
      %v4127 = vrot.slane %v3997, 7
      %v4128 = vsel %vm930, %v4126, %v4127
      %v4129 = vrot.slane %v4127, 2
      %v4130 = vrot.slane %v4005, 7
      %v4131 = vsel %vm930, %v4129, %v4130
      %v4132 = vrot.slane %v4130, 2
      %v4133 = vrot.slane %v4006, 7
      %v4134 = vsel %vm930, %v4132, %v4133
      %s4135 = scalar_lea.vmem %s1, 2688
      %v4136 = vld [vmem:[%s4135] sm:$0xff]
      %v4137 = vld [vmem:[%s4135 + $0x8] sm:$0xff]
      %v4138 = vld [vmem:[%s4135 + $0x10] sm:$0xff]
      %v4139 = vld [vmem:[%s4135 + $0x18] sm:$0xff]
      %v4140 = vld [vmem:[%s4135 + $0x20] sm:$0xff]
      %v4141 = vld [vmem:[%s4135 + $0x28] sm:$0xff]
      %v4142 = vld [vmem:[%s4135 + $0x30] sm:$0xff]
      %v4143 = vld [vmem:[%s4135 + $0x38] sm:$0xff]
      %v4144 = vld [vmem:[%s4135 + $0x40] sm:$0xff]
      %v4145 = vld [vmem:[%s4135 + $0x48] sm:$0xff]
      %v4146 = vld [vmem:[%s4135 + $0x50] sm:$0xff]
      %v4147 = vld [vmem:[%s4135 + $0x58] sm:$0xff]
      %v4148 = vld [vmem:[%s4135 + $0x60] sm:$0xff]
      %v4149 = vld [vmem:[%s4135 + $0x68] sm:$0xff]
      %v4150 = vld [vmem:[%s4135 + $0x70] sm:$0xff]
      %v4151 = vld [vmem:[%s4135 + $0x78] sm:$0xff]
      %v4152 = vld [vmem:[%s4135 + $0x80] sm:$0xff]
      %v4153 = vld [vmem:[%s4135 + $0x88] sm:$0xff]
      %v4154 = vld [vmem:[%s4135 + $0x90] sm:$0xff]
      %v4155 = vld [vmem:[%s4135 + $0x98] sm:$0xff]
      %v4156 = vld [vmem:[%s4135 + $0xa0] sm:$0xff]
      %v4157 = vld [vmem:[%s4135 + $0xa8] sm:$0xff]
      %v4158 = vld [vmem:[%s4135 + $0xb0] sm:$0xff]
      %v4159 = vld [vmem:[%s4135 + $0xb8] sm:$0xff]
      %v4160 = vld [vmem:[%s4135 + $0xc0] sm:$0xff]
      %v4161 = vld [vmem:[%s4135 + $0xc8] sm:$0xff]
      %v4162 = vld [vmem:[%s4135 + $0xd0] sm:$0xff]
      %v4163 = vld [vmem:[%s4135 + $0xd8] sm:$0xff]
      %v4164 = vld [vmem:[%s4135 + $0xe0] sm:$0xff]
      %v4165 = vld [vmem:[%s4135 + $0xe8] sm:$0xff]
      %v4166 = vld [vmem:[%s4135 + $0xf0] sm:$0xff]
      %v4167 = vld [vmem:[%s4135 + $0xf8] sm:$0xff]
      %v4168 = vld [vmem:[%s4135 + $0x100] sm:$0xff]
      %v4169 = vld [vmem:[%s4135 + $0x108] sm:$0xff]
      %v4170 = vld [vmem:[%s4135 + $0x110] sm:$0xff]
      %v4171 = vld [vmem:[%s4135 + $0x118] sm:$0xff]
      %v4172 = vld [vmem:[%s4135 + $0x120] sm:$0xff]
      %v4173 = vld [vmem:[%s4135 + $0x128] sm:$0xff]
      %v4174 = vld [vmem:[%s4135 + $0x130] sm:$0xff]
      %v4175 = vld [vmem:[%s4135 + $0x138] sm:$0xff]
      %v4176 = vld [vmem:[%s4135 + $0x140] sm:$0xff]
      %v4177 = vld [vmem:[%s4135 + $0x148] sm:$0xff]
      %v4178 = vld [vmem:[%s4135 + $0x150] sm:$0xff]
      %v4179 = vld [vmem:[%s4135 + $0x158] sm:$0xff]
      %v4180 = vld [vmem:[%s4135 + $0x160] sm:$0xff]
      %v4181 = vld [vmem:[%s4135 + $0x168] sm:$0xff]
      %v4182 = vld [vmem:[%s4135 + $0x170] sm:$0xff]
      %v4183 = vld [vmem:[%s4135 + $0x178] sm:$0xff]
      %v4184 = vld [vmem:[%s4135 + $0x180] sm:$0xff]
      %v4185 = vld [vmem:[%s4135 + $0x188] sm:$0xff]
      %v4186 = vld [vmem:[%s4135 + $0x190] sm:$0xff]
      %v4187 = vld [vmem:[%s4135 + $0x198] sm:$0xff]
      %v4188 = vld [vmem:[%s4135 + $0x1a0] sm:$0xff]
      %v4189 = vld [vmem:[%s4135 + $0x1a8] sm:$0xff]
      %v4190 = vld [vmem:[%s4135 + $0x1b0] sm:$0xff]
      %v4191 = vld [vmem:[%s4135 + $0x1b8] sm:$0xff]
      %v4192 = vld [vmem:[%s4135 + $0x1c0] sm:$0xff]
      %v4193 = vld [vmem:[%s4135 + $0x1c8] sm:$0xff]
      %v4194 = vld [vmem:[%s4135 + $0x1d0] sm:$0xff]
      %v4195 = vld [vmem:[%s4135 + $0x1d8] sm:$0xff]
      %v4196 = vld [vmem:[%s4135 + $0x1e0] sm:$0xff]
      %v4197 = vld [vmem:[%s4135 + $0x1e8] sm:$0xff]
      %v4198 = vld [vmem:[%s4135 + $0x1f0] sm:$0xff]
      %v4199 = vld [vmem:[%s4135 + $0x1f8] sm:$0xff]
      %v4200 = vld [vmem:[%s4135 + $0x200] sm:$0xff]
      %v4201 = vld [vmem:[%s4135 + $0x208] sm:$0xff]
      %v4202 = vld [vmem:[%s4135 + $0x210] sm:$0xff]
      %v4203 = vld [vmem:[%s4135 + $0x218] sm:$0xff]
      %v4204 = vld [vmem:[%s4135 + $0x220] sm:$0xff]
      %v4205 = vld [vmem:[%s4135 + $0x228] sm:$0xff]
      %v4206 = vld [vmem:[%s4135 + $0x230] sm:$0xff]
      %v4207 = vld [vmem:[%s4135 + $0x238] sm:$0xff]
      %v4208 = vld [vmem:[%s4135 + $0x240] sm:$0xff]
      %v4209 = vld [vmem:[%s4135 + $0x248] sm:$0xff]
      %v4210 = vld [vmem:[%s4135 + $0x250] sm:$0xff]
      %v4211 = vld [vmem:[%s4135 + $0x258] sm:$0xff]
      %v4212 = vld [vmem:[%s4135 + $0x260] sm:$0xff]
      %v4213 = vld [vmem:[%s4135 + $0x268] sm:$0xff]
      %v4214 = vld [vmem:[%s4135 + $0x270] sm:$0xff]
      %v4215 = vld [vmem:[%s4135 + $0x278] sm:$0xff]
      %v4216 = vld [vmem:[%s4135 + $0x280] sm:$0xff]
      %v4217 = vld [vmem:[%s4135 + $0x288] sm:$0xff]
      %v4218 = vld [vmem:[%s4135 + $0x290] sm:$0xff]
      %v4219 = vld [vmem:[%s4135 + $0x298] sm:$0xff]
      %v4220 = vcombine.low %v4010, %v4013
      %v4221 = vcombine.low %v4016, %v4019
      %v4223 = vunpack.c.l.s4 1983009808
      %v4224 = vunpack.c.0.s8 %v4223
      %v4225 = vlaneseq
      %v4226 = vshrl.u32 %v4225, 7
      %v4227 = vsub.s32 %v4224, %v4226
      %v4228 = vrot.slane %v4220, %v4227
      %v4230 = vunpack.c.l.s4 1983009808
      %v4231 = vunpack.c.0.s8 %v4230
      %v4232 = vlaneseq
      %v4233 = vshrl.u32 %v4232, 7
      %v4234 = vsub.s32 %v4231, %v4233
      %v4235 = vrot.slane %v4221, %v4234
      %v4236 = vcombine.low %v4228, %v4235
      %v4237 = vcombine.high %v4228, %v4235
      %v4238 = vcombine.low %v4022, %v4026
      %v4239 = vcombine.low %v4029, %v4032
      %v4241 = vunpack.c.l.s4 1983009808
      %v4242 = vunpack.c.0.s8 %v4241
      %v4243 = vlaneseq
      %v4244 = vshrl.u32 %v4243, 7
      %v4245 = vsub.s32 %v4242, %v4244
      %v4246 = vrot.slane %v4238, %v4245
      %v4248 = vunpack.c.l.s4 1983009808
      %v4249 = vunpack.c.0.s8 %v4248
      %v4250 = vlaneseq
      %v4251 = vshrl.u32 %v4250, 7
      %v4252 = vsub.s32 %v4249, %v4251
      %v4253 = vrot.slane %v4239, %v4252
      %v4254 = vcombine.low %v4246, %v4253
      %v4255 = vcombine.high %v4246, %v4253
      %v4256 = vcombine.low %v4035, %v4038
      %v4257 = vcombine.low %v4042, %v4045
      %v4259 = vunpack.c.l.s4 1983009808
      %v4260 = vunpack.c.0.s8 %v4259
      %v4261 = vlaneseq
      %v4262 = vshrl.u32 %v4261, 7
      %v4263 = vsub.s32 %v4260, %v4262
      %v4264 = vrot.slane %v4256, %v4263
      %v4266 = vunpack.c.l.s4 1983009808
      %v4267 = vunpack.c.0.s8 %v4266
      %v4268 = vlaneseq
      %v4269 = vshrl.u32 %v4268, 7
      %v4270 = vsub.s32 %v4267, %v4269
      %v4271 = vrot.slane %v4257, %v4270
      %v4272 = vcombine.low %v4264, %v4271
      %v4273 = vcombine.high %v4264, %v4271
      %v4274 = vcombine.low %v4048, %v4051
      %v4275 = vcombine.low %v4054, %v4058
      %v4277 = vunpack.c.l.s4 1983009808
      %v4278 = vunpack.c.0.s8 %v4277
      %v4279 = vlaneseq
      %v4280 = vshrl.u32 %v4279, 7
      %v4281 = vsub.s32 %v4278, %v4280
      %v4282 = vrot.slane %v4274, %v4281
      %v4284 = vunpack.c.l.s4 1983009808
      %v4285 = vunpack.c.0.s8 %v4284
      %v4286 = vlaneseq
      %v4287 = vshrl.u32 %v4286, 7
      %v4288 = vsub.s32 %v4285, %v4287
      %v4289 = vrot.slane %v4275, %v4288
      %v4290 = vcombine.low %v4282, %v4289
      %v4291 = vcombine.high %v4282, %v4289
      %v4292 = vcombine.low %v4061, %v4064
      %v4293 = vcombine.low %v4067, %v4070
      %v4295 = vunpack.c.l.s4 1983009808
      %v4296 = vunpack.c.0.s8 %v4295
      %v4297 = vlaneseq
      %v4298 = vshrl.u32 %v4297, 7
      %v4299 = vsub.s32 %v4296, %v4298
      %v4300 = vrot.slane %v4292, %v4299
      %v4302 = vunpack.c.l.s4 1983009808
      %v4303 = vunpack.c.0.s8 %v4302
      %v4304 = vlaneseq
      %v4305 = vshrl.u32 %v4304, 7
      %v4306 = vsub.s32 %v4303, %v4305
      %v4307 = vrot.slane %v4293, %v4306
      %v4308 = vcombine.low %v4300, %v4307
      %v4309 = vcombine.high %v4300, %v4307
      %v4310 = vcombine.low %v4074, %v4077
      %v4311 = vcombine.low %v4080, %v4083
      %v4313 = vunpack.c.l.s4 1983009808
      %v4314 = vunpack.c.0.s8 %v4313
      %v4315 = vlaneseq
      %v4316 = vshrl.u32 %v4315, 7
      %v4317 = vsub.s32 %v4314, %v4316
      %v4318 = vrot.slane %v4310, %v4317
      %v4320 = vunpack.c.l.s4 1983009808
      %v4321 = vunpack.c.0.s8 %v4320
      %v4322 = vlaneseq
      %v4323 = vshrl.u32 %v4322, 7
      %v4324 = vsub.s32 %v4321, %v4323
      %v4325 = vrot.slane %v4311, %v4324
      %v4326 = vcombine.low %v4318, %v4325
      %v4327 = vcombine.high %v4318, %v4325
      %v4328 = vcombine.low %v4086, %v4090
      %v4329 = vcombine.low %v4093, %v4096
      %v4331 = vunpack.c.l.s4 1983009808
      %v4332 = vunpack.c.0.s8 %v4331
      %v4333 = vlaneseq
      %v4334 = vshrl.u32 %v4333, 7
      %v4335 = vsub.s32 %v4332, %v4334
      %v4336 = vrot.slane %v4328, %v4335
      %v4338 = vunpack.c.l.s4 1983009808
      %v4339 = vunpack.c.0.s8 %v4338
      %v4340 = vlaneseq
      %v4341 = vshrl.u32 %v4340, 7
      %v4342 = vsub.s32 %v4339, %v4341
      %v4343 = vrot.slane %v4329, %v4342
      %v4344 = vcombine.low %v4336, %v4343
      %v4345 = vcombine.high %v4336, %v4343
      %v4346 = vcombine.low %v4099, %v4102
      %v4347 = vcombine.low %v4106, %v4109
      %v4349 = vunpack.c.l.s4 1983009808
      %v4350 = vunpack.c.0.s8 %v4349
      %v4351 = vlaneseq
      %v4352 = vshrl.u32 %v4351, 7
      %v4353 = vsub.s32 %v4350, %v4352
      %v4354 = vrot.slane %v4346, %v4353
      %v4356 = vunpack.c.l.s4 1983009808
      %v4357 = vunpack.c.0.s8 %v4356
      %v4358 = vlaneseq
      %v4359 = vshrl.u32 %v4358, 7
      %v4360 = vsub.s32 %v4357, %v4359
      %v4361 = vrot.slane %v4347, %v4360
      %v4362 = vcombine.low %v4354, %v4361
      %v4363 = vcombine.high %v4354, %v4361
      %v4364 = vcombine.low %v4112, %v4115
      %v4365 = vcombine.low %v4118, %v4122
      %v4367 = vunpack.c.l.s4 1983009808
      %v4368 = vunpack.c.0.s8 %v4367
      %v4369 = vlaneseq
      %v4370 = vshrl.u32 %v4369, 7
      %v4371 = vsub.s32 %v4368, %v4370
      %v4372 = vrot.slane %v4364, %v4371
      %v4374 = vunpack.c.l.s4 1983009808
      %v4375 = vunpack.c.0.s8 %v4374
      %v4376 = vlaneseq
      %v4377 = vshrl.u32 %v4376, 7
      %v4378 = vsub.s32 %v4375, %v4377
      %v4379 = vrot.slane %v4365, %v4378
      %v4380 = vcombine.low %v4372, %v4379
      %v4381 = vcombine.high %v4372, %v4379
      %v4382 = vcombine.low %v4125, %v4128
      %v4383 = vcombine.low %v4131, %v4134
      %v4385 = vunpack.c.l.s4 1983009808
      %v4386 = vunpack.c.0.s8 %v4385
      %v4387 = vlaneseq
      %v4388 = vshrl.u32 %v4387, 7
      %v4389 = vsub.s32 %v4386, %v4388
      %v4390 = vrot.slane %v4382, %v4389
      %v4392 = vunpack.c.l.s4 1983009808
      %v4393 = vunpack.c.0.s8 %v4392
      %v4394 = vlaneseq
      %v4395 = vshrl.u32 %v4394, 7
      %v4396 = vsub.s32 %v4393, %v4395
      %v4397 = vrot.slane %v4383, %v4396
      %v4398 = vcombine.low %v4390, %v4397
      %v4399 = vcombine.high %v4390, %v4397
      %v4410 = vsel %vm172, %v4237, 0
      %v4412 = vsel %vm172, %v4255, 0
      %v4414 = vsel %vm172, %v4273, 0
      %v4416 = vsel %vm172, %v4291, 0
      %v4418 = vsel %vm172, %v4309, 0
      %v4420 = vsel %vm172, %v4327, 0
      %v4422 = vsel %vm172, %v4345, 0
      %v4424 = vsel %vm172, %v4363, 0
      %v4426 = vsel %vm172, %v4381, 0
      %v4428 = vsel %vm172, %v4399, 0
      %4430 = vmatprep.subr.mxu0 %v4137
      %4431 = vmatpush1.msra.mxu0 %v4136
      %4432 = vmatprep.subr.mxu0 %v4140
      %4433 = vmatpush1.msra.mxu0 %v4139
      %4434 = vmatprep.subr.mxu0 %v4143
      %4435 = vmatpush1.msra.mxu0 %v4142
      %4436 = vmatprep.subr.mxu0 %v4146
      %4437 = vmatpush1.msra.mxu0 %v4145
      %4438 = vmatprep.subr.mxu0 %v4149
      %4439 = vmatpush1.msra.mxu0 %v4148
      %4440 = vmatprep.subr.mxu0 %v4152
      %4441 = vmatpush1.msra.mxu0 %v4151
      %4442 = vmatprep.subr.mxu0 %v4155
      %4443 = vmatpush1.msra.mxu0 %v4154
      %4444 = vmatprep.subr.mxu0 %v4158
      %4445 = vmatpush1.msra.mxu0 %v4157
      %4446 = vmatprep.subr.mxu0 %v4161
      %4447 = vmatpush1.msra.mxu0 %v4160
      %4448 = vmatprep.subr.mxu0 %v4164
      %4449 = vmatpush1.msra.mxu0 %v4163
      %4450 = vmatprep.subr.mxu0 %v4167
      %4451 = vmatpush1.msra.mxu0 %v4166
      %4452 = vmatprep.subr.mxu0 %v4170
      %4453 = vmatpush1.msra.mxu0 %v4169
      %4454 = vmatprep.subr.mxu0 %v4173
      %4455 = vmatpush1.msra.mxu0 %v4172
      %4456 = vmatprep.subr.mxu0 %v4176
      %4457 = vmatpush1.msra.mxu0 %v4175
      %4458 = vmatprep.subr.mxu0 %v4179
      %4459 = vmatpush1.msra.mxu0 %v4178
      %4460 = vmatprep.subr.mxu0 %v4182
      %4461 = vmatpush1.msra.mxu0 %v4181
      %4462 = vmatprep.subr.mxu0 %v4185
      %4463 = vmatpush1.msra.mxu0 %v4184
      %4464 = vmatprep.subr.mxu0 %v4188
      %4465 = vmatpush1.msra.mxu0 %v4187
      %4466 = vmatprep.subr.mxu0 %v4191
      %4467 = vmatpush1.msra.mxu0 %v4190
      %4468 = vmatprep.subr.mxu0 %v4194
      %4469 = vmatpush1.msra.mxu0 %v4193
      %4470 = vmatprep.subr.mxu0 %v4197
      %4471 = vmatpush1.msra.mxu0 %v4196
      %4472 = vmatprep.subr.mxu0 %v4200
      %4473 = vmatpush1.msra.mxu0 %v4199
      %4474 = vmatprep.subr.mxu0 %v4203
      %4475 = vmatpush1.msra.mxu0 %v4202
      %4476 = vmatprep.subr.mxu0 %v4206
      %4477 = vmatpush1.msra.mxu0 %v4205
      %4478 = vmatprep.subr.mxu0 %v4209
      %4479 = vmatpush1.msra.mxu0 %v4208
      %4480 = vmatprep.subr.mxu0 %v4212
      %4481 = vmatpush1.msra.mxu0 %v4211
      %4482 = vmatprep.subr.mxu0 %v4215
      %4483 = vmatpush1.msra.mxu0 %v4214
      %4484 = vmatprep.subr.mxu0 %v4218
      %4485 = vmatpush1.msra.mxu0 %v4217
      %4486 = vmatprep.subr.mxu0 0.0
      %4487 = vmatpush1.msra.mxu0 0.0
      %4488 = vmatprep.subr.mxu0 0.0
      %4489 = vmatpush1.msra.mxu0 0.0
      %4490 = vmatprep.subr.mxu0 0.0
      %4491 = vmatpush1.msra.mxu0 0.0
      %4492 = vmatprep.subr.mxu0 0.0
      %4493 = vmatpush1.msra.mxu0 0.0
      %4494 = vmatprep.mubr.f32.mxu0 %v4410
      %4495 = vmatmul.mubr.f32.gmra.mrb[0].mxu0 %v4236
      %v4496 = vpop.f32.mrb[0].mxu0
      %v4497 = vadd.f32 0.0, %v4496
      %v4498 = vpop.f32.mrb[0].mxu0
      %v4499 = vadd.f32 0.0, %v4498
      %4500 = vmatprep.mubr.f32.mxu0 %v4412
      %4501 = vmatmul.mubr.f32.gmra.mrb[0].mxu0 %v4254
      %v4502 = vpop.f32.mrb[0].mxu0
      %v4503 = vadd.f32 0.0, %v4502
      %v4504 = vpop.f32.mrb[0].mxu0
      %v4505 = vadd.f32 0.0, %v4504
      %4506 = vmatprep.mubr.f32.mxu0 %v4414
      %4507 = vmatmul.mubr.f32.gmra.mrb[0].mxu0 %v4272
      %v4508 = vpop.f32.mrb[0].mxu0
      %v4509 = vadd.f32 0.0, %v4508
      %v4510 = vpop.f32.mrb[0].mxu0
      %v4511 = vadd.f32 0.0, %v4510
      %4512 = vmatprep.mubr.f32.mxu0 %v4416
      %4513 = vmatmul.mubr.f32.gmra.mrb[0].mxu0 %v4290
      %v4514 = vpop.f32.mrb[0].mxu0
      %v4515 = vadd.f32 0.0, %v4514
      %v4516 = vpop.f32.mrb[0].mxu0
      %v4517 = vadd.f32 0.0, %v4516
      %4518 = vmatprep.mubr.f32.mxu0 %v4418
      %4519 = vmatmul.mubr.f32.gmra.mrb[0].mxu0 %v4308
      %v4520 = vpop.f32.mrb[0].mxu0
      %v4521 = vadd.f32 0.0, %v4520
      %v4522 = vpop.f32.mrb[0].mxu0
      %v4523 = vadd.f32 0.0, %v4522
      %4524 = vmatprep.mubr.f32.mxu0 %v4420
      %4525 = vmatmul.mubr.f32.gmra.mrb[0].mxu0 %v4326
      %v4526 = vpop.f32.mrb[0].mxu0
      %v4527 = vadd.f32 0.0, %v4526
      %v4528 = vpop.f32.mrb[0].mxu0
      %v4529 = vadd.f32 0.0, %v4528
      %4530 = vmatprep.mubr.f32.mxu0 %v4422
      %4531 = vmatmul.mubr.f32.gmra.mrb[0].mxu0 %v4344
      %v4532 = vpop.f32.mrb[0].mxu0
      %v4533 = vadd.f32 0.0, %v4532
      %v4534 = vpop.f32.mrb[0].mxu0
      %v4535 = vadd.f32 0.0, %v4534
      %4536 = vmatprep.mubr.f32.mxu0 %v4424
      %4537 = vmatmul.mubr.f32.gmra.mrb[0].mxu0 %v4362
      %v4538 = vpop.f32.mrb[0].mxu0
      %v4539 = vadd.f32 0.0, %v4538
      %v4540 = vpop.f32.mrb[0].mxu0
      %v4541 = vadd.f32 0.0, %v4540
      %4542 = vmatprep.mubr.f32.mxu0 %v4426
      %4543 = vmatmul.mubr.f32.gmra.mrb[0].mxu0 %v4380
      %v4544 = vpop.f32.mrb[0].mxu0
      %v4545 = vadd.f32 0.0, %v4544
      %v4546 = vpop.f32.mrb[0].mxu0
      %v4547 = vadd.f32 0.0, %v4546
      %4548 = vmatprep.mubr.f32.mxu0 %v4428
      %4549 = vmatmul.mubr.f32.gmra.mrb[0].mxu0 %v4398
      %v4550 = vpop.f32.mrb[0].mxu0
      %v4551 = vadd.f32 0.0, %v4550
      %v4552 = vpop.f32.mrb[0].mxu0
      %v4553 = vadd.f32 0.0, %v4552
      %4554 = vdwg.mxu0
      %4555 = vmatprep.subr.mxu0 0.0
      %4556 = vmatpush1.msra.mxu0 %v4138
      %4557 = vmatprep.subr.mxu0 0.0
      %4558 = vmatpush1.msra.mxu0 %v4141
      %4559 = vmatprep.subr.mxu0 0.0
      %4560 = vmatpush1.msra.mxu0 %v4144
      %4561 = vmatprep.subr.mxu0 0.0
      %4562 = vmatpush1.msra.mxu0 %v4147
      %4563 = vmatprep.subr.mxu0 0.0
      %4564 = vmatpush1.msra.mxu0 %v4150
      %4565 = vmatprep.subr.mxu0 0.0
      %4566 = vmatpush1.msra.mxu0 %v4153
      %4567 = vmatprep.subr.mxu0 0.0
      %4568 = vmatpush1.msra.mxu0 %v4156
      %4569 = vmatprep.subr.mxu0 0.0
      %4570 = vmatpush1.msra.mxu0 %v4159
      %4571 = vmatprep.subr.mxu0 0.0
      %4572 = vmatpush1.msra.mxu0 %v4162
      %4573 = vmatprep.subr.mxu0 0.0
      %4574 = vmatpush1.msra.mxu0 %v4165
      %4575 = vmatprep.subr.mxu0 0.0
      %4576 = vmatpush1.msra.mxu0 %v4168
      %4577 = vmatprep.subr.mxu0 0.0
      %4578 = vmatpush1.msra.mxu0 %v4171
      %4579 = vmatprep.subr.mxu0 0.0
      %4580 = vmatpush1.msra.mxu0 %v4174
      %4581 = vmatprep.subr.mxu0 0.0
      %4582 = vmatpush1.msra.mxu0 %v4177
      %4583 = vmatprep.subr.mxu0 0.0
      %4584 = vmatpush1.msra.mxu0 %v4180
      %4585 = vmatprep.subr.mxu0 0.0
      %4586 = vmatpush1.msra.mxu0 %v4183
      %4587 = vmatprep.subr.mxu0 0.0
      %4588 = vmatpush1.msra.mxu0 %v4186
      %4589 = vmatprep.subr.mxu0 0.0
      %4590 = vmatpush1.msra.mxu0 %v4189
      %4591 = vmatprep.subr.mxu0 0.0
      %4592 = vmatpush1.msra.mxu0 %v4192
      %4593 = vmatprep.subr.mxu0 0.0
      %4594 = vmatpush1.msra.mxu0 %v4195
      %4595 = vmatprep.subr.mxu0 0.0
      %4596 = vmatpush1.msra.mxu0 %v4198
      %4597 = vmatprep.subr.mxu0 0.0
      %4598 = vmatpush1.msra.mxu0 %v4201
      %4599 = vmatprep.subr.mxu0 0.0
      %4600 = vmatpush1.msra.mxu0 %v4204
      %4601 = vmatprep.subr.mxu0 0.0
      %4602 = vmatpush1.msra.mxu0 %v4207
      %4603 = vmatprep.subr.mxu0 0.0
      %4604 = vmatpush1.msra.mxu0 %v4210
      %4605 = vmatprep.subr.mxu0 0.0
      %4606 = vmatpush1.msra.mxu0 %v4213
      %4607 = vmatprep.subr.mxu0 0.0
      %4608 = vmatpush1.msra.mxu0 %v4216
      %4609 = vmatprep.subr.mxu0 0.0
      %4610 = vmatpush1.msra.mxu0 %v4219
      %4611 = vmatprep.subr.mxu0 0.0
      %4612 = vmatpush1.msra.mxu0 0.0
      %4613 = vmatprep.subr.mxu0 0.0
      %4614 = vmatpush1.msra.mxu0 0.0
      %4615 = vmatprep.subr.mxu0 0.0
      %4616 = vmatpush1.msra.mxu0 0.0
      %4617 = vmatprep.subr.mxu0 0.0
      %4618 = vmatpush1.msra.mxu0 0.0
      %4619 = vmatprep.mubr.f32.mxu0 %v4410
      %4620 = vmatmul.mubr.f32.gmra.mrb[0].mxu0 %v4236
      %v4621 = vpop.f32.mrb[0].mxu0
      %v4622 = vadd.f32 0.0, %v4621
      %v4623 = vpop.f32.mrb[0].mxu0
      %4624 = vmatprep.mubr.f32.mxu0 %v4412
      %4625 = vmatmul.mubr.f32.gmra.mrb[0].mxu0 %v4254
      %v4626 = vpop.f32.mrb[0].mxu0
      %v4627 = vadd.f32 0.0, %v4626
      %v4628 = vpop.f32.mrb[0].mxu0
      %4629 = vmatprep.mubr.f32.mxu0 %v4414
      %4630 = vmatmul.mubr.f32.gmra.mrb[0].mxu0 %v4272
      %v4631 = vpop.f32.mrb[0].mxu0
      %v4632 = vadd.f32 0.0, %v4631
      %v4633 = vpop.f32.mrb[0].mxu0
      %4634 = vmatprep.mubr.f32.mxu0 %v4416
      %4635 = vmatmul.mubr.f32.gmra.mrb[0].mxu0 %v4290
      %v4636 = vpop.f32.mrb[0].mxu0
      %v4637 = vadd.f32 0.0, %v4636
      %v4638 = vpop.f32.mrb[0].mxu0
      %4639 = vmatprep.mubr.f32.mxu0 %v4418
      %4640 = vmatmul.mubr.f32.gmra.mrb[0].mxu0 %v4308
      %v4641 = vpop.f32.mrb[0].mxu0
      %v4642 = vadd.f32 0.0, %v4641
      %v4643 = vpop.f32.mrb[0].mxu0
      %4644 = vmatprep.mubr.f32.mxu0 %v4420
      %4645 = vmatmul.mubr.f32.gmra.mrb[0].mxu0 %v4326
      %v4646 = vpop.f32.mrb[0].mxu0
      %v4647 = vadd.f32 0.0, %v4646
      %v4648 = vpop.f32.mrb[0].mxu0
      %4649 = vmatprep.mubr.f32.mxu0 %v4422
      %4650 = vmatmul.mubr.f32.gmra.mrb[0].mxu0 %v4344
      %v4651 = vpop.f32.mrb[0].mxu0
      %v4652 = vadd.f32 0.0, %v4651
      %v4653 = vpop.f32.mrb[0].mxu0
      %4654 = vmatprep.mubr.f32.mxu0 %v4424
      %4655 = vmatmul.mubr.f32.gmra.mrb[0].mxu0 %v4362
      %v4656 = vpop.f32.mrb[0].mxu0
      %v4657 = vadd.f32 0.0, %v4656
      %v4658 = vpop.f32.mrb[0].mxu0
      %4659 = vmatprep.mubr.f32.mxu0 %v4426
      %4660 = vmatmul.mubr.f32.gmra.mrb[0].mxu0 %v4380
      %v4661 = vpop.f32.mrb[0].mxu0
      %v4662 = vadd.f32 0.0, %v4661
      %v4663 = vpop.f32.mrb[0].mxu0
      %4664 = vmatprep.mubr.f32.mxu0 %v4428
      %4665 = vmatmul.mubr.f32.gmra.mrb[0].mxu0 %v4398
      %v4666 = vpop.f32.mrb[0].mxu0
      %v4667 = vadd.f32 0.0, %v4666
      %v4668 = vpop.f32.mrb[0].mxu0
      %4669 = vdwg.mxu0
      %v4670 = vadd.f32 %v3697, %v4497
      %v4671 = vadd.f32 %v3698, %v4499
      %v4672 = vadd.f32 %v3699, %v4622
      %v4673 = vadd.f32 %v3700, %v4503
      %v4674 = vadd.f32 %v3701, %v4505
      %v4675 = vadd.f32 %v3702, %v4627
      %v4676 = vadd.f32 %v3703, %v4509
      %v4677 = vadd.f32 %v3704, %v4511
      %v4678 = vadd.f32 %v3705, %v4632
      %v4679 = vadd.f32 %v3706, %v4515
      %v4680 = vadd.f32 %v3707, %v4517
      %v4681 = vadd.f32 %v3708, %v4637
      %v4682 = vadd.f32 %v3709, %v4521
      %v4683 = vadd.f32 %v3710, %v4523
      %v4684 = vadd.f32 %v3711, %v4642
      %v4685 = vadd.f32 %v3712, %v4527
      %v4686 = vadd.f32 %v3713, %v4529
      %v4687 = vadd.f32 %v3714, %v4647
      %v4688 = vadd.f32 %v3715, %v4533
      %v4689 = vadd.f32 %v3716, %v4535
      %v4690 = vadd.f32 %v3717, %v4652
      %v4691 = vadd.f32 %v3718, %v4539
      %v4692 = vadd.f32 %v3719, %v4541
      %v4693 = vadd.f32 %v3720, %v4657
      %v4694 = vadd.f32 %v3721, %v4545
      %v4695 = vadd.f32 %v3722, %v4547
      %v4696 = vadd.f32 %v3723, %v4662
      %v4697 = vadd.f32 %v3724, %v4551
      %v4698 = vadd.f32 %v3725, %v4553
      %v4699 = vadd.f32 %v3726, %v4667
      %v4700 = vld [vmem:[%s2889] sm:$0xfc]
      %v4701 = vld [vmem:[%s2889 + $0x8] sm:$0xfc]
      %v4702 = vld [vmem:[%s2889 + $0x10] sm:$0xf]
      %v4703 = vld [vmem:[%s2889 + $0x18] sm:$0xf]
      %v4704 = vld [vmem:[%s2889 + $0x20] sm:$0xfc]
      %v4705 = vld [vmem:[%s2889 + $0x28] sm:$0xfc]
      %v4706 = vld [vmem:[%s2889 + $0x30] sm:$0xf]
      %v4707 = vld [vmem:[%s2889 + $0x38] sm:$0xf]
      %v4708 = vld [vmem:[%s2889 + $0x40] sm:$0xfc]
      %v4709 = vld [vmem:[%s2889 + $0x48] sm:$0xfc]
      %v4710 = vld [vmem:[%s2889 + $0x50] sm:$0xf]
      %v4711 = vld [vmem:[%s2889 + $0x58] sm:$0xf]
      %v4712 = vld [vmem:[%s2889 + $0x60] sm:$0xfc]
      %v4713 = vld [vmem:[%s2889 + $0x68] sm:$0xfc]
      %v4714 = vld [vmem:[%s2889 + $0x70] sm:$0xf]
      %v4715 = vld [vmem:[%s2889 + $0x78] sm:$0xf]
      %v4716 = vld [vmem:[%s2889 + $0x80] sm:$0xfc]
      %v4717 = vld [vmem:[%s2889 + $0x88] sm:$0xfc]
      %v4718 = vld [vmem:[%s2889 + $0x90] sm:$0xf]
      %v4719 = vld [vmem:[%s2889 + $0x98] sm:$0xf]
      %v4720 = vld [vmem:[%s2889 + $0xa0] sm:$0xfc]
      %v4721 = vld [vmem:[%s2889 + $0xa8] sm:$0xfc]
      %v4722 = vld [vmem:[%s2889 + $0xb0] sm:$0xf]
      %v4723 = vld [vmem:[%s2889 + $0xb8] sm:$0xf]
      %v4724 = vld [vmem:[%s2889 + $0xc0] sm:$0xfc]
      %v4725 = vld [vmem:[%s2889 + $0xc8] sm:$0xfc]
      %v4726 = vld [vmem:[%s2889 + $0xd0] sm:$0xf]
      %v4727 = vld [vmem:[%s2889 + $0xd8] sm:$0xf]
      %v4728 = vld [vmem:[%s2889 + $0xe0] sm:$0xfc]
      %v4729 = vld [vmem:[%s2889 + $0xe8] sm:$0xfc]
      %v4730 = vld [vmem:[%s2889 + $0xf0] sm:$0xf]
      %v4731 = vld [vmem:[%s2889 + $0xf8] sm:$0xf]
      %v4764 = vcombine.low %v4700, %v4701
      %v4765 = vcombine.high %v4700, %v4701
      %v4767 = vunpack.c.l.s4 1983009808
      %v4768 = vunpack.c.0.s8 %v4767
      %v4769 = vlaneseq
      %v4770 = vshrl.u32 %v4769, 7
      %v4771 = vsub.s32 %v4768, %v4770
      %v4772 = vrot.slane %v4764, %v4771
      %v4774 = vunpack.c.l.s4 1983009808
      %v4775 = vunpack.c.0.s8 %v4774
      %v4776 = vlaneseq
      %v4777 = vshrl.u32 %v4776, 7
      %v4778 = vsub.s32 %v4775, %v4777
      %v4779 = vrot.slane %v4765, %v4778
      %v4780 = vcombine.high %v4772, %v4772
      %v4781 = vcombine.high %v4779, %v4779
      %v4782 = vcombine.low %v4702, %v4703
      %v4784 = vunpack.c.l.s4 1983009808
      %v4785 = vunpack.c.0.s8 %v4784
      %v4786 = vlaneseq
      %v4787 = vshrl.u32 %v4786, 7
      %v4788 = vsub.s32 %v4785, %v4787
      %v4789 = vrot.slane %v4782, %v4788
      %v4790 = vcombine.high %v4789, %v4789
      %v4791 = vcombine.low %v4704, %v4705
      %v4792 = vcombine.high %v4704, %v4705
      %v4794 = vunpack.c.l.s4 1983009808
      %v4795 = vunpack.c.0.s8 %v4794
      %v4796 = vlaneseq
      %v4797 = vshrl.u32 %v4796, 7
      %v4798 = vsub.s32 %v4795, %v4797
      %v4799 = vrot.slane %v4791, %v4798
      %v4801 = vunpack.c.l.s4 1983009808
      %v4802 = vunpack.c.0.s8 %v4801
      %v4803 = vlaneseq
      %v4804 = vshrl.u32 %v4803, 7
      %v4805 = vsub.s32 %v4802, %v4804
      %v4806 = vrot.slane %v4792, %v4805
      %v4807 = vcombine.high %v4799, %v4799
      %v4808 = vcombine.high %v4806, %v4806
      %v4809 = vcombine.low %v4706, %v4707
      %v4811 = vunpack.c.l.s4 1983009808
      %v4812 = vunpack.c.0.s8 %v4811
      %v4813 = vlaneseq
      %v4814 = vshrl.u32 %v4813, 7
      %v4815 = vsub.s32 %v4812, %v4814
      %v4816 = vrot.slane %v4809, %v4815
      %v4817 = vcombine.high %v4816, %v4816
      %v4818 = vcombine.low %v4708, %v4709
      %v4819 = vcombine.high %v4708, %v4709
      %v4821 = vunpack.c.l.s4 1983009808
      %v4822 = vunpack.c.0.s8 %v4821
      %v4823 = vlaneseq
      %v4824 = vshrl.u32 %v4823, 7
      %v4825 = vsub.s32 %v4822, %v4824
      %v4826 = vrot.slane %v4818, %v4825
      %v4828 = vunpack.c.l.s4 1983009808
      %v4829 = vunpack.c.0.s8 %v4828
      %v4830 = vlaneseq
      %v4831 = vshrl.u32 %v4830, 7
      %v4832 = vsub.s32 %v4829, %v4831
      %v4833 = vrot.slane %v4819, %v4832
      %v4834 = vcombine.high %v4826, %v4826
      %v4835 = vcombine.high %v4833, %v4833
      %v4836 = vcombine.low %v4710, %v4711
      %v4838 = vunpack.c.l.s4 1983009808
      %v4839 = vunpack.c.0.s8 %v4838
      %v4840 = vlaneseq
      %v4841 = vshrl.u32 %v4840, 7
      %v4842 = vsub.s32 %v4839, %v4841
      %v4843 = vrot.slane %v4836, %v4842
      %v4844 = vcombine.high %v4843, %v4843
      %v4845 = vcombine.low %v4712, %v4713
      %v4846 = vcombine.high %v4712, %v4713
      %v4848 = vunpack.c.l.s4 1983009808
      %v4849 = vunpack.c.0.s8 %v4848
      %v4850 = vlaneseq
      %v4851 = vshrl.u32 %v4850, 7
      %v4852 = vsub.s32 %v4849, %v4851
      %v4853 = vrot.slane %v4845, %v4852
      %v4855 = vunpack.c.l.s4 1983009808
      %v4856 = vunpack.c.0.s8 %v4855
      %v4857 = vlaneseq
      %v4858 = vshrl.u32 %v4857, 7
      %v4859 = vsub.s32 %v4856, %v4858
      %v4860 = vrot.slane %v4846, %v4859
      %v4861 = vcombine.high %v4853, %v4853
      %v4862 = vcombine.high %v4860, %v4860
      %v4863 = vcombine.low %v4714, %v4715
      %v4865 = vunpack.c.l.s4 1983009808
      %v4866 = vunpack.c.0.s8 %v4865
      %v4867 = vlaneseq
      %v4868 = vshrl.u32 %v4867, 7
      %v4869 = vsub.s32 %v4866, %v4868
      %v4870 = vrot.slane %v4863, %v4869
      %v4871 = vcombine.high %v4870, %v4870
      %v4872 = vcombine.low %v4716, %v4717
      %v4873 = vcombine.high %v4716, %v4717
      %v4875 = vunpack.c.l.s4 1983009808
      %v4876 = vunpack.c.0.s8 %v4875
      %v4877 = vlaneseq
      %v4878 = vshrl.u32 %v4877, 7
      %v4879 = vsub.s32 %v4876, %v4878
      %v4880 = vrot.slane %v4872, %v4879
      %v4882 = vunpack.c.l.s4 1983009808
      %v4883 = vunpack.c.0.s8 %v4882
      %v4884 = vlaneseq
      %v4885 = vshrl.u32 %v4884, 7
      %v4886 = vsub.s32 %v4883, %v4885
      %v4887 = vrot.slane %v4873, %v4886
      %v4888 = vcombine.high %v4880, %v4880
      %v4889 = vcombine.high %v4887, %v4887
      %v4890 = vcombine.low %v4718, %v4719
      %v4892 = vunpack.c.l.s4 1983009808
      %v4893 = vunpack.c.0.s8 %v4892
      %v4894 = vlaneseq
      %v4895 = vshrl.u32 %v4894, 7
      %v4896 = vsub.s32 %v4893, %v4895
      %v4897 = vrot.slane %v4890, %v4896
      %v4898 = vcombine.high %v4897, %v4897
      %v4899 = vcombine.low %v4720, %v4721
      %v4900 = vcombine.high %v4720, %v4721
      %v4902 = vunpack.c.l.s4 1983009808
      %v4903 = vunpack.c.0.s8 %v4902
      %v4904 = vlaneseq
      %v4905 = vshrl.u32 %v4904, 7
      %v4906 = vsub.s32 %v4903, %v4905
      %v4907 = vrot.slane %v4899, %v4906
      %v4909 = vunpack.c.l.s4 1983009808
      %v4910 = vunpack.c.0.s8 %v4909
      %v4911 = vlaneseq
      %v4912 = vshrl.u32 %v4911, 7
      %v4913 = vsub.s32 %v4910, %v4912
      %v4914 = vrot.slane %v4900, %v4913
      %v4915 = vcombine.high %v4907, %v4907
      %v4916 = vcombine.high %v4914, %v4914
      %v4917 = vcombine.low %v4722, %v4723
      %v4919 = vunpack.c.l.s4 1983009808
      %v4920 = vunpack.c.0.s8 %v4919
      %v4921 = vlaneseq
      %v4922 = vshrl.u32 %v4921, 7
      %v4923 = vsub.s32 %v4920, %v4922
      %v4924 = vrot.slane %v4917, %v4923
      %v4925 = vcombine.high %v4924, %v4924
      %v4926 = vcombine.low %v4724, %v4725
      %v4927 = vcombine.high %v4724, %v4725
      %v4929 = vunpack.c.l.s4 1983009808
      %v4930 = vunpack.c.0.s8 %v4929
      %v4931 = vlaneseq
      %v4932 = vshrl.u32 %v4931, 7
      %v4933 = vsub.s32 %v4930, %v4932
      %v4934 = vrot.slane %v4926, %v4933
      %v4936 = vunpack.c.l.s4 1983009808
      %v4937 = vunpack.c.0.s8 %v4936
      %v4938 = vlaneseq
      %v4939 = vshrl.u32 %v4938, 7
      %v4940 = vsub.s32 %v4937, %v4939
      %v4941 = vrot.slane %v4927, %v4940
      %v4942 = vcombine.high %v4934, %v4934
      %v4943 = vcombine.high %v4941, %v4941
      %v4944 = vcombine.low %v4726, %v4727
      %v4946 = vunpack.c.l.s4 1983009808
      %v4947 = vunpack.c.0.s8 %v4946
      %v4948 = vlaneseq
      %v4949 = vshrl.u32 %v4948, 7
      %v4950 = vsub.s32 %v4947, %v4949
      %v4951 = vrot.slane %v4944, %v4950
      %v4952 = vcombine.high %v4951, %v4951
      %v4953 = vcombine.low %v4728, %v4729
      %v4954 = vcombine.high %v4728, %v4729
      %v4956 = vunpack.c.l.s4 1983009808
      %v4957 = vunpack.c.0.s8 %v4956
      %v4958 = vlaneseq
      %v4959 = vshrl.u32 %v4958, 7
      %v4960 = vsub.s32 %v4957, %v4959
      %v4961 = vrot.slane %v4953, %v4960
      %v4963 = vunpack.c.l.s4 1983009808
      %v4964 = vunpack.c.0.s8 %v4963
      %v4965 = vlaneseq
      %v4966 = vshrl.u32 %v4965, 7
      %v4967 = vsub.s32 %v4964, %v4966
      %v4968 = vrot.slane %v4954, %v4967
      %v4969 = vcombine.high %v4961, %v4961
      %v4970 = vcombine.high %v4968, %v4968
      %v4971 = vcombine.low %v4730, %v4731
      %v4973 = vunpack.c.l.s4 1983009808
      %v4974 = vunpack.c.0.s8 %v4973
      %v4975 = vlaneseq
      %v4976 = vshrl.u32 %v4975, 7
      %v4977 = vsub.s32 %v4974, %v4976
      %v4978 = vrot.slane %v4971, %v4977
      %v4979 = vcombine.high %v4978, %v4978
      %s4980 = scalar_lea.vmem %s1, 3360
      %v4981 = vld [vmem:[%s4980] sm:$0xff]
      %v4982 = vld [vmem:[%s4980 + $0x8] sm:$0xff]
      %v4983 = vld [vmem:[%s4980 + $0x10] sm:$0xff]
      %v4984 = vld [vmem:[%s4980 + $0x18] sm:$0xff]
      %v4985 = vld [vmem:[%s4980 + $0x20] sm:$0xff]
      %v4986 = vld [vmem:[%s4980 + $0x28] sm:$0xff]
      %v4987 = vld [vmem:[%s4980 + $0x30] sm:$0xff]
      %v4988 = vld [vmem:[%s4980 + $0x38] sm:$0xff]
      %v4989 = vld [vmem:[%s4980 + $0x40] sm:$0xff]
      %v4990 = vld [vmem:[%s4980 + $0x48] sm:$0xff]
      %v4991 = vld [vmem:[%s4980 + $0x50] sm:$0xff]
      %v4992 = vld [vmem:[%s4980 + $0x58] sm:$0xff]
      %v4993 = vld [vmem:[%s4980 + $0x60] sm:$0xff]
      %v4994 = vld [vmem:[%s4980 + $0x68] sm:$0xff]
      %v4995 = vld [vmem:[%s4980 + $0x70] sm:$0xff]
      %v4996 = vld [vmem:[%s4980 + $0x78] sm:$0xff]
      %v4997 = vld [vmem:[%s4980 + $0x80] sm:$0xff]
      %v4998 = vld [vmem:[%s4980 + $0x88] sm:$0xff]
      %v4999 = vld [vmem:[%s4980 + $0x90] sm:$0xff]
      %v5000 = vld [vmem:[%s4980 + $0x98] sm:$0xff]
      %v5001 = vld [vmem:[%s4980 + $0xa0] sm:$0xff]
      %v5002 = vld [vmem:[%s4980 + $0xa8] sm:$0xff]
      %v5003 = vld [vmem:[%s4980 + $0xb0] sm:$0xff]
      %v5004 = vld [vmem:[%s4980 + $0xb8] sm:$0xff]
      %v5005 = vld [vmem:[%s4980 + $0xc0] sm:$0xff]
      %v5006 = vld [vmem:[%s4980 + $0xc8] sm:$0xff]
      %v5007 = vld [vmem:[%s4980 + $0xd0] sm:$0xff]
      %v5008 = vld [vmem:[%s4980 + $0xd8] sm:$0xff]
      %v5009 = vld [vmem:[%s4980 + $0xe0] sm:$0xff]
      %v5010 = vld [vmem:[%s4980 + $0xe8] sm:$0xff]
      %v5011 = vld [vmem:[%s4980 + $0xf0] sm:$0xff]
      %v5012 = vld [vmem:[%s4980 + $0xf8] sm:$0xff]
      %v5013 = vld [vmem:[%s4980 + $0x100] sm:$0xff]
      %v5014 = vld [vmem:[%s4980 + $0x108] sm:$0xff]
      %v5015 = vld [vmem:[%s4980 + $0x110] sm:$0xff]
      %v5016 = vld [vmem:[%s4980 + $0x118] sm:$0xff]
      %v5017 = vld [vmem:[%s4980 + $0x120] sm:$0xff]
      %v5018 = vld [vmem:[%s4980 + $0x128] sm:$0xff]
      %v5019 = vld [vmem:[%s4980 + $0x130] sm:$0xff]
      %v5020 = vld [vmem:[%s4980 + $0x138] sm:$0xff]
      %v5021 = vld [vmem:[%s4980 + $0x140] sm:$0xff]
      %v5022 = vld [vmem:[%s4980 + $0x148] sm:$0xff]
      %v5023 = vld [vmem:[%s4980 + $0x150] sm:$0xff]
      %v5024 = vld [vmem:[%s4980 + $0x158] sm:$0xff]
      %v5025 = vld [vmem:[%s4980 + $0x160] sm:$0xff]
      %v5026 = vld [vmem:[%s4980 + $0x168] sm:$0xff]
      %v5027 = vld [vmem:[%s4980 + $0x170] sm:$0xff]
      %v5028 = vld [vmem:[%s4980 + $0x178] sm:$0xff]
      %v5029 = vld [vmem:[%s4980 + $0x180] sm:$0xff]
      %v5030 = vld [vmem:[%s4980 + $0x188] sm:$0xff]
      %v5031 = vld [vmem:[%s4980 + $0x190] sm:$0xff]
      %v5032 = vld [vmem:[%s4980 + $0x198] sm:$0xff]
      %v5033 = vld [vmem:[%s4980 + $0x1a0] sm:$0xff]
      %v5034 = vld [vmem:[%s4980 + $0x1a8] sm:$0xff]
      %v5035 = vld [vmem:[%s4980 + $0x1b0] sm:$0xff]
      %v5036 = vld [vmem:[%s4980 + $0x1b8] sm:$0xff]
      %v5037 = vld [vmem:[%s4980 + $0x1c0] sm:$0xff]
      %v5038 = vld [vmem:[%s4980 + $0x1c8] sm:$0xff]
      %v5039 = vld [vmem:[%s4980 + $0x1d0] sm:$0xff]
      %v5040 = vld [vmem:[%s4980 + $0x1d8] sm:$0xff]
      %v5041 = vld [vmem:[%s4980 + $0x1e0] sm:$0xff]
      %v5042 = vld [vmem:[%s4980 + $0x1e8] sm:$0xff]
      %v5043 = vld [vmem:[%s4980 + $0x1f0] sm:$0xff]
      %v5044 = vld [vmem:[%s4980 + $0x1f8] sm:$0xff]
      %v5045 = vld [vmem:[%s4980 + $0x200] sm:$0xff]
      %v5046 = vld [vmem:[%s4980 + $0x208] sm:$0xff]
      %v5047 = vld [vmem:[%s4980 + $0x210] sm:$0xff]
      %v5048 = vld [vmem:[%s4980 + $0x218] sm:$0xff]
      %v5049 = vld [vmem:[%s4980 + $0x220] sm:$0xff]
      %v5050 = vld [vmem:[%s4980 + $0x228] sm:$0xff]
      %v5051 = vld [vmem:[%s4980 + $0x230] sm:$0xff]
      %v5052 = vld [vmem:[%s4980 + $0x238] sm:$0xff]
      %v5053 = vld [vmem:[%s4980 + $0x240] sm:$0xff]
      %v5054 = vld [vmem:[%s4980 + $0x248] sm:$0xff]
      %v5055 = vld [vmem:[%s4980 + $0x250] sm:$0xff]
      %v5056 = vld [vmem:[%s4980 + $0x258] sm:$0xff]
      %v5057 = vld [vmem:[%s4980 + $0x260] sm:$0xff]
      %v5058 = vld [vmem:[%s4980 + $0x268] sm:$0xff]
      %v5059 = vld [vmem:[%s4980 + $0x270] sm:$0xff]
      %v5060 = vld [vmem:[%s4980 + $0x278] sm:$0xff]
      %v5061 = vld [vmem:[%s4980 + $0x280] sm:$0xff]
      %v5062 = vld [vmem:[%s4980 + $0x288] sm:$0xff]
      %v5063 = vld [vmem:[%s4980 + $0x290] sm:$0xff]
      %v5064 = vld [vmem:[%s4980 + $0x298] sm:$0xff]
      %v5065 = vcombine.low %v4780, %v4779
      %v5066 = vcombine.low %v4781, %v4789
      %v5068 = vunpack.c.l.s4 1983009808
      %v5069 = vunpack.c.0.s8 %v5068
      %v5070 = vlaneseq
      %v5071 = vshrl.u32 %v5070, 7
      %v5072 = vsub.s32 %v5069, %v5071
      %v5073 = vrot.slane %v5065, %v5072
      %v5075 = vunpack.c.l.s4 1983009808
      %v5076 = vunpack.c.0.s8 %v5075
      %v5077 = vlaneseq
      %v5078 = vshrl.u32 %v5077, 7
      %v5079 = vsub.s32 %v5076, %v5078
      %v5080 = vrot.slane %v5066, %v5079
      %v5081 = vcombine.low %v5073, %v5080
      %v5082 = vcombine.high %v5073, %v5080
      %v5083 = vcombine.low %v4790, %v4807
      %v5084 = vcombine.low %v4806, %v4808
      %v5086 = vunpack.c.l.s4 1983009808
      %v5087 = vunpack.c.0.s8 %v5086
      %v5088 = vlaneseq
      %v5089 = vshrl.u32 %v5088, 7
      %v5090 = vsub.s32 %v5087, %v5089
      %v5091 = vrot.slane %v5083, %v5090
      %v5093 = vunpack.c.l.s4 1983009808
      %v5094 = vunpack.c.0.s8 %v5093
      %v5095 = vlaneseq
      %v5096 = vshrl.u32 %v5095, 7
      %v5097 = vsub.s32 %v5094, %v5096
      %v5098 = vrot.slane %v5084, %v5097
      %v5099 = vcombine.low %v5091, %v5098
      %v5100 = vcombine.high %v5091, %v5098
      %v5101 = vcombine.low %v4816, %v4817
      %v5102 = vcombine.low %v4834, %v4833
      %v5104 = vunpack.c.l.s4 1983009808
      %v5105 = vunpack.c.0.s8 %v5104
      %v5106 = vlaneseq
      %v5107 = vshrl.u32 %v5106, 7
      %v5108 = vsub.s32 %v5105, %v5107
      %v5109 = vrot.slane %v5101, %v5108
      %v5111 = vunpack.c.l.s4 1983009808
      %v5112 = vunpack.c.0.s8 %v5111
      %v5113 = vlaneseq
      %v5114 = vshrl.u32 %v5113, 7
      %v5115 = vsub.s32 %v5112, %v5114
      %v5116 = vrot.slane %v5102, %v5115
      %v5117 = vcombine.low %v5109, %v5116
      %v5118 = vcombine.high %v5109, %v5116
      %v5119 = vcombine.low %v4835, %v4843
      %v5120 = vcombine.low %v4844, %v4861
      %v5122 = vunpack.c.l.s4 1983009808
      %v5123 = vunpack.c.0.s8 %v5122
      %v5124 = vlaneseq
      %v5125 = vshrl.u32 %v5124, 7
      %v5126 = vsub.s32 %v5123, %v5125
      %v5127 = vrot.slane %v5119, %v5126
      %v5129 = vunpack.c.l.s4 1983009808
      %v5130 = vunpack.c.0.s8 %v5129
      %v5131 = vlaneseq
      %v5132 = vshrl.u32 %v5131, 7
      %v5133 = vsub.s32 %v5130, %v5132
      %v5134 = vrot.slane %v5120, %v5133
      %v5135 = vcombine.low %v5127, %v5134
      %v5136 = vcombine.high %v5127, %v5134
      %v5137 = vcombine.low %v4860, %v4862
      %v5138 = vcombine.low %v4870, %v4871
      %v5140 = vunpack.c.l.s4 1983009808
      %v5141 = vunpack.c.0.s8 %v5140
      %v5142 = vlaneseq
      %v5143 = vshrl.u32 %v5142, 7
      %v5144 = vsub.s32 %v5141, %v5143
      %v5145 = vrot.slane %v5137, %v5144
      %v5147 = vunpack.c.l.s4 1983009808
      %v5148 = vunpack.c.0.s8 %v5147
      %v5149 = vlaneseq
      %v5150 = vshrl.u32 %v5149, 7
      %v5151 = vsub.s32 %v5148, %v5150
      %v5152 = vrot.slane %v5138, %v5151
      %v5153 = vcombine.low %v5145, %v5152
      %v5154 = vcombine.high %v5145, %v5152
      %v5155 = vcombine.low %v4888, %v4887
      %v5156 = vcombine.low %v4889, %v4897
      %v5158 = vunpack.c.l.s4 1983009808
      %v5159 = vunpack.c.0.s8 %v5158
      %v5160 = vlaneseq
      %v5161 = vshrl.u32 %v5160, 7
      %v5162 = vsub.s32 %v5159, %v5161
      %v5163 = vrot.slane %v5155, %v5162
      %v5165 = vunpack.c.l.s4 1983009808
      %v5166 = vunpack.c.0.s8 %v5165
      %v5167 = vlaneseq
      %v5168 = vshrl.u32 %v5167, 7
      %v5169 = vsub.s32 %v5166, %v5168
      %v5170 = vrot.slane %v5156, %v5169
      %v5171 = vcombine.low %v5163, %v5170
      %v5172 = vcombine.high %v5163, %v5170
      %v5173 = vcombine.low %v4898, %v4915
      %v5174 = vcombine.low %v4914, %v4916
      %v5176 = vunpack.c.l.s4 1983009808
      %v5177 = vunpack.c.0.s8 %v5176
      %v5178 = vlaneseq
      %v5179 = vshrl.u32 %v5178, 7
      %v5180 = vsub.s32 %v5177, %v5179
      %v5181 = vrot.slane %v5173, %v5180
      %v5183 = vunpack.c.l.s4 1983009808
      %v5184 = vunpack.c.0.s8 %v5183
      %v5185 = vlaneseq
      %v5186 = vshrl.u32 %v5185, 7
      %v5187 = vsub.s32 %v5184, %v5186
      %v5188 = vrot.slane %v5174, %v5187
      %v5189 = vcombine.low %v5181, %v5188
      %v5190 = vcombine.high %v5181, %v5188
      %v5191 = vcombine.low %v4924, %v4925
      %v5192 = vcombine.low %v4942, %v4941
      %v5194 = vunpack.c.l.s4 1983009808
      %v5195 = vunpack.c.0.s8 %v5194
      %v5196 = vlaneseq
      %v5197 = vshrl.u32 %v5196, 7
      %v5198 = vsub.s32 %v5195, %v5197
      %v5199 = vrot.slane %v5191, %v5198
      %v5201 = vunpack.c.l.s4 1983009808
      %v5202 = vunpack.c.0.s8 %v5201
      %v5203 = vlaneseq
      %v5204 = vshrl.u32 %v5203, 7
      %v5205 = vsub.s32 %v5202, %v5204
      %v5206 = vrot.slane %v5192, %v5205
      %v5207 = vcombine.low %v5199, %v5206
      %v5208 = vcombine.high %v5199, %v5206
      %v5209 = vcombine.low %v4943, %v4951
      %v5210 = vcombine.low %v4952, %v4969
      %v5212 = vunpack.c.l.s4 1983009808
      %v5213 = vunpack.c.0.s8 %v5212
      %v5214 = vlaneseq
      %v5215 = vshrl.u32 %v5214, 7
      %v5216 = vsub.s32 %v5213, %v5215
      %v5217 = vrot.slane %v5209, %v5216
      %v5219 = vunpack.c.l.s4 1983009808
      %v5220 = vunpack.c.0.s8 %v5219
      %v5221 = vlaneseq
      %v5222 = vshrl.u32 %v5221, 7
      %v5223 = vsub.s32 %v5220, %v5222
      %v5224 = vrot.slane %v5210, %v5223
      %v5225 = vcombine.low %v5217, %v5224
      %v5226 = vcombine.high %v5217, %v5224
      %v5227 = vcombine.low %v4968, %v4970
      %v5228 = vcombine.low %v4978, %v4979
      %v5230 = vunpack.c.l.s4 1983009808
      %v5231 = vunpack.c.0.s8 %v5230
      %v5232 = vlaneseq
      %v5233 = vshrl.u32 %v5232, 7
      %v5234 = vsub.s32 %v5231, %v5233
      %v5235 = vrot.slane %v5227, %v5234
      %v5237 = vunpack.c.l.s4 1983009808
      %v5238 = vunpack.c.0.s8 %v5237
      %v5239 = vlaneseq
      %v5240 = vshrl.u32 %v5239, 7
      %v5241 = vsub.s32 %v5238, %v5240
      %v5242 = vrot.slane %v5228, %v5241
      %v5243 = vcombine.low %v5235, %v5242
      %v5244 = vcombine.high %v5235, %v5242
      %v5255 = vsel %vm172, %v5082, 0
      %v5257 = vsel %vm172, %v5100, 0
      %v5259 = vsel %vm172, %v5118, 0
      %v5261 = vsel %vm172, %v5136, 0
      %v5263 = vsel %vm172, %v5154, 0
      %v5265 = vsel %vm172, %v5172, 0
      %v5267 = vsel %vm172, %v5190, 0
      %v5269 = vsel %vm172, %v5208, 0
      %v5271 = vsel %vm172, %v5226, 0
      %v5273 = vsel %vm172, %v5244, 0
      %5275 = vmatprep.subr.mxu0 %v4982
      %5276 = vmatpush1.msra.mxu0 %v4981
      %5277 = vmatprep.subr.mxu0 %v4985
      %5278 = vmatpush1.msra.mxu0 %v4984
      %5279 = vmatprep.subr.mxu0 %v4988
      %5280 = vmatpush1.msra.mxu0 %v4987
      %5281 = vmatprep.subr.mxu0 %v4991
      %5282 = vmatpush1.msra.mxu0 %v4990
      %5283 = vmatprep.subr.mxu0 %v4994
      %5284 = vmatpush1.msra.mxu0 %v4993
      %5285 = vmatprep.subr.mxu0 %v4997
      %5286 = vmatpush1.msra.mxu0 %v4996
      %5287 = vmatprep.subr.mxu0 %v5000
      %5288 = vmatpush1.msra.mxu0 %v4999
      %5289 = vmatprep.subr.mxu0 %v5003
      %5290 = vmatpush1.msra.mxu0 %v5002
      %5291 = vmatprep.subr.mxu0 %v5006
      %5292 = vmatpush1.msra.mxu0 %v5005
      %5293 = vmatprep.subr.mxu0 %v5009
      %5294 = vmatpush1.msra.mxu0 %v5008
      %5295 = vmatprep.subr.mxu0 %v5012
      %5296 = vmatpush1.msra.mxu0 %v5011
      %5297 = vmatprep.subr.mxu0 %v5015
      %5298 = vmatpush1.msra.mxu0 %v5014
      %5299 = vmatprep.subr.mxu0 %v5018
      %5300 = vmatpush1.msra.mxu0 %v5017
      %5301 = vmatprep.subr.mxu0 %v5021
      %5302 = vmatpush1.msra.mxu0 %v5020
      %5303 = vmatprep.subr.mxu0 %v5024
      %5304 = vmatpush1.msra.mxu0 %v5023
      %5305 = vmatprep.subr.mxu0 %v5027
      %5306 = vmatpush1.msra.mxu0 %v5026
      %5307 = vmatprep.subr.mxu0 %v5030
      %5308 = vmatpush1.msra.mxu0 %v5029
      %5309 = vmatprep.subr.mxu0 %v5033
      %5310 = vmatpush1.msra.mxu0 %v5032
      %5311 = vmatprep.subr.mxu0 %v5036
      %5312 = vmatpush1.msra.mxu0 %v5035
      %5313 = vmatprep.subr.mxu0 %v5039
      %5314 = vmatpush1.msra.mxu0 %v5038
      %5315 = vmatprep.subr.mxu0 %v5042
      %5316 = vmatpush1.msra.mxu0 %v5041
      %5317 = vmatprep.subr.mxu0 %v5045
      %5318 = vmatpush1.msra.mxu0 %v5044
      %5319 = vmatprep.subr.mxu0 %v5048
      %5320 = vmatpush1.msra.mxu0 %v5047
      %5321 = vmatprep.subr.mxu0 %v5051
      %5322 = vmatpush1.msra.mxu0 %v5050
      %5323 = vmatprep.subr.mxu0 %v5054
      %5324 = vmatpush1.msra.mxu0 %v5053
      %5325 = vmatprep.subr.mxu0 %v5057
      %5326 = vmatpush1.msra.mxu0 %v5056
      %5327 = vmatprep.subr.mxu0 %v5060
      %5328 = vmatpush1.msra.mxu0 %v5059
      %5329 = vmatprep.subr.mxu0 %v5063
      %5330 = vmatpush1.msra.mxu0 %v5062
      %5331 = vmatprep.subr.mxu0 0.0
      %5332 = vmatpush1.msra.mxu0 0.0
      %5333 = vmatprep.subr.mxu0 0.0
      %5334 = vmatpush1.msra.mxu0 0.0
      %5335 = vmatprep.subr.mxu0 0.0
      %5336 = vmatpush1.msra.mxu0 0.0
      %5337 = vmatprep.subr.mxu0 0.0
      %5338 = vmatpush1.msra.mxu0 0.0
      %5339 = vmatprep.mubr.f32.mxu0 %v5255
      %5340 = vmatmul.mubr.f32.gmra.mrb[0].mxu0 %v5081
      %v5341 = vpop.f32.mrb[0].mxu0
      %v5342 = vadd.f32 0.0, %v5341
      %v5343 = vpop.f32.mrb[0].mxu0
      %v5344 = vadd.f32 0.0, %v5343
      %5345 = vmatprep.mubr.f32.mxu0 %v5257
      %5346 = vmatmul.mubr.f32.gmra.mrb[0].mxu0 %v5099
      %v5347 = vpop.f32.mrb[0].mxu0
      %v5348 = vadd.f32 0.0, %v5347
      %v5349 = vpop.f32.mrb[0].mxu0
      %v5350 = vadd.f32 0.0, %v5349
      %5351 = vmatprep.mubr.f32.mxu0 %v5259
      %5352 = vmatmul.mubr.f32.gmra.mrb[0].mxu0 %v5117
      %v5353 = vpop.f32.mrb[0].mxu0
      %v5354 = vadd.f32 0.0, %v5353
      %v5355 = vpop.f32.mrb[0].mxu0
      %v5356 = vadd.f32 0.0, %v5355
      %5357 = vmatprep.mubr.f32.mxu0 %v5261
      %5358 = vmatmul.mubr.f32.gmra.mrb[0].mxu0 %v5135
      %v5359 = vpop.f32.mrb[0].mxu0
      %v5360 = vadd.f32 0.0, %v5359
      %v5361 = vpop.f32.mrb[0].mxu0
      %v5362 = vadd.f32 0.0, %v5361
      %5363 = vmatprep.mubr.f32.mxu0 %v5263
      %5364 = vmatmul.mubr.f32.gmra.mrb[0].mxu0 %v5153
      %v5365 = vpop.f32.mrb[0].mxu0
      %v5366 = vadd.f32 0.0, %v5365
      %v5367 = vpop.f32.mrb[0].mxu0
      %v5368 = vadd.f32 0.0, %v5367
      %5369 = vmatprep.mubr.f32.mxu0 %v5265
      %5370 = vmatmul.mubr.f32.gmra.mrb[0].mxu0 %v5171
      %v5371 = vpop.f32.mrb[0].mxu0
      %v5372 = vadd.f32 0.0, %v5371
      %v5373 = vpop.f32.mrb[0].mxu0
      %v5374 = vadd.f32 0.0, %v5373
      %5375 = vmatprep.mubr.f32.mxu0 %v5267
      %5376 = vmatmul.mubr.f32.gmra.mrb[0].mxu0 %v5189
      %v5377 = vpop.f32.mrb[0].mxu0
      %v5378 = vadd.f32 0.0, %v5377
      %v5379 = vpop.f32.mrb[0].mxu0
      %v5380 = vadd.f32 0.0, %v5379
      %5381 = vmatprep.mubr.f32.mxu0 %v5269
      %5382 = vmatmul.mubr.f32.gmra.mrb[0].mxu0 %v5207
      %v5383 = vpop.f32.mrb[0].mxu0
      %v5384 = vadd.f32 0.0, %v5383
      %v5385 = vpop.f32.mrb[0].mxu0
      %v5386 = vadd.f32 0.0, %v5385
      %5387 = vmatprep.mubr.f32.mxu0 %v5271
      %5388 = vmatmul.mubr.f32.gmra.mrb[0].mxu0 %v5225
      %v5389 = vpop.f32.mrb[0].mxu0
      %v5390 = vadd.f32 0.0, %v5389
      %v5391 = vpop.f32.mrb[0].mxu0
      %v5392 = vadd.f32 0.0, %v5391
      %5393 = vmatprep.mubr.f32.mxu0 %v5273
      %5394 = vmatmul.mubr.f32.gmra.mrb[0].mxu0 %v5243
      %v5395 = vpop.f32.mrb[0].mxu0
      %v5396 = vadd.f32 0.0, %v5395
      %v5397 = vpop.f32.mrb[0].mxu0
      %v5398 = vadd.f32 0.0, %v5397
      %5399 = vdwg.mxu0
      %5400 = vmatprep.subr.mxu0 0.0
      %5401 = vmatpush1.msra.mxu0 %v4983
      %5402 = vmatprep.subr.mxu0 0.0
      %5403 = vmatpush1.msra.mxu0 %v4986
      %5404 = vmatprep.subr.mxu0 0.0
      %5405 = vmatpush1.msra.mxu0 %v4989
      %5406 = vmatprep.subr.mxu0 0.0
      %5407 = vmatpush1.msra.mxu0 %v4992
      %5408 = vmatprep.subr.mxu0 0.0
      %5409 = vmatpush1.msra.mxu0 %v4995
      %5410 = vmatprep.subr.mxu0 0.0
      %5411 = vmatpush1.msra.mxu0 %v4998
      %5412 = vmatprep.subr.mxu0 0.0
      %5413 = vmatpush1.msra.mxu0 %v5001
      %5414 = vmatprep.subr.mxu0 0.0
      %5415 = vmatpush1.msra.mxu0 %v5004
      %5416 = vmatprep.subr.mxu0 0.0
      %5417 = vmatpush1.msra.mxu0 %v5007
      %5418 = vmatprep.subr.mxu0 0.0
      %5419 = vmatpush1.msra.mxu0 %v5010
      %5420 = vmatprep.subr.mxu0 0.0
      %5421 = vmatpush1.msra.mxu0 %v5013
      %5422 = vmatprep.subr.mxu0 0.0
      %5423 = vmatpush1.msra.mxu0 %v5016
      %5424 = vmatprep.subr.mxu0 0.0
      %5425 = vmatpush1.msra.mxu0 %v5019
      %5426 = vmatprep.subr.mxu0 0.0
      %5427 = vmatpush1.msra.mxu0 %v5022
      %5428 = vmatprep.subr.mxu0 0.0
      %5429 = vmatpush1.msra.mxu0 %v5025
      %5430 = vmatprep.subr.mxu0 0.0
      %5431 = vmatpush1.msra.mxu0 %v5028
      %5432 = vmatprep.subr.mxu0 0.0
      %5433 = vmatpush1.msra.mxu0 %v5031
      %5434 = vmatprep.subr.mxu0 0.0
      %5435 = vmatpush1.msra.mxu0 %v5034
      %5436 = vmatprep.subr.mxu0 0.0
      %5437 = vmatpush1.msra.mxu0 %v5037
      %5438 = vmatprep.subr.mxu0 0.0
      %5439 = vmatpush1.msra.mxu0 %v5040
      %5440 = vmatprep.subr.mxu0 0.0
      %5441 = vmatpush1.msra.mxu0 %v5043
      %5442 = vmatprep.subr.mxu0 0.0
      %5443 = vmatpush1.msra.mxu0 %v5046
      %5444 = vmatprep.subr.mxu0 0.0
      %5445 = vmatpush1.msra.mxu0 %v5049
      %5446 = vmatprep.subr.mxu0 0.0
      %5447 = vmatpush1.msra.mxu0 %v5052
      %5448 = vmatprep.subr.mxu0 0.0
      %5449 = vmatpush1.msra.mxu0 %v5055
      %5450 = vmatprep.subr.mxu0 0.0
      %5451 = vmatpush1.msra.mxu0 %v5058
      %5452 = vmatprep.subr.mxu0 0.0
      %5453 = vmatpush1.msra.mxu0 %v5061
      %5454 = vmatprep.subr.mxu0 0.0
      %5455 = vmatpush1.msra.mxu0 %v5064
      %5456 = vmatprep.subr.mxu0 0.0
      %5457 = vmatpush1.msra.mxu0 0.0
      %5458 = vmatprep.subr.mxu0 0.0
      %5459 = vmatpush1.msra.mxu0 0.0
      %5460 = vmatprep.subr.mxu0 0.0
      %5461 = vmatpush1.msra.mxu0 0.0
      %5462 = vmatprep.subr.mxu0 0.0
      %5463 = vmatpush1.msra.mxu0 0.0
      %5464 = vmatprep.mubr.f32.mxu0 %v5255
      %5465 = vmatmul.mubr.f32.gmra.mrb[0].mxu0 %v5081
      %v5466 = vpop.f32.mrb[0].mxu0
      %v5467 = vadd.f32 0.0, %v5466
      %v5468 = vpop.f32.mrb[0].mxu0
      %5469 = vmatprep.mubr.f32.mxu0 %v5257
      %5470 = vmatmul.mubr.f32.gmra.mrb[0].mxu0 %v5099
      %v5471 = vpop.f32.mrb[0].mxu0
      %v5472 = vadd.f32 0.0, %v5471
      %v5473 = vpop.f32.mrb[0].mxu0
      %5474 = vmatprep.mubr.f32.mxu0 %v5259
      %5475 = vmatmul.mubr.f32.gmra.mrb[0].mxu0 %v5117
      %v5476 = vpop.f32.mrb[0].mxu0
      %v5477 = vadd.f32 0.0, %v5476
      %v5478 = vpop.f32.mrb[0].mxu0
      %5479 = vmatprep.mubr.f32.mxu0 %v5261
      %5480 = vmatmul.mubr.f32.gmra.mrb[0].mxu0 %v5135
      %v5481 = vpop.f32.mrb[0].mxu0
      %v5482 = vadd.f32 0.0, %v5481
      %v5483 = vpop.f32.mrb[0].mxu0
      %5484 = vmatprep.mubr.f32.mxu0 %v5263
      %5485 = vmatmul.mubr.f32.gmra.mrb[0].mxu0 %v5153
      %v5486 = vpop.f32.mrb[0].mxu0
      %v5487 = vadd.f32 0.0, %v5486
      %v5488 = vpop.f32.mrb[0].mxu0
      %5489 = vmatprep.mubr.f32.mxu0 %v5265
      %5490 = vmatmul.mubr.f32.gmra.mrb[0].mxu0 %v5171
      %v5491 = vpop.f32.mrb[0].mxu0
      %v5492 = vadd.f32 0.0, %v5491
      %v5493 = vpop.f32.mrb[0].mxu0
      %5494 = vmatprep.mubr.f32.mxu0 %v5267
      %5495 = vmatmul.mubr.f32.gmra.mrb[0].mxu0 %v5189
      %v5496 = vpop.f32.mrb[0].mxu0
      %v5497 = vadd.f32 0.0, %v5496
      %v5498 = vpop.f32.mrb[0].mxu0
      %5499 = vmatprep.mubr.f32.mxu0 %v5269
      %5500 = vmatmul.mubr.f32.gmra.mrb[0].mxu0 %v5207
      %v5501 = vpop.f32.mrb[0].mxu0
      %v5502 = vadd.f32 0.0, %v5501
      %v5503 = vpop.f32.mrb[0].mxu0
      %5504 = vmatprep.mubr.f32.mxu0 %v5271
      %5505 = vmatmul.mubr.f32.gmra.mrb[0].mxu0 %v5225
      %v5506 = vpop.f32.mrb[0].mxu0
      %v5507 = vadd.f32 0.0, %v5506
      %v5508 = vpop.f32.mrb[0].mxu0
      %5509 = vmatprep.mubr.f32.mxu0 %v5273
      %5510 = vmatmul.mubr.f32.gmra.mrb[0].mxu0 %v5243
      %v5511 = vpop.f32.mrb[0].mxu0
      %v5512 = vadd.f32 0.0, %v5511
      %v5513 = vpop.f32.mrb[0].mxu0
      %5514 = vdwg.mxu0
      %v5515 = vadd.f32 %v4670, %v5342
      %v5516 = vadd.f32 %v4671, %v5344
      %v5517 = vadd.f32 %v4672, %v5467
      %v5518 = vadd.f32 %v4673, %v5348
      %v5519 = vadd.f32 %v4674, %v5350
      %v5520 = vadd.f32 %v4675, %v5472
      %v5521 = vadd.f32 %v4676, %v5354
      %v5522 = vadd.f32 %v4677, %v5356
      %v5523 = vadd.f32 %v4678, %v5477
      %v5524 = vadd.f32 %v4679, %v5360
      %v5525 = vadd.f32 %v4680, %v5362
      %v5526 = vadd.f32 %v4681, %v5482
      %v5527 = vadd.f32 %v4682, %v5366
      %v5528 = vadd.f32 %v4683, %v5368
      %v5529 = vadd.f32 %v4684, %v5487
      %v5530 = vadd.f32 %v4685, %v5372
      %v5531 = vadd.f32 %v4686, %v5374
      %v5532 = vadd.f32 %v4687, %v5492
      %v5533 = vadd.f32 %v4688, %v5378
      %v5534 = vadd.f32 %v4689, %v5380
      %v5535 = vadd.f32 %v4690, %v5497
      %v5536 = vadd.f32 %v4691, %v5384
      %v5537 = vadd.f32 %v4692, %v5386
      %v5538 = vadd.f32 %v4693, %v5502
      %v5539 = vadd.f32 %v4694, %v5390
      %v5540 = vadd.f32 %v4695, %v5392
      %v5541 = vadd.f32 %v4696, %v5507
      %v5542 = vadd.f32 %v4697, %v5396
      %v5543 = vadd.f32 %v4698, %v5398
      %v5544 = vadd.f32 %v4699, %v5512
      %v5545 = vld [vmem:[%s261] sm:$0xff]
      %v5546 = vld [vmem:[%s261 + $0x8] sm:$0xff]
      %v5547 = vld [vmem:[%s261 + $0x10] sm:$0x3]
      %v5548 = vld [vmem:[%s261 + $0x18] sm:$0x3]
      %v5549 = vld [vmem:[%s261 + $0x20] sm:$0xff]
      %v5550 = vld [vmem:[%s261 + $0x28] sm:$0xff]
      %v5551 = vld [vmem:[%s261 + $0x30] sm:$0x3]
      %v5552 = vld [vmem:[%s261 + $0x38] sm:$0x3]
      %v5553 = vld [vmem:[%s261 + $0x40] sm:$0xff]
      %v5554 = vld [vmem:[%s261 + $0x48] sm:$0xff]
      %v5555 = vld [vmem:[%s261 + $0x50] sm:$0x3]
      %v5556 = vld [vmem:[%s261 + $0x58] sm:$0x3]
      %v5557 = vld [vmem:[%s261 + $0x60] sm:$0xff]
      %v5558 = vld [vmem:[%s261 + $0x68] sm:$0xff]
      %v5559 = vld [vmem:[%s261 + $0x70] sm:$0x3]
      %v5560 = vld [vmem:[%s261 + $0x78] sm:$0x3]
      %v5561 = vld [vmem:[%s261 + $0x80] sm:$0xff]
      %v5562 = vld [vmem:[%s261 + $0x88] sm:$0xff]
      %v5563 = vld [vmem:[%s261 + $0x90] sm:$0x3]
      %v5564 = vld [vmem:[%s261 + $0x98] sm:$0x3]
      %v5565 = vld [vmem:[%s261 + $0xa0] sm:$0xff]
      %v5566 = vld [vmem:[%s261 + $0xa8] sm:$0xff]
      %v5567 = vld [vmem:[%s261 + $0xb0] sm:$0x3]
      %v5568 = vld [vmem:[%s261 + $0xb8] sm:$0x3]
      %v5569 = vld [vmem:[%s261 + $0xc0] sm:$0xff]
      %v5570 = vld [vmem:[%s261 + $0xc8] sm:$0xff]
      %v5571 = vld [vmem:[%s261 + $0xd0] sm:$0x3]
      %v5572 = vld [vmem:[%s261 + $0xd8] sm:$0x3]
      %v5573 = vld [vmem:[%s261 + $0xe0] sm:$0xff]
      %v5574 = vld [vmem:[%s261 + $0xe8] sm:$0xff]
      %v5575 = vld [vmem:[%s261 + $0xf0] sm:$0x3]
      %v5576 = vld [vmem:[%s261 + $0xf8] sm:$0x3]
      %v5609 = vcombine.low %v5545, %v5546
      %v5610 = vcombine.high %v5545, %v5546
      %v5612 = vunpack.c.l.s4 1983009808
      %v5613 = vunpack.c.0.s8 %v5612
      %v5614 = vlaneseq
      %v5615 = vshrl.u32 %v5614, 7
      %v5616 = vsub.s32 %v5613, %v5615
      %v5617 = vrot.slane %v5609, %v5616
      %v5619 = vunpack.c.l.s4 1983009808
      %v5620 = vunpack.c.0.s8 %v5619
      %v5621 = vlaneseq
      %v5622 = vshrl.u32 %v5621, 7
      %v5623 = vsub.s32 %v5620, %v5622
      %v5624 = vrot.slane %v5610, %v5623
      %v5625 = vcombine.high %v5617, %v5617
      %v5626 = vcombine.high %v5624, %v5624
      %v5627 = vcombine.low %v5547, %v5548
      %v5629 = vunpack.c.l.s4 1983009808
      %v5630 = vunpack.c.0.s8 %v5629
      %v5631 = vlaneseq
      %v5632 = vshrl.u32 %v5631, 7
      %v5633 = vsub.s32 %v5630, %v5632
      %v5634 = vrot.slane %v5627, %v5633
      %v5635 = vcombine.low %v5549, %v5550
      %v5636 = vcombine.high %v5549, %v5550
      %v5638 = vunpack.c.l.s4 1983009808
      %v5639 = vunpack.c.0.s8 %v5638
      %v5640 = vlaneseq
      %v5641 = vshrl.u32 %v5640, 7
      %v5642 = vsub.s32 %v5639, %v5641
      %v5643 = vrot.slane %v5635, %v5642
      %v5645 = vunpack.c.l.s4 1983009808
      %v5646 = vunpack.c.0.s8 %v5645
      %v5647 = vlaneseq
      %v5648 = vshrl.u32 %v5647, 7
      %v5649 = vsub.s32 %v5646, %v5648
      %v5650 = vrot.slane %v5636, %v5649
      %v5651 = vcombine.high %v5643, %v5643
      %v5652 = vcombine.high %v5650, %v5650
      %v5653 = vcombine.low %v5551, %v5552
      %v5655 = vunpack.c.l.s4 1983009808
      %v5656 = vunpack.c.0.s8 %v5655
      %v5657 = vlaneseq
      %v5658 = vshrl.u32 %v5657, 7
      %v5659 = vsub.s32 %v5656, %v5658
      %v5660 = vrot.slane %v5653, %v5659
      %v5661 = vcombine.low %v5553, %v5554
      %v5662 = vcombine.high %v5553, %v5554
      %v5664 = vunpack.c.l.s4 1983009808
      %v5665 = vunpack.c.0.s8 %v5664
      %v5666 = vlaneseq
      %v5667 = vshrl.u32 %v5666, 7
      %v5668 = vsub.s32 %v5665, %v5667
      %v5669 = vrot.slane %v5661, %v5668
      %v5671 = vunpack.c.l.s4 1983009808
      %v5672 = vunpack.c.0.s8 %v5671
      %v5673 = vlaneseq
      %v5674 = vshrl.u32 %v5673, 7
      %v5675 = vsub.s32 %v5672, %v5674
      %v5676 = vrot.slane %v5662, %v5675
      %v5677 = vcombine.high %v5669, %v5669
      %v5678 = vcombine.high %v5676, %v5676
      %v5679 = vcombine.low %v5555, %v5556
      %v5681 = vunpack.c.l.s4 1983009808
      %v5682 = vunpack.c.0.s8 %v5681
      %v5683 = vlaneseq
      %v5684 = vshrl.u32 %v5683, 7
      %v5685 = vsub.s32 %v5682, %v5684
      %v5686 = vrot.slane %v5679, %v5685
      %v5687 = vcombine.low %v5557, %v5558
      %v5688 = vcombine.high %v5557, %v5558
      %v5690 = vunpack.c.l.s4 1983009808
      %v5691 = vunpack.c.0.s8 %v5690
      %v5692 = vlaneseq
      %v5693 = vshrl.u32 %v5692, 7
      %v5694 = vsub.s32 %v5691, %v5693
      %v5695 = vrot.slane %v5687, %v5694
      %v5697 = vunpack.c.l.s4 1983009808
      %v5698 = vunpack.c.0.s8 %v5697
      %v5699 = vlaneseq
      %v5700 = vshrl.u32 %v5699, 7
      %v5701 = vsub.s32 %v5698, %v5700
      %v5702 = vrot.slane %v5688, %v5701
      %v5703 = vcombine.high %v5695, %v5695
      %v5704 = vcombine.high %v5702, %v5702
      %v5705 = vcombine.low %v5559, %v5560
      %v5707 = vunpack.c.l.s4 1983009808
      %v5708 = vunpack.c.0.s8 %v5707
      %v5709 = vlaneseq
      %v5710 = vshrl.u32 %v5709, 7
      %v5711 = vsub.s32 %v5708, %v5710
      %v5712 = vrot.slane %v5705, %v5711
      %v5713 = vcombine.low %v5561, %v5562
      %v5714 = vcombine.high %v5561, %v5562
      %v5716 = vunpack.c.l.s4 1983009808
      %v5717 = vunpack.c.0.s8 %v5716
      %v5718 = vlaneseq
      %v5719 = vshrl.u32 %v5718, 7
      %v5720 = vsub.s32 %v5717, %v5719
      %v5721 = vrot.slane %v5713, %v5720
      %v5723 = vunpack.c.l.s4 1983009808
      %v5724 = vunpack.c.0.s8 %v5723
      %v5725 = vlaneseq
      %v5726 = vshrl.u32 %v5725, 7
      %v5727 = vsub.s32 %v5724, %v5726
      %v5728 = vrot.slane %v5714, %v5727
      %v5729 = vcombine.high %v5721, %v5721
      %v5730 = vcombine.high %v5728, %v5728
      %v5731 = vcombine.low %v5563, %v5564
      %v5733 = vunpack.c.l.s4 1983009808
      %v5734 = vunpack.c.0.s8 %v5733
      %v5735 = vlaneseq
      %v5736 = vshrl.u32 %v5735, 7
      %v5737 = vsub.s32 %v5734, %v5736
      %v5738 = vrot.slane %v5731, %v5737
      %v5739 = vcombine.low %v5565, %v5566
      %v5740 = vcombine.high %v5565, %v5566
      %v5742 = vunpack.c.l.s4 1983009808
      %v5743 = vunpack.c.0.s8 %v5742
      %v5744 = vlaneseq
      %v5745 = vshrl.u32 %v5744, 7
      %v5746 = vsub.s32 %v5743, %v5745
      %v5747 = vrot.slane %v5739, %v5746
      %v5749 = vunpack.c.l.s4 1983009808
      %v5750 = vunpack.c.0.s8 %v5749
      %v5751 = vlaneseq
      %v5752 = vshrl.u32 %v5751, 7
      %v5753 = vsub.s32 %v5750, %v5752
      %v5754 = vrot.slane %v5740, %v5753
      %v5755 = vcombine.high %v5747, %v5747
      %v5756 = vcombine.high %v5754, %v5754
      %v5757 = vcombine.low %v5567, %v5568
      %v5759 = vunpack.c.l.s4 1983009808
      %v5760 = vunpack.c.0.s8 %v5759
      %v5761 = vlaneseq
      %v5762 = vshrl.u32 %v5761, 7
      %v5763 = vsub.s32 %v5760, %v5762
      %v5764 = vrot.slane %v5757, %v5763
      %v5765 = vcombine.low %v5569, %v5570
      %v5766 = vcombine.high %v5569, %v5570
      %v5768 = vunpack.c.l.s4 1983009808
      %v5769 = vunpack.c.0.s8 %v5768
      %v5770 = vlaneseq
      %v5771 = vshrl.u32 %v5770, 7
      %v5772 = vsub.s32 %v5769, %v5771
      %v5773 = vrot.slane %v5765, %v5772
      %v5775 = vunpack.c.l.s4 1983009808
      %v5776 = vunpack.c.0.s8 %v5775
      %v5777 = vlaneseq
      %v5778 = vshrl.u32 %v5777, 7
      %v5779 = vsub.s32 %v5776, %v5778
      %v5780 = vrot.slane %v5766, %v5779
      %v5781 = vcombine.high %v5773, %v5773
      %v5782 = vcombine.high %v5780, %v5780
      %v5783 = vcombine.low %v5571, %v5572
      %v5785 = vunpack.c.l.s4 1983009808
      %v5786 = vunpack.c.0.s8 %v5785
      %v5787 = vlaneseq
      %v5788 = vshrl.u32 %v5787, 7
      %v5789 = vsub.s32 %v5786, %v5788
      %v5790 = vrot.slane %v5783, %v5789
      %v5791 = vcombine.low %v5573, %v5574
      %v5792 = vcombine.high %v5573, %v5574
      %v5794 = vunpack.c.l.s4 1983009808
      %v5795 = vunpack.c.0.s8 %v5794
      %v5796 = vlaneseq
      %v5797 = vshrl.u32 %v5796, 7
      %v5798 = vsub.s32 %v5795, %v5797
      %v5799 = vrot.slane %v5791, %v5798
      %v5801 = vunpack.c.l.s4 1983009808
      %v5802 = vunpack.c.0.s8 %v5801
      %v5803 = vlaneseq
      %v5804 = vshrl.u32 %v5803, 7
      %v5805 = vsub.s32 %v5802, %v5804
      %v5806 = vrot.slane %v5792, %v5805
      %v5807 = vcombine.high %v5799, %v5799
      %v5808 = vcombine.high %v5806, %v5806
      %v5809 = vcombine.low %v5575, %v5576
      %v5811 = vunpack.c.l.s4 1983009808
      %v5812 = vunpack.c.0.s8 %v5811
      %v5813 = vlaneseq
      %v5814 = vshrl.u32 %v5813, 7
      %v5815 = vsub.s32 %v5812, %v5814
      %v5816 = vrot.slane %v5809, %v5815
      %s5817 = scalar_lea.vmem %s1, 4032
      %v5818 = vld [vmem:[%s5817] sm:$0xff]
      %v5819 = vld [vmem:[%s5817 + $0x8] sm:$0xff]
      %v5820 = vld [vmem:[%s5817 + $0x10] sm:$0xff]
      %v5821 = vld [vmem:[%s5817 + $0x18] sm:$0xff]
      %v5822 = vld [vmem:[%s5817 + $0x20] sm:$0xff]
      %v5823 = vld [vmem:[%s5817 + $0x28] sm:$0xff]
      %v5824 = vld [vmem:[%s5817 + $0x30] sm:$0xff]
      %v5825 = vld [vmem:[%s5817 + $0x38] sm:$0xff]
      %v5826 = vld [vmem:[%s5817 + $0x40] sm:$0xff]
      %v5827 = vld [vmem:[%s5817 + $0x48] sm:$0xff]
      %v5828 = vld [vmem:[%s5817 + $0x50] sm:$0xff]
      %v5829 = vld [vmem:[%s5817 + $0x58] sm:$0xff]
      %v5830 = vld [vmem:[%s5817 + $0x60] sm:$0xff]
      %v5831 = vld [vmem:[%s5817 + $0x68] sm:$0xff]
      %v5832 = vld [vmem:[%s5817 + $0x70] sm:$0xff]
      %v5833 = vld [vmem:[%s5817 + $0x78] sm:$0xff]
      %v5834 = vld [vmem:[%s5817 + $0x80] sm:$0xff]
      %v5835 = vld [vmem:[%s5817 + $0x88] sm:$0xff]
      %v5836 = vld [vmem:[%s5817 + $0x90] sm:$0xff]
      %v5837 = vld [vmem:[%s5817 + $0x98] sm:$0xff]
      %v5838 = vld [vmem:[%s5817 + $0xa0] sm:$0xff]
      %v5839 = vld [vmem:[%s5817 + $0xa8] sm:$0xff]
      %v5840 = vld [vmem:[%s5817 + $0xb0] sm:$0xff]
      %v5841 = vld [vmem:[%s5817 + $0xb8] sm:$0xff]
      %v5842 = vld [vmem:[%s5817 + $0xc0] sm:$0xff]
      %v5843 = vld [vmem:[%s5817 + $0xc8] sm:$0xff]
      %v5844 = vld [vmem:[%s5817 + $0xd0] sm:$0xff]
      %v5845 = vld [vmem:[%s5817 + $0xd8] sm:$0xff]
      %v5846 = vld [vmem:[%s5817 + $0xe0] sm:$0xff]
      %v5847 = vld [vmem:[%s5817 + $0xe8] sm:$0xff]
      %v5848 = vld [vmem:[%s5817 + $0xf0] sm:$0xff]
      %v5849 = vld [vmem:[%s5817 + $0xf8] sm:$0xff]
      %v5850 = vld [vmem:[%s5817 + $0x100] sm:$0xff]
      %v5851 = vld [vmem:[%s5817 + $0x108] sm:$0xff]
      %v5852 = vld [vmem:[%s5817 + $0x110] sm:$0xff]
      %v5853 = vld [vmem:[%s5817 + $0x118] sm:$0xff]
      %v5854 = vld [vmem:[%s5817 + $0x120] sm:$0xff]
      %v5855 = vld [vmem:[%s5817 + $0x128] sm:$0xff]
      %v5856 = vld [vmem:[%s5817 + $0x130] sm:$0xff]
      %v5857 = vld [vmem:[%s5817 + $0x138] sm:$0xff]
      %v5858 = vld [vmem:[%s5817 + $0x140] sm:$0xff]
      %v5859 = vld [vmem:[%s5817 + $0x148] sm:$0xff]
      %v5860 = vld [vmem:[%s5817 + $0x150] sm:$0xff]
      %v5861 = vld [vmem:[%s5817 + $0x158] sm:$0xff]
      %v5862 = vld [vmem:[%s5817 + $0x160] sm:$0xff]
      %v5863 = vld [vmem:[%s5817 + $0x168] sm:$0xff]
      %v5864 = vld [vmem:[%s5817 + $0x170] sm:$0xff]
      %v5865 = vld [vmem:[%s5817 + $0x178] sm:$0xff]
      %v5866 = vld [vmem:[%s5817 + $0x180] sm:$0xff]
      %v5867 = vld [vmem:[%s5817 + $0x188] sm:$0xff]
      %v5868 = vld [vmem:[%s5817 + $0x190] sm:$0xff]
      %v5869 = vld [vmem:[%s5817 + $0x198] sm:$0xff]
      %v5870 = vld [vmem:[%s5817 + $0x1a0] sm:$0xff]
      %v5871 = vld [vmem:[%s5817 + $0x1a8] sm:$0xff]
      %v5872 = vld [vmem:[%s5817 + $0x1b0] sm:$0xff]
      %v5873 = vld [vmem:[%s5817 + $0x1b8] sm:$0xff]
      %v5874 = vld [vmem:[%s5817 + $0x1c0] sm:$0xff]
      %v5875 = vld [vmem:[%s5817 + $0x1c8] sm:$0xff]
      %v5876 = vld [vmem:[%s5817 + $0x1d0] sm:$0xff]
      %v5877 = vld [vmem:[%s5817 + $0x1d8] sm:$0xff]
      %v5878 = vld [vmem:[%s5817 + $0x1e0] sm:$0xff]
      %v5879 = vld [vmem:[%s5817 + $0x1e8] sm:$0xff]
      %v5880 = vld [vmem:[%s5817 + $0x1f0] sm:$0xff]
      %v5881 = vld [vmem:[%s5817 + $0x1f8] sm:$0xff]
      %v5882 = vld [vmem:[%s5817 + $0x200] sm:$0xff]
      %v5883 = vld [vmem:[%s5817 + $0x208] sm:$0xff]
      %v5884 = vld [vmem:[%s5817 + $0x210] sm:$0xff]
      %v5885 = vld [vmem:[%s5817 + $0x218] sm:$0xff]
      %v5886 = vld [vmem:[%s5817 + $0x220] sm:$0xff]
      %v5887 = vld [vmem:[%s5817 + $0x228] sm:$0xff]
      %v5888 = vld [vmem:[%s5817 + $0x230] sm:$0xff]
      %v5889 = vld [vmem:[%s5817 + $0x238] sm:$0xff]
      %v5890 = vld [vmem:[%s5817 + $0x240] sm:$0xff]
      %v5891 = vld [vmem:[%s5817 + $0x248] sm:$0xff]
      %v5892 = vld [vmem:[%s5817 + $0x250] sm:$0xff]
      %v5893 = vld [vmem:[%s5817 + $0x258] sm:$0xff]
      %v5894 = vld [vmem:[%s5817 + $0x260] sm:$0xff]
      %v5895 = vld [vmem:[%s5817 + $0x268] sm:$0xff]
      %v5896 = vld [vmem:[%s5817 + $0x270] sm:$0xff]
      %v5897 = vld [vmem:[%s5817 + $0x278] sm:$0xff]
      %v5898 = vld [vmem:[%s5817 + $0x280] sm:$0xff]
      %v5899 = vld [vmem:[%s5817 + $0x288] sm:$0xff]
      %v5900 = vld [vmem:[%s5817 + $0x290] sm:$0xff]
      %v5901 = vld [vmem:[%s5817 + $0x298] sm:$0xff]
      %v5902 = vcombine.low %v5617, %v5625
      %v5903 = vcombine.low %v5624, %v5626
      %v5905 = vunpack.c.l.s4 1983009808
      %v5906 = vunpack.c.0.s8 %v5905
      %v5907 = vlaneseq
      %v5908 = vshrl.u32 %v5907, 7
      %v5909 = vsub.s32 %v5906, %v5908
      %v5910 = vrot.slane %v5902, %v5909
      %v5912 = vunpack.c.l.s4 1983009808
      %v5913 = vunpack.c.0.s8 %v5912
      %v5914 = vlaneseq
      %v5915 = vshrl.u32 %v5914, 7
      %v5916 = vsub.s32 %v5913, %v5915
      %v5917 = vrot.slane %v5903, %v5916
      %v5918 = vcombine.low %v5910, %v5917
      %v5919 = vcombine.high %v5910, %v5917
      %v5920 = vcombine.low %v5634, %v5643
      %v5921 = vcombine.low %v5651, %v5650
      %v5923 = vunpack.c.l.s4 1983009808
      %v5924 = vunpack.c.0.s8 %v5923
      %v5925 = vlaneseq
      %v5926 = vshrl.u32 %v5925, 7
      %v5927 = vsub.s32 %v5924, %v5926
      %v5928 = vrot.slane %v5920, %v5927
      %v5930 = vunpack.c.l.s4 1983009808
      %v5931 = vunpack.c.0.s8 %v5930
      %v5932 = vlaneseq
      %v5933 = vshrl.u32 %v5932, 7
      %v5934 = vsub.s32 %v5931, %v5933
      %v5935 = vrot.slane %v5921, %v5934
      %v5936 = vcombine.low %v5928, %v5935
      %v5937 = vcombine.high %v5928, %v5935
      %v5938 = vcombine.low %v5652, %v5660
      %v5939 = vcombine.low %v5669, %v5677
      %v5941 = vunpack.c.l.s4 1983009808
      %v5942 = vunpack.c.0.s8 %v5941
      %v5943 = vlaneseq
      %v5944 = vshrl.u32 %v5943, 7
      %v5945 = vsub.s32 %v5942, %v5944
      %v5946 = vrot.slane %v5938, %v5945
      %v5948 = vunpack.c.l.s4 1983009808
      %v5949 = vunpack.c.0.s8 %v5948
      %v5950 = vlaneseq
      %v5951 = vshrl.u32 %v5950, 7
      %v5952 = vsub.s32 %v5949, %v5951
      %v5953 = vrot.slane %v5939, %v5952
      %v5954 = vcombine.low %v5946, %v5953
      %v5955 = vcombine.high %v5946, %v5953
      %v5956 = vcombine.low %v5676, %v5678
      %v5957 = vcombine.low %v5686, %v5695
      %v5959 = vunpack.c.l.s4 1983009808
      %v5960 = vunpack.c.0.s8 %v5959
      %v5961 = vlaneseq
      %v5962 = vshrl.u32 %v5961, 7
      %v5963 = vsub.s32 %v5960, %v5962
      %v5964 = vrot.slane %v5956, %v5963
      %v5966 = vunpack.c.l.s4 1983009808
      %v5967 = vunpack.c.0.s8 %v5966
      %v5968 = vlaneseq
      %v5969 = vshrl.u32 %v5968, 7
      %v5970 = vsub.s32 %v5967, %v5969
      %v5971 = vrot.slane %v5957, %v5970
      %v5972 = vcombine.low %v5964, %v5971
      %v5973 = vcombine.high %v5964, %v5971
      %v5974 = vcombine.low %v5703, %v5702
      %v5975 = vcombine.low %v5704, %v5712
      %v5977 = vunpack.c.l.s4 1983009808
      %v5978 = vunpack.c.0.s8 %v5977
      %v5979 = vlaneseq
      %v5980 = vshrl.u32 %v5979, 7
      %v5981 = vsub.s32 %v5978, %v5980
      %v5982 = vrot.slane %v5974, %v5981
      %v5984 = vunpack.c.l.s4 1983009808
      %v5985 = vunpack.c.0.s8 %v5984
      %v5986 = vlaneseq
      %v5987 = vshrl.u32 %v5986, 7
      %v5988 = vsub.s32 %v5985, %v5987
      %v5989 = vrot.slane %v5975, %v5988
      %v5990 = vcombine.low %v5982, %v5989
      %v5991 = vcombine.high %v5982, %v5989
      %v5992 = vcombine.low %v5721, %v5729
      %v5993 = vcombine.low %v5728, %v5730
      %v5995 = vunpack.c.l.s4 1983009808
      %v5996 = vunpack.c.0.s8 %v5995
      %v5997 = vlaneseq
      %v5998 = vshrl.u32 %v5997, 7
      %v5999 = vsub.s32 %v5996, %v5998
      %v6000 = vrot.slane %v5992, %v5999
      %v6002 = vunpack.c.l.s4 1983009808
      %v6003 = vunpack.c.0.s8 %v6002
      %v6004 = vlaneseq
      %v6005 = vshrl.u32 %v6004, 7
      %v6006 = vsub.s32 %v6003, %v6005
      %v6007 = vrot.slane %v5993, %v6006
      %v6008 = vcombine.low %v6000, %v6007
      %v6009 = vcombine.high %v6000, %v6007
      %v6010 = vcombine.low %v5738, %v5747
      %v6011 = vcombine.low %v5755, %v5754
      %v6013 = vunpack.c.l.s4 1983009808
      %v6014 = vunpack.c.0.s8 %v6013
      %v6015 = vlaneseq
      %v6016 = vshrl.u32 %v6015, 7
      %v6017 = vsub.s32 %v6014, %v6016
      %v6018 = vrot.slane %v6010, %v6017
      %v6020 = vunpack.c.l.s4 1983009808
      %v6021 = vunpack.c.0.s8 %v6020
      %v6022 = vlaneseq
      %v6023 = vshrl.u32 %v6022, 7
      %v6024 = vsub.s32 %v6021, %v6023
      %v6025 = vrot.slane %v6011, %v6024
      %v6026 = vcombine.low %v6018, %v6025
      %v6027 = vcombine.high %v6018, %v6025
      %v6028 = vcombine.low %v5756, %v5764
      %v6029 = vcombine.low %v5773, %v5781
      %v6031 = vunpack.c.l.s4 1983009808
      %v6032 = vunpack.c.0.s8 %v6031
      %v6033 = vlaneseq
      %v6034 = vshrl.u32 %v6033, 7
      %v6035 = vsub.s32 %v6032, %v6034
      %v6036 = vrot.slane %v6028, %v6035
      %v6038 = vunpack.c.l.s4 1983009808
      %v6039 = vunpack.c.0.s8 %v6038
      %v6040 = vlaneseq
      %v6041 = vshrl.u32 %v6040, 7
      %v6042 = vsub.s32 %v6039, %v6041
      %v6043 = vrot.slane %v6029, %v6042
      %v6044 = vcombine.low %v6036, %v6043
      %v6045 = vcombine.high %v6036, %v6043
      %v6046 = vcombine.low %v5780, %v5782
      %v6047 = vcombine.low %v5790, %v5799
      %v6049 = vunpack.c.l.s4 1983009808
      %v6050 = vunpack.c.0.s8 %v6049
      %v6051 = vlaneseq
      %v6052 = vshrl.u32 %v6051, 7
      %v6053 = vsub.s32 %v6050, %v6052
      %v6054 = vrot.slane %v6046, %v6053
      %v6056 = vunpack.c.l.s4 1983009808
      %v6057 = vunpack.c.0.s8 %v6056
      %v6058 = vlaneseq
      %v6059 = vshrl.u32 %v6058, 7
      %v6060 = vsub.s32 %v6057, %v6059
      %v6061 = vrot.slane %v6047, %v6060
      %v6062 = vcombine.low %v6054, %v6061
      %v6063 = vcombine.high %v6054, %v6061
      %v6064 = vcombine.low %v5807, %v5806
      %v6065 = vcombine.low %v5808, %v5816
      %v6067 = vunpack.c.l.s4 1983009808
      %v6068 = vunpack.c.0.s8 %v6067
      %v6069 = vlaneseq
      %v6070 = vshrl.u32 %v6069, 7
      %v6071 = vsub.s32 %v6068, %v6070
      %v6072 = vrot.slane %v6064, %v6071
      %v6074 = vunpack.c.l.s4 1983009808
      %v6075 = vunpack.c.0.s8 %v6074
      %v6076 = vlaneseq
      %v6077 = vshrl.u32 %v6076, 7
      %v6078 = vsub.s32 %v6075, %v6077
      %v6079 = vrot.slane %v6065, %v6078
      %v6080 = vcombine.low %v6072, %v6079
      %v6081 = vcombine.high %v6072, %v6079
      %v6092 = vsel %vm172, %v5919, 0
      %v6094 = vsel %vm172, %v5937, 0
      %v6096 = vsel %vm172, %v5955, 0
      %v6098 = vsel %vm172, %v5973, 0
      %v6100 = vsel %vm172, %v5991, 0
      %v6102 = vsel %vm172, %v6009, 0
      %v6104 = vsel %vm172, %v6027, 0
      %v6106 = vsel %vm172, %v6045, 0
      %v6108 = vsel %vm172, %v6063, 0
      %v6110 = vsel %vm172, %v6081, 0
      %6112 = vmatprep.subr.mxu0 %v5819
      %6113 = vmatpush1.msra.mxu0 %v5818
      %6114 = vmatprep.subr.mxu0 %v5822
      %6115 = vmatpush1.msra.mxu0 %v5821
      %6116 = vmatprep.subr.mxu0 %v5825
      %6117 = vmatpush1.msra.mxu0 %v5824
      %6118 = vmatprep.subr.mxu0 %v5828
      %6119 = vmatpush1.msra.mxu0 %v5827
      %6120 = vmatprep.subr.mxu0 %v5831
      %6121 = vmatpush1.msra.mxu0 %v5830
      %6122 = vmatprep.subr.mxu0 %v5834
      %6123 = vmatpush1.msra.mxu0 %v5833
      %6124 = vmatprep.subr.mxu0 %v5837
      %6125 = vmatpush1.msra.mxu0 %v5836
      %6126 = vmatprep.subr.mxu0 %v5840
      %6127 = vmatpush1.msra.mxu0 %v5839
      %6128 = vmatprep.subr.mxu0 %v5843
      %6129 = vmatpush1.msra.mxu0 %v5842
      %6130 = vmatprep.subr.mxu0 %v5846
      %6131 = vmatpush1.msra.mxu0 %v5845
      %6132 = vmatprep.subr.mxu0 %v5849
      %6133 = vmatpush1.msra.mxu0 %v5848
      %6134 = vmatprep.subr.mxu0 %v5852
      %6135 = vmatpush1.msra.mxu0 %v5851
      %6136 = vmatprep.subr.mxu0 %v5855
      %6137 = vmatpush1.msra.mxu0 %v5854
      %6138 = vmatprep.subr.mxu0 %v5858
      %6139 = vmatpush1.msra.mxu0 %v5857
      %6140 = vmatprep.subr.mxu0 %v5861
      %6141 = vmatpush1.msra.mxu0 %v5860
      %6142 = vmatprep.subr.mxu0 %v5864
      %6143 = vmatpush1.msra.mxu0 %v5863
      %6144 = vmatprep.subr.mxu0 %v5867
      %6145 = vmatpush1.msra.mxu0 %v5866
      %6146 = vmatprep.subr.mxu0 %v5870
      %6147 = vmatpush1.msra.mxu0 %v5869
      %6148 = vmatprep.subr.mxu0 %v5873
      %6149 = vmatpush1.msra.mxu0 %v5872
      %6150 = vmatprep.subr.mxu0 %v5876
      %6151 = vmatpush1.msra.mxu0 %v5875
      %6152 = vmatprep.subr.mxu0 %v5879
      %6153 = vmatpush1.msra.mxu0 %v5878
      %6154 = vmatprep.subr.mxu0 %v5882
      %6155 = vmatpush1.msra.mxu0 %v5881
      %6156 = vmatprep.subr.mxu0 %v5885
      %6157 = vmatpush1.msra.mxu0 %v5884
      %6158 = vmatprep.subr.mxu0 %v5888
      %6159 = vmatpush1.msra.mxu0 %v5887
      %6160 = vmatprep.subr.mxu0 %v5891
      %6161 = vmatpush1.msra.mxu0 %v5890
      %6162 = vmatprep.subr.mxu0 %v5894
      %6163 = vmatpush1.msra.mxu0 %v5893
      %6164 = vmatprep.subr.mxu0 %v5897
      %6165 = vmatpush1.msra.mxu0 %v5896
      %6166 = vmatprep.subr.mxu0 %v5900
      %6167 = vmatpush1.msra.mxu0 %v5899
      %6168 = vmatprep.subr.mxu0 0.0
      %6169 = vmatpush1.msra.mxu0 0.0
      %6170 = vmatprep.subr.mxu0 0.0
      %6171 = vmatpush1.msra.mxu0 0.0
      %6172 = vmatprep.subr.mxu0 0.0
      %6173 = vmatpush1.msra.mxu0 0.0
      %6174 = vmatprep.subr.mxu0 0.0
      %6175 = vmatpush1.msra.mxu0 0.0
      %6176 = vmatprep.mubr.f32.mxu0 %v6092
      %6177 = vmatmul.mubr.f32.gmra.mrb[0].mxu0 %v5918
      %v6178 = vpop.f32.mrb[0].mxu0
      %v6179 = vadd.f32 0.0, %v6178
      %v6180 = vpop.f32.mrb[0].mxu0
      %v6181 = vadd.f32 0.0, %v6180
      %6182 = vmatprep.mubr.f32.mxu0 %v6094
      %6183 = vmatmul.mubr.f32.gmra.mrb[0].mxu0 %v5936
      %v6184 = vpop.f32.mrb[0].mxu0
      %v6185 = vadd.f32 0.0, %v6184
      %v6186 = vpop.f32.mrb[0].mxu0
      %v6187 = vadd.f32 0.0, %v6186
      %6188 = vmatprep.mubr.f32.mxu0 %v6096
      %6189 = vmatmul.mubr.f32.gmra.mrb[0].mxu0 %v5954
      %v6190 = vpop.f32.mrb[0].mxu0
      %v6191 = vadd.f32 0.0, %v6190
      %v6192 = vpop.f32.mrb[0].mxu0
      %v6193 = vadd.f32 0.0, %v6192
      %6194 = vmatprep.mubr.f32.mxu0 %v6098
      %6195 = vmatmul.mubr.f32.gmra.mrb[0].mxu0 %v5972
      %v6196 = vpop.f32.mrb[0].mxu0
      %v6197 = vadd.f32 0.0, %v6196
      %v6198 = vpop.f32.mrb[0].mxu0
      %v6199 = vadd.f32 0.0, %v6198
      %6200 = vmatprep.mubr.f32.mxu0 %v6100
      %6201 = vmatmul.mubr.f32.gmra.mrb[0].mxu0 %v5990
      %v6202 = vpop.f32.mrb[0].mxu0
      %v6203 = vadd.f32 0.0, %v6202
      %v6204 = vpop.f32.mrb[0].mxu0
      %v6205 = vadd.f32 0.0, %v6204
      %6206 = vmatprep.mubr.f32.mxu0 %v6102
      %6207 = vmatmul.mubr.f32.gmra.mrb[0].mxu0 %v6008
      %v6208 = vpop.f32.mrb[0].mxu0
      %v6209 = vadd.f32 0.0, %v6208
      %v6210 = vpop.f32.mrb[0].mxu0
      %v6211 = vadd.f32 0.0, %v6210
      %6212 = vmatprep.mubr.f32.mxu0 %v6104
      %6213 = vmatmul.mubr.f32.gmra.mrb[0].mxu0 %v6026
      %v6214 = vpop.f32.mrb[0].mxu0
      %v6215 = vadd.f32 0.0, %v6214
      %v6216 = vpop.f32.mrb[0].mxu0
      %v6217 = vadd.f32 0.0, %v6216
      %6218 = vmatprep.mubr.f32.mxu0 %v6106
      %6219 = vmatmul.mubr.f32.gmra.mrb[0].mxu0 %v6044
      %v6220 = vpop.f32.mrb[0].mxu0
      %v6221 = vadd.f32 0.0, %v6220
      %v6222 = vpop.f32.mrb[0].mxu0
      %v6223 = vadd.f32 0.0, %v6222
      %6224 = vmatprep.mubr.f32.mxu0 %v6108
      %6225 = vmatmul.mubr.f32.gmra.mrb[0].mxu0 %v6062
      %v6226 = vpop.f32.mrb[0].mxu0
      %v6227 = vadd.f32 0.0, %v6226
      %v6228 = vpop.f32.mrb[0].mxu0
      %v6229 = vadd.f32 0.0, %v6228
      %6230 = vmatprep.mubr.f32.mxu0 %v6110
      %6231 = vmatmul.mubr.f32.gmra.mrb[0].mxu0 %v6080
      %v6232 = vpop.f32.mrb[0].mxu0
      %v6233 = vadd.f32 0.0, %v6232
      %v6234 = vpop.f32.mrb[0].mxu0
      %v6235 = vadd.f32 0.0, %v6234
      %6236 = vdwg.mxu0
      %6237 = vmatprep.subr.mxu0 0.0
      %6238 = vmatpush1.msra.mxu0 %v5820
      %6239 = vmatprep.subr.mxu0 0.0
      %6240 = vmatpush1.msra.mxu0 %v5823
      %6241 = vmatprep.subr.mxu0 0.0
      %6242 = vmatpush1.msra.mxu0 %v5826
      %6243 = vmatprep.subr.mxu0 0.0
      %6244 = vmatpush1.msra.mxu0 %v5829
      %6245 = vmatprep.subr.mxu0 0.0
      %6246 = vmatpush1.msra.mxu0 %v5832
      %6247 = vmatprep.subr.mxu0 0.0
      %6248 = vmatpush1.msra.mxu0 %v5835
      %6249 = vmatprep.subr.mxu0 0.0
      %6250 = vmatpush1.msra.mxu0 %v5838
      %6251 = vmatprep.subr.mxu0 0.0
      %6252 = vmatpush1.msra.mxu0 %v5841
      %6253 = vmatprep.subr.mxu0 0.0
      %6254 = vmatpush1.msra.mxu0 %v5844
      %6255 = vmatprep.subr.mxu0 0.0
      %6256 = vmatpush1.msra.mxu0 %v5847
      %6257 = vmatprep.subr.mxu0 0.0
      %6258 = vmatpush1.msra.mxu0 %v5850
      %6259 = vmatprep.subr.mxu0 0.0
      %6260 = vmatpush1.msra.mxu0 %v5853
      %6261 = vmatprep.subr.mxu0 0.0
      %6262 = vmatpush1.msra.mxu0 %v5856
      %6263 = vmatprep.subr.mxu0 0.0
      %6264 = vmatpush1.msra.mxu0 %v5859
      %6265 = vmatprep.subr.mxu0 0.0
      %6266 = vmatpush1.msra.mxu0 %v5862
      %6267 = vmatprep.subr.mxu0 0.0
      %6268 = vmatpush1.msra.mxu0 %v5865
      %6269 = vmatprep.subr.mxu0 0.0
      %6270 = vmatpush1.msra.mxu0 %v5868
      %6271 = vmatprep.subr.mxu0 0.0
      %6272 = vmatpush1.msra.mxu0 %v5871
      %6273 = vmatprep.subr.mxu0 0.0
      %6274 = vmatpush1.msra.mxu0 %v5874
      %6275 = vmatprep.subr.mxu0 0.0
      %6276 = vmatpush1.msra.mxu0 %v5877
      %6277 = vmatprep.subr.mxu0 0.0
      %6278 = vmatpush1.msra.mxu0 %v5880
      %6279 = vmatprep.subr.mxu0 0.0
      %6280 = vmatpush1.msra.mxu0 %v5883
      %6281 = vmatprep.subr.mxu0 0.0
      %6282 = vmatpush1.msra.mxu0 %v5886
      %6283 = vmatprep.subr.mxu0 0.0
      %6284 = vmatpush1.msra.mxu0 %v5889
      %6285 = vmatprep.subr.mxu0 0.0
      %6286 = vmatpush1.msra.mxu0 %v5892
      %6287 = vmatprep.subr.mxu0 0.0
      %6288 = vmatpush1.msra.mxu0 %v5895
      %6289 = vmatprep.subr.mxu0 0.0
      %6290 = vmatpush1.msra.mxu0 %v5898
      %6291 = vmatprep.subr.mxu0 0.0
      %6292 = vmatpush1.msra.mxu0 %v5901
      %6293 = vmatprep.subr.mxu0 0.0
      %6294 = vmatpush1.msra.mxu0 0.0
      %6295 = vmatprep.subr.mxu0 0.0
      %6296 = vmatpush1.msra.mxu0 0.0
      %6297 = vmatprep.subr.mxu0 0.0
      %6298 = vmatpush1.msra.mxu0 0.0
      %6299 = vmatprep.subr.mxu0 0.0
      %6300 = vmatpush1.msra.mxu0 0.0
      %6301 = vmatprep.mubr.f32.mxu0 %v6092
      %6302 = vmatmul.mubr.f32.gmra.mrb[0].mxu0 %v5918
      %v6303 = vpop.f32.mrb[0].mxu0
      %v6304 = vadd.f32 0.0, %v6303
      %v6305 = vpop.f32.mrb[0].mxu0
      %6306 = vmatprep.mubr.f32.mxu0 %v6094
      %6307 = vmatmul.mubr.f32.gmra.mrb[0].mxu0 %v5936
      %v6308 = vpop.f32.mrb[0].mxu0
      %v6309 = vadd.f32 0.0, %v6308
      %v6310 = vpop.f32.mrb[0].mxu0
      %6311 = vmatprep.mubr.f32.mxu0 %v6096
      %6312 = vmatmul.mubr.f32.gmra.mrb[0].mxu0 %v5954
      %v6313 = vpop.f32.mrb[0].mxu0
      %v6314 = vadd.f32 0.0, %v6313
      %v6315 = vpop.f32.mrb[0].mxu0
      %6316 = vmatprep.mubr.f32.mxu0 %v6098
      %6317 = vmatmul.mubr.f32.gmra.mrb[0].mxu0 %v5972
      %v6318 = vpop.f32.mrb[0].mxu0
      %v6319 = vadd.f32 0.0, %v6318
      %v6320 = vpop.f32.mrb[0].mxu0
      %6321 = vmatprep.mubr.f32.mxu0 %v6100
      %6322 = vmatmul.mubr.f32.gmra.mrb[0].mxu0 %v5990
      %v6323 = vpop.f32.mrb[0].mxu0
      %v6324 = vadd.f32 0.0, %v6323
      %v6325 = vpop.f32.mrb[0].mxu0
      %6326 = vmatprep.mubr.f32.mxu0 %v6102
      %6327 = vmatmul.mubr.f32.gmra.mrb[0].mxu0 %v6008
      %v6328 = vpop.f32.mrb[0].mxu0
      %v6329 = vadd.f32 0.0, %v6328
      %v6330 = vpop.f32.mrb[0].mxu0
      %6331 = vmatprep.mubr.f32.mxu0 %v6104
      %6332 = vmatmul.mubr.f32.gmra.mrb[0].mxu0 %v6026
      %v6333 = vpop.f32.mrb[0].mxu0
      %v6334 = vadd.f32 0.0, %v6333
      %v6335 = vpop.f32.mrb[0].mxu0
      %6336 = vmatprep.mubr.f32.mxu0 %v6106
      %6337 = vmatmul.mubr.f32.gmra.mrb[0].mxu0 %v6044
      %v6338 = vpop.f32.mrb[0].mxu0
      %v6339 = vadd.f32 0.0, %v6338
      %v6340 = vpop.f32.mrb[0].mxu0
      %6341 = vmatprep.mubr.f32.mxu0 %v6108
      %6342 = vmatmul.mubr.f32.gmra.mrb[0].mxu0 %v6062
      %v6343 = vpop.f32.mrb[0].mxu0
      %v6344 = vadd.f32 0.0, %v6343
      %v6345 = vpop.f32.mrb[0].mxu0
      %6346 = vmatprep.mubr.f32.mxu0 %v6110
      %6347 = vmatmul.mubr.f32.gmra.mrb[0].mxu0 %v6080
      %v6348 = vpop.f32.mrb[0].mxu0
      %v6349 = vadd.f32 0.0, %v6348
      %v6350 = vpop.f32.mrb[0].mxu0
      %6351 = vdwg.mxu0
      %v6352 = vadd.f32 %v5515, %v6179
      %v6353 = vadd.f32 %v5516, %v6181
      %v6354 = vadd.f32 %v5517, %v6304
      %v6355 = vadd.f32 %v5518, %v6185
      %v6356 = vadd.f32 %v5519, %v6187
      %v6357 = vadd.f32 %v5520, %v6309
      %v6358 = vadd.f32 %v5521, %v6191
      %v6359 = vadd.f32 %v5522, %v6193
      %v6360 = vadd.f32 %v5523, %v6314
      %v6361 = vadd.f32 %v5524, %v6197
      %v6362 = vadd.f32 %v5525, %v6199
      %v6363 = vadd.f32 %v5526, %v6319
      %v6364 = vadd.f32 %v5527, %v6203
      %v6365 = vadd.f32 %v5528, %v6205
      %v6366 = vadd.f32 %v5529, %v6324
      %v6367 = vadd.f32 %v5530, %v6209
      %v6368 = vadd.f32 %v5531, %v6211
      %v6369 = vadd.f32 %v5532, %v6329
      %v6370 = vadd.f32 %v5533, %v6215
      %v6371 = vadd.f32 %v5534, %v6217
      %v6372 = vadd.f32 %v5535, %v6334
      %v6373 = vadd.f32 %v5536, %v6221
      %v6374 = vadd.f32 %v5537, %v6223
      %v6375 = vadd.f32 %v5538, %v6339
      %v6376 = vadd.f32 %v5539, %v6227
      %v6377 = vadd.f32 %v5540, %v6229
      %v6378 = vadd.f32 %v5541, %v6344
      %v6379 = vadd.f32 %v5542, %v6233
      %v6380 = vadd.f32 %v5543, %v6235
      %v6381 = vadd.f32 %v5544, %v6349
      %v6382 = vld [vmem:[%s261] sm:$0xfe]
      %v6383 = vld [vmem:[%s261 + $0x8] sm:$0xfe]
      %v6384 = vld [vmem:[%s261 + $0x10] sm:$0x7]
      %v6385 = vld [vmem:[%s261 + $0x18] sm:$0x7]
      %v6386 = vld [vmem:[%s261 + $0x20] sm:$0xfe]
      %v6387 = vld [vmem:[%s261 + $0x28] sm:$0xfe]
      %v6388 = vld [vmem:[%s261 + $0x30] sm:$0x7]
      %v6389 = vld [vmem:[%s261 + $0x38] sm:$0x7]
      %v6390 = vld [vmem:[%s261 + $0x40] sm:$0xfe]
      %v6391 = vld [vmem:[%s261 + $0x48] sm:$0xfe]
      %v6392 = vld [vmem:[%s261 + $0x50] sm:$0x7]
      %v6393 = vld [vmem:[%s261 + $0x58] sm:$0x7]
      %v6394 = vld [vmem:[%s261 + $0x60] sm:$0xfe]
      %v6395 = vld [vmem:[%s261 + $0x68] sm:$0xfe]
      %v6396 = vld [vmem:[%s261 + $0x70] sm:$0x7]
      %v6397 = vld [vmem:[%s261 + $0x78] sm:$0x7]
      %v6398 = vld [vmem:[%s261 + $0x80] sm:$0xfe]
      %v6399 = vld [vmem:[%s261 + $0x88] sm:$0xfe]
      %v6400 = vld [vmem:[%s261 + $0x90] sm:$0x7]
      %v6401 = vld [vmem:[%s261 + $0x98] sm:$0x7]
      %v6402 = vld [vmem:[%s261 + $0xa0] sm:$0xfe]
      %v6403 = vld [vmem:[%s261 + $0xa8] sm:$0xfe]
      %v6404 = vld [vmem:[%s261 + $0xb0] sm:$0x7]
      %v6405 = vld [vmem:[%s261 + $0xb8] sm:$0x7]
      %v6406 = vld [vmem:[%s261 + $0xc0] sm:$0xfe]
      %v6407 = vld [vmem:[%s261 + $0xc8] sm:$0xfe]
      %v6408 = vld [vmem:[%s261 + $0xd0] sm:$0x7]
      %v6409 = vld [vmem:[%s261 + $0xd8] sm:$0x7]
      %v6410 = vld [vmem:[%s261 + $0xe0] sm:$0xfe]
      %v6411 = vld [vmem:[%s261 + $0xe8] sm:$0xfe]
      %v6412 = vld [vmem:[%s261 + $0xf0] sm:$0x7]
      %v6413 = vld [vmem:[%s261 + $0xf8] sm:$0x7]
      %v6446 = vcombine.low %v6382, %v6383
      %v6447 = vcombine.high %v6382, %v6383
      %v6449 = vunpack.c.l.s4 1983009808
      %v6450 = vunpack.c.0.s8 %v6449
      %v6451 = vlaneseq
      %v6452 = vshrl.u32 %v6451, 7
      %v6453 = vsub.s32 %v6450, %v6452
      %v6454 = vrot.slane %v6446, %v6453
      %v6456 = vunpack.c.l.s4 1983009808
      %v6457 = vunpack.c.0.s8 %v6456
      %v6458 = vlaneseq
      %v6459 = vshrl.u32 %v6458, 7
      %v6460 = vsub.s32 %v6457, %v6459
      %v6461 = vrot.slane %v6447, %v6460
      %v6462 = vcombine.high %v6454, %v6454
      %v6463 = vcombine.high %v6461, %v6461
      %v6464 = vcombine.low %v6384, %v6385
      %v6466 = vunpack.c.l.s4 1983009808
      %v6467 = vunpack.c.0.s8 %v6466
      %v6468 = vlaneseq
      %v6469 = vshrl.u32 %v6468, 7
      %v6470 = vsub.s32 %v6467, %v6469
      %v6471 = vrot.slane %v6464, %v6470
      %v6472 = vcombine.high %v6471, %v6471
      %v6473 = vcombine.low %v6386, %v6387
      %v6474 = vcombine.high %v6386, %v6387
      %v6476 = vunpack.c.l.s4 1983009808
      %v6477 = vunpack.c.0.s8 %v6476
      %v6478 = vlaneseq
      %v6479 = vshrl.u32 %v6478, 7
      %v6480 = vsub.s32 %v6477, %v6479
      %v6481 = vrot.slane %v6473, %v6480
      %v6483 = vunpack.c.l.s4 1983009808
      %v6484 = vunpack.c.0.s8 %v6483
      %v6485 = vlaneseq
      %v6486 = vshrl.u32 %v6485, 7
      %v6487 = vsub.s32 %v6484, %v6486
      %v6488 = vrot.slane %v6474, %v6487
      %v6489 = vcombine.high %v6481, %v6481
      %v6490 = vcombine.high %v6488, %v6488
      %v6491 = vcombine.low %v6388, %v6389
      %v6493 = vunpack.c.l.s4 1983009808
      %v6494 = vunpack.c.0.s8 %v6493
      %v6495 = vlaneseq
      %v6496 = vshrl.u32 %v6495, 7
      %v6497 = vsub.s32 %v6494, %v6496
      %v6498 = vrot.slane %v6491, %v6497
      %v6499 = vcombine.high %v6498, %v6498
      %v6500 = vcombine.low %v6390, %v6391
      %v6501 = vcombine.high %v6390, %v6391
      %v6503 = vunpack.c.l.s4 1983009808
      %v6504 = vunpack.c.0.s8 %v6503
      %v6505 = vlaneseq
      %v6506 = vshrl.u32 %v6505, 7
      %v6507 = vsub.s32 %v6504, %v6506
      %v6508 = vrot.slane %v6500, %v6507
      %v6510 = vunpack.c.l.s4 1983009808
      %v6511 = vunpack.c.0.s8 %v6510
      %v6512 = vlaneseq
      %v6513 = vshrl.u32 %v6512, 7
      %v6514 = vsub.s32 %v6511, %v6513
      %v6515 = vrot.slane %v6501, %v6514
      %v6516 = vcombine.high %v6508, %v6508
      %v6517 = vcombine.high %v6515, %v6515
      %v6518 = vcombine.low %v6392, %v6393
      %v6520 = vunpack.c.l.s4 1983009808
      %v6521 = vunpack.c.0.s8 %v6520
      %v6522 = vlaneseq
      %v6523 = vshrl.u32 %v6522, 7
      %v6524 = vsub.s32 %v6521, %v6523
      %v6525 = vrot.slane %v6518, %v6524
      %v6526 = vcombine.high %v6525, %v6525
      %v6527 = vcombine.low %v6394, %v6395
      %v6528 = vcombine.high %v6394, %v6395
      %v6530 = vunpack.c.l.s4 1983009808
      %v6531 = vunpack.c.0.s8 %v6530
      %v6532 = vlaneseq
      %v6533 = vshrl.u32 %v6532, 7
      %v6534 = vsub.s32 %v6531, %v6533
      %v6535 = vrot.slane %v6527, %v6534
      %v6537 = vunpack.c.l.s4 1983009808
      %v6538 = vunpack.c.0.s8 %v6537
      %v6539 = vlaneseq
      %v6540 = vshrl.u32 %v6539, 7
      %v6541 = vsub.s32 %v6538, %v6540
      %v6542 = vrot.slane %v6528, %v6541
      %v6543 = vcombine.high %v6535, %v6535
      %v6544 = vcombine.high %v6542, %v6542
      %v6545 = vcombine.low %v6396, %v6397
      %v6547 = vunpack.c.l.s4 1983009808
      %v6548 = vunpack.c.0.s8 %v6547
      %v6549 = vlaneseq
      %v6550 = vshrl.u32 %v6549, 7
      %v6551 = vsub.s32 %v6548, %v6550
      %v6552 = vrot.slane %v6545, %v6551
      %v6553 = vcombine.high %v6552, %v6552
      %v6554 = vcombine.low %v6398, %v6399
      %v6555 = vcombine.high %v6398, %v6399
      %v6557 = vunpack.c.l.s4 1983009808
      %v6558 = vunpack.c.0.s8 %v6557
      %v6559 = vlaneseq
      %v6560 = vshrl.u32 %v6559, 7
      %v6561 = vsub.s32 %v6558, %v6560
      %v6562 = vrot.slane %v6554, %v6561
      %v6564 = vunpack.c.l.s4 1983009808
      %v6565 = vunpack.c.0.s8 %v6564
      %v6566 = vlaneseq
      %v6567 = vshrl.u32 %v6566, 7
      %v6568 = vsub.s32 %v6565, %v6567
      %v6569 = vrot.slane %v6555, %v6568
      %v6570 = vcombine.high %v6562, %v6562
      %v6571 = vcombine.high %v6569, %v6569
      %v6572 = vcombine.low %v6400, %v6401
      %v6574 = vunpack.c.l.s4 1983009808
      %v6575 = vunpack.c.0.s8 %v6574
      %v6576 = vlaneseq
      %v6577 = vshrl.u32 %v6576, 7
      %v6578 = vsub.s32 %v6575, %v6577
      %v6579 = vrot.slane %v6572, %v6578
      %v6580 = vcombine.high %v6579, %v6579
      %v6581 = vcombine.low %v6402, %v6403
      %v6582 = vcombine.high %v6402, %v6403
      %v6584 = vunpack.c.l.s4 1983009808
      %v6585 = vunpack.c.0.s8 %v6584
      %v6586 = vlaneseq
      %v6587 = vshrl.u32 %v6586, 7
      %v6588 = vsub.s32 %v6585, %v6587
      %v6589 = vrot.slane %v6581, %v6588
      %v6591 = vunpack.c.l.s4 1983009808
      %v6592 = vunpack.c.0.s8 %v6591
      %v6593 = vlaneseq
      %v6594 = vshrl.u32 %v6593, 7
      %v6595 = vsub.s32 %v6592, %v6594
      %v6596 = vrot.slane %v6582, %v6595
      %v6597 = vcombine.high %v6589, %v6589
      %v6598 = vcombine.high %v6596, %v6596
      %v6599 = vcombine.low %v6404, %v6405
      %v6601 = vunpack.c.l.s4 1983009808
      %v6602 = vunpack.c.0.s8 %v6601
      %v6603 = vlaneseq
      %v6604 = vshrl.u32 %v6603, 7
      %v6605 = vsub.s32 %v6602, %v6604
      %v6606 = vrot.slane %v6599, %v6605
      %v6607 = vcombine.high %v6606, %v6606
      %v6608 = vcombine.low %v6406, %v6407
      %v6609 = vcombine.high %v6406, %v6407
      %v6611 = vunpack.c.l.s4 1983009808
      %v6612 = vunpack.c.0.s8 %v6611
      %v6613 = vlaneseq
      %v6614 = vshrl.u32 %v6613, 7
      %v6615 = vsub.s32 %v6612, %v6614
      %v6616 = vrot.slane %v6608, %v6615
      %v6618 = vunpack.c.l.s4 1983009808
      %v6619 = vunpack.c.0.s8 %v6618
      %v6620 = vlaneseq
      %v6621 = vshrl.u32 %v6620, 7
      %v6622 = vsub.s32 %v6619, %v6621
      %v6623 = vrot.slane %v6609, %v6622
      %v6624 = vcombine.high %v6616, %v6616
      %v6625 = vcombine.high %v6623, %v6623
      %v6626 = vcombine.low %v6408, %v6409
      %v6628 = vunpack.c.l.s4 1983009808
      %v6629 = vunpack.c.0.s8 %v6628
      %v6630 = vlaneseq
      %v6631 = vshrl.u32 %v6630, 7
      %v6632 = vsub.s32 %v6629, %v6631
      %v6633 = vrot.slane %v6626, %v6632
      %v6634 = vcombine.high %v6633, %v6633
      %v6635 = vcombine.low %v6410, %v6411
      %v6636 = vcombine.high %v6410, %v6411
      %v6638 = vunpack.c.l.s4 1983009808
      %v6639 = vunpack.c.0.s8 %v6638
      %v6640 = vlaneseq
      %v6641 = vshrl.u32 %v6640, 7
      %v6642 = vsub.s32 %v6639, %v6641
      %v6643 = vrot.slane %v6635, %v6642
      %v6645 = vunpack.c.l.s4 1983009808
      %v6646 = vunpack.c.0.s8 %v6645
      %v6647 = vlaneseq
      %v6648 = vshrl.u32 %v6647, 7
      %v6649 = vsub.s32 %v6646, %v6648
      %v6650 = vrot.slane %v6636, %v6649
      %v6651 = vcombine.high %v6643, %v6643
      %v6652 = vcombine.high %v6650, %v6650
      %v6653 = vcombine.low %v6412, %v6413
      %v6655 = vunpack.c.l.s4 1983009808
      %v6656 = vunpack.c.0.s8 %v6655
      %v6657 = vlaneseq
      %v6658 = vshrl.u32 %v6657, 7
      %v6659 = vsub.s32 %v6656, %v6658
      %v6660 = vrot.slane %v6653, %v6659
      %v6661 = vcombine.high %v6660, %v6660
      %v6662 = vrot.slane %v6454, 7
      %v6663 = vrot.slane %v6662, 2
      %v6664 = vrot.slane %v6462, 7
      %v6665 = vsel %vm930, %v6663, %v6664
      %v6666 = vrot.slane %v6664, 2
      %v6667 = vrot.slane %v6461, 7
      %v6668 = vsel %vm930, %v6666, %v6667
      %v6669 = vrot.slane %v6667, 2
      %v6670 = vrot.slane %v6463, 7
      %v6671 = vsel %vm930, %v6669, %v6670
      %v6672 = vrot.slane %v6670, 2
      %v6673 = vrot.slane %v6471, 7
      %v6674 = vsel %vm930, %v6672, %v6673
      %v6675 = vrot.slane %v6673, 2
      %v6676 = vrot.slane %v6472, 7
      %v6677 = vsel %vm930, %v6675, %v6676
      %v6678 = vrot.slane %v6481, 7
      %v6679 = vrot.slane %v6678, 2
      %v6680 = vrot.slane %v6489, 7
      %v6681 = vsel %vm930, %v6679, %v6680
      %v6682 = vrot.slane %v6680, 2
      %v6683 = vrot.slane %v6488, 7
      %v6684 = vsel %vm930, %v6682, %v6683
      %v6685 = vrot.slane %v6683, 2
      %v6686 = vrot.slane %v6490, 7
      %v6687 = vsel %vm930, %v6685, %v6686
      %v6688 = vrot.slane %v6686, 2
      %v6689 = vrot.slane %v6498, 7
      %v6690 = vsel %vm930, %v6688, %v6689
      %v6691 = vrot.slane %v6689, 2
      %v6692 = vrot.slane %v6499, 7
      %v6693 = vsel %vm930, %v6691, %v6692
      %v6694 = vrot.slane %v6508, 7
      %v6695 = vrot.slane %v6694, 2
      %v6696 = vrot.slane %v6516, 7
      %v6697 = vsel %vm930, %v6695, %v6696
      %v6698 = vrot.slane %v6696, 2
      %v6699 = vrot.slane %v6515, 7
      %v6700 = vsel %vm930, %v6698, %v6699
      %v6701 = vrot.slane %v6699, 2
      %v6702 = vrot.slane %v6517, 7
      %v6703 = vsel %vm930, %v6701, %v6702
      %v6704 = vrot.slane %v6702, 2
      %v6705 = vrot.slane %v6525, 7
      %v6706 = vsel %vm930, %v6704, %v6705
      %v6707 = vrot.slane %v6705, 2
      %v6708 = vrot.slane %v6526, 7
      %v6709 = vsel %vm930, %v6707, %v6708
      %v6710 = vrot.slane %v6535, 7
      %v6711 = vrot.slane %v6710, 2
      %v6712 = vrot.slane %v6543, 7
      %v6713 = vsel %vm930, %v6711, %v6712
      %v6714 = vrot.slane %v6712, 2
      %v6715 = vrot.slane %v6542, 7
      %v6716 = vsel %vm930, %v6714, %v6715
      %v6717 = vrot.slane %v6715, 2
      %v6718 = vrot.slane %v6544, 7
      %v6719 = vsel %vm930, %v6717, %v6718
      %v6720 = vrot.slane %v6718, 2
      %v6721 = vrot.slane %v6552, 7
      %v6722 = vsel %vm930, %v6720, %v6721
      %v6723 = vrot.slane %v6721, 2
      %v6724 = vrot.slane %v6553, 7
      %v6725 = vsel %vm930, %v6723, %v6724
      %v6726 = vrot.slane %v6562, 7
      %v6727 = vrot.slane %v6726, 2
      %v6728 = vrot.slane %v6570, 7
      %v6729 = vsel %vm930, %v6727, %v6728
      %v6730 = vrot.slane %v6728, 2
      %v6731 = vrot.slane %v6569, 7
      %v6732 = vsel %vm930, %v6730, %v6731
      %v6733 = vrot.slane %v6731, 2
      %v6734 = vrot.slane %v6571, 7
      %v6735 = vsel %vm930, %v6733, %v6734
      %v6736 = vrot.slane %v6734, 2
      %v6737 = vrot.slane %v6579, 7
      %v6738 = vsel %vm930, %v6736, %v6737
      %v6739 = vrot.slane %v6737, 2
      %v6740 = vrot.slane %v6580, 7
      %v6741 = vsel %vm930, %v6739, %v6740
      %v6742 = vrot.slane %v6589, 7
      %v6743 = vrot.slane %v6742, 2
      %v6744 = vrot.slane %v6597, 7
      %v6745 = vsel %vm930, %v6743, %v6744
      %v6746 = vrot.slane %v6744, 2
      %v6747 = vrot.slane %v6596, 7
      %v6748 = vsel %vm930, %v6746, %v6747
      %v6749 = vrot.slane %v6747, 2
      %v6750 = vrot.slane %v6598, 7
      %v6751 = vsel %vm930, %v6749, %v6750
      %v6752 = vrot.slane %v6750, 2
      %v6753 = vrot.slane %v6606, 7
      %v6754 = vsel %vm930, %v6752, %v6753
      %v6755 = vrot.slane %v6753, 2
      %v6756 = vrot.slane %v6607, 7
      %v6757 = vsel %vm930, %v6755, %v6756
      %v6758 = vrot.slane %v6616, 7
      %v6759 = vrot.slane %v6758, 2
      %v6760 = vrot.slane %v6624, 7
      %v6761 = vsel %vm930, %v6759, %v6760
      %v6762 = vrot.slane %v6760, 2
      %v6763 = vrot.slane %v6623, 7
      %v6764 = vsel %vm930, %v6762, %v6763
      %v6765 = vrot.slane %v6763, 2
      %v6766 = vrot.slane %v6625, 7
      %v6767 = vsel %vm930, %v6765, %v6766
      %v6768 = vrot.slane %v6766, 2
      %v6769 = vrot.slane %v6633, 7
      %v6770 = vsel %vm930, %v6768, %v6769
      %v6771 = vrot.slane %v6769, 2
      %v6772 = vrot.slane %v6634, 7
      %v6773 = vsel %vm930, %v6771, %v6772
      %v6774 = vrot.slane %v6643, 7
      %v6775 = vrot.slane %v6774, 2
      %v6776 = vrot.slane %v6651, 7
      %v6777 = vsel %vm930, %v6775, %v6776
      %v6778 = vrot.slane %v6776, 2
      %v6779 = vrot.slane %v6650, 7
      %v6780 = vsel %vm930, %v6778, %v6779
      %v6781 = vrot.slane %v6779, 2
      %v6782 = vrot.slane %v6652, 7
      %v6783 = vsel %vm930, %v6781, %v6782
      %v6784 = vrot.slane %v6782, 2
      %v6785 = vrot.slane %v6660, 7
      %v6786 = vsel %vm930, %v6784, %v6785
      %v6787 = vrot.slane %v6785, 2
      %v6788 = vrot.slane %v6661, 7
      %v6789 = vsel %vm930, %v6787, %v6788
      %s6790 = scalar_lea.vmem %s1, 4704
      %v6791 = vld [vmem:[%s6790] sm:$0xff]
      %v6792 = vld [vmem:[%s6790 + $0x8] sm:$0xff]
      %v6793 = vld [vmem:[%s6790 + $0x10] sm:$0xff]
      %v6794 = vld [vmem:[%s6790 + $0x18] sm:$0xff]
      %v6795 = vld [vmem:[%s6790 + $0x20] sm:$0xff]
      %v6796 = vld [vmem:[%s6790 + $0x28] sm:$0xff]
      %v6797 = vld [vmem:[%s6790 + $0x30] sm:$0xff]
      %v6798 = vld [vmem:[%s6790 + $0x38] sm:$0xff]
      %v6799 = vld [vmem:[%s6790 + $0x40] sm:$0xff]
      %v6800 = vld [vmem:[%s6790 + $0x48] sm:$0xff]
      %v6801 = vld [vmem:[%s6790 + $0x50] sm:$0xff]
      %v6802 = vld [vmem:[%s6790 + $0x58] sm:$0xff]
      %v6803 = vld [vmem:[%s6790 + $0x60] sm:$0xff]
      %v6804 = vld [vmem:[%s6790 + $0x68] sm:$0xff]
      %v6805 = vld [vmem:[%s6790 + $0x70] sm:$0xff]
      %v6806 = vld [vmem:[%s6790 + $0x78] sm:$0xff]
      %v6807 = vld [vmem:[%s6790 + $0x80] sm:$0xff]
      %v6808 = vld [vmem:[%s6790 + $0x88] sm:$0xff]
      %v6809 = vld [vmem:[%s6790 + $0x90] sm:$0xff]
      %v6810 = vld [vmem:[%s6790 + $0x98] sm:$0xff]
      %v6811 = vld [vmem:[%s6790 + $0xa0] sm:$0xff]
      %v6812 = vld [vmem:[%s6790 + $0xa8] sm:$0xff]
      %v6813 = vld [vmem:[%s6790 + $0xb0] sm:$0xff]
      %v6814 = vld [vmem:[%s6790 + $0xb8] sm:$0xff]
      %v6815 = vld [vmem:[%s6790 + $0xc0] sm:$0xff]
      %v6816 = vld [vmem:[%s6790 + $0xc8] sm:$0xff]
      %v6817 = vld [vmem:[%s6790 + $0xd0] sm:$0xff]
      %v6818 = vld [vmem:[%s6790 + $0xd8] sm:$0xff]
      %v6819 = vld [vmem:[%s6790 + $0xe0] sm:$0xff]
      %v6820 = vld [vmem:[%s6790 + $0xe8] sm:$0xff]
      %v6821 = vld [vmem:[%s6790 + $0xf0] sm:$0xff]
      %v6822 = vld [vmem:[%s6790 + $0xf8] sm:$0xff]
      %v6823 = vld [vmem:[%s6790 + $0x100] sm:$0xff]
      %v6824 = vld [vmem:[%s6790 + $0x108] sm:$0xff]
      %v6825 = vld [vmem:[%s6790 + $0x110] sm:$0xff]
      %v6826 = vld [vmem:[%s6790 + $0x118] sm:$0xff]
      %v6827 = vld [vmem:[%s6790 + $0x120] sm:$0xff]
      %v6828 = vld [vmem:[%s6790 + $0x128] sm:$0xff]
      %v6829 = vld [vmem:[%s6790 + $0x130] sm:$0xff]
      %v6830 = vld [vmem:[%s6790 + $0x138] sm:$0xff]
      %v6831 = vld [vmem:[%s6790 + $0x140] sm:$0xff]
      %v6832 = vld [vmem:[%s6790 + $0x148] sm:$0xff]
      %v6833 = vld [vmem:[%s6790 + $0x150] sm:$0xff]
      %v6834 = vld [vmem:[%s6790 + $0x158] sm:$0xff]
      %v6835 = vld [vmem:[%s6790 + $0x160] sm:$0xff]
      %v6836 = vld [vmem:[%s6790 + $0x168] sm:$0xff]
      %v6837 = vld [vmem:[%s6790 + $0x170] sm:$0xff]
      %v6838 = vld [vmem:[%s6790 + $0x178] sm:$0xff]
      %v6839 = vld [vmem:[%s6790 + $0x180] sm:$0xff]
      %v6840 = vld [vmem:[%s6790 + $0x188] sm:$0xff]
      %v6841 = vld [vmem:[%s6790 + $0x190] sm:$0xff]
      %v6842 = vld [vmem:[%s6790 + $0x198] sm:$0xff]
      %v6843 = vld [vmem:[%s6790 + $0x1a0] sm:$0xff]
      %v6844 = vld [vmem:[%s6790 + $0x1a8] sm:$0xff]
      %v6845 = vld [vmem:[%s6790 + $0x1b0] sm:$0xff]
      %v6846 = vld [vmem:[%s6790 + $0x1b8] sm:$0xff]
      %v6847 = vld [vmem:[%s6790 + $0x1c0] sm:$0xff]
      %v6848 = vld [vmem:[%s6790 + $0x1c8] sm:$0xff]
      %v6849 = vld [vmem:[%s6790 + $0x1d0] sm:$0xff]
      %v6850 = vld [vmem:[%s6790 + $0x1d8] sm:$0xff]
      %v6851 = vld [vmem:[%s6790 + $0x1e0] sm:$0xff]
      %v6852 = vld [vmem:[%s6790 + $0x1e8] sm:$0xff]
      %v6853 = vld [vmem:[%s6790 + $0x1f0] sm:$0xff]
      %v6854 = vld [vmem:[%s6790 + $0x1f8] sm:$0xff]
      %v6855 = vld [vmem:[%s6790 + $0x200] sm:$0xff]
      %v6856 = vld [vmem:[%s6790 + $0x208] sm:$0xff]
      %v6857 = vld [vmem:[%s6790 + $0x210] sm:$0xff]
      %v6858 = vld [vmem:[%s6790 + $0x218] sm:$0xff]
      %v6859 = vld [vmem:[%s6790 + $0x220] sm:$0xff]
      %v6860 = vld [vmem:[%s6790 + $0x228] sm:$0xff]
      %v6861 = vld [vmem:[%s6790 + $0x230] sm:$0xff]
      %v6862 = vld [vmem:[%s6790 + $0x238] sm:$0xff]
      %v6863 = vld [vmem:[%s6790 + $0x240] sm:$0xff]
      %v6864 = vld [vmem:[%s6790 + $0x248] sm:$0xff]
      %v6865 = vld [vmem:[%s6790 + $0x250] sm:$0xff]
      %v6866 = vld [vmem:[%s6790 + $0x258] sm:$0xff]
      %v6867 = vld [vmem:[%s6790 + $0x260] sm:$0xff]
      %v6868 = vld [vmem:[%s6790 + $0x268] sm:$0xff]
      %v6869 = vld [vmem:[%s6790 + $0x270] sm:$0xff]
      %v6870 = vld [vmem:[%s6790 + $0x278] sm:$0xff]
      %v6871 = vld [vmem:[%s6790 + $0x280] sm:$0xff]
      %v6872 = vld [vmem:[%s6790 + $0x288] sm:$0xff]
      %v6873 = vld [vmem:[%s6790 + $0x290] sm:$0xff]
      %v6874 = vld [vmem:[%s6790 + $0x298] sm:$0xff]
      %v6875 = vcombine.low %v6665, %v6668
      %v6876 = vcombine.low %v6671, %v6674
      %v6878 = vunpack.c.l.s4 1983009808
      %v6879 = vunpack.c.0.s8 %v6878
      %v6880 = vlaneseq
      %v6881 = vshrl.u32 %v6880, 7
      %v6882 = vsub.s32 %v6879, %v6881
      %v6883 = vrot.slane %v6875, %v6882
      %v6885 = vunpack.c.l.s4 1983009808
      %v6886 = vunpack.c.0.s8 %v6885
      %v6887 = vlaneseq
      %v6888 = vshrl.u32 %v6887, 7
      %v6889 = vsub.s32 %v6886, %v6888
      %v6890 = vrot.slane %v6876, %v6889
      %v6891 = vcombine.low %v6883, %v6890
      %v6892 = vcombine.high %v6883, %v6890
      %v6893 = vcombine.low %v6677, %v6681
      %v6894 = vcombine.low %v6684, %v6687
      %v6896 = vunpack.c.l.s4 1983009808
      %v6897 = vunpack.c.0.s8 %v6896
      %v6898 = vlaneseq
      %v6899 = vshrl.u32 %v6898, 7
      %v6900 = vsub.s32 %v6897, %v6899
      %v6901 = vrot.slane %v6893, %v6900
      %v6903 = vunpack.c.l.s4 1983009808
      %v6904 = vunpack.c.0.s8 %v6903
      %v6905 = vlaneseq
      %v6906 = vshrl.u32 %v6905, 7
      %v6907 = vsub.s32 %v6904, %v6906
      %v6908 = vrot.slane %v6894, %v6907
      %v6909 = vcombine.low %v6901, %v6908
      %v6910 = vcombine.high %v6901, %v6908
      %v6911 = vcombine.low %v6690, %v6693
      %v6912 = vcombine.low %v6697, %v6700
      %v6914 = vunpack.c.l.s4 1983009808
      %v6915 = vunpack.c.0.s8 %v6914
      %v6916 = vlaneseq
      %v6917 = vshrl.u32 %v6916, 7
      %v6918 = vsub.s32 %v6915, %v6917
      %v6919 = vrot.slane %v6911, %v6918
      %v6921 = vunpack.c.l.s4 1983009808
      %v6922 = vunpack.c.0.s8 %v6921
      %v6923 = vlaneseq
      %v6924 = vshrl.u32 %v6923, 7
      %v6925 = vsub.s32 %v6922, %v6924
      %v6926 = vrot.slane %v6912, %v6925
      %v6927 = vcombine.low %v6919, %v6926
      %v6928 = vcombine.high %v6919, %v6926
      %v6929 = vcombine.low %v6703, %v6706
      %v6930 = vcombine.low %v6709, %v6713
      %v6932 = vunpack.c.l.s4 1983009808
      %v6933 = vunpack.c.0.s8 %v6932
      %v6934 = vlaneseq
      %v6935 = vshrl.u32 %v6934, 7
      %v6936 = vsub.s32 %v6933, %v6935
      %v6937 = vrot.slane %v6929, %v6936
      %v6939 = vunpack.c.l.s4 1983009808
      %v6940 = vunpack.c.0.s8 %v6939
      %v6941 = vlaneseq
      %v6942 = vshrl.u32 %v6941, 7
      %v6943 = vsub.s32 %v6940, %v6942
      %v6944 = vrot.slane %v6930, %v6943
      %v6945 = vcombine.low %v6937, %v6944
      %v6946 = vcombine.high %v6937, %v6944
      %v6947 = vcombine.low %v6716, %v6719
      %v6948 = vcombine.low %v6722, %v6725
      %v6950 = vunpack.c.l.s4 1983009808
      %v6951 = vunpack.c.0.s8 %v6950
      %v6952 = vlaneseq
      %v6953 = vshrl.u32 %v6952, 7
      %v6954 = vsub.s32 %v6951, %v6953
      %v6955 = vrot.slane %v6947, %v6954
      %v6957 = vunpack.c.l.s4 1983009808
      %v6958 = vunpack.c.0.s8 %v6957
      %v6959 = vlaneseq
      %v6960 = vshrl.u32 %v6959, 7
      %v6961 = vsub.s32 %v6958, %v6960
      %v6962 = vrot.slane %v6948, %v6961
      %v6963 = vcombine.low %v6955, %v6962
      %v6964 = vcombine.high %v6955, %v6962
      %v6965 = vcombine.low %v6729, %v6732
      %v6966 = vcombine.low %v6735, %v6738
      %v6968 = vunpack.c.l.s4 1983009808
      %v6969 = vunpack.c.0.s8 %v6968
      %v6970 = vlaneseq
      %v6971 = vshrl.u32 %v6970, 7
      %v6972 = vsub.s32 %v6969, %v6971
      %v6973 = vrot.slane %v6965, %v6972
      %v6975 = vunpack.c.l.s4 1983009808
      %v6976 = vunpack.c.0.s8 %v6975
      %v6977 = vlaneseq
      %v6978 = vshrl.u32 %v6977, 7
      %v6979 = vsub.s32 %v6976, %v6978
      %v6980 = vrot.slane %v6966, %v6979
      %v6981 = vcombine.low %v6973, %v6980
      %v6982 = vcombine.high %v6973, %v6980
      %v6983 = vcombine.low %v6741, %v6745
      %v6984 = vcombine.low %v6748, %v6751
      %v6986 = vunpack.c.l.s4 1983009808
      %v6987 = vunpack.c.0.s8 %v6986
      %v6988 = vlaneseq
      %v6989 = vshrl.u32 %v6988, 7
      %v6990 = vsub.s32 %v6987, %v6989
      %v6991 = vrot.slane %v6983, %v6990
      %v6993 = vunpack.c.l.s4 1983009808
      %v6994 = vunpack.c.0.s8 %v6993
      %v6995 = vlaneseq
      %v6996 = vshrl.u32 %v6995, 7
      %v6997 = vsub.s32 %v6994, %v6996
      %v6998 = vrot.slane %v6984, %v6997
      %v6999 = vcombine.low %v6991, %v6998
      %v7000 = vcombine.high %v6991, %v6998
      %v7001 = vcombine.low %v6754, %v6757
      %v7002 = vcombine.low %v6761, %v6764
      %v7004 = vunpack.c.l.s4 1983009808
      %v7005 = vunpack.c.0.s8 %v7004
      %v7006 = vlaneseq
      %v7007 = vshrl.u32 %v7006, 7
      %v7008 = vsub.s32 %v7005, %v7007
      %v7009 = vrot.slane %v7001, %v7008
      %v7011 = vunpack.c.l.s4 1983009808
      %v7012 = vunpack.c.0.s8 %v7011
      %v7013 = vlaneseq
      %v7014 = vshrl.u32 %v7013, 7
      %v7015 = vsub.s32 %v7012, %v7014
      %v7016 = vrot.slane %v7002, %v7015
      %v7017 = vcombine.low %v7009, %v7016
      %v7018 = vcombine.high %v7009, %v7016
      %v7019 = vcombine.low %v6767, %v6770
      %v7020 = vcombine.low %v6773, %v6777
      %v7022 = vunpack.c.l.s4 1983009808
      %v7023 = vunpack.c.0.s8 %v7022
      %v7024 = vlaneseq
      %v7025 = vshrl.u32 %v7024, 7
      %v7026 = vsub.s32 %v7023, %v7025
      %v7027 = vrot.slane %v7019, %v7026
      %v7029 = vunpack.c.l.s4 1983009808
      %v7030 = vunpack.c.0.s8 %v7029
      %v7031 = vlaneseq
      %v7032 = vshrl.u32 %v7031, 7
      %v7033 = vsub.s32 %v7030, %v7032
      %v7034 = vrot.slane %v7020, %v7033
      %v7035 = vcombine.low %v7027, %v7034
      %v7036 = vcombine.high %v7027, %v7034
      %v7037 = vcombine.low %v6780, %v6783
      %v7038 = vcombine.low %v6786, %v6789
      %v7040 = vunpack.c.l.s4 1983009808
      %v7041 = vunpack.c.0.s8 %v7040
      %v7042 = vlaneseq
      %v7043 = vshrl.u32 %v7042, 7
      %v7044 = vsub.s32 %v7041, %v7043
      %v7045 = vrot.slane %v7037, %v7044
      %v7047 = vunpack.c.l.s4 1983009808
      %v7048 = vunpack.c.0.s8 %v7047
      %v7049 = vlaneseq
      %v7050 = vshrl.u32 %v7049, 7
      %v7051 = vsub.s32 %v7048, %v7050
      %v7052 = vrot.slane %v7038, %v7051
      %v7053 = vcombine.low %v7045, %v7052
      %v7054 = vcombine.high %v7045, %v7052
      %v7065 = vsel %vm172, %v6892, 0
      %v7067 = vsel %vm172, %v6910, 0
      %v7069 = vsel %vm172, %v6928, 0
      %v7071 = vsel %vm172, %v6946, 0
      %v7073 = vsel %vm172, %v6964, 0
      %v7075 = vsel %vm172, %v6982, 0
      %v7077 = vsel %vm172, %v7000, 0
      %v7079 = vsel %vm172, %v7018, 0
      %v7081 = vsel %vm172, %v7036, 0
      %v7083 = vsel %vm172, %v7054, 0
      %7085 = vmatprep.subr.mxu0 %v6792
      %7086 = vmatpush1.msra.mxu0 %v6791
      %7087 = vmatprep.subr.mxu0 %v6795
      %7088 = vmatpush1.msra.mxu0 %v6794
      %7089 = vmatprep.subr.mxu0 %v6798
      %7090 = vmatpush1.msra.mxu0 %v6797
      %7091 = vmatprep.subr.mxu0 %v6801
      %7092 = vmatpush1.msra.mxu0 %v6800
      %7093 = vmatprep.subr.mxu0 %v6804
      %7094 = vmatpush1.msra.mxu0 %v6803
      %7095 = vmatprep.subr.mxu0 %v6807
      %7096 = vmatpush1.msra.mxu0 %v6806
      %7097 = vmatprep.subr.mxu0 %v6810
      %7098 = vmatpush1.msra.mxu0 %v6809
      %7099 = vmatprep.subr.mxu0 %v6813
      %7100 = vmatpush1.msra.mxu0 %v6812
      %7101 = vmatprep.subr.mxu0 %v6816
      %7102 = vmatpush1.msra.mxu0 %v6815
      %7103 = vmatprep.subr.mxu0 %v6819
      %7104 = vmatpush1.msra.mxu0 %v6818
      %7105 = vmatprep.subr.mxu0 %v6822
      %7106 = vmatpush1.msra.mxu0 %v6821
      %7107 = vmatprep.subr.mxu0 %v6825
      %7108 = vmatpush1.msra.mxu0 %v6824
      %7109 = vmatprep.subr.mxu0 %v6828
      %7110 = vmatpush1.msra.mxu0 %v6827
      %7111 = vmatprep.subr.mxu0 %v6831
      %7112 = vmatpush1.msra.mxu0 %v6830
      %7113 = vmatprep.subr.mxu0 %v6834
      %7114 = vmatpush1.msra.mxu0 %v6833
      %7115 = vmatprep.subr.mxu0 %v6837
      %7116 = vmatpush1.msra.mxu0 %v6836
      %7117 = vmatprep.subr.mxu0 %v6840
      %7118 = vmatpush1.msra.mxu0 %v6839
      %7119 = vmatprep.subr.mxu0 %v6843
      %7120 = vmatpush1.msra.mxu0 %v6842
      %7121 = vmatprep.subr.mxu0 %v6846
      %7122 = vmatpush1.msra.mxu0 %v6845
      %7123 = vmatprep.subr.mxu0 %v6849
      %7124 = vmatpush1.msra.mxu0 %v6848
      %7125 = vmatprep.subr.mxu0 %v6852
      %7126 = vmatpush1.msra.mxu0 %v6851
      %7127 = vmatprep.subr.mxu0 %v6855
      %7128 = vmatpush1.msra.mxu0 %v6854
      %7129 = vmatprep.subr.mxu0 %v6858
      %7130 = vmatpush1.msra.mxu0 %v6857
      %7131 = vmatprep.subr.mxu0 %v6861
      %7132 = vmatpush1.msra.mxu0 %v6860
      %7133 = vmatprep.subr.mxu0 %v6864
      %7134 = vmatpush1.msra.mxu0 %v6863
      %7135 = vmatprep.subr.mxu0 %v6867
      %7136 = vmatpush1.msra.mxu0 %v6866
      %7137 = vmatprep.subr.mxu0 %v6870
      %7138 = vmatpush1.msra.mxu0 %v6869
      %7139 = vmatprep.subr.mxu0 %v6873
      %7140 = vmatpush1.msra.mxu0 %v6872
      %7141 = vmatprep.subr.mxu0 0.0
      %7142 = vmatpush1.msra.mxu0 0.0
      %7143 = vmatprep.subr.mxu0 0.0
      %7144 = vmatpush1.msra.mxu0 0.0
      %7145 = vmatprep.subr.mxu0 0.0
      %7146 = vmatpush1.msra.mxu0 0.0
      %7147 = vmatprep.subr.mxu0 0.0
      %7148 = vmatpush1.msra.mxu0 0.0
      %7149 = vmatprep.mubr.f32.mxu0 %v7065
      %7150 = vmatmul.mubr.f32.gmra.mrb[0].mxu0 %v6891
      %v7151 = vpop.f32.mrb[0].mxu0
      %v7152 = vadd.f32 0.0, %v7151
      %v7153 = vpop.f32.mrb[0].mxu0
      %v7154 = vadd.f32 0.0, %v7153
      %7155 = vmatprep.mubr.f32.mxu0 %v7067
      %7156 = vmatmul.mubr.f32.gmra.mrb[0].mxu0 %v6909
      %v7157 = vpop.f32.mrb[0].mxu0
      %v7158 = vadd.f32 0.0, %v7157
      %v7159 = vpop.f32.mrb[0].mxu0
      %v7160 = vadd.f32 0.0, %v7159
      %7161 = vmatprep.mubr.f32.mxu0 %v7069
      %7162 = vmatmul.mubr.f32.gmra.mrb[0].mxu0 %v6927
      %v7163 = vpop.f32.mrb[0].mxu0
      %v7164 = vadd.f32 0.0, %v7163
      %v7165 = vpop.f32.mrb[0].mxu0
      %v7166 = vadd.f32 0.0, %v7165
      %7167 = vmatprep.mubr.f32.mxu0 %v7071
      %7168 = vmatmul.mubr.f32.gmra.mrb[0].mxu0 %v6945
      %v7169 = vpop.f32.mrb[0].mxu0
      %v7170 = vadd.f32 0.0, %v7169
      %v7171 = vpop.f32.mrb[0].mxu0
      %v7172 = vadd.f32 0.0, %v7171
      %7173 = vmatprep.mubr.f32.mxu0 %v7073
      %7174 = vmatmul.mubr.f32.gmra.mrb[0].mxu0 %v6963
      %v7175 = vpop.f32.mrb[0].mxu0
      %v7176 = vadd.f32 0.0, %v7175
      %v7177 = vpop.f32.mrb[0].mxu0
      %v7178 = vadd.f32 0.0, %v7177
      %7179 = vmatprep.mubr.f32.mxu0 %v7075
      %7180 = vmatmul.mubr.f32.gmra.mrb[0].mxu0 %v6981
      %v7181 = vpop.f32.mrb[0].mxu0
      %v7182 = vadd.f32 0.0, %v7181
      %v7183 = vpop.f32.mrb[0].mxu0
      %v7184 = vadd.f32 0.0, %v7183
      %7185 = vmatprep.mubr.f32.mxu0 %v7077
      %7186 = vmatmul.mubr.f32.gmra.mrb[0].mxu0 %v6999
      %v7187 = vpop.f32.mrb[0].mxu0
      %v7188 = vadd.f32 0.0, %v7187
      %v7189 = vpop.f32.mrb[0].mxu0
      %v7190 = vadd.f32 0.0, %v7189
      %7191 = vmatprep.mubr.f32.mxu0 %v7079
      %7192 = vmatmul.mubr.f32.gmra.mrb[0].mxu0 %v7017
      %v7193 = vpop.f32.mrb[0].mxu0
      %v7194 = vadd.f32 0.0, %v7193
      %v7195 = vpop.f32.mrb[0].mxu0
      %v7196 = vadd.f32 0.0, %v7195
      %7197 = vmatprep.mubr.f32.mxu0 %v7081
      %7198 = vmatmul.mubr.f32.gmra.mrb[0].mxu0 %v7035
      %v7199 = vpop.f32.mrb[0].mxu0
      %v7200 = vadd.f32 0.0, %v7199
      %v7201 = vpop.f32.mrb[0].mxu0
      %v7202 = vadd.f32 0.0, %v7201
      %7203 = vmatprep.mubr.f32.mxu0 %v7083
      %7204 = vmatmul.mubr.f32.gmra.mrb[0].mxu0 %v7053
      %v7205 = vpop.f32.mrb[0].mxu0
      %v7206 = vadd.f32 0.0, %v7205
      %v7207 = vpop.f32.mrb[0].mxu0
      %v7208 = vadd.f32 0.0, %v7207
      %7209 = vdwg.mxu0
      %7210 = vmatprep.subr.mxu0 0.0
      %7211 = vmatpush1.msra.mxu0 %v6793
      %7212 = vmatprep.subr.mxu0 0.0
      %7213 = vmatpush1.msra.mxu0 %v6796
      %7214 = vmatprep.subr.mxu0 0.0
      %7215 = vmatpush1.msra.mxu0 %v6799
      %7216 = vmatprep.subr.mxu0 0.0
      %7217 = vmatpush1.msra.mxu0 %v6802
      %7218 = vmatprep.subr.mxu0 0.0
      %7219 = vmatpush1.msra.mxu0 %v6805
      %7220 = vmatprep.subr.mxu0 0.0
      %7221 = vmatpush1.msra.mxu0 %v6808
      %7222 = vmatprep.subr.mxu0 0.0
      %7223 = vmatpush1.msra.mxu0 %v6811
      %7224 = vmatprep.subr.mxu0 0.0
      %7225 = vmatpush1.msra.mxu0 %v6814
      %7226 = vmatprep.subr.mxu0 0.0
      %7227 = vmatpush1.msra.mxu0 %v6817
      %7228 = vmatprep.subr.mxu0 0.0
      %7229 = vmatpush1.msra.mxu0 %v6820
      %7230 = vmatprep.subr.mxu0 0.0
      %7231 = vmatpush1.msra.mxu0 %v6823
      %7232 = vmatprep.subr.mxu0 0.0
      %7233 = vmatpush1.msra.mxu0 %v6826
      %7234 = vmatprep.subr.mxu0 0.0
      %7235 = vmatpush1.msra.mxu0 %v6829
      %7236 = vmatprep.subr.mxu0 0.0
      %7237 = vmatpush1.msra.mxu0 %v6832
      %7238 = vmatprep.subr.mxu0 0.0
      %7239 = vmatpush1.msra.mxu0 %v6835
      %7240 = vmatprep.subr.mxu0 0.0
      %7241 = vmatpush1.msra.mxu0 %v6838
      %7242 = vmatprep.subr.mxu0 0.0
      %7243 = vmatpush1.msra.mxu0 %v6841
      %7244 = vmatprep.subr.mxu0 0.0
      %7245 = vmatpush1.msra.mxu0 %v6844
      %7246 = vmatprep.subr.mxu0 0.0
      %7247 = vmatpush1.msra.mxu0 %v6847
      %7248 = vmatprep.subr.mxu0 0.0
      %7249 = vmatpush1.msra.mxu0 %v6850
      %7250 = vmatprep.subr.mxu0 0.0
      %7251 = vmatpush1.msra.mxu0 %v6853
      %7252 = vmatprep.subr.mxu0 0.0
      %7253 = vmatpush1.msra.mxu0 %v6856
      %7254 = vmatprep.subr.mxu0 0.0
      %7255 = vmatpush1.msra.mxu0 %v6859
      %7256 = vmatprep.subr.mxu0 0.0
      %7257 = vmatpush1.msra.mxu0 %v6862
      %7258 = vmatprep.subr.mxu0 0.0
      %7259 = vmatpush1.msra.mxu0 %v6865
      %7260 = vmatprep.subr.mxu0 0.0
      %7261 = vmatpush1.msra.mxu0 %v6868
      %7262 = vmatprep.subr.mxu0 0.0
      %7263 = vmatpush1.msra.mxu0 %v6871
      %7264 = vmatprep.subr.mxu0 0.0
      %7265 = vmatpush1.msra.mxu0 %v6874
      %7266 = vmatprep.subr.mxu0 0.0
      %7267 = vmatpush1.msra.mxu0 0.0
      %7268 = vmatprep.subr.mxu0 0.0
      %7269 = vmatpush1.msra.mxu0 0.0
      %7270 = vmatprep.subr.mxu0 0.0
      %7271 = vmatpush1.msra.mxu0 0.0
      %7272 = vmatprep.subr.mxu0 0.0
      %7273 = vmatpush1.msra.mxu0 0.0
      %7274 = vmatprep.mubr.f32.mxu0 %v7065
      %7275 = vmatmul.mubr.f32.gmra.mrb[0].mxu0 %v6891
      %v7276 = vpop.f32.mrb[0].mxu0
      %v7277 = vadd.f32 0.0, %v7276
      %v7278 = vpop.f32.mrb[0].mxu0
      %7279 = vmatprep.mubr.f32.mxu0 %v7067
      %7280 = vmatmul.mubr.f32.gmra.mrb[0].mxu0 %v6909
      %v7281 = vpop.f32.mrb[0].mxu0
      %v7282 = vadd.f32 0.0, %v7281
      %v7283 = vpop.f32.mrb[0].mxu0
      %7284 = vmatprep.mubr.f32.mxu0 %v7069
      %7285 = vmatmul.mubr.f32.gmra.mrb[0].mxu0 %v6927
      %v7286 = vpop.f32.mrb[0].mxu0
      %v7287 = vadd.f32 0.0, %v7286
      %v7288 = vpop.f32.mrb[0].mxu0
      %7289 = vmatprep.mubr.f32.mxu0 %v7071
      %7290 = vmatmul.mubr.f32.gmra.mrb[0].mxu0 %v6945
      %v7291 = vpop.f32.mrb[0].mxu0
      %v7292 = vadd.f32 0.0, %v7291
      %v7293 = vpop.f32.mrb[0].mxu0
      %7294 = vmatprep.mubr.f32.mxu0 %v7073
      %7295 = vmatmul.mubr.f32.gmra.mrb[0].mxu0 %v6963
      %v7296 = vpop.f32.mrb[0].mxu0
      %v7297 = vadd.f32 0.0, %v7296
      %v7298 = vpop.f32.mrb[0].mxu0
      %7299 = vmatprep.mubr.f32.mxu0 %v7075
      %7300 = vmatmul.mubr.f32.gmra.mrb[0].mxu0 %v6981
      %v7301 = vpop.f32.mrb[0].mxu0
      %v7302 = vadd.f32 0.0, %v7301
      %v7303 = vpop.f32.mrb[0].mxu0
      %7304 = vmatprep.mubr.f32.mxu0 %v7077
      %7305 = vmatmul.mubr.f32.gmra.mrb[0].mxu0 %v6999
      %v7306 = vpop.f32.mrb[0].mxu0
      %v7307 = vadd.f32 0.0, %v7306
      %v7308 = vpop.f32.mrb[0].mxu0
      %7309 = vmatprep.mubr.f32.mxu0 %v7079
      %7310 = vmatmul.mubr.f32.gmra.mrb[0].mxu0 %v7017
      %v7311 = vpop.f32.mrb[0].mxu0
      %v7312 = vadd.f32 0.0, %v7311
      %v7313 = vpop.f32.mrb[0].mxu0
      %7314 = vmatprep.mubr.f32.mxu0 %v7081
      %7315 = vmatmul.mubr.f32.gmra.mrb[0].mxu0 %v7035
      %v7316 = vpop.f32.mrb[0].mxu0
      %v7317 = vadd.f32 0.0, %v7316
      %v7318 = vpop.f32.mrb[0].mxu0
      %7319 = vmatprep.mubr.f32.mxu0 %v7083
      %7320 = vmatmul.mubr.f32.gmra.mrb[0].mxu0 %v7053
      %v7321 = vpop.f32.mrb[0].mxu0
      %v7322 = vadd.f32 0.0, %v7321
      %v7323 = vpop.f32.mrb[0].mxu0
      %7324 = vdwg.mxu0
      %v7325 = vadd.f32 %v6352, %v7152
      %v7326 = vadd.f32 %v6353, %v7154
      %v7327 = vadd.f32 %v6354, %v7277
      %v7328 = vadd.f32 %v6355, %v7158
      %v7329 = vadd.f32 %v6356, %v7160
      %v7330 = vadd.f32 %v6357, %v7282
      %v7331 = vadd.f32 %v6358, %v7164
      %v7332 = vadd.f32 %v6359, %v7166
      %v7333 = vadd.f32 %v6360, %v7287
      %v7334 = vadd.f32 %v6361, %v7170
      %v7335 = vadd.f32 %v6362, %v7172
      %v7336 = vadd.f32 %v6363, %v7292
      %v7337 = vadd.f32 %v6364, %v7176
      %v7338 = vadd.f32 %v6365, %v7178
      %v7339 = vadd.f32 %v6366, %v7297
      %v7340 = vadd.f32 %v6367, %v7182
      %v7341 = vadd.f32 %v6368, %v7184
      %v7342 = vadd.f32 %v6369, %v7302
      %v7343 = vadd.f32 %v6370, %v7188
      %v7344 = vadd.f32 %v6371, %v7190
      %v7345 = vadd.f32 %v6372, %v7307
      %v7346 = vadd.f32 %v6373, %v7194
      %v7347 = vadd.f32 %v6374, %v7196
      %v7348 = vadd.f32 %v6375, %v7312
      %v7349 = vadd.f32 %v6376, %v7200
      %v7350 = vadd.f32 %v6377, %v7202
      %v7351 = vadd.f32 %v6378, %v7317
      %v7352 = vadd.f32 %v6379, %v7206
      %v7353 = vadd.f32 %v6380, %v7208
      %v7354 = vadd.f32 %v6381, %v7322
      %v7355 = vld [vmem:[%s261] sm:$0xfc]
      %v7356 = vld [vmem:[%s261 + $0x8] sm:$0xfc]
      %v7357 = vld [vmem:[%s261 + $0x10] sm:$0xf]
      %v7358 = vld [vmem:[%s261 + $0x18] sm:$0xf]
      %v7359 = vld [vmem:[%s261 + $0x20] sm:$0xfc]
      %v7360 = vld [vmem:[%s261 + $0x28] sm:$0xfc]
      %v7361 = vld [vmem:[%s261 + $0x30] sm:$0xf]
      %v7362 = vld [vmem:[%s261 + $0x38] sm:$0xf]
      %v7363 = vld [vmem:[%s261 + $0x40] sm:$0xfc]
      %v7364 = vld [vmem:[%s261 + $0x48] sm:$0xfc]
      %v7365 = vld [vmem:[%s261 + $0x50] sm:$0xf]
      %v7366 = vld [vmem:[%s261 + $0x58] sm:$0xf]
      %v7367 = vld [vmem:[%s261 + $0x60] sm:$0xfc]
      %v7368 = vld [vmem:[%s261 + $0x68] sm:$0xfc]
      %v7369 = vld [vmem:[%s261 + $0x70] sm:$0xf]
      %v7370 = vld [vmem:[%s261 + $0x78] sm:$0xf]
      %v7371 = vld [vmem:[%s261 + $0x80] sm:$0xfc]
      %v7372 = vld [vmem:[%s261 + $0x88] sm:$0xfc]
      %v7373 = vld [vmem:[%s261 + $0x90] sm:$0xf]
      %v7374 = vld [vmem:[%s261 + $0x98] sm:$0xf]
      %v7375 = vld [vmem:[%s261 + $0xa0] sm:$0xfc]
      %v7376 = vld [vmem:[%s261 + $0xa8] sm:$0xfc]
      %v7377 = vld [vmem:[%s261 + $0xb0] sm:$0xf]
      %v7378 = vld [vmem:[%s261 + $0xb8] sm:$0xf]
      %v7379 = vld [vmem:[%s261 + $0xc0] sm:$0xfc]
      %v7380 = vld [vmem:[%s261 + $0xc8] sm:$0xfc]
      %v7381 = vld [vmem:[%s261 + $0xd0] sm:$0xf]
      %v7382 = vld [vmem:[%s261 + $0xd8] sm:$0xf]
      %v7383 = vld [vmem:[%s261 + $0xe0] sm:$0xfc]
      %v7384 = vld [vmem:[%s261 + $0xe8] sm:$0xfc]
      %v7385 = vld [vmem:[%s261 + $0xf0] sm:$0xf]
      %v7386 = vld [vmem:[%s261 + $0xf8] sm:$0xf]
      %v7419 = vcombine.low %v7355, %v7356
      %v7420 = vcombine.high %v7355, %v7356
      %v7422 = vunpack.c.l.s4 1983009808
      %v7423 = vunpack.c.0.s8 %v7422
      %v7424 = vlaneseq
      %v7425 = vshrl.u32 %v7424, 7
      %v7426 = vsub.s32 %v7423, %v7425
      %v7427 = vrot.slane %v7419, %v7426
      %v7429 = vunpack.c.l.s4 1983009808
      %v7430 = vunpack.c.0.s8 %v7429
      %v7431 = vlaneseq
      %v7432 = vshrl.u32 %v7431, 7
      %v7433 = vsub.s32 %v7430, %v7432
      %v7434 = vrot.slane %v7420, %v7433
      %v7435 = vcombine.high %v7427, %v7427
      %v7436 = vcombine.high %v7434, %v7434
      %v7437 = vcombine.low %v7357, %v7358
      %v7439 = vunpack.c.l.s4 1983009808
      %v7440 = vunpack.c.0.s8 %v7439
      %v7441 = vlaneseq
      %v7442 = vshrl.u32 %v7441, 7
      %v7443 = vsub.s32 %v7440, %v7442
      %v7444 = vrot.slane %v7437, %v7443
      %v7445 = vcombine.high %v7444, %v7444
      %v7446 = vcombine.low %v7359, %v7360
      %v7447 = vcombine.high %v7359, %v7360
      %v7449 = vunpack.c.l.s4 1983009808
      %v7450 = vunpack.c.0.s8 %v7449
      %v7451 = vlaneseq
      %v7452 = vshrl.u32 %v7451, 7
      %v7453 = vsub.s32 %v7450, %v7452
      %v7454 = vrot.slane %v7446, %v7453
      %v7456 = vunpack.c.l.s4 1983009808
      %v7457 = vunpack.c.0.s8 %v7456
      %v7458 = vlaneseq
      %v7459 = vshrl.u32 %v7458, 7
      %v7460 = vsub.s32 %v7457, %v7459
      %v7461 = vrot.slane %v7447, %v7460
      %v7462 = vcombine.high %v7454, %v7454
      %v7463 = vcombine.high %v7461, %v7461
      %v7464 = vcombine.low %v7361, %v7362
      %v7466 = vunpack.c.l.s4 1983009808
      %v7467 = vunpack.c.0.s8 %v7466
      %v7468 = vlaneseq
      %v7469 = vshrl.u32 %v7468, 7
      %v7470 = vsub.s32 %v7467, %v7469
      %v7471 = vrot.slane %v7464, %v7470
      %v7472 = vcombine.high %v7471, %v7471
      %v7473 = vcombine.low %v7363, %v7364
      %v7474 = vcombine.high %v7363, %v7364
      %v7476 = vunpack.c.l.s4 1983009808
      %v7477 = vunpack.c.0.s8 %v7476
      %v7478 = vlaneseq
      %v7479 = vshrl.u32 %v7478, 7
      %v7480 = vsub.s32 %v7477, %v7479
      %v7481 = vrot.slane %v7473, %v7480
      %v7483 = vunpack.c.l.s4 1983009808
      %v7484 = vunpack.c.0.s8 %v7483
      %v7485 = vlaneseq
      %v7486 = vshrl.u32 %v7485, 7
      %v7487 = vsub.s32 %v7484, %v7486
      %v7488 = vrot.slane %v7474, %v7487
      %v7489 = vcombine.high %v7481, %v7481
      %v7490 = vcombine.high %v7488, %v7488
      %v7491 = vcombine.low %v7365, %v7366
      %v7493 = vunpack.c.l.s4 1983009808
      %v7494 = vunpack.c.0.s8 %v7493
      %v7495 = vlaneseq
      %v7496 = vshrl.u32 %v7495, 7
      %v7497 = vsub.s32 %v7494, %v7496
      %v7498 = vrot.slane %v7491, %v7497
      %v7499 = vcombine.high %v7498, %v7498
      %v7500 = vcombine.low %v7367, %v7368
      %v7501 = vcombine.high %v7367, %v7368
      %v7503 = vunpack.c.l.s4 1983009808
      %v7504 = vunpack.c.0.s8 %v7503
      %v7505 = vlaneseq
      %v7506 = vshrl.u32 %v7505, 7
      %v7507 = vsub.s32 %v7504, %v7506
      %v7508 = vrot.slane %v7500, %v7507
      %v7510 = vunpack.c.l.s4 1983009808
      %v7511 = vunpack.c.0.s8 %v7510
      %v7512 = vlaneseq
      %v7513 = vshrl.u32 %v7512, 7
      %v7514 = vsub.s32 %v7511, %v7513
      %v7515 = vrot.slane %v7501, %v7514
      %v7516 = vcombine.high %v7508, %v7508
      %v7517 = vcombine.high %v7515, %v7515
      %v7518 = vcombine.low %v7369, %v7370
      %v7520 = vunpack.c.l.s4 1983009808
      %v7521 = vunpack.c.0.s8 %v7520
      %v7522 = vlaneseq
      %v7523 = vshrl.u32 %v7522, 7
      %v7524 = vsub.s32 %v7521, %v7523
      %v7525 = vrot.slane %v7518, %v7524
      %v7526 = vcombine.high %v7525, %v7525
      %v7527 = vcombine.low %v7371, %v7372
      %v7528 = vcombine.high %v7371, %v7372
      %v7530 = vunpack.c.l.s4 1983009808
      %v7531 = vunpack.c.0.s8 %v7530
      %v7532 = vlaneseq
      %v7533 = vshrl.u32 %v7532, 7
      %v7534 = vsub.s32 %v7531, %v7533
      %v7535 = vrot.slane %v7527, %v7534
      %v7537 = vunpack.c.l.s4 1983009808
      %v7538 = vunpack.c.0.s8 %v7537
      %v7539 = vlaneseq
      %v7540 = vshrl.u32 %v7539, 7
      %v7541 = vsub.s32 %v7538, %v7540
      %v7542 = vrot.slane %v7528, %v7541
      %v7543 = vcombine.high %v7535, %v7535
      %v7544 = vcombine.high %v7542, %v7542
      %v7545 = vcombine.low %v7373, %v7374
      %v7547 = vunpack.c.l.s4 1983009808
      %v7548 = vunpack.c.0.s8 %v7547
      %v7549 = vlaneseq
      %v7550 = vshrl.u32 %v7549, 7
      %v7551 = vsub.s32 %v7548, %v7550
      %v7552 = vrot.slane %v7545, %v7551
      %v7553 = vcombine.high %v7552, %v7552
      %v7554 = vcombine.low %v7375, %v7376
      %v7555 = vcombine.high %v7375, %v7376
      %v7557 = vunpack.c.l.s4 1983009808
      %v7558 = vunpack.c.0.s8 %v7557
      %v7559 = vlaneseq
      %v7560 = vshrl.u32 %v7559, 7
      %v7561 = vsub.s32 %v7558, %v7560
      %v7562 = vrot.slane %v7554, %v7561
      %v7564 = vunpack.c.l.s4 1983009808
      %v7565 = vunpack.c.0.s8 %v7564
      %v7566 = vlaneseq
      %v7567 = vshrl.u32 %v7566, 7
      %v7568 = vsub.s32 %v7565, %v7567
      %v7569 = vrot.slane %v7555, %v7568
      %v7570 = vcombine.high %v7562, %v7562
      %v7571 = vcombine.high %v7569, %v7569
      %v7572 = vcombine.low %v7377, %v7378
      %v7574 = vunpack.c.l.s4 1983009808
      %v7575 = vunpack.c.0.s8 %v7574
      %v7576 = vlaneseq
      %v7577 = vshrl.u32 %v7576, 7
      %v7578 = vsub.s32 %v7575, %v7577
      %v7579 = vrot.slane %v7572, %v7578
      %v7580 = vcombine.high %v7579, %v7579
      %v7581 = vcombine.low %v7379, %v7380
      %v7582 = vcombine.high %v7379, %v7380
      %v7584 = vunpack.c.l.s4 1983009808
      %v7585 = vunpack.c.0.s8 %v7584
      %v7586 = vlaneseq
      %v7587 = vshrl.u32 %v7586, 7
      %v7588 = vsub.s32 %v7585, %v7587
      %v7589 = vrot.slane %v7581, %v7588
      %v7591 = vunpack.c.l.s4 1983009808
      %v7592 = vunpack.c.0.s8 %v7591
      %v7593 = vlaneseq
      %v7594 = vshrl.u32 %v7593, 7
      %v7595 = vsub.s32 %v7592, %v7594
      %v7596 = vrot.slane %v7582, %v7595
      %v7597 = vcombine.high %v7589, %v7589
      %v7598 = vcombine.high %v7596, %v7596
      %v7599 = vcombine.low %v7381, %v7382
      %v7601 = vunpack.c.l.s4 1983009808
      %v7602 = vunpack.c.0.s8 %v7601
      %v7603 = vlaneseq
      %v7604 = vshrl.u32 %v7603, 7
      %v7605 = vsub.s32 %v7602, %v7604
      %v7606 = vrot.slane %v7599, %v7605
      %v7607 = vcombine.high %v7606, %v7606
      %v7608 = vcombine.low %v7383, %v7384
      %v7609 = vcombine.high %v7383, %v7384
      %v7611 = vunpack.c.l.s4 1983009808
      %v7612 = vunpack.c.0.s8 %v7611
      %v7613 = vlaneseq
      %v7614 = vshrl.u32 %v7613, 7
      %v7615 = vsub.s32 %v7612, %v7614
      %v7616 = vrot.slane %v7608, %v7615
      %v7618 = vunpack.c.l.s4 1983009808
      %v7619 = vunpack.c.0.s8 %v7618
      %v7620 = vlaneseq
      %v7621 = vshrl.u32 %v7620, 7
      %v7622 = vsub.s32 %v7619, %v7621
      %v7623 = vrot.slane %v7609, %v7622
      %v7624 = vcombine.high %v7616, %v7616
      %v7625 = vcombine.high %v7623, %v7623
      %v7626 = vcombine.low %v7385, %v7386
      %v7628 = vunpack.c.l.s4 1983009808
      %v7629 = vunpack.c.0.s8 %v7628
      %v7630 = vlaneseq
      %v7631 = vshrl.u32 %v7630, 7
      %v7632 = vsub.s32 %v7629, %v7631
      %v7633 = vrot.slane %v7626, %v7632
      %v7634 = vcombine.high %v7633, %v7633
      %s7635 = scalar_lea.vmem %s1, 5376
      %v7636 = vld [vmem:[%s7635] sm:$0xff]
      %v7637 = vld [vmem:[%s7635 + $0x8] sm:$0xff]
      %v7638 = vld [vmem:[%s7635 + $0x10] sm:$0xff]
      %v7639 = vld [vmem:[%s7635 + $0x18] sm:$0xff]
      %v7640 = vld [vmem:[%s7635 + $0x20] sm:$0xff]
      %v7641 = vld [vmem:[%s7635 + $0x28] sm:$0xff]
      %v7642 = vld [vmem:[%s7635 + $0x30] sm:$0xff]
      %v7643 = vld [vmem:[%s7635 + $0x38] sm:$0xff]
      %v7644 = vld [vmem:[%s7635 + $0x40] sm:$0xff]
      %v7645 = vld [vmem:[%s7635 + $0x48] sm:$0xff]
      %v7646 = vld [vmem:[%s7635 + $0x50] sm:$0xff]
      %v7647 = vld [vmem:[%s7635 + $0x58] sm:$0xff]
      %v7648 = vld [vmem:[%s7635 + $0x60] sm:$0xff]
      %v7649 = vld [vmem:[%s7635 + $0x68] sm:$0xff]
      %v7650 = vld [vmem:[%s7635 + $0x70] sm:$0xff]
      %v7651 = vld [vmem:[%s7635 + $0x78] sm:$0xff]
      %v7652 = vld [vmem:[%s7635 + $0x80] sm:$0xff]
      %v7653 = vld [vmem:[%s7635 + $0x88] sm:$0xff]
      %v7654 = vld [vmem:[%s7635 + $0x90] sm:$0xff]
      %v7655 = vld [vmem:[%s7635 + $0x98] sm:$0xff]
      %v7656 = vld [vmem:[%s7635 + $0xa0] sm:$0xff]
      %v7657 = vld [vmem:[%s7635 + $0xa8] sm:$0xff]
      %v7658 = vld [vmem:[%s7635 + $0xb0] sm:$0xff]
      %v7659 = vld [vmem:[%s7635 + $0xb8] sm:$0xff]
      %v7660 = vld [vmem:[%s7635 + $0xc0] sm:$0xff]
      %v7661 = vld [vmem:[%s7635 + $0xc8] sm:$0xff]
      %v7662 = vld [vmem:[%s7635 + $0xd0] sm:$0xff]
      %v7663 = vld [vmem:[%s7635 + $0xd8] sm:$0xff]
      %v7664 = vld [vmem:[%s7635 + $0xe0] sm:$0xff]
      %v7665 = vld [vmem:[%s7635 + $0xe8] sm:$0xff]
      %v7666 = vld [vmem:[%s7635 + $0xf0] sm:$0xff]
      %v7667 = vld [vmem:[%s7635 + $0xf8] sm:$0xff]
      %v7668 = vld [vmem:[%s7635 + $0x100] sm:$0xff]
      %v7669 = vld [vmem:[%s7635 + $0x108] sm:$0xff]
      %v7670 = vld [vmem:[%s7635 + $0x110] sm:$0xff]
      %v7671 = vld [vmem:[%s7635 + $0x118] sm:$0xff]
      %v7672 = vld [vmem:[%s7635 + $0x120] sm:$0xff]
      %v7673 = vld [vmem:[%s7635 + $0x128] sm:$0xff]
      %v7674 = vld [vmem:[%s7635 + $0x130] sm:$0xff]
      %v7675 = vld [vmem:[%s7635 + $0x138] sm:$0xff]
      %v7676 = vld [vmem:[%s7635 + $0x140] sm:$0xff]
      %v7677 = vld [vmem:[%s7635 + $0x148] sm:$0xff]
      %v7678 = vld [vmem:[%s7635 + $0x150] sm:$0xff]
      %v7679 = vld [vmem:[%s7635 + $0x158] sm:$0xff]
      %v7680 = vld [vmem:[%s7635 + $0x160] sm:$0xff]
      %v7681 = vld [vmem:[%s7635 + $0x168] sm:$0xff]
      %v7682 = vld [vmem:[%s7635 + $0x170] sm:$0xff]
      %v7683 = vld [vmem:[%s7635 + $0x178] sm:$0xff]
      %v7684 = vld [vmem:[%s7635 + $0x180] sm:$0xff]
      %v7685 = vld [vmem:[%s7635 + $0x188] sm:$0xff]
      %v7686 = vld [vmem:[%s7635 + $0x190] sm:$0xff]
      %v7687 = vld [vmem:[%s7635 + $0x198] sm:$0xff]
      %v7688 = vld [vmem:[%s7635 + $0x1a0] sm:$0xff]
      %v7689 = vld [vmem:[%s7635 + $0x1a8] sm:$0xff]
      %v7690 = vld [vmem:[%s7635 + $0x1b0] sm:$0xff]
      %v7691 = vld [vmem:[%s7635 + $0x1b8] sm:$0xff]
      %v7692 = vld [vmem:[%s7635 + $0x1c0] sm:$0xff]
      %v7693 = vld [vmem:[%s7635 + $0x1c8] sm:$0xff]
      %v7694 = vld [vmem:[%s7635 + $0x1d0] sm:$0xff]
      %v7695 = vld [vmem:[%s7635 + $0x1d8] sm:$0xff]
      %v7696 = vld [vmem:[%s7635 + $0x1e0] sm:$0xff]
      %v7697 = vld [vmem:[%s7635 + $0x1e8] sm:$0xff]
      %v7698 = vld [vmem:[%s7635 + $0x1f0] sm:$0xff]
      %v7699 = vld [vmem:[%s7635 + $0x1f8] sm:$0xff]
      %v7700 = vld [vmem:[%s7635 + $0x200] sm:$0xff]
      %v7701 = vld [vmem:[%s7635 + $0x208] sm:$0xff]
      %v7702 = vld [vmem:[%s7635 + $0x210] sm:$0xff]
      %v7703 = vld [vmem:[%s7635 + $0x218] sm:$0xff]
      %v7704 = vld [vmem:[%s7635 + $0x220] sm:$0xff]
      %v7705 = vld [vmem:[%s7635 + $0x228] sm:$0xff]
      %v7706 = vld [vmem:[%s7635 + $0x230] sm:$0xff]
      %v7707 = vld [vmem:[%s7635 + $0x238] sm:$0xff]
      %v7708 = vld [vmem:[%s7635 + $0x240] sm:$0xff]
      %v7709 = vld [vmem:[%s7635 + $0x248] sm:$0xff]
      %v7710 = vld [vmem:[%s7635 + $0x250] sm:$0xff]
      %v7711 = vld [vmem:[%s7635 + $0x258] sm:$0xff]
      %v7712 = vld [vmem:[%s7635 + $0x260] sm:$0xff]
      %v7713 = vld [vmem:[%s7635 + $0x268] sm:$0xff]
      %v7714 = vld [vmem:[%s7635 + $0x270] sm:$0xff]
      %v7715 = vld [vmem:[%s7635 + $0x278] sm:$0xff]
      %v7716 = vld [vmem:[%s7635 + $0x280] sm:$0xff]
      %v7717 = vld [vmem:[%s7635 + $0x288] sm:$0xff]
      %v7718 = vld [vmem:[%s7635 + $0x290] sm:$0xff]
      %v7719 = vld [vmem:[%s7635 + $0x298] sm:$0xff]
      %v7720 = vcombine.low %v7435, %v7434
      %v7721 = vcombine.low %v7436, %v7444
      %v7723 = vunpack.c.l.s4 1983009808
      %v7724 = vunpack.c.0.s8 %v7723
      %v7725 = vlaneseq
      %v7726 = vshrl.u32 %v7725, 7
      %v7727 = vsub.s32 %v7724, %v7726
      %v7728 = vrot.slane %v7720, %v7727
      %v7730 = vunpack.c.l.s4 1983009808
      %v7731 = vunpack.c.0.s8 %v7730
      %v7732 = vlaneseq
      %v7733 = vshrl.u32 %v7732, 7
      %v7734 = vsub.s32 %v7731, %v7733
      %v7735 = vrot.slane %v7721, %v7734
      %v7736 = vcombine.low %v7728, %v7735
      %v7737 = vcombine.high %v7728, %v7735
      %v7738 = vcombine.low %v7445, %v7462
      %v7739 = vcombine.low %v7461, %v7463
      %v7741 = vunpack.c.l.s4 1983009808
      %v7742 = vunpack.c.0.s8 %v7741
      %v7743 = vlaneseq
      %v7744 = vshrl.u32 %v7743, 7
      %v7745 = vsub.s32 %v7742, %v7744
      %v7746 = vrot.slane %v7738, %v7745
      %v7748 = vunpack.c.l.s4 1983009808
      %v7749 = vunpack.c.0.s8 %v7748
      %v7750 = vlaneseq
      %v7751 = vshrl.u32 %v7750, 7
      %v7752 = vsub.s32 %v7749, %v7751
      %v7753 = vrot.slane %v7739, %v7752
      %v7754 = vcombine.low %v7746, %v7753
      %v7755 = vcombine.high %v7746, %v7753
      %v7756 = vcombine.low %v7471, %v7472
      %v7757 = vcombine.low %v7489, %v7488
      %v7759 = vunpack.c.l.s4 1983009808
      %v7760 = vunpack.c.0.s8 %v7759
      %v7761 = vlaneseq
      %v7762 = vshrl.u32 %v7761, 7
      %v7763 = vsub.s32 %v7760, %v7762
      %v7764 = vrot.slane %v7756, %v7763
      %v7766 = vunpack.c.l.s4 1983009808
      %v7767 = vunpack.c.0.s8 %v7766
      %v7768 = vlaneseq
      %v7769 = vshrl.u32 %v7768, 7
      %v7770 = vsub.s32 %v7767, %v7769
      %v7771 = vrot.slane %v7757, %v7770
      %v7772 = vcombine.low %v7764, %v7771
      %v7773 = vcombine.high %v7764, %v7771
      %v7774 = vcombine.low %v7490, %v7498
      %v7775 = vcombine.low %v7499, %v7516
      %v7777 = vunpack.c.l.s4 1983009808
      %v7778 = vunpack.c.0.s8 %v7777
      %v7779 = vlaneseq
      %v7780 = vshrl.u32 %v7779, 7
      %v7781 = vsub.s32 %v7778, %v7780
      %v7782 = vrot.slane %v7774, %v7781
      %v7784 = vunpack.c.l.s4 1983009808
      %v7785 = vunpack.c.0.s8 %v7784
      %v7786 = vlaneseq
      %v7787 = vshrl.u32 %v7786, 7
      %v7788 = vsub.s32 %v7785, %v7787
      %v7789 = vrot.slane %v7775, %v7788
      %v7790 = vcombine.low %v7782, %v7789
      %v7791 = vcombine.high %v7782, %v7789
      %v7792 = vcombine.low %v7515, %v7517
      %v7793 = vcombine.low %v7525, %v7526
      %v7795 = vunpack.c.l.s4 1983009808
      %v7796 = vunpack.c.0.s8 %v7795
      %v7797 = vlaneseq
      %v7798 = vshrl.u32 %v7797, 7
      %v7799 = vsub.s32 %v7796, %v7798
      %v7800 = vrot.slane %v7792, %v7799
      %v7802 = vunpack.c.l.s4 1983009808
      %v7803 = vunpack.c.0.s8 %v7802
      %v7804 = vlaneseq
      %v7805 = vshrl.u32 %v7804, 7
      %v7806 = vsub.s32 %v7803, %v7805
      %v7807 = vrot.slane %v7793, %v7806
      %v7808 = vcombine.low %v7800, %v7807
      %v7809 = vcombine.high %v7800, %v7807
      %v7810 = vcombine.low %v7543, %v7542
      %v7811 = vcombine.low %v7544, %v7552
      %v7813 = vunpack.c.l.s4 1983009808
      %v7814 = vunpack.c.0.s8 %v7813
      %v7815 = vlaneseq
      %v7816 = vshrl.u32 %v7815, 7
      %v7817 = vsub.s32 %v7814, %v7816
      %v7818 = vrot.slane %v7810, %v7817
      %v7820 = vunpack.c.l.s4 1983009808
      %v7821 = vunpack.c.0.s8 %v7820
      %v7822 = vlaneseq
      %v7823 = vshrl.u32 %v7822, 7
      %v7824 = vsub.s32 %v7821, %v7823
      %v7825 = vrot.slane %v7811, %v7824
      %v7826 = vcombine.low %v7818, %v7825
      %v7827 = vcombine.high %v7818, %v7825
      %v7828 = vcombine.low %v7553, %v7570
      %v7829 = vcombine.low %v7569, %v7571
      %v7831 = vunpack.c.l.s4 1983009808
      %v7832 = vunpack.c.0.s8 %v7831
      %v7833 = vlaneseq
      %v7834 = vshrl.u32 %v7833, 7
      %v7835 = vsub.s32 %v7832, %v7834
      %v7836 = vrot.slane %v7828, %v7835
      %v7838 = vunpack.c.l.s4 1983009808
      %v7839 = vunpack.c.0.s8 %v7838
      %v7840 = vlaneseq
      %v7841 = vshrl.u32 %v7840, 7
      %v7842 = vsub.s32 %v7839, %v7841
      %v7843 = vrot.slane %v7829, %v7842
      %v7844 = vcombine.low %v7836, %v7843
      %v7845 = vcombine.high %v7836, %v7843
      %v7846 = vcombine.low %v7579, %v7580
      %v7847 = vcombine.low %v7597, %v7596
      %v7849 = vunpack.c.l.s4 1983009808
      %v7850 = vunpack.c.0.s8 %v7849
      %v7851 = vlaneseq
      %v7852 = vshrl.u32 %v7851, 7
      %v7853 = vsub.s32 %v7850, %v7852
      %v7854 = vrot.slane %v7846, %v7853
      %v7856 = vunpack.c.l.s4 1983009808
      %v7857 = vunpack.c.0.s8 %v7856
      %v7858 = vlaneseq
      %v7859 = vshrl.u32 %v7858, 7
      %v7860 = vsub.s32 %v7857, %v7859
      %v7861 = vrot.slane %v7847, %v7860
      %v7862 = vcombine.low %v7854, %v7861
      %v7863 = vcombine.high %v7854, %v7861
      %v7864 = vcombine.low %v7598, %v7606
      %v7865 = vcombine.low %v7607, %v7624
      %v7867 = vunpack.c.l.s4 1983009808
      %v7868 = vunpack.c.0.s8 %v7867
      %v7869 = vlaneseq
      %v7870 = vshrl.u32 %v7869, 7
      %v7871 = vsub.s32 %v7868, %v7870
      %v7872 = vrot.slane %v7864, %v7871
      %v7874 = vunpack.c.l.s4 1983009808
      %v7875 = vunpack.c.0.s8 %v7874
      %v7876 = vlaneseq
      %v7877 = vshrl.u32 %v7876, 7
      %v7878 = vsub.s32 %v7875, %v7877
      %v7879 = vrot.slane %v7865, %v7878
      %v7880 = vcombine.low %v7872, %v7879
      %v7881 = vcombine.high %v7872, %v7879
      %v7882 = vcombine.low %v7623, %v7625
      %v7883 = vcombine.low %v7633, %v7634
      %v7885 = vunpack.c.l.s4 1983009808
      %v7886 = vunpack.c.0.s8 %v7885
      %v7887 = vlaneseq
      %v7888 = vshrl.u32 %v7887, 7
      %v7889 = vsub.s32 %v7886, %v7888
      %v7890 = vrot.slane %v7882, %v7889
      %v7892 = vunpack.c.l.s4 1983009808
      %v7893 = vunpack.c.0.s8 %v7892
      %v7894 = vlaneseq
      %v7895 = vshrl.u32 %v7894, 7
      %v7896 = vsub.s32 %v7893, %v7895
      %v7897 = vrot.slane %v7883, %v7896
      %v7898 = vcombine.low %v7890, %v7897
      %v7899 = vcombine.high %v7890, %v7897
      %v7910 = vsel %vm172, %v7737, 0
      %v7912 = vsel %vm172, %v7755, 0
      %v7914 = vsel %vm172, %v7773, 0
      %v7916 = vsel %vm172, %v7791, 0
      %v7918 = vsel %vm172, %v7809, 0
      %v7920 = vsel %vm172, %v7827, 0
      %v7922 = vsel %vm172, %v7845, 0
      %v7924 = vsel %vm172, %v7863, 0
      %v7926 = vsel %vm172, %v7881, 0
      %v7928 = vsel %vm172, %v7899, 0
      %7930 = vmatprep.subr.mxu0 %v7637
      %7931 = vmatpush1.msra.mxu0 %v7636
      %7932 = vmatprep.subr.mxu0 %v7640
      %7933 = vmatpush1.msra.mxu0 %v7639
      %7934 = vmatprep.subr.mxu0 %v7643
      %7935 = vmatpush1.msra.mxu0 %v7642
      %7936 = vmatprep.subr.mxu0 %v7646
      %7937 = vmatpush1.msra.mxu0 %v7645
      %7938 = vmatprep.subr.mxu0 %v7649
      %7939 = vmatpush1.msra.mxu0 %v7648
      %7940 = vmatprep.subr.mxu0 %v7652
      %7941 = vmatpush1.msra.mxu0 %v7651
      %7942 = vmatprep.subr.mxu0 %v7655
      %7943 = vmatpush1.msra.mxu0 %v7654
      %7944 = vmatprep.subr.mxu0 %v7658
      %7945 = vmatpush1.msra.mxu0 %v7657
      %7946 = vmatprep.subr.mxu0 %v7661
      %7947 = vmatpush1.msra.mxu0 %v7660
      %7948 = vmatprep.subr.mxu0 %v7664
      %7949 = vmatpush1.msra.mxu0 %v7663
      %7950 = vmatprep.subr.mxu0 %v7667
      %7951 = vmatpush1.msra.mxu0 %v7666
      %7952 = vmatprep.subr.mxu0 %v7670
      %7953 = vmatpush1.msra.mxu0 %v7669
      %7954 = vmatprep.subr.mxu0 %v7673
      %7955 = vmatpush1.msra.mxu0 %v7672
      %7956 = vmatprep.subr.mxu0 %v7676
      %7957 = vmatpush1.msra.mxu0 %v7675
      %7958 = vmatprep.subr.mxu0 %v7679
      %7959 = vmatpush1.msra.mxu0 %v7678
      %7960 = vmatprep.subr.mxu0 %v7682
      %7961 = vmatpush1.msra.mxu0 %v7681
      %7962 = vmatprep.subr.mxu0 %v7685
      %7963 = vmatpush1.msra.mxu0 %v7684
      %7964 = vmatprep.subr.mxu0 %v7688
      %7965 = vmatpush1.msra.mxu0 %v7687
      %7966 = vmatprep.subr.mxu0 %v7691
      %7967 = vmatpush1.msra.mxu0 %v7690
      %7968 = vmatprep.subr.mxu0 %v7694
      %7969 = vmatpush1.msra.mxu0 %v7693
      %7970 = vmatprep.subr.mxu0 %v7697
      %7971 = vmatpush1.msra.mxu0 %v7696
      %7972 = vmatprep.subr.mxu0 %v7700
      %7973 = vmatpush1.msra.mxu0 %v7699
      %7974 = vmatprep.subr.mxu0 %v7703
      %7975 = vmatpush1.msra.mxu0 %v7702
      %7976 = vmatprep.subr.mxu0 %v7706
      %7977 = vmatpush1.msra.mxu0 %v7705
      %7978 = vmatprep.subr.mxu0 %v7709
      %7979 = vmatpush1.msra.mxu0 %v7708
      %7980 = vmatprep.subr.mxu0 %v7712
      %7981 = vmatpush1.msra.mxu0 %v7711
      %7982 = vmatprep.subr.mxu0 %v7715
      %7983 = vmatpush1.msra.mxu0 %v7714
      %7984 = vmatprep.subr.mxu0 %v7718
      %7985 = vmatpush1.msra.mxu0 %v7717
      %7986 = vmatprep.subr.mxu0 0.0
      %7987 = vmatpush1.msra.mxu0 0.0
      %7988 = vmatprep.subr.mxu0 0.0
      %7989 = vmatpush1.msra.mxu0 0.0
      %7990 = vmatprep.subr.mxu0 0.0
      %7991 = vmatpush1.msra.mxu0 0.0
      %7992 = vmatprep.subr.mxu0 0.0
      %7993 = vmatpush1.msra.mxu0 0.0
      %7994 = vmatprep.mubr.f32.mxu0 %v7910
      %7995 = vmatmul.mubr.f32.gmra.mrb[0].mxu0 %v7736
      %v7996 = vpop.f32.mrb[0].mxu0
      %v7997 = vadd.f32 0.0, %v7996
      %v7998 = vpop.f32.mrb[0].mxu0
      %v7999 = vadd.f32 0.0, %v7998
      %8000 = vmatprep.mubr.f32.mxu0 %v7912
      %8001 = vmatmul.mubr.f32.gmra.mrb[0].mxu0 %v7754
      %v8002 = vpop.f32.mrb[0].mxu0
      %v8003 = vadd.f32 0.0, %v8002
      %v8004 = vpop.f32.mrb[0].mxu0
      %v8005 = vadd.f32 0.0, %v8004
      %8006 = vmatprep.mubr.f32.mxu0 %v7914
      %8007 = vmatmul.mubr.f32.gmra.mrb[0].mxu0 %v7772
      %v8008 = vpop.f32.mrb[0].mxu0
      %v8009 = vadd.f32 0.0, %v8008
      %v8010 = vpop.f32.mrb[0].mxu0
      %v8011 = vadd.f32 0.0, %v8010
      %8012 = vmatprep.mubr.f32.mxu0 %v7916
      %8013 = vmatmul.mubr.f32.gmra.mrb[0].mxu0 %v7790
      %v8014 = vpop.f32.mrb[0].mxu0
      %v8015 = vadd.f32 0.0, %v8014
      %v8016 = vpop.f32.mrb[0].mxu0
      %v8017 = vadd.f32 0.0, %v8016
      %8018 = vmatprep.mubr.f32.mxu0 %v7918
      %8019 = vmatmul.mubr.f32.gmra.mrb[0].mxu0 %v7808
      %v8020 = vpop.f32.mrb[0].mxu0
      %v8021 = vadd.f32 0.0, %v8020
      %v8022 = vpop.f32.mrb[0].mxu0
      %v8023 = vadd.f32 0.0, %v8022
      %8024 = vmatprep.mubr.f32.mxu0 %v7920
      %8025 = vmatmul.mubr.f32.gmra.mrb[0].mxu0 %v7826
      %v8026 = vpop.f32.mrb[0].mxu0
      %v8027 = vadd.f32 0.0, %v8026
      %v8028 = vpop.f32.mrb[0].mxu0
      %v8029 = vadd.f32 0.0, %v8028
      %8030 = vmatprep.mubr.f32.mxu0 %v7922
      %8031 = vmatmul.mubr.f32.gmra.mrb[0].mxu0 %v7844
      %v8032 = vpop.f32.mrb[0].mxu0
      %v8033 = vadd.f32 0.0, %v8032
      %v8034 = vpop.f32.mrb[0].mxu0
      %v8035 = vadd.f32 0.0, %v8034
      %8036 = vmatprep.mubr.f32.mxu0 %v7924
      %8037 = vmatmul.mubr.f32.gmra.mrb[0].mxu0 %v7862
      %v8038 = vpop.f32.mrb[0].mxu0
      %v8039 = vadd.f32 0.0, %v8038
      %v8040 = vpop.f32.mrb[0].mxu0
      %v8041 = vadd.f32 0.0, %v8040
      %8042 = vmatprep.mubr.f32.mxu0 %v7926
      %8043 = vmatmul.mubr.f32.gmra.mrb[0].mxu0 %v7880
      %v8044 = vpop.f32.mrb[0].mxu0
      %v8045 = vadd.f32 0.0, %v8044
      %v8046 = vpop.f32.mrb[0].mxu0
      %v8047 = vadd.f32 0.0, %v8046
      %8048 = vmatprep.mubr.f32.mxu0 %v7928
      %8049 = vmatmul.mubr.f32.gmra.mrb[0].mxu0 %v7898
      %v8050 = vpop.f32.mrb[0].mxu0
      %v8051 = vadd.f32 0.0, %v8050
      %v8052 = vpop.f32.mrb[0].mxu0
      %v8053 = vadd.f32 0.0, %v8052
      %8054 = vdwg.mxu0
      %8055 = vmatprep.subr.mxu0 0.0
      %8056 = vmatpush1.msra.mxu0 %v7638
      %8057 = vmatprep.subr.mxu0 0.0
      %8058 = vmatpush1.msra.mxu0 %v7641
      %8059 = vmatprep.subr.mxu0 0.0
      %8060 = vmatpush1.msra.mxu0 %v7644
      %8061 = vmatprep.subr.mxu0 0.0
      %8062 = vmatpush1.msra.mxu0 %v7647
      %8063 = vmatprep.subr.mxu0 0.0
      %8064 = vmatpush1.msra.mxu0 %v7650
      %8065 = vmatprep.subr.mxu0 0.0
      %8066 = vmatpush1.msra.mxu0 %v7653
      %8067 = vmatprep.subr.mxu0 0.0
      %8068 = vmatpush1.msra.mxu0 %v7656
      %8069 = vmatprep.subr.mxu0 0.0
      %8070 = vmatpush1.msra.mxu0 %v7659
      %8071 = vmatprep.subr.mxu0 0.0
      %8072 = vmatpush1.msra.mxu0 %v7662
      %8073 = vmatprep.subr.mxu0 0.0
      %8074 = vmatpush1.msra.mxu0 %v7665
      %8075 = vmatprep.subr.mxu0 0.0
      %8076 = vmatpush1.msra.mxu0 %v7668
      %8077 = vmatprep.subr.mxu0 0.0
      %8078 = vmatpush1.msra.mxu0 %v7671
      %8079 = vmatprep.subr.mxu0 0.0
      %8080 = vmatpush1.msra.mxu0 %v7674
      %8081 = vmatprep.subr.mxu0 0.0
      %8082 = vmatpush1.msra.mxu0 %v7677
      %8083 = vmatprep.subr.mxu0 0.0
      %8084 = vmatpush1.msra.mxu0 %v7680
      %8085 = vmatprep.subr.mxu0 0.0
      %8086 = vmatpush1.msra.mxu0 %v7683
      %8087 = vmatprep.subr.mxu0 0.0
      %8088 = vmatpush1.msra.mxu0 %v7686
      %8089 = vmatprep.subr.mxu0 0.0
      %8090 = vmatpush1.msra.mxu0 %v7689
      %8091 = vmatprep.subr.mxu0 0.0
      %8092 = vmatpush1.msra.mxu0 %v7692
      %8093 = vmatprep.subr.mxu0 0.0
      %8094 = vmatpush1.msra.mxu0 %v7695
      %8095 = vmatprep.subr.mxu0 0.0
      %8096 = vmatpush1.msra.mxu0 %v7698
      %8097 = vmatprep.subr.mxu0 0.0
      %8098 = vmatpush1.msra.mxu0 %v7701
      %8099 = vmatprep.subr.mxu0 0.0
      %8100 = vmatpush1.msra.mxu0 %v7704
      %8101 = vmatprep.subr.mxu0 0.0
      %8102 = vmatpush1.msra.mxu0 %v7707
      %8103 = vmatprep.subr.mxu0 0.0
      %8104 = vmatpush1.msra.mxu0 %v7710
      %8105 = vmatprep.subr.mxu0 0.0
      %8106 = vmatpush1.msra.mxu0 %v7713
      %8107 = vmatprep.subr.mxu0 0.0
      %8108 = vmatpush1.msra.mxu0 %v7716
      %8109 = vmatprep.subr.mxu0 0.0
      %8110 = vmatpush1.msra.mxu0 %v7719
      %8111 = vmatprep.subr.mxu0 0.0
      %8112 = vmatpush1.msra.mxu0 0.0
      %8113 = vmatprep.subr.mxu0 0.0
      %8114 = vmatpush1.msra.mxu0 0.0
      %8115 = vmatprep.subr.mxu0 0.0
      %8116 = vmatpush1.msra.mxu0 0.0
      %8117 = vmatprep.subr.mxu0 0.0
      %8118 = vmatpush1.msra.mxu0 0.0
      %8119 = vmatprep.mubr.f32.mxu0 %v7910
      %8120 = vmatmul.mubr.f32.gmra.mrb[0].mxu0 %v7736
      %v8121 = vpop.f32.mrb[0].mxu0
      %v8122 = vadd.f32 0.0, %v8121
      %v8123 = vpop.f32.mrb[0].mxu0
      %8124 = vmatprep.mubr.f32.mxu0 %v7912
      %8125 = vmatmul.mubr.f32.gmra.mrb[0].mxu0 %v7754
      %v8126 = vpop.f32.mrb[0].mxu0
      %v8127 = vadd.f32 0.0, %v8126
      %v8128 = vpop.f32.mrb[0].mxu0
      %8129 = vmatprep.mubr.f32.mxu0 %v7914
      %8130 = vmatmul.mubr.f32.gmra.mrb[0].mxu0 %v7772
      %v8131 = vpop.f32.mrb[0].mxu0
      %v8132 = vadd.f32 0.0, %v8131
      %v8133 = vpop.f32.mrb[0].mxu0
      %8134 = vmatprep.mubr.f32.mxu0 %v7916
      %8135 = vmatmul.mubr.f32.gmra.mrb[0].mxu0 %v7790
      %v8136 = vpop.f32.mrb[0].mxu0
      %v8137 = vadd.f32 0.0, %v8136
      %v8138 = vpop.f32.mrb[0].mxu0
      %8139 = vmatprep.mubr.f32.mxu0 %v7918
      %8140 = vmatmul.mubr.f32.gmra.mrb[0].mxu0 %v7808
      %v8141 = vpop.f32.mrb[0].mxu0
      %v8142 = vadd.f32 0.0, %v8141
      %v8143 = vpop.f32.mrb[0].mxu0
      %8144 = vmatprep.mubr.f32.mxu0 %v7920
      %8145 = vmatmul.mubr.f32.gmra.mrb[0].mxu0 %v7826
      %v8146 = vpop.f32.mrb[0].mxu0
      %v8147 = vadd.f32 0.0, %v8146
      %v8148 = vpop.f32.mrb[0].mxu0
      %8149 = vmatprep.mubr.f32.mxu0 %v7922
      %8150 = vmatmul.mubr.f32.gmra.mrb[0].mxu0 %v7844
      %v8151 = vpop.f32.mrb[0].mxu0
      %v8152 = vadd.f32 0.0, %v8151
      %v8153 = vpop.f32.mrb[0].mxu0
      %8154 = vmatprep.mubr.f32.mxu0 %v7924
      %8155 = vmatmul.mubr.f32.gmra.mrb[0].mxu0 %v7862
      %v8156 = vpop.f32.mrb[0].mxu0
      %v8157 = vadd.f32 0.0, %v8156
      %v8158 = vpop.f32.mrb[0].mxu0
      %8159 = vmatprep.mubr.f32.mxu0 %v7926
      %8160 = vmatmul.mubr.f32.gmra.mrb[0].mxu0 %v7880
      %v8161 = vpop.f32.mrb[0].mxu0
      %v8162 = vadd.f32 0.0, %v8161
      %v8163 = vpop.f32.mrb[0].mxu0
      %8164 = vmatprep.mubr.f32.mxu0 %v7928
      %8165 = vmatmul.mubr.f32.gmra.mrb[0].mxu0 %v7898
      %v8166 = vpop.f32.mrb[0].mxu0
      %v8167 = vadd.f32 0.0, %v8166
      %v8168 = vpop.f32.mrb[0].mxu0
      %8169 = vdwg.mxu0
      %v8170 = vadd.f32 %v7325, %v7997
      %v8171 = vadd.f32 %v7326, %v7999
      %v8172 = vadd.f32 %v7327, %v8122
      %v8173 = vadd.f32 %v7328, %v8003
      %v8174 = vadd.f32 %v7329, %v8005
      %v8175 = vadd.f32 %v7330, %v8127
      %v8176 = vadd.f32 %v7331, %v8009
      %v8177 = vadd.f32 %v7332, %v8011
      %v8178 = vadd.f32 %v7333, %v8132
      %v8179 = vadd.f32 %v7334, %v8015
      %v8180 = vadd.f32 %v7335, %v8017
      %v8181 = vadd.f32 %v7336, %v8137
      %v8182 = vadd.f32 %v7337, %v8021
      %v8183 = vadd.f32 %v7338, %v8023
      %v8184 = vadd.f32 %v7339, %v8142
      %v8185 = vadd.f32 %v7340, %v8027
      %v8186 = vadd.f32 %v7341, %v8029
      %v8187 = vadd.f32 %v7342, %v8147
      %v8188 = vadd.f32 %v7343, %v8033
      %v8189 = vadd.f32 %v7344, %v8035
      %v8190 = vadd.f32 %v7345, %v8152
      %v8191 = vadd.f32 %v7346, %v8039
      %v8192 = vadd.f32 %v7347, %v8041
      %v8193 = vadd.f32 %v7348, %v8157
      %v8194 = vadd.f32 %v7349, %v8045
      %v8195 = vadd.f32 %v7350, %v8047
      %v8196 = vadd.f32 %v7351, %v8162
      %v8197 = vadd.f32 %v7352, %v8051
      %v8198 = vadd.f32 %v7353, %v8053
      %v8199 = vadd.f32 %v7354, %v8167
      %v8200 = vld [vmem:[%s2] sm:$0x7]
      %v8202 = vlaneseq
      %v8203 = vshrl.u32 %v8202, 7
      %v8204 = vsub.s32 0, %v8203
      %v8205 = vrot.slane %v8200, %v8204
      %v8206 = vlaneseq
      %v8207 = vshrl.u32 %v8206, 7
      %v8208 = vsub.s32 1, %v8207
      %v8209 = vrot.slane %v8200, %v8208
      %v8210 = vlaneseq
      %v8211 = vshrl.u32 %v8210, 7
      %v8212 = vsub.s32 2, %v8211
      %v8213 = vrot.slane %v8200, %v8212
      %v8217 = vadd.f32 %v8170, %v8205
      %v8218 = vadd.f32 %v8171, %v8209
      %v8219 = vadd.f32 %v8172, %v8213
      %v8220 = vadd.f32 %v8173, %v8205
      %v8221 = vadd.f32 %v8174, %v8209
      %v8222 = vadd.f32 %v8175, %v8213
      %v8223 = vadd.f32 %v8176, %v8205
      %v8224 = vadd.f32 %v8177, %v8209
      %v8225 = vadd.f32 %v8178, %v8213
      %v8226 = vadd.f32 %v8179, %v8205
      %v8227 = vadd.f32 %v8180, %v8209
      %v8228 = vadd.f32 %v8181, %v8213
      %v8229 = vadd.f32 %v8182, %v8205
      %v8230 = vadd.f32 %v8183, %v8209
      %v8231 = vadd.f32 %v8184, %v8213
      %v8232 = vadd.f32 %v8185, %v8205
      %v8233 = vadd.f32 %v8186, %v8209
      %v8234 = vadd.f32 %v8187, %v8213
      %v8235 = vadd.f32 %v8188, %v8205
      %v8236 = vadd.f32 %v8189, %v8209
      %v8237 = vadd.f32 %v8190, %v8213
      %v8238 = vadd.f32 %v8191, %v8205
      %v8239 = vadd.f32 %v8192, %v8209
      %v8240 = vadd.f32 %v8193, %v8213
      %v8241 = vadd.f32 %v8194, %v8205
      %v8242 = vadd.f32 %v8195, %v8209
      %v8243 = vadd.f32 %v8196, %v8213
      %v8244 = vadd.f32 %v8197, %v8205
      %v8245 = vadd.f32 %v8198, %v8209
      %v8246 = vadd.f32 %v8199, %v8213
      %v8277 = vcombine.low %v8217, %v8218
      %v8278 = vcombine.high %v8217, %v8218
      %v8279 = vcombine.high %v8219, %v8219
      %v8281 = vunpack.c.l.s4 1983009808
      %v8282 = vunpack.c.0.s8 %v8281
      %v8283 = vlaneseq
      %v8284 = vshrl.u32 %v8283, 7
      %v8285 = vsub.s32 %v8282, %v8284
      %v8286 = vrot.slane %v8277, %v8285
      %v8288 = vunpack.c.l.s4 1983009808
      %v8289 = vunpack.c.0.s8 %v8288
      %v8290 = vlaneseq
      %v8291 = vshrl.u32 %v8290, 7
      %v8292 = vsub.s32 %v8289, %v8291
      %v8293 = vrot.slane %v8278, %v8292
      %v8295 = vunpack.c.l.s4 1983009808
      %v8296 = vunpack.c.0.s8 %v8295
      %v8297 = vlaneseq
      %v8298 = vshrl.u32 %v8297, 7
      %v8299 = vsub.s32 %v8296, %v8298
      %v8300 = vrot.slane %v8219, %v8299
      %v8302 = vunpack.c.l.s4 1983009808
      %v8303 = vunpack.c.0.s8 %v8302
      %v8304 = vlaneseq
      %v8305 = vshrl.u32 %v8304, 7
      %v8306 = vsub.s32 %v8303, %v8305
      %v8307 = vrot.slane %v8279, %v8306
      %v8308 = vcombine.low %v8286, %v8300
      %v8309 = vcombine.high %v8286, %v8300
      %v8310 = vcombine.low %v8293, %v8307
      %v8311 = vcombine.high %v8293, %v8307
      %v8312 = vcombine.low %v8220, %v8221
      %v8313 = vcombine.high %v8220, %v8221
      %v8314 = vcombine.high %v8222, %v8222
      %v8316 = vunpack.c.l.s4 1983009808
      %v8317 = vunpack.c.0.s8 %v8316
      %v8318 = vlaneseq
      %v8319 = vshrl.u32 %v8318, 7
      %v8320 = vsub.s32 %v8317, %v8319
      %v8321 = vrot.slane %v8312, %v8320
      %v8323 = vunpack.c.l.s4 1983009808
      %v8324 = vunpack.c.0.s8 %v8323
      %v8325 = vlaneseq
      %v8326 = vshrl.u32 %v8325, 7
      %v8327 = vsub.s32 %v8324, %v8326
      %v8328 = vrot.slane %v8313, %v8327
      %v8330 = vunpack.c.l.s4 1983009808
      %v8331 = vunpack.c.0.s8 %v8330
      %v8332 = vlaneseq
      %v8333 = vshrl.u32 %v8332, 7
      %v8334 = vsub.s32 %v8331, %v8333
      %v8335 = vrot.slane %v8222, %v8334
      %v8337 = vunpack.c.l.s4 1983009808
      %v8338 = vunpack.c.0.s8 %v8337
      %v8339 = vlaneseq
      %v8340 = vshrl.u32 %v8339, 7
      %v8341 = vsub.s32 %v8338, %v8340
      %v8342 = vrot.slane %v8314, %v8341
      %v8343 = vcombine.low %v8321, %v8335
      %v8344 = vcombine.high %v8321, %v8335
      %v8345 = vcombine.low %v8328, %v8342
      %v8346 = vcombine.high %v8328, %v8342
      %v8347 = vcombine.low %v8223, %v8224
      %v8348 = vcombine.high %v8223, %v8224
      %v8349 = vcombine.high %v8225, %v8225
      %v8351 = vunpack.c.l.s4 1983009808
      %v8352 = vunpack.c.0.s8 %v8351
      %v8353 = vlaneseq
      %v8354 = vshrl.u32 %v8353, 7
      %v8355 = vsub.s32 %v8352, %v8354
      %v8356 = vrot.slane %v8347, %v8355
      %v8358 = vunpack.c.l.s4 1983009808
      %v8359 = vunpack.c.0.s8 %v8358
      %v8360 = vlaneseq
      %v8361 = vshrl.u32 %v8360, 7
      %v8362 = vsub.s32 %v8359, %v8361
      %v8363 = vrot.slane %v8348, %v8362
      %v8365 = vunpack.c.l.s4 1983009808
      %v8366 = vunpack.c.0.s8 %v8365
      %v8367 = vlaneseq
      %v8368 = vshrl.u32 %v8367, 7
      %v8369 = vsub.s32 %v8366, %v8368
      %v8370 = vrot.slane %v8225, %v8369
      %v8372 = vunpack.c.l.s4 1983009808
      %v8373 = vunpack.c.0.s8 %v8372
      %v8374 = vlaneseq
      %v8375 = vshrl.u32 %v8374, 7
      %v8376 = vsub.s32 %v8373, %v8375
      %v8377 = vrot.slane %v8349, %v8376
      %v8378 = vcombine.low %v8356, %v8370
      %v8379 = vcombine.high %v8356, %v8370
      %v8380 = vcombine.low %v8363, %v8377
      %v8381 = vcombine.high %v8363, %v8377
      %v8382 = vcombine.low %v8226, %v8227
      %v8383 = vcombine.high %v8226, %v8227
      %v8384 = vcombine.high %v8228, %v8228
      %v8386 = vunpack.c.l.s4 1983009808
      %v8387 = vunpack.c.0.s8 %v8386
      %v8388 = vlaneseq
      %v8389 = vshrl.u32 %v8388, 7
      %v8390 = vsub.s32 %v8387, %v8389
      %v8391 = vrot.slane %v8382, %v8390
      %v8393 = vunpack.c.l.s4 1983009808
      %v8394 = vunpack.c.0.s8 %v8393
      %v8395 = vlaneseq
      %v8396 = vshrl.u32 %v8395, 7
      %v8397 = vsub.s32 %v8394, %v8396
      %v8398 = vrot.slane %v8383, %v8397
      %v8400 = vunpack.c.l.s4 1983009808
      %v8401 = vunpack.c.0.s8 %v8400
      %v8402 = vlaneseq
      %v8403 = vshrl.u32 %v8402, 7
      %v8404 = vsub.s32 %v8401, %v8403
      %v8405 = vrot.slane %v8228, %v8404
      %v8407 = vunpack.c.l.s4 1983009808
      %v8408 = vunpack.c.0.s8 %v8407
      %v8409 = vlaneseq
      %v8410 = vshrl.u32 %v8409, 7
      %v8411 = vsub.s32 %v8408, %v8410
      %v8412 = vrot.slane %v8384, %v8411
      %v8413 = vcombine.low %v8391, %v8405
      %v8414 = vcombine.high %v8391, %v8405
      %v8415 = vcombine.low %v8398, %v8412
      %v8416 = vcombine.high %v8398, %v8412
      %v8417 = vcombine.low %v8229, %v8230
      %v8418 = vcombine.high %v8229, %v8230
      %v8419 = vcombine.high %v8231, %v8231
      %v8421 = vunpack.c.l.s4 1983009808
      %v8422 = vunpack.c.0.s8 %v8421
      %v8423 = vlaneseq
      %v8424 = vshrl.u32 %v8423, 7
      %v8425 = vsub.s32 %v8422, %v8424
      %v8426 = vrot.slane %v8417, %v8425
      %v8428 = vunpack.c.l.s4 1983009808
      %v8429 = vunpack.c.0.s8 %v8428
      %v8430 = vlaneseq
      %v8431 = vshrl.u32 %v8430, 7
      %v8432 = vsub.s32 %v8429, %v8431
      %v8433 = vrot.slane %v8418, %v8432
      %v8435 = vunpack.c.l.s4 1983009808
      %v8436 = vunpack.c.0.s8 %v8435
      %v8437 = vlaneseq
      %v8438 = vshrl.u32 %v8437, 7
      %v8439 = vsub.s32 %v8436, %v8438
      %v8440 = vrot.slane %v8231, %v8439
      %v8442 = vunpack.c.l.s4 1983009808
      %v8443 = vunpack.c.0.s8 %v8442
      %v8444 = vlaneseq
      %v8445 = vshrl.u32 %v8444, 7
      %v8446 = vsub.s32 %v8443, %v8445
      %v8447 = vrot.slane %v8419, %v8446
      %v8448 = vcombine.low %v8426, %v8440
      %v8449 = vcombine.high %v8426, %v8440
      %v8450 = vcombine.low %v8433, %v8447
      %v8451 = vcombine.high %v8433, %v8447
      %v8452 = vcombine.low %v8232, %v8233
      %v8453 = vcombine.high %v8232, %v8233
      %v8454 = vcombine.high %v8234, %v8234
      %v8456 = vunpack.c.l.s4 1983009808
      %v8457 = vunpack.c.0.s8 %v8456
      %v8458 = vlaneseq
      %v8459 = vshrl.u32 %v8458, 7
      %v8460 = vsub.s32 %v8457, %v8459
      %v8461 = vrot.slane %v8452, %v8460
      %v8463 = vunpack.c.l.s4 1983009808
      %v8464 = vunpack.c.0.s8 %v8463
      %v8465 = vlaneseq
      %v8466 = vshrl.u32 %v8465, 7
      %v8467 = vsub.s32 %v8464, %v8466
      %v8468 = vrot.slane %v8453, %v8467
      %v8470 = vunpack.c.l.s4 1983009808
      %v8471 = vunpack.c.0.s8 %v8470
      %v8472 = vlaneseq
      %v8473 = vshrl.u32 %v8472, 7
      %v8474 = vsub.s32 %v8471, %v8473
      %v8475 = vrot.slane %v8234, %v8474
      %v8477 = vunpack.c.l.s4 1983009808
      %v8478 = vunpack.c.0.s8 %v8477
      %v8479 = vlaneseq
      %v8480 = vshrl.u32 %v8479, 7
      %v8481 = vsub.s32 %v8478, %v8480
      %v8482 = vrot.slane %v8454, %v8481
      %v8483 = vcombine.low %v8461, %v8475
      %v8484 = vcombine.high %v8461, %v8475
      %v8485 = vcombine.low %v8468, %v8482
      %v8486 = vcombine.high %v8468, %v8482
      %v8487 = vcombine.low %v8235, %v8236
      %v8488 = vcombine.high %v8235, %v8236
      %v8489 = vcombine.high %v8237, %v8237
      %v8491 = vunpack.c.l.s4 1983009808
      %v8492 = vunpack.c.0.s8 %v8491
      %v8493 = vlaneseq
      %v8494 = vshrl.u32 %v8493, 7
      %v8495 = vsub.s32 %v8492, %v8494
      %v8496 = vrot.slane %v8487, %v8495
      %v8498 = vunpack.c.l.s4 1983009808
      %v8499 = vunpack.c.0.s8 %v8498
      %v8500 = vlaneseq
      %v8501 = vshrl.u32 %v8500, 7
      %v8502 = vsub.s32 %v8499, %v8501
      %v8503 = vrot.slane %v8488, %v8502
      %v8505 = vunpack.c.l.s4 1983009808
      %v8506 = vunpack.c.0.s8 %v8505
      %v8507 = vlaneseq
      %v8508 = vshrl.u32 %v8507, 7
      %v8509 = vsub.s32 %v8506, %v8508
      %v8510 = vrot.slane %v8237, %v8509
      %v8512 = vunpack.c.l.s4 1983009808
      %v8513 = vunpack.c.0.s8 %v8512
      %v8514 = vlaneseq
      %v8515 = vshrl.u32 %v8514, 7
      %v8516 = vsub.s32 %v8513, %v8515
      %v8517 = vrot.slane %v8489, %v8516
      %v8518 = vcombine.low %v8496, %v8510
      %v8519 = vcombine.high %v8496, %v8510
      %v8520 = vcombine.low %v8503, %v8517
      %v8521 = vcombine.high %v8503, %v8517
      %v8522 = vcombine.low %v8238, %v8239
      %v8523 = vcombine.high %v8238, %v8239
      %v8524 = vcombine.high %v8240, %v8240
      %v8526 = vunpack.c.l.s4 1983009808
      %v8527 = vunpack.c.0.s8 %v8526
      %v8528 = vlaneseq
      %v8529 = vshrl.u32 %v8528, 7
      %v8530 = vsub.s32 %v8527, %v8529
      %v8531 = vrot.slane %v8522, %v8530
      %v8533 = vunpack.c.l.s4 1983009808
      %v8534 = vunpack.c.0.s8 %v8533
      %v8535 = vlaneseq
      %v8536 = vshrl.u32 %v8535, 7
      %v8537 = vsub.s32 %v8534, %v8536
      %v8538 = vrot.slane %v8523, %v8537
      %v8540 = vunpack.c.l.s4 1983009808
      %v8541 = vunpack.c.0.s8 %v8540
      %v8542 = vlaneseq
      %v8543 = vshrl.u32 %v8542, 7
      %v8544 = vsub.s32 %v8541, %v8543
      %v8545 = vrot.slane %v8240, %v8544
      %v8547 = vunpack.c.l.s4 1983009808
      %v8548 = vunpack.c.0.s8 %v8547
      %v8549 = vlaneseq
      %v8550 = vshrl.u32 %v8549, 7
      %v8551 = vsub.s32 %v8548, %v8550
      %v8552 = vrot.slane %v8524, %v8551
      %v8553 = vcombine.low %v8531, %v8545
      %v8554 = vcombine.high %v8531, %v8545
      %v8555 = vcombine.low %v8538, %v8552
      %v8556 = vcombine.high %v8538, %v8552
      %v8557 = vcombine.low %v8241, %v8242
      %v8558 = vcombine.high %v8241, %v8242
      %v8559 = vcombine.high %v8243, %v8243
      %v8561 = vunpack.c.l.s4 1983009808
      %v8562 = vunpack.c.0.s8 %v8561
      %v8563 = vlaneseq
      %v8564 = vshrl.u32 %v8563, 7
      %v8565 = vsub.s32 %v8562, %v8564
      %v8566 = vrot.slane %v8557, %v8565
      %v8568 = vunpack.c.l.s4 1983009808
      %v8569 = vunpack.c.0.s8 %v8568
      %v8570 = vlaneseq
      %v8571 = vshrl.u32 %v8570, 7
      %v8572 = vsub.s32 %v8569, %v8571
      %v8573 = vrot.slane %v8558, %v8572
      %v8575 = vunpack.c.l.s4 1983009808
      %v8576 = vunpack.c.0.s8 %v8575
      %v8577 = vlaneseq
      %v8578 = vshrl.u32 %v8577, 7
      %v8579 = vsub.s32 %v8576, %v8578
      %v8580 = vrot.slane %v8243, %v8579
      %v8582 = vunpack.c.l.s4 1983009808
      %v8583 = vunpack.c.0.s8 %v8582
      %v8584 = vlaneseq
      %v8585 = vshrl.u32 %v8584, 7
      %v8586 = vsub.s32 %v8583, %v8585
      %v8587 = vrot.slane %v8559, %v8586
      %v8588 = vcombine.low %v8566, %v8580
      %v8589 = vcombine.high %v8566, %v8580
      %v8590 = vcombine.low %v8573, %v8587
      %v8591 = vcombine.high %v8573, %v8587
      %v8592 = vcombine.low %v8244, %v8245
      %v8593 = vcombine.high %v8244, %v8245
      %v8594 = vcombine.high %v8246, %v8246
      %v8596 = vunpack.c.l.s4 1983009808
      %v8597 = vunpack.c.0.s8 %v8596
      %v8598 = vlaneseq
      %v8599 = vshrl.u32 %v8598, 7
      %v8600 = vsub.s32 %v8597, %v8599
      %v8601 = vrot.slane %v8592, %v8600
      %v8603 = vunpack.c.l.s4 1983009808
      %v8604 = vunpack.c.0.s8 %v8603
      %v8605 = vlaneseq
      %v8606 = vshrl.u32 %v8605, 7
      %v8607 = vsub.s32 %v8604, %v8606
      %v8608 = vrot.slane %v8593, %v8607
      %v8610 = vunpack.c.l.s4 1983009808
      %v8611 = vunpack.c.0.s8 %v8610
      %v8612 = vlaneseq
      %v8613 = vshrl.u32 %v8612, 7
      %v8614 = vsub.s32 %v8611, %v8613
      %v8615 = vrot.slane %v8246, %v8614
      %v8617 = vunpack.c.l.s4 1983009808
      %v8618 = vunpack.c.0.s8 %v8617
      %v8619 = vlaneseq
      %v8620 = vshrl.u32 %v8619, 7
      %v8621 = vsub.s32 %v8618, %v8620
      %v8622 = vrot.slane %v8594, %v8621
      %v8623 = vcombine.low %v8601, %v8615
      %v8624 = vcombine.high %v8601, %v8615
      %v8625 = vcombine.low %v8608, %v8622
      %v8626 = vcombine.high %v8608, %v8622
      %v8627 = vcombine.low %v8308, %v8309
      %v8628 = vcombine.high %v8308, %v8309
      %v8629 = vcombine.low %v8310, %v8311
      %v8630 = vcombine.high %v8310, %v8311
      %v8632 = vunpack.c.l.s4 1983009808
      %v8633 = vunpack.c.0.s8 %v8632
      %v8634 = vlaneseq
      %v8635 = vshrl.u32 %v8634, 7
      %v8636 = vsub.s32 %v8633, %v8635
      %v8637 = vrot.slane %v8627, %v8636
      %v8639 = vunpack.c.l.s4 1983009808
      %v8640 = vunpack.c.0.s8 %v8639
      %v8641 = vlaneseq
      %v8642 = vshrl.u32 %v8641, 7
      %v8643 = vsub.s32 %v8640, %v8642
      %v8644 = vrot.slane %v8628, %v8643
      %v8646 = vunpack.c.l.s4 1983009808
      %v8647 = vunpack.c.0.s8 %v8646
      %v8648 = vlaneseq
      %v8649 = vshrl.u32 %v8648, 7
      %v8650 = vsub.s32 %v8647, %v8649
      %v8651 = vrot.slane %v8629, %v8650
      %v8653 = vunpack.c.l.s4 1983009808
      %v8654 = vunpack.c.0.s8 %v8653
      %v8655 = vlaneseq
      %v8656 = vshrl.u32 %v8655, 7
      %v8657 = vsub.s32 %v8654, %v8656
      %v8658 = vrot.slane %v8630, %v8657
      %v8659 = vcombine.low %v8637, %v8651
      %v8660 = vcombine.high %v8637, %v8651
      %v8661 = vcombine.low %v8644, %v8658
      %v8662 = vcombine.high %v8343, %v8343
      %v8664 = vunpack.c.l.s4 1983009808
      %v8665 = vunpack.c.0.s8 %v8664
      %v8666 = vlaneseq
      %v8667 = vshrl.u32 %v8666, 7
      %v8668 = vsub.s32 %v8665, %v8667
      %v8669 = vrot.slane %v8343, %v8668
      %v8671 = vunpack.c.l.s4 1983009808
      %v8672 = vunpack.c.0.s8 %v8671
      %v8673 = vlaneseq
      %v8674 = vshrl.u32 %v8673, 7
      %v8675 = vsub.s32 %v8672, %v8674
      %v8676 = vrot.slane %v8662, %v8675
      %v8677 = vcombine.high %v8669, %v8669
      %v8678 = vcombine.low %v8344, %v8345
      %v8679 = vcombine.high %v8344, %v8345
      %v8680 = vcombine.low %v8346, %v8378
      %v8681 = vcombine.high %v8346, %v8378
      %v8683 = vunpack.c.l.s4 1983009808
      %v8684 = vunpack.c.0.s8 %v8683
      %v8685 = vlaneseq
      %v8686 = vshrl.u32 %v8685, 7
      %v8687 = vsub.s32 %v8684, %v8686
      %v8688 = vrot.slane %v8678, %v8687
      %v8690 = vunpack.c.l.s4 1983009808
      %v8691 = vunpack.c.0.s8 %v8690
      %v8692 = vlaneseq
      %v8693 = vshrl.u32 %v8692, 7
      %v8694 = vsub.s32 %v8691, %v8693
      %v8695 = vrot.slane %v8679, %v8694
      %v8697 = vunpack.c.l.s4 1983009808
      %v8698 = vunpack.c.0.s8 %v8697
      %v8699 = vlaneseq
      %v8700 = vshrl.u32 %v8699, 7
      %v8701 = vsub.s32 %v8698, %v8700
      %v8702 = vrot.slane %v8680, %v8701
      %v8704 = vunpack.c.l.s4 1983009808
      %v8705 = vunpack.c.0.s8 %v8704
      %v8706 = vlaneseq
      %v8707 = vshrl.u32 %v8706, 7
      %v8708 = vsub.s32 %v8705, %v8707
      %v8709 = vrot.slane %v8681, %v8708
      %v8710 = vcombine.low %v8688, %v8702
      %v8711 = vcombine.high %v8688, %v8702
      %v8712 = vcombine.low %v8695, %v8709
      %v8713 = vcombine.high %v8379, %v8379
      %v8715 = vunpack.c.l.s4 1983009808
      %v8716 = vunpack.c.0.s8 %v8715
      %v8717 = vlaneseq
      %v8718 = vshrl.u32 %v8717, 7
      %v8719 = vsub.s32 %v8716, %v8718
      %v8720 = vrot.slane %v8379, %v8719
      %v8722 = vunpack.c.l.s4 1983009808
      %v8723 = vunpack.c.0.s8 %v8722
      %v8724 = vlaneseq
      %v8725 = vshrl.u32 %v8724, 7
      %v8726 = vsub.s32 %v8723, %v8725
      %v8727 = vrot.slane %v8713, %v8726
      %v8728 = vcombine.high %v8720, %v8720
      %v8729 = vcombine.low %v8380, %v8381
      %v8730 = vcombine.high %v8380, %v8381
      %v8731 = vcombine.low %v8413, %v8414
      %v8732 = vcombine.high %v8413, %v8414
      %v8734 = vunpack.c.l.s4 1983009808
      %v8735 = vunpack.c.0.s8 %v8734
      %v8736 = vlaneseq
      %v8737 = vshrl.u32 %v8736, 7
      %v8738 = vsub.s32 %v8735, %v8737
      %v8739 = vrot.slane %v8729, %v8738
      %v8741 = vunpack.c.l.s4 1983009808
      %v8742 = vunpack.c.0.s8 %v8741
      %v8743 = vlaneseq
      %v8744 = vshrl.u32 %v8743, 7
      %v8745 = vsub.s32 %v8742, %v8744
      %v8746 = vrot.slane %v8730, %v8745
      %v8748 = vunpack.c.l.s4 1983009808
      %v8749 = vunpack.c.0.s8 %v8748
      %v8750 = vlaneseq
      %v8751 = vshrl.u32 %v8750, 7
      %v8752 = vsub.s32 %v8749, %v8751
      %v8753 = vrot.slane %v8731, %v8752
      %v8755 = vunpack.c.l.s4 1983009808
      %v8756 = vunpack.c.0.s8 %v8755
      %v8757 = vlaneseq
      %v8758 = vshrl.u32 %v8757, 7
      %v8759 = vsub.s32 %v8756, %v8758
      %v8760 = vrot.slane %v8732, %v8759
      %v8761 = vcombine.low %v8739, %v8753
      %v8762 = vcombine.high %v8739, %v8753
      %v8763 = vcombine.low %v8746, %v8760
      %v8764 = vcombine.high %v8415, %v8415
      %v8766 = vunpack.c.l.s4 1983009808
      %v8767 = vunpack.c.0.s8 %v8766
      %v8768 = vlaneseq
      %v8769 = vshrl.u32 %v8768, 7
      %v8770 = vsub.s32 %v8767, %v8769
      %v8771 = vrot.slane %v8415, %v8770
      %v8773 = vunpack.c.l.s4 1983009808
      %v8774 = vunpack.c.0.s8 %v8773
      %v8775 = vlaneseq
      %v8776 = vshrl.u32 %v8775, 7
      %v8777 = vsub.s32 %v8774, %v8776
      %v8778 = vrot.slane %v8764, %v8777
      %v8779 = vcombine.high %v8771, %v8771
      %v8780 = vcombine.low %v8416, %v8448
      %v8781 = vcombine.high %v8416, %v8448
      %v8782 = vcombine.low %v8449, %v8450
      %v8783 = vcombine.high %v8449, %v8450
      %v8785 = vunpack.c.l.s4 1983009808
      %v8786 = vunpack.c.0.s8 %v8785
      %v8787 = vlaneseq
      %v8788 = vshrl.u32 %v8787, 7
      %v8789 = vsub.s32 %v8786, %v8788
      %v8790 = vrot.slane %v8780, %v8789
      %v8792 = vunpack.c.l.s4 1983009808
      %v8793 = vunpack.c.0.s8 %v8792
      %v8794 = vlaneseq
      %v8795 = vshrl.u32 %v8794, 7
      %v8796 = vsub.s32 %v8793, %v8795
      %v8797 = vrot.slane %v8781, %v8796
      %v8799 = vunpack.c.l.s4 1983009808
      %v8800 = vunpack.c.0.s8 %v8799
      %v8801 = vlaneseq
      %v8802 = vshrl.u32 %v8801, 7
      %v8803 = vsub.s32 %v8800, %v8802
      %v8804 = vrot.slane %v8782, %v8803
      %v8806 = vunpack.c.l.s4 1983009808
      %v8807 = vunpack.c.0.s8 %v8806
      %v8808 = vlaneseq
      %v8809 = vshrl.u32 %v8808, 7
      %v8810 = vsub.s32 %v8807, %v8809
      %v8811 = vrot.slane %v8783, %v8810
      %v8812 = vcombine.low %v8790, %v8804
      %v8813 = vcombine.high %v8790, %v8804
      %v8814 = vcombine.low %v8797, %v8811
      %v8815 = vcombine.high %v8451, %v8451
      %v8817 = vunpack.c.l.s4 1983009808
      %v8818 = vunpack.c.0.s8 %v8817
      %v8819 = vlaneseq
      %v8820 = vshrl.u32 %v8819, 7
      %v8821 = vsub.s32 %v8818, %v8820
      %v8822 = vrot.slane %v8451, %v8821
      %v8824 = vunpack.c.l.s4 1983009808
      %v8825 = vunpack.c.0.s8 %v8824
      %v8826 = vlaneseq
      %v8827 = vshrl.u32 %v8826, 7
      %v8828 = vsub.s32 %v8825, %v8827
      %v8829 = vrot.slane %v8815, %v8828
      %v8830 = vcombine.high %v8822, %v8822
      %v8831 = vcombine.low %v8483, %v8484
      %v8832 = vcombine.high %v8483, %v8484
      %v8833 = vcombine.low %v8485, %v8486
      %v8834 = vcombine.high %v8485, %v8486
      %v8836 = vunpack.c.l.s4 1983009808
      %v8837 = vunpack.c.0.s8 %v8836
      %v8838 = vlaneseq
      %v8839 = vshrl.u32 %v8838, 7
      %v8840 = vsub.s32 %v8837, %v8839
      %v8841 = vrot.slane %v8831, %v8840
      %v8843 = vunpack.c.l.s4 1983009808
      %v8844 = vunpack.c.0.s8 %v8843
      %v8845 = vlaneseq
      %v8846 = vshrl.u32 %v8845, 7
      %v8847 = vsub.s32 %v8844, %v8846
      %v8848 = vrot.slane %v8832, %v8847
      %v8850 = vunpack.c.l.s4 1983009808
      %v8851 = vunpack.c.0.s8 %v8850
      %v8852 = vlaneseq
      %v8853 = vshrl.u32 %v8852, 7
      %v8854 = vsub.s32 %v8851, %v8853
      %v8855 = vrot.slane %v8833, %v8854
      %v8857 = vunpack.c.l.s4 1983009808
      %v8858 = vunpack.c.0.s8 %v8857
      %v8859 = vlaneseq
      %v8860 = vshrl.u32 %v8859, 7
      %v8861 = vsub.s32 %v8858, %v8860
      %v8862 = vrot.slane %v8834, %v8861
      %v8863 = vcombine.low %v8841, %v8855
      %v8864 = vcombine.high %v8841, %v8855
      %v8865 = vcombine.low %v8848, %v8862
      %v8866 = vcombine.high %v8518, %v8518
      %v8868 = vunpack.c.l.s4 1983009808
      %v8869 = vunpack.c.0.s8 %v8868
      %v8870 = vlaneseq
      %v8871 = vshrl.u32 %v8870, 7
      %v8872 = vsub.s32 %v8869, %v8871
      %v8873 = vrot.slane %v8518, %v8872
      %v8875 = vunpack.c.l.s4 1983009808
      %v8876 = vunpack.c.0.s8 %v8875
      %v8877 = vlaneseq
      %v8878 = vshrl.u32 %v8877, 7
      %v8879 = vsub.s32 %v8876, %v8878
      %v8880 = vrot.slane %v8866, %v8879
      %v8881 = vcombine.high %v8873, %v8873
      %v8882 = vcombine.low %v8519, %v8520
      %v8883 = vcombine.high %v8519, %v8520
      %v8884 = vcombine.low %v8521, %v8553
      %v8885 = vcombine.high %v8521, %v8553
      %v8887 = vunpack.c.l.s4 1983009808
      %v8888 = vunpack.c.0.s8 %v8887
      %v8889 = vlaneseq
      %v8890 = vshrl.u32 %v8889, 7
      %v8891 = vsub.s32 %v8888, %v8890
      %v8892 = vrot.slane %v8882, %v8891
      %v8894 = vunpack.c.l.s4 1983009808
      %v8895 = vunpack.c.0.s8 %v8894
      %v8896 = vlaneseq
      %v8897 = vshrl.u32 %v8896, 7
      %v8898 = vsub.s32 %v8895, %v8897
      %v8899 = vrot.slane %v8883, %v8898
      %v8901 = vunpack.c.l.s4 1983009808
      %v8902 = vunpack.c.0.s8 %v8901
      %v8903 = vlaneseq
      %v8904 = vshrl.u32 %v8903, 7
      %v8905 = vsub.s32 %v8902, %v8904
      %v8906 = vrot.slane %v8884, %v8905
      %v8908 = vunpack.c.l.s4 1983009808
      %v8909 = vunpack.c.0.s8 %v8908
      %v8910 = vlaneseq
      %v8911 = vshrl.u32 %v8910, 7
      %v8912 = vsub.s32 %v8909, %v8911
      %v8913 = vrot.slane %v8885, %v8912
      %v8914 = vcombine.low %v8892, %v8906
      %v8915 = vcombine.high %v8892, %v8906
      %v8916 = vcombine.low %v8899, %v8913
      %v8917 = vcombine.high %v8554, %v8554
      %v8919 = vunpack.c.l.s4 1983009808
      %v8920 = vunpack.c.0.s8 %v8919
      %v8921 = vlaneseq
      %v8922 = vshrl.u32 %v8921, 7
      %v8923 = vsub.s32 %v8920, %v8922
      %v8924 = vrot.slane %v8554, %v8923
      %v8926 = vunpack.c.l.s4 1983009808
      %v8927 = vunpack.c.0.s8 %v8926
      %v8928 = vlaneseq
      %v8929 = vshrl.u32 %v8928, 7
      %v8930 = vsub.s32 %v8927, %v8929
      %v8931 = vrot.slane %v8917, %v8930
      %v8932 = vcombine.high %v8924, %v8924
      %v8933 = vcombine.low %v8555, %v8556
      %v8934 = vcombine.high %v8555, %v8556
      %v8935 = vcombine.low %v8588, %v8589
      %v8936 = vcombine.high %v8588, %v8589
      %v8938 = vunpack.c.l.s4 1983009808
      %v8939 = vunpack.c.0.s8 %v8938
      %v8940 = vlaneseq
      %v8941 = vshrl.u32 %v8940, 7
      %v8942 = vsub.s32 %v8939, %v8941
      %v8943 = vrot.slane %v8933, %v8942
      %v8945 = vunpack.c.l.s4 1983009808
      %v8946 = vunpack.c.0.s8 %v8945
      %v8947 = vlaneseq
      %v8948 = vshrl.u32 %v8947, 7
      %v8949 = vsub.s32 %v8946, %v8948
      %v8950 = vrot.slane %v8934, %v8949
      %v8952 = vunpack.c.l.s4 1983009808
      %v8953 = vunpack.c.0.s8 %v8952
      %v8954 = vlaneseq
      %v8955 = vshrl.u32 %v8954, 7
      %v8956 = vsub.s32 %v8953, %v8955
      %v8957 = vrot.slane %v8935, %v8956
      %v8959 = vunpack.c.l.s4 1983009808
      %v8960 = vunpack.c.0.s8 %v8959
      %v8961 = vlaneseq
      %v8962 = vshrl.u32 %v8961, 7
      %v8963 = vsub.s32 %v8960, %v8962
      %v8964 = vrot.slane %v8936, %v8963
      %v8965 = vcombine.low %v8943, %v8957
      %v8966 = vcombine.high %v8943, %v8957
      %v8967 = vcombine.low %v8950, %v8964
      %v8968 = vcombine.high %v8590, %v8590
      %v8970 = vunpack.c.l.s4 1983009808
      %v8971 = vunpack.c.0.s8 %v8970
      %v8972 = vlaneseq
      %v8973 = vshrl.u32 %v8972, 7
      %v8974 = vsub.s32 %v8971, %v8973
      %v8975 = vrot.slane %v8590, %v8974
      %v8977 = vunpack.c.l.s4 1983009808
      %v8978 = vunpack.c.0.s8 %v8977
      %v8979 = vlaneseq
      %v8980 = vshrl.u32 %v8979, 7
      %v8981 = vsub.s32 %v8978, %v8980
      %v8982 = vrot.slane %v8968, %v8981
      %v8983 = vcombine.high %v8975, %v8975
      %v8984 = vcombine.low %v8591, %v8623
      %v8985 = vcombine.high %v8591, %v8623
      %v8986 = vcombine.low %v8624, %v8625
      %v8987 = vcombine.high %v8624, %v8625
      %v8989 = vunpack.c.l.s4 1983009808
      %v8990 = vunpack.c.0.s8 %v8989
      %v8991 = vlaneseq
      %v8992 = vshrl.u32 %v8991, 7
      %v8993 = vsub.s32 %v8990, %v8992
      %v8994 = vrot.slane %v8984, %v8993
      %v8996 = vunpack.c.l.s4 1983009808
      %v8997 = vunpack.c.0.s8 %v8996
      %v8998 = vlaneseq
      %v8999 = vshrl.u32 %v8998, 7
      %v9000 = vsub.s32 %v8997, %v8999
      %v9001 = vrot.slane %v8985, %v9000
      %v9003 = vunpack.c.l.s4 1983009808
      %v9004 = vunpack.c.0.s8 %v9003
      %v9005 = vlaneseq
      %v9006 = vshrl.u32 %v9005, 7
      %v9007 = vsub.s32 %v9004, %v9006
      %v9008 = vrot.slane %v8986, %v9007
      %v9010 = vunpack.c.l.s4 1983009808
      %v9011 = vunpack.c.0.s8 %v9010
      %v9012 = vlaneseq
      %v9013 = vshrl.u32 %v9012, 7
      %v9014 = vsub.s32 %v9011, %v9013
      %v9015 = vrot.slane %v8987, %v9014
      %v9016 = vcombine.low %v8994, %v9008
      %v9017 = vcombine.high %v8994, %v9008
      %v9018 = vcombine.low %v9001, %v9015
      %v9019 = vcombine.high %v8626, %v8626
      %v9021 = vunpack.c.l.s4 1983009808
      %v9022 = vunpack.c.0.s8 %v9021
      %v9023 = vlaneseq
      %v9024 = vshrl.u32 %v9023, 7
      %v9025 = vsub.s32 %v9022, %v9024
      %v9026 = vrot.slane %v8626, %v9025
      %v9028 = vunpack.c.l.s4 1983009808
      %v9029 = vunpack.c.0.s8 %v9028
      %v9030 = vlaneseq
      %v9031 = vshrl.u32 %v9030, 7
      %v9032 = vsub.s32 %v9029, %v9031
      %v9033 = vrot.slane %v9019, %v9032
      %v9034 = vcombine.high %v9026, %v9026
      %9083 = vst [vmem:[%s170] sm:$0xff] %v8659
      %9084 = vst [vmem:[%s170 + $0x8] sm:$0xff] %v8660
      %9085 = vst [vmem:[%s170 + $0x10] sm:$0xff] %v8661
      %9086 = vst [vmem:[%s170 + $0x18] sm:$0x3] %v8669
      %9087 = vst [vmem:[%s170 + $0x20] sm:$0x3] %v8677
      %9088 = vst [vmem:[%s170 + $0x28] sm:$0x3] %v8676
      %9089 = vst [vmem:[%s170 + $0x30] sm:$0xff] %v8710
      %9090 = vst [vmem:[%s170 + $0x38] sm:$0xff] %v8711
      %9091 = vst [vmem:[%s170 + $0x40] sm:$0xff] %v8712
      %9092 = vst [vmem:[%s170 + $0x48] sm:$0x3] %v8720
      %9093 = vst [vmem:[%s170 + $0x50] sm:$0x3] %v8728
      %9094 = vst [vmem:[%s170 + $0x58] sm:$0x3] %v8727
      %9095 = vst [vmem:[%s170 + $0x60] sm:$0xff] %v8761
      %9096 = vst [vmem:[%s170 + $0x68] sm:$0xff] %v8762
      %9097 = vst [vmem:[%s170 + $0x70] sm:$0xff] %v8763
      %9098 = vst [vmem:[%s170 + $0x78] sm:$0x3] %v8771
      %9099 = vst [vmem:[%s170 + $0x80] sm:$0x3] %v8779
      %9100 = vst [vmem:[%s170 + $0x88] sm:$0x3] %v8778
      %9101 = vst [vmem:[%s170 + $0x90] sm:$0xff] %v8812
      %9102 = vst [vmem:[%s170 + $0x98] sm:$0xff] %v8813
      %9103 = vst [vmem:[%s170 + $0xa0] sm:$0xff] %v8814
      %9104 = vst [vmem:[%s170 + $0xa8] sm:$0x3] %v8822
      %9105 = vst [vmem:[%s170 + $0xb0] sm:$0x3] %v8830
      %9106 = vst [vmem:[%s170 + $0xb8] sm:$0x3] %v8829
      %9107 = vst [vmem:[%s170 + $0xc0] sm:$0xff] %v8863
      %9108 = vst [vmem:[%s170 + $0xc8] sm:$0xff] %v8864
      %9109 = vst [vmem:[%s170 + $0xd0] sm:$0xff] %v8865
      %9110 = vst [vmem:[%s170 + $0xd8] sm:$0x3] %v8873
      %9111 = vst [vmem:[%s170 + $0xe0] sm:$0x3] %v8881
      %9112 = vst [vmem:[%s170 + $0xe8] sm:$0x3] %v8880
      %9113 = vst [vmem:[%s170 + $0xf0] sm:$0xff] %v8914
      %9114 = vst [vmem:[%s170 + $0xf8] sm:$0xff] %v8915
      %9115 = vst [vmem:[%s170 + $0x100] sm:$0xff] %v8916
      %9116 = vst [vmem:[%s170 + $0x108] sm:$0x3] %v8924
      %9117 = vst [vmem:[%s170 + $0x110] sm:$0x3] %v8932
      %9118 = vst [vmem:[%s170 + $0x118] sm:$0x3] %v8931
      %9119 = vst [vmem:[%s170 + $0x120] sm:$0xff] %v8965
      %9120 = vst [vmem:[%s170 + $0x128] sm:$0xff] %v8966
      %9121 = vst [vmem:[%s170 + $0x130] sm:$0xff] %v8967
      %9122 = vst [vmem:[%s170 + $0x138] sm:$0x3] %v8975
      %9123 = vst [vmem:[%s170 + $0x140] sm:$0x3] %v8983
      %9124 = vst [vmem:[%s170 + $0x148] sm:$0x3] %v8982
      %9125 = vst [vmem:[%s170 + $0x150] sm:$0xff] %v9016
      %9126 = vst [vmem:[%s170 + $0x158] sm:$0xff] %v9017
      %9127 = vst [vmem:[%s170 + $0x160] sm:$0xff] %v9018
      %9128 = vst [vmem:[%s170 + $0x168] sm:$0x3] %v9026
      %9129 = vst [vmem:[%s170 + $0x170] sm:$0x3] %v9034
      %9130 = vst [vmem:[%s170 + $0x178] sm:$0x3] %v9033
      %p9131 = scmp.lt.s32.totalorder %s14, 1
      %s9132 = scalar_select %p9131, %s14, 1
      %s9133 = smul.addr %s9132, 48
      %s9134 = smul.addr %s9133, 8
      %s9135 = scalar_lea.vmem %s3, %s9134
      // Predicated region
      $region33: #{conv_transpose3d_pallas.1} parent=31 // pred_check
        %p9136 = pneg %p100
      $region34: #{conv_transpose3d_pallas.1} parent=31 // pred_check_branch
        %9138 = sbr.rel (%p9136) target = $region36
      $region35: #{conv_transpose3d_pallas.1} parent=31 // pred_region
        _
      $region36: #{conv_transpose3d_pallas.1} parent=31 // pred_fallthru
        _
    $region32: #{conv_transpose3d_pallas.1} parent=5 // pred_fallthru
      _
    %p9139 = scmp.le.s32.totalorder 2, %s9
    // Predicated region
    $region37: #{conv_transpose3d_pallas.1} parent=5 // pred_check
      %p9140 = pneg %p9139
    $region38: #{conv_transpose3d_pallas.1} parent=5 // pred_check_branch
      %9142 = sbr.rel (%p9140) target = $region40
    $region39: #{conv_transpose3d_pallas.1} parent=5 // pred_region
      %s9143 = ssub.s32 %s9, 2
      // Predicated region
      $region41: #{conv_transpose3d_pallas.1} parent=39 // pred_check
        %p9144 = pneg %p106
      $region42: #{conv_transpose3d_pallas.1} parent=39 // pred_check_branch
        %9146 = sbr.rel (%p9144) target = $region44
      $region43: #{conv_transpose3d_pallas.1} parent=39 // pred_region
        %p9147 = scmp.lt.s32.totalorder %s15, 1
        %s9148 = scalar_select %p9147, %s15, 1
        %s9149 = smul.addr %s9148, 48
        %s9150 = smul.addr %s9149, 8
        %s9151 = scalar_lea.vmem %s3, %s9150
      $region44: #{conv_transpose3d_pallas.1} parent=39 // pred_fallthru
        _
    $region40: #{conv_transpose3d_pallas.1} parent=5 // pred_fallthru
      _
  $region6: #{conv_transpose3d_pallas.1} parent=0 // loop_footer
    %s13 = sadd.s32 1, %s9
  $region7: #{conv_transpose3d_pallas.1} parent=0 // loop_footer_branch
    %8 = sbr.rel target = $region3
  $region8: #{conv_transpose3d_pallas.1} parent=0 // loop_exit
    _

</llo_original>
